<compile_context>
chip_gen: v7x
topology: tpu7x:2x2x1
jax: 0.10.0
libtpu: 0.0.40
codegen_flags: <defaults>
</compile_context>

<pallas_src>
import jax
import jax.numpy as jnp
from jax.experimental import pallas as pl
from jax.experimental.pallas import tpu as pltpu

EPS = 1e-5


# ------------------------------ Pallas kernels ------------------------------

def _mlp_bn_relu_kernel(z_ref, w1_ref, b1_ref, w2_ref, g_ref, bt_ref, o_ref):
    # Linear(latent -> 128) + ReLU (tiny GEMM; recomputed per column tile, negligible).
    h = jnp.dot(z_ref[...], w1_ref[...], preferred_element_type=jnp.float32)
    h = jnp.maximum(h + b1_ref[...], 0.0)
    # Linear(128 -> d).  Its bias is exactly cancelled by the BatchNorm1d mean
    # subtraction below, so it is not applied.
    y = jnp.dot(h.astype(jnp.bfloat16), w2_ref[...],
                preferred_element_type=jnp.float32)
    # BatchNorm1d (batch statistics, biased variance), one-pass moments.
    mu = jnp.mean(y, axis=0, keepdims=True)
    msq = jnp.mean(y * y, axis=0, keepdims=True)
    var = jnp.maximum(msq - mu * mu, 0.0)
    scale = g_ref[...] * jax.lax.rsqrt(var + EPS)
    shift = bt_ref[...] - scale * mu
    o_ref[...] = jnp.maximum(y * scale + shift, 0.0).astype(o_ref.dtype)


def _deconv_bn_relu_kernel(p_ref, w_ref, g_ref, bt_ref, o_ref):
    # Sub-pixel ConvTranspose2d GEMM; output columns ordered (parity ry*2+rx, cout).
    y = jnp.dot(p_ref[...], w_ref[...], preferred_element_type=jnp.float32)
    cout = g_ref.shape[-1]
    n_el = 4.0 * y.shape[0]                                  # rows (B*H*W) * 4 parities
    # BatchNorm2d statistics: per channel, over all rows AND the 4 parity groups.
    cs = jnp.sum(y, axis=0, keepdims=True)                   # (1, 4*cout)
    ss = jnp.sum(y * y, axis=0, keepdims=True)               # (1, 4*cout)
    ch_sum = (cs[:, 0 * cout:1 * cout] + cs[:, 1 * cout:2 * cout]
              + cs[:, 2 * cout:3 * cout] + cs[:, 3 * cout:4 * cout])
    ch_ssq = (ss[:, 0 * cout:1 * cout] + ss[:, 1 * cout:2 * cout]
              + ss[:, 2 * cout:3 * cout] + ss[:, 3 * cout:4 * cout])
    mu = ch_sum / n_el                                       # (1, cout)
    var = jnp.maximum(ch_ssq / n_el - mu * mu, 0.0)
    scale = g_ref[...] * jax.lax.rsqrt(var + EPS)
    shift = bt_ref[...] - scale * mu
    scale4 = jnp.concatenate([scale, scale, scale, scale], axis=1)
    shift4 = jnp.concatenate([shift, shift, shift, shift], axis=1)
    o_ref[...] = jnp.maximum(y * scale4 + shift4, 0.0).astype(o_ref.dtype)


def _deconv_sigmoid_kernel(p_ref, w_ref, b_ref, o_ref):
    y = jnp.dot(p_ref[...], w_ref[...], preferred_element_type=jnp.float32)
    y = y + b_ref[...]
    # sigmoid(y) = 0.5*(tanh(y/2)+1): transcendental goes to the EUP, no VALU
    # divide, and the result is exactly within [0, 1].
    o_ref[...] = 0.5 * (jnp.tanh(0.5 * y) + 1.0)


# ------------------------------ pallas_call wrappers -------------------------

def fused_mlp_bn_relu(z, w1, b1_row, w2_cols, gamma_row, beta_row):
    """relu(bn1d(relu(z @ w1 + b1) @ w2_cols)) — columns pre-permuted to NHWC order."""
    B, latent = z.shape
    d = w2_cols.shape[1]
    TN = d // 2 if (d % 256 == 0) else d        # 2 lane-dense column tiles
    grid = (d // TN,)
    inv0 = lambda j: (0, 0)
    colj = lambda j: (0, j)
    return pl.pallas_call(
        _mlp_bn_relu_kernel,
        out_shape=jax.ShapeDtypeStruct((B, d), jnp.bfloat16),
        grid=grid,
        in_specs=[
            pl.BlockSpec((B, latent), inv0),
            pl.BlockSpec((latent, w1.shape[1]), inv0),
            pl.BlockSpec((1, w1.shape[1]), inv0),
            pl.BlockSpec((w2_cols.shape[0], TN), colj),
            pl.BlockSpec((1, TN), colj),
            pl.BlockSpec((1, TN), colj),
        ],
        out_specs=pl.BlockSpec((B, TN), colj),
        compiler_params=pltpu.CompilerParams(dimension_semantics=("parallel",)),
    )(z, w1, b1_row, w2_cols, gamma_row, beta_row)


def deconv_bn_relu(patches, w_mat, gamma_row, beta_row):
    """relu(bn2d(patches @ w_mat)) in the sub-pixel (parity, cout) column layout."""
    M = patches.shape[0]
    cout = gamma_row.shape[1]
    # Single-block call (BN2d needs all rows + parities together); everything
    # fits comfortably in VMEM at these sizes (~2.5 MB of bf16 weights/patches).
    return pl.pallas_call(
        _deconv_bn_relu_kernel,
        out_shape=jax.ShapeDtypeStruct((M, 4 * cout), jnp.bfloat16),
    )(patches, w_mat, gamma_row, beta_row)


def deconv_bias_sigmoid(patches, w_mat, bias_row):
    M, K = patches.shape
    N = w_mat.shape[1]                           # already padded to a multiple of 128
    TM = M // 2 if (M % 16 == 0) else M          # 2 parallel row tiles (v7x megacore)
    grid = (M // TM,)
    return pl.pallas_call(
        _deconv_sigmoid_kernel,
        out_shape=jax.ShapeDtypeStruct((M, N), jnp.float32),
        grid=grid,
        in_specs=[pl.BlockSpec((TM, K), lambda i: (i, 0)),
                  pl.BlockSpec((K, N), lambda i: (0, 0)),
                  pl.BlockSpec((1, N), lambda i: (0, 0))],
        out_specs=pl.BlockSpec((TM, N), lambda i: (i, 0)),
        compiler_params=pltpu.CompilerParams(dimension_semantics=("parallel",)),
    )(patches, w_mat, bias_row)


# ---------------------- sub-pixel ConvTranspose2d glue ----------------------
# ConvTranspose2d(k=4, s=2, p=1): output pixel (2m+ry, 2n+rx) only touches the
# 2x2 input window starting at padded coords (m+ry, n+rx), with kernel taps
# (3-ry-2*dy, 3-rx-2*dx).  We build ONE 3x3 im2col (the union of all four
# parities' windows) and one GEMM whose columns are (parity, cout); the 12/16
# zero taps of the naive zero-upsample formulation never enter the GEMM.

def _subpixel_patches(x_nhwc):
    B, H, W, C = x_nhwc.shape
    xp = jnp.pad(x_nhwc, ((0, 0), (1, 1), (1, 1), (0, 0)))
    cols = [xp[:, ty:ty + H, tx:tx + W, :] for ty in range(3) for tx in range(3)]
    pat = jnp.stack(cols, axis=3)                            # (B, H, W, 9, C)
    return pat.reshape(B * H * W, 9 * C), (H, W)


def _subpixel_weight_matrix(w_pt):
    """PyTorch ConvTranspose2d weight (Cin, Cout, 4, 4) -> (9*Cin, 4*Cout) GEMM
    matrix.  Row = (ty*3+tx)*Cin + ci (tap in the 3x3 padded window), column =
    (ry*2+rx)*Cout + co (output-pixel parity, channel)."""
    cin, cout = w_pt.shape[0], w_pt.shape[1]
    wm = jnp.zeros((3, 3, cin, 2, 2, cout), w_pt.dtype)
    for ry in range(2):
        for rx in range(2):
            for dy in range(2):
                for dx in range(2):
                    wm = wm.at[ry + dy, rx + dx, :, ry, rx, :].set(
                        w_pt[:, :, 3 - ry - 2 * dy, 3 - rx - 2 * dx])
    return wm.reshape(9 * cin, 4 * cout)


def _depth_to_space(y_flat, B, H, W, cout):
    """(B*H*W, 4*cout) with columns (ry, rx, co) -> (B, 2H, 2W, cout)."""
    y = y_flat.reshape(B, H, W, 2, 2, cout)
    y = y.transpose(0, 1, 3, 2, 4, 5)
    return y.reshape(B, 2 * H, 2 * W, cout)


# ------------------------------ parameter prep ------------------------------

def prepare_params(params, tile_size, img_channels):
    """One-time weight-layout transforms (run OUTSIDE the jitted forward)."""
    init = tile_size // 4
    d = 256 * init * init
    # Permute Linear-2 / BN1d feature columns (c, iy, ix) -> (iy, ix, c) so the
    # fused MLP kernel's output is already NHWC-flat; PyTorch's view()+NCHW->NHWC
    # transpose becomes a free reshape.  (b2 / ct1_b are dropped: batch-stat BN
    # cancels a per-column constant exactly.)
    w2_cols = params["w2"].reshape(128, 256, init, init) \
                          .transpose(0, 2, 3, 1).reshape(128, d)
    g1_cols = params["bn1_g"].reshape(256, init, init).transpose(1, 2, 0).reshape(1, d)
    bt1_cols = params["bn1_b"].reshape(256, init, init).transpose(1, 2, 0).reshape(1, d)

    wm1 = _subpixel_weight_matrix(params["ct1_w"]).astype(jnp.bfloat16)

    wm2 = _subpixel_weight_matrix(params["ct2_w"])           # (9*128, 4*img_channels)
    n_real = 4 * img_channels
    n_pad = max(128, ((n_real + 127) // 128) * 128)          # lane-dense last GEMM
    wm2p = jnp.zeros((wm2.shape[0], n_pad), jnp.float32) \
              .at[:, :n_real].set(wm2).astype(jnp.bfloat16)
    bias2 = jnp.zeros((1, n_pad), jnp.float32) \
               .at[0, :n_real].set(jnp.tile(params["ct2_b"], 4))

    return {
        "w1": params["w1"],
        "b1_row": params["b1"].reshape(1, -1),
        "w2_cols": w2_cols.astype(jnp.bfloat16),
        "bn1_g": g1_cols,
        "bn1_b": bt1_cols,
        "wm1": wm1,
        "bn2_g": params["bn2_g"].reshape(1, -1),
        "bn2_b": params["bn2_b"].reshape(1, -1),
        "wm2p": wm2p,
        "bias2": bias2,
    }


# ------------------------------ Generator forward ----------------------------

def generator_forward(z, prep, tile_size, img_channels):
    init = tile_size // 4
    B = z.shape[0]

    # Fused Linear -> ReLU -> Linear -> BatchNorm1d -> ReLU (NHWC-flat output).
    y = fused_mlp_bn_relu(z, prep["w1"], prep["b1_row"], prep["w2_cols"],
                          prep["bn1_g"], prep["bn1_b"])
    x = y.reshape(B, init, init, 256)                        # NHWC, bf16

    # ConvTranspose2d(256 -> 128) + BatchNorm2d + ReLU (ct1 bias cancelled by BN).
    p1, (h1, w1s) = _subpixel_patches(x)                     # (B*init^2, 9*256) bf16
    c1 = deconv_bn_relu(p1, prep["wm1"], prep["bn2_g"], prep["bn2_b"])
    x1 = _depth_to_space(c1, B, h1, w1s, 128)                # (B, 2*init, 2*init, 128)

    # ConvTranspose2d(128 -> img_channels) + Sigmoid, output padded to 128 lanes.
    p2, (h2, w2s) = _subpixel_patches(x1)                    # (B*(2*init)^2, 9*128) bf16
    c2 = deconv_bias_sigmoid(p2, prep["wm2p"], prep["bias2"])
    n_real = 4 * img_channels
    img = _depth_to_space(c2[:, :n_real], B, h2, w2s, img_channels)
    return img.transpose(0, 3, 1, 2)                         # NCHW


def init_params(key, latent_dim, img_channels, tile_size):
    init = tile_size // 4
    d = 256 * init * init
    ks = jax.random.split(key, 8)
    f32 = jnp.float32
    return {
        "w1": jax.random.normal(ks[0], (latent_dim, 128), f32) * 0.05,
        "b1": jax.random.normal(ks[1], (128,), f32) * 0.05,
        "w2": jax.random.normal(ks[2], (128, d), f32) * 0.05,
        # b2 / ct1_b exist in the PyTorch module but are mathematically
        # cancelled by the following batch-statistic BatchNorm layers, so the
        # kernels do not consume them.
        "b2": jax.random.normal(ks[3], (d,), f32) * 0.05,
        "bn1_g": jnp.ones((d,), f32),
        "bn1_b": jnp.zeros((d,), f32),
        "ct1_w": jax.random.normal(ks[4], (256, 128, 4, 4), f32) * 0.05,
        "ct1_b": jax.random.normal(ks[5], (128,), f32) * 0.05,
        "bn2_g": jnp.ones((128,), f32),
        "bn2_b": jnp.zeros((128,), f32),
        "ct2_w": jax.random.normal(ks[6], (128, img_channels, 4, 4), f32) * 0.05,
        "ct2_b": jax.random.normal(ks[7], (img_channels,), f32) * 0.05,
    }


if __name__ == "__main__":
    latent_dim, img_channels, tile_size, batch = 32, 1, 16, 2

    key = jax.random.PRNGKey(0)
    pkey, zkey = jax.random.split(key)
    params = init_params(pkey, latent_dim, img_channels, tile_size)
    prep = prepare_params(params, tile_size, img_channels)   # one-time weight layout work
    z = jax.random.normal(zkey, (batch, latent_dim), jnp.float32)

    fwd = jax.jit(generator_forward, static_argnums=(2, 3))
    img = jax.block_until_ready(fwd(z, prep, tile_size, img_channels))

    assert img.shape == (batch, img_channels, tile_size, tile_size), img.shape
    assert bool(jnp.all(jnp.isfinite(img)))
    assert bool(jnp.all((img >= 0.0) & (img <= 1.0)))        # sigmoid output range
    print("KERNEL_OK")
</pallas_src>

<mosaic_0001>
module attributes {stable_mosaic.version = 11 : i64} {
  func.func @_mlp_bn_relu_kernel(%arg0: i32, %arg1: memref<2x32xf32, #tpu.memory_space<vmem>>, %arg2: memref<32x128xf32, #tpu.memory_space<vmem>>, %arg3: memref<1x128xf32, #tpu.memory_space<vmem>>, %arg4: memref<128x2048xbf16, #tpu.memory_space<vmem>>, %arg5: memref<1x2048xf32, #tpu.memory_space<vmem>>, %arg6: memref<1x2048xf32, #tpu.memory_space<vmem>>, %arg7: memref<2x2048xbf16, #tpu.memory_space<vmem>>) attributes {dimension_semantics = [#tpu.dimension_semantics<parallel>], iteration_bounds = array<i64: 2>, scalar_prefetch = 0 : i64, scratch_operands = 0 : i64, tpu.core_type = #tpu.core_type<tc>, window_params = [{pipeline_mode = #tpu.pipeline_mode<synchronous>, transform_indices = @transform_0, window_bounds = array<i64: 2, 32>}, {pipeline_mode = #tpu.pipeline_mode<synchronous>, transform_indices = @transform_1, window_bounds = array<i64: 32, 128>}, {pipeline_mode = #tpu.pipeline_mode<synchronous>, transform_indices = @transform_2, window_bounds = array<i64: 1, 128>}, {transform_indices = @transform_3, window_bounds = array<i64: 128, 2048>}, {transform_indices = @transform_4, window_bounds = array<i64: 1, 2048>}, {transform_indices = @transform_5, window_bounds = array<i64: 1, 2048>}, {transform_indices = @transform_6, window_bounds = array<i64: 2, 2048>}]} {
    %c0 = arith.constant 0 : index
    %c0_0 = arith.constant 0 : index
    %0 = vector.load %arg1[%c0, %c0_0] : memref<2x32xf32, #tpu.memory_space<vmem>>, vector<2x32xf32>
    %c0_1 = arith.constant 0 : index
    %c0_2 = arith.constant 0 : index
    %1 = vector.load %arg2[%c0_1, %c0_2] : memref<32x128xf32, #tpu.memory_space<vmem>>, vector<32x128xf32>
    %cst = arith.constant dense<0.000000e+00> : vector<2x128xf32>
    %2 = tpu.matmul %0, %1, %cst {dimension_numbers = #tpu.dot_dimension_numbers<[1], [0], [0], [1], [0, 0, 1, 1], [], []>} : vector<2x32xf32>, vector<32x128xf32>, vector<2x128xf32> -> vector<2x128xf32>
    %c0_3 = arith.constant 0 : index
    %c0_4 = arith.constant 0 : index
    %3 = vector.load %arg3[%c0_3, %c0_4] : memref<1x128xf32, #tpu.memory_space<vmem>>, vector<1x128xf32>
    %4 = vector.broadcast %3 : vector<1x128xf32> to vector<2x128xf32>
    %5 = arith.addf %2, %4 : vector<2x128xf32>
    %cst_5 = arith.constant 0.000000e+00 : f32
    %6 = vector.broadcast %cst_5 : f32 to vector<2x128xf32>
    %7 = arith.maximumf %5, %6 : vector<2x128xf32>
    %8 = arith.truncf %7 : vector<2x128xf32> to vector<2x128xbf16>
    %c0_6 = arith.constant 0 : index
    %c0_7 = arith.constant 0 : index
    %9 = vector.load %arg4[%c0_6, %c0_7] : memref<128x2048xbf16, #tpu.memory_space<vmem>>, vector<128x2048xbf16>
    %cst_8 = arith.constant dense<0.000000e+00> : vector<2x2048xf32>
    %10 = tpu.matmul %8, %9, %cst_8 {dimension_numbers = #tpu.dot_dimension_numbers<[1], [0], [0], [1], [0, 0, 1, 1], [], []>} : vector<2x128xbf16>, vector<128x2048xbf16>, vector<2x2048xf32> -> vector<2x2048xf32>
    %cst_9 = arith.constant dense<0.000000e+00> : vector<2048xf32>
    %11 = vector.multi_reduction <add>, %10, %cst_9 [0] : vector<2x2048xf32> to vector<2048xf32>
    %12 = vector.shape_cast %11 : vector<2048xf32> to vector<1x2048xf32>
    %cst_10 = arith.constant 2.000000e+00 : f32
    %13 = vector.broadcast %cst_10 : f32 to vector<1x2048xf32>
    %14 = arith.divf %12, %13 : vector<1x2048xf32>
    %15 = arith.mulf %10, %10 : vector<2x2048xf32>
    %cst_11 = arith.constant dense<0.000000e+00> : vector<2048xf32>
    %16 = vector.multi_reduction <add>, %15, %cst_11 [0] : vector<2x2048xf32> to vector<2048xf32>
    %17 = vector.shape_cast %16 : vector<2048xf32> to vector<1x2048xf32>
    %cst_12 = arith.constant 2.000000e+00 : f32
    %18 = vector.broadcast %cst_12 : f32 to vector<1x2048xf32>
    %19 = arith.divf %17, %18 : vector<1x2048xf32>
    %20 = arith.mulf %14, %14 : vector<1x2048xf32>
    %21 = arith.subf %19, %20 : vector<1x2048xf32>
    %cst_13 = arith.constant 0.000000e+00 : f32
    %22 = vector.broadcast %cst_13 : f32 to vector<1x2048xf32>
    %23 = arith.maximumf %21, %22 : vector<1x2048xf32>
    %c0_14 = arith.constant 0 : index
    %c0_15 = arith.constant 0 : index
    %24 = vector.load %arg5[%c0_14, %c0_15] : memref<1x2048xf32, #tpu.memory_space<vmem>>, vector<1x2048xf32>
    %cst_16 = arith.constant 9.99999974E-6 : f32
    %25 = vector.broadcast %cst_16 : f32 to vector<1x2048xf32>
    %26 = arith.addf %23, %25 : vector<1x2048xf32>
    %27 = math.rsqrt %26 : vector<1x2048xf32>
    %28 = arith.mulf %24, %27 : vector<1x2048xf32>
    %c0_17 = arith.constant 0 : index
    %c0_18 = arith.constant 0 : index
    %29 = vector.load %arg6[%c0_17, %c0_18] : memref<1x2048xf32, #tpu.memory_space<vmem>>, vector<1x2048xf32>
    %30 = arith.mulf %28, %14 : vector<1x2048xf32>
    %31 = arith.subf %29, %30 : vector<1x2048xf32>
    %32 = vector.broadcast %28 : vector<1x2048xf32> to vector<2x2048xf32>
    %33 = arith.mulf %10, %32 : vector<2x2048xf32>
    %34 = vector.broadcast %31 : vector<1x2048xf32> to vector<2x2048xf32>
    %35 = arith.addf %33, %34 : vector<2x2048xf32>
    %cst_19 = arith.constant 0.000000e+00 : f32
    %36 = vector.broadcast %cst_19 : f32 to vector<2x2048xf32>
    %37 = arith.maximumf %35, %36 : vector<2x2048xf32>
    %38 = arith.truncf %37 : vector<2x2048xf32> to vector<2x2048xbf16>
    %c0_20 = arith.constant 0 : index
    %c0_21 = arith.constant 0 : index
    %39 = vector.load %arg7[%c0_20, %c0_21] : memref<2x2048xbf16, #tpu.memory_space<vmem>>, vector<2x2048xbf16>
    tpu.vector_store %arg7[%c0_20, %c0_21], %38 {strides = array<i32>} : memref<2x2048xbf16, #tpu.memory_space<vmem>>, vector<2x2048xbf16>,
    return
  }
  func.func @transform_0(%arg0: i32) -> (i32, i32) {
    %c0_i32 = arith.constant 0 : i32
    %c0_i32_0 = arith.constant 0 : i32
    %c0_i32_1 = arith.constant 0 : i32
    return %c0_i32, %c0_i32_0 : i32, i32
  }
  func.func @transform_1(%arg0: i32) -> (i32, i32) {
    %c0_i32 = arith.constant 0 : i32
    %c0_i32_0 = arith.constant 0 : i32
    %c0_i32_1 = arith.constant 0 : i32
    return %c0_i32, %c0_i32_0 : i32, i32
  }
  func.func @transform_2(%arg0: i32) -> (i32, i32) {
    %c0_i32 = arith.constant 0 : i32
    %c0_i32_0 = arith.constant 0 : i32
    %c0_i32_1 = arith.constant 0 : i32
    return %c0_i32, %c0_i32_0 : i32, i32
  }
  func.func @transform_3(%arg0: i32) -> (i32, i32) {
    %c0_i32 = arith.constant 0 : i32
    %c0_i32_0 = arith.constant 0 : i32
    return %c0_i32, %arg0 : i32, i32
  }
  func.func @transform_4(%arg0: i32) -> (i32, i32) {
    %c0_i32 = arith.constant 0 : i32
    %c0_i32_0 = arith.constant 0 : i32
    return %c0_i32, %arg0 : i32, i32
  }
  func.func @transform_5(%arg0: i32) -> (i32, i32) {
    %c0_i32 = arith.constant 0 : i32
    %c0_i32_0 = arith.constant 0 : i32
    return %c0_i32, %arg0 : i32, i32
  }
  func.func @transform_6(%arg0: i32) -> (i32, i32) {
    %c0_i32 = arith.constant 0 : i32
    %c0_i32_0 = arith.constant 0 : i32
    return %c0_i32, %arg0 : i32, i32
  }
}

module attributes {stable_mosaic.version = 11 : i64} {
  func.func @_deconv_bn_relu_kernel(%arg0: memref<32x2304xbf16, #tpu.memory_space<vmem>>, %arg1: memref<2304x512xbf16, #tpu.memory_space<vmem>>, %arg2: memref<1x128xf32, #tpu.memory_space<vmem>>, %arg3: memref<1x128xf32, #tpu.memory_space<vmem>>, %arg4: memref<32x512xbf16, #tpu.memory_space<vmem>>) attributes {dimension_semantics = [], scalar_prefetch = 0 : i64, scratch_operands = 0 : i64, tpu.core_type = #tpu.core_type<tc>} {
    %c0 = arith.constant 0 : index
    %c0_0 = arith.constant 0 : index
    %0 = vector.load %arg0[%c0, %c0_0] : memref<32x2304xbf16, #tpu.memory_space<vmem>>, vector<32x2304xbf16>
    %c0_1 = arith.constant 0 : index
    %c0_2 = arith.constant 0 : index
    %1 = vector.load %arg1[%c0_1, %c0_2] : memref<2304x512xbf16, #tpu.memory_space<vmem>>, vector<2304x512xbf16>
    %cst = arith.constant dense<0.000000e+00> : vector<32x512xf32>
    %2 = tpu.matmul %0, %1, %cst {dimension_numbers = #tpu.dot_dimension_numbers<[1], [0], [0], [1], [0, 0, 1, 1], [], []>} : vector<32x2304xbf16>, vector<2304x512xbf16>, vector<32x512xf32> -> vector<32x512xf32>
    %cst_3 = arith.constant dense<0.000000e+00> : vector<512xf32>
    %3 = vector.multi_reduction <add>, %2, %cst_3 [0] : vector<32x512xf32> to vector<512xf32>
    %4 = vector.shape_cast %3 : vector<512xf32> to vector<1x512xf32>
    %5 = arith.mulf %2, %2 : vector<32x512xf32>
    %cst_4 = arith.constant dense<0.000000e+00> : vector<512xf32>
    %6 = vector.multi_reduction <add>, %5, %cst_4 [0] : vector<32x512xf32> to vector<512xf32>
    %7 = vector.shape_cast %6 : vector<512xf32> to vector<1x512xf32>
    %8 = vector.extract_strided_slice %4 {offsets = [0, 0], sizes = [1, 128], strides = [1, 1]} : vector<1x512xf32> to vector<1x128xf32>
    %9 = vector.extract_strided_slice %4 {offsets = [0, 128], sizes = [1, 128], strides = [1, 1]} : vector<1x512xf32> to vector<1x128xf32>
    %10 = arith.addf %8, %9 : vector<1x128xf32>
    %11 = vector.extract_strided_slice %4 {offsets = [0, 256], sizes = [1, 128], strides = [1, 1]} : vector<1x512xf32> to vector<1x128xf32>
    %12 = arith.addf %10, %11 : vector<1x128xf32>
    %13 = vector.extract_strided_slice %4 {offsets = [0, 384], sizes = [1, 128], strides = [1, 1]} : vector<1x512xf32> to vector<1x128xf32>
    %14 = arith.addf %12, %13 : vector<1x128xf32>
    %15 = vector.extract_strided_slice %7 {offsets = [0, 0], sizes = [1, 128], strides = [1, 1]} : vector<1x512xf32> to vector<1x128xf32>
    %16 = vector.extract_strided_slice %7 {offsets = [0, 128], sizes = [1, 128], strides = [1, 1]} : vector<1x512xf32> to vector<1x128xf32>
    %17 = arith.addf %15, %16 : vector<1x128xf32>
    %18 = vector.extract_strided_slice %7 {offsets = [0, 256], sizes = [1, 128], strides = [1, 1]} : vector<1x512xf32> to vector<1x128xf32>
    %19 = arith.addf %17, %18 : vector<1x128xf32>
    %20 = vector.extract_strided_slice %7 {offsets = [0, 384], sizes = [1, 128], strides = [1, 1]} : vector<1x512xf32> to vector<1x128xf32>
    %21 = arith.addf %19, %20 : vector<1x128xf32>
    %cst_5 = arith.constant 1.280000e+02 : f32
    %22 = vector.broadcast %cst_5 : f32 to vector<1x128xf32>
    %23 = arith.divf %14, %22 : vector<1x128xf32>
    %cst_6 = arith.constant 1.280000e+02 : f32
    %24 = vector.broadcast %cst_6 : f32 to vector<1x128xf32>
    %25 = arith.divf %21, %24 : vector<1x128xf32>
    %26 = arith.mulf %23, %23 : vector<1x128xf32>
    %27 = arith.subf %25, %26 : vector<1x128xf32>
    %cst_7 = arith.constant 0.000000e+00 : f32
    %28 = vector.broadcast %cst_7 : f32 to vector<1x128xf32>
    %29 = arith.maximumf %27, %28 : vector<1x128xf32>
    %c0_8 = arith.constant 0 : index
    %c0_9 = arith.constant 0 : index
    %30 = vector.load %arg2[%c0_8, %c0_9] : memref<1x128xf32, #tpu.memory_space<vmem>>, vector<1x128xf32>
    %cst_10 = arith.constant 9.99999974E-6 : f32
    %31 = vector.broadcast %cst_10 : f32 to vector<1x128xf32>
    %32 = arith.addf %29, %31 : vector<1x128xf32>
    %33 = math.rsqrt %32 : vector<1x128xf32>
    %34 = arith.mulf %30, %33 : vector<1x128xf32>
    %c0_11 = arith.constant 0 : index
    %c0_12 = arith.constant 0 : index
    %35 = vector.load %arg3[%c0_11, %c0_12] : memref<1x128xf32, #tpu.memory_space<vmem>>, vector<1x128xf32>
    %36 = arith.mulf %34, %23 : vector<1x128xf32>
    %37 = arith.subf %35, %36 : vector<1x128xf32>
    %38 = tpu.concatenate %34, %34, %34, %34 in 1 : vector<1x128xf32>, vector<1x128xf32>, vector<1x128xf32>, vector<1x128xf32> -> vector<1x512xf32>
    %39 = tpu.concatenate %37, %37, %37, %37 in 1 : vector<1x128xf32>, vector<1x128xf32>, vector<1x128xf32>, vector<1x128xf32> -> vector<1x512xf32>
    %40 = vector.broadcast %38 : vector<1x512xf32> to vector<32x512xf32>
    %41 = arith.mulf %2, %40 : vector<32x512xf32>
    %42 = vector.broadcast %39 : vector<1x512xf32> to vector<32x512xf32>
    %43 = arith.addf %41, %42 : vector<32x512xf32>
    %cst_13 = arith.constant 0.000000e+00 : f32
    %44 = vector.broadcast %cst_13 : f32 to vector<32x512xf32>
    %45 = arith.maximumf %43, %44 : vector<32x512xf32>
    %46 = arith.truncf %45 : vector<32x512xf32> to vector<32x512xbf16>
    %c0_14 = arith.constant 0 : index
    %c0_15 = arith.constant 0 : index
    %47 = vector.load %arg4[%c0_14, %c0_15] : memref<32x512xbf16, #tpu.memory_space<vmem>>, vector<32x512xbf16>
    tpu.vector_store %arg4[%c0_14, %c0_15], %46 {strides = array<i32>} : memref<32x512xbf16, #tpu.memory_space<vmem>>, vector<32x512xbf16>,
    return
  }
}

module attributes {stable_mosaic.version = 11 : i64} {
  func.func @_deconv_sigmoid_kernel(%arg0: i32, %arg1: memref<64x1152xbf16, #tpu.memory_space<vmem>>, %arg2: memref<1152x128xbf16, #tpu.memory_space<vmem>>, %arg3: memref<1x128xf32, #tpu.memory_space<vmem>>, %arg4: memref<64x128xf32, #tpu.memory_space<vmem>>) attributes {dimension_semantics = [#tpu.dimension_semantics<parallel>], iteration_bounds = array<i64: 2>, scalar_prefetch = 0 : i64, scratch_operands = 0 : i64, tpu.core_type = #tpu.core_type<tc>, window_params = [{transform_indices = @transform_0, window_bounds = array<i64: 64, 1152>}, {pipeline_mode = #tpu.pipeline_mode<synchronous>, transform_indices = @transform_1, window_bounds = array<i64: 1152, 128>}, {pipeline_mode = #tpu.pipeline_mode<synchronous>, transform_indices = @transform_2, window_bounds = array<i64: 1, 128>}, {transform_indices = @transform_3, window_bounds = array<i64: 64, 128>}]} {
    %c0 = arith.constant 0 : index
    %c0_0 = arith.constant 0 : index
    %0 = vector.load %arg1[%c0, %c0_0] : memref<64x1152xbf16, #tpu.memory_space<vmem>>, vector<64x1152xbf16>
    %c0_1 = arith.constant 0 : index
    %c0_2 = arith.constant 0 : index
    %1 = vector.load %arg2[%c0_1, %c0_2] : memref<1152x128xbf16, #tpu.memory_space<vmem>>, vector<1152x128xbf16>
    %cst = arith.constant dense<0.000000e+00> : vector<64x128xf32>
    %2 = tpu.matmul %0, %1, %cst {dimension_numbers = #tpu.dot_dimension_numbers<[1], [0], [0], [1], [0, 0, 1, 1], [], []>} : vector<64x1152xbf16>, vector<1152x128xbf16>, vector<64x128xf32> -> vector<64x128xf32>
    %c0_3 = arith.constant 0 : index
    %c0_4 = arith.constant 0 : index
    %3 = vector.load %arg3[%c0_3, %c0_4] : memref<1x128xf32, #tpu.memory_space<vmem>>, vector<1x128xf32>
    %4 = vector.broadcast %3 : vector<1x128xf32> to vector<64x128xf32>
    %5 = arith.addf %2, %4 : vector<64x128xf32>
    %cst_5 = arith.constant 5.000000e-01 : f32
    %6 = vector.broadcast %cst_5 : f32 to vector<64x128xf32>
    %7 = arith.mulf %6, %5 : vector<64x128xf32>
    %8 = math.tanh %7 : vector<64x128xf32>
    %cst_6 = arith.constant 1.000000e+00 : f32
    %9 = vector.broadcast %cst_6 : f32 to vector<64x128xf32>
    %10 = arith.addf %8, %9 : vector<64x128xf32>
    %cst_7 = arith.constant 5.000000e-01 : f32
    %11 = vector.broadcast %cst_7 : f32 to vector<64x128xf32>
    %12 = arith.mulf %11, %10 : vector<64x128xf32>
    %c0_8 = arith.constant 0 : index
    %c0_9 = arith.constant 0 : index
    %13 = vector.load %arg4[%c0_8, %c0_9] : memref<64x128xf32, #tpu.memory_space<vmem>>, vector<64x128xf32>
    tpu.vector_store %arg4[%c0_8, %c0_9], %12 {strides = array<i32>} : memref<64x128xf32, #tpu.memory_space<vmem>>, vector<64x128xf32>,
    return
  }
  func.func @transform_0(%arg0: i32) -> (i32, i32) {
    %c0_i32 = arith.constant 0 : i32
    %c0_i32_0 = arith.constant 0 : i32
    return %arg0, %c0_i32 : i32, i32
  }
  func.func @transform_1(%arg0: i32) -> (i32, i32) {
    %c0_i32 = arith.constant 0 : i32
    %c0_i32_0 = arith.constant 0 : i32
    %c0_i32_1 = arith.constant 0 : i32
    return %c0_i32, %c0_i32_0 : i32, i32
  }
  func.func @transform_2(%arg0: i32) -> (i32, i32) {
    %c0_i32 = arith.constant 0 : i32
    %c0_i32_0 = arith.constant 0 : i32
    %c0_i32_1 = arith.constant 0 : i32
    return %c0_i32, %c0_i32_0 : i32, i32
  }
  func.func @transform_3(%arg0: i32) -> (i32, i32) {
    %c0_i32 = arith.constant 0 : i32
    %c0_i32_0 = arith.constant 0 : i32
    return %arg0, %c0_i32 : i32, i32
  }
}

</mosaic_0001>

<llo_original>
// kernel: generator_forward.3
$region0: #{generator_forward.3}
  #allocation0 [shape = 'u32[]', space=smem, size = 0x4, offset = 0x4, fixed_abs, tag = 'smem constant byte address 0x4 - core index']
  #allocation1 [shape = 'u32[144,128]{1,0:T(1,128)}', space=vmem, size = 0x12000, scoped, tag = 'internal scratch']
  %s0 = inlined_call_operand.hbm [shape: f32[2,32], index: 0, kind: input, shape index: {}]
  %s1 = inlined_call_operand.hbm [shape: f32[32,128], index: 1, kind: input, shape index: {}]
  %s2 = inlined_call_operand.hbm [shape: f32[1,128], index: 2, kind: input, shape index: {}]
  %s3 = inlined_call_operand.hbm [shape: bf16[128,4096], index: 3, kind: input, shape index: {}]
  %s4 = inlined_call_operand.hbm [shape: f32[1,4096], index: 4, kind: input, shape index: {}]
  %s5 = inlined_call_operand.hbm [shape: f32[1,4096], index: 5, kind: input, shape index: {}]
  %s6 = inlined_call_operand.vmem [shape: bf16[2,4096], index: 6, kind: output, shape index: {}]
  %s7 = sld [smem:[#allocation0]]
  $region81: #{generator_forward.3} parent=0
    _
  %s9 = ssub.s32 1, %s7
  %s10 = scalar_select 0, %s9, %s7
  $region1: #{generator_forward.3} parent=0
    #allocation2 [shape = 'u8[1024]{0}', space=vmem, size = 0x400, scoped, tag = 'input window, operand 0, single buffered']
    #allocation3 [shape = 's32[2]{0}', space=sflag, size = 0x8, scoped, tag = 'scoped memory for generator_forward.3']
    #allocation4 [shape = 'u8[16384]{0}', space=vmem, size = 0x4000, scoped, tag = 'input window, operand 1, single buffered']
    #allocation5 [shape = 's32[1]{0}', space=sflag, size = 0x4, scoped, tag = 'scoped memory for generator_forward.3']
    #allocation6 [shape = 'u8[512]{0}', space=vmem, size = 0x400, scoped, tag = 'input window, operand 2, single buffered']
    #allocation7 [shape = 'u8[1048576]{0}', space=vmem, size = 0x100000, scoped, tag = 'input window, operand 3']
    #allocation8 [shape = 's32[2]{0}', space=sflag, size = 0x8, scoped, tag = 'scoped memory for generator_forward.3']
    #allocation9 [shape = 'u8[16384]{0}', space=vmem, size = 0x4000, scoped, tag = 'input window, operand 4']
    #allocation10 [shape = 'u8[16384]{0}', space=vmem, size = 0x4000, scoped, tag = 'input window, operand 5']
    #allocation11 [shape = 's32[2]{0}', space=sflag, size = 0x8, scoped, tag = 'scoped memory for generator_forward.3']
    %11 = vsyncpa [#allocation3], 0
    %12 = vsyncpa [#allocation5], 0
    %13 = vsyncpa [#allocation8], 0
    %s14 = scalar_lea.sflag [#allocation8], 1
    %15 = vsyncpa %s14, 0
    %16 = vsyncpa [#allocation11], 0
    %s17 = scalar_lea.sflag [#allocation11], 1
    %18 = vsyncpa %s17, 0
    loop: start=0, step=1, limit=4
    $region2: #{generator_forward.3} parent=1 // loop_pre_header
      _
    $region3: #{generator_forward.3} parent=1 // loop_header
      %s20 = sphi 0, %s24
      %p21 = scmp.ge.s32.totalorder %s20, 4
      %s28 = sphi 0, %s28
      %s30 = sphi 0, %s28
      %s31 = sphi 0, %s30
      %s45 = sphi 0, %s31
      %s49 = sphi 0, %s49
      %s51 = sphi 0, %s49
      %s52 = sphi 0, %s51
      %s66 = sphi 0, %s52
      %s70 = sphi 0, %s70
      %s72 = sphi 0, %s70
      %s73 = sphi 0, %s72
      %s87 = sphi 0, %s73
      %s93 = sphi 0, %s95
      %s96 = sphi 0, %s93
      %s97 = sphi 0, %s96
      %s113 = sphi 0, %s97
      %s119 = sphi 0, %s121
      %s122 = sphi 0, %s119
      %s123 = sphi 0, %s122
      %s139 = sphi 0, %s123
      %s145 = sphi 0, %s147
      %s148 = sphi 0, %s145
      %s149 = sphi 0, %s148
      %s165 = sphi 0, %s149
      %s171 = sphi 0, %s173
      %s174 = sphi 0, %s171
      %s175 = sphi 0, %s174
      %s191 = sphi 0, %s175
    $region4: #{generator_forward.3} parent=1 // loop_header_branch
      %23 = sbr.rel (%p21) target = $region8
    $region5: #{generator_forward.3} parent=1 // loop_body
      %s25 = ssub.s32 %s20, 1
      %s26 = ssub.s32 %s20, 2
      %s27 = sadd.s32 %s20, 1
      %s29 = sadd.s32 %s28, 1
      %p32 = scmp.eq.s32.totalorder %s20, 1
      %p33 = scmp.ne.s32.totalorder %s28, %s30
      %p34 = scmp.eq.s32.totalorder %s20, 0
      %p35 = por %p33, %p34
      %p36 = scmp.ne.s32.totalorder %s28, %s30
      %p37 = scmp.eq.s32.totalorder %s25, 1
      %p38 = por %p36, %p37
      %p39 = scmp.ne.s32.totalorder %s30, %s31
      %p40 = scmp.eq.s32.totalorder %s25, 0
      %p41 = por %p39, %p40
      %p42 = scmp.ne.s32.totalorder %s30, %s31
      %p43 = scmp.eq.s32.totalorder %s26, 1
      %p44 = por %p42, %p43
      %p46 = scmp.ne.s32.totalorder %s31, %s45
      %p47 = scmp.eq.s32.totalorder %s26, 0
      %p48 = por %p46, %p47
      %s50 = sadd.s32 %s49, 1
      %p53 = scmp.eq.s32.totalorder %s20, 1
      %p54 = scmp.ne.s32.totalorder %s49, %s51
      %p55 = scmp.eq.s32.totalorder %s20, 0
      %p56 = por %p54, %p55
      %p57 = scmp.ne.s32.totalorder %s49, %s51
      %p58 = scmp.eq.s32.totalorder %s25, 1
      %p59 = por %p57, %p58
      %p60 = scmp.ne.s32.totalorder %s51, %s52
      %p61 = scmp.eq.s32.totalorder %s25, 0
      %p62 = por %p60, %p61
      %p63 = scmp.ne.s32.totalorder %s51, %s52
      %p64 = scmp.eq.s32.totalorder %s26, 1
      %p65 = por %p63, %p64
      %p67 = scmp.ne.s32.totalorder %s52, %s66
      %p68 = scmp.eq.s32.totalorder %s26, 0
      %p69 = por %p67, %p68
      %s71 = sadd.s32 %s70, 1
      %p74 = scmp.eq.s32.totalorder %s20, 1
      %p75 = scmp.ne.s32.totalorder %s70, %s72
      %p76 = scmp.eq.s32.totalorder %s20, 0
      %p77 = por %p75, %p76
      %p78 = scmp.ne.s32.totalorder %s70, %s72
      %p79 = scmp.eq.s32.totalorder %s25, 1
      %p80 = por %p78, %p79
      %p81 = scmp.ne.s32.totalorder %s72, %s73
      %p82 = scmp.eq.s32.totalorder %s25, 0
      %p83 = por %p81, %p82
      %p84 = scmp.ne.s32.totalorder %s72, %s73
      %p85 = scmp.eq.s32.totalorder %s26, 1
      %p86 = por %p84, %p85
      %p88 = scmp.ne.s32.totalorder %s73, %s87
      %p89 = scmp.eq.s32.totalorder %s26, 0
      %p90 = por %p88, %p89
      %s91 = ssub.s32 %s20, %s27
      %p92 = scmp.eq.s32.totalorder %s91, 0
      %s94 = sadd.s32 %s93, 1
      %s95 = scalar_select %p92, %s93, %s94
      %p98 = pneg %p92
      %p99 = scmp.eq.s32.totalorder %s20, 1
      %p100 = por %p98, %p99
      %p101 = scmp.ne.s32.totalorder %s93, %s96
      %p102 = scmp.eq.s32.totalorder %s20, 0
      %p103 = por %p101, %p102
      %p104 = scmp.ne.s32.totalorder %s93, %s96
      %p105 = scmp.eq.s32.totalorder %s25, 1
      %p106 = por %p104, %p105
      %p107 = scmp.ne.s32.totalorder %s96, %s97
      %p108 = scmp.eq.s32.totalorder %s25, 0
      %p109 = por %p107, %p108
      %p110 = scmp.ne.s32.totalorder %s96, %s97
      %p111 = scmp.eq.s32.totalorder %s26, 1
      %p112 = por %p110, %p111
      %p114 = scmp.ne.s32.totalorder %s97, %s113
      %p115 = scmp.eq.s32.totalorder %s26, 0
      %p116 = por %p114, %p115
      %s117 = ssub.s32 %s20, %s27
      %p118 = scmp.eq.s32.totalorder %s117, 0
      %s120 = sadd.s32 %s119, 1
      %s121 = scalar_select %p118, %s119, %s120
      %p124 = pneg %p118
      %p125 = scmp.eq.s32.totalorder %s20, 1
      %p126 = por %p124, %p125
      %p127 = scmp.ne.s32.totalorder %s119, %s122
      %p128 = scmp.eq.s32.totalorder %s20, 0
      %p129 = por %p127, %p128
      %p130 = scmp.ne.s32.totalorder %s119, %s122
      %p131 = scmp.eq.s32.totalorder %s25, 1
      %p132 = por %p130, %p131
      %p133 = scmp.ne.s32.totalorder %s122, %s123
      %p134 = scmp.eq.s32.totalorder %s25, 0
      %p135 = por %p133, %p134
      %p136 = scmp.ne.s32.totalorder %s122, %s123
      %p137 = scmp.eq.s32.totalorder %s26, 1
      %p138 = por %p136, %p137
      %p140 = scmp.ne.s32.totalorder %s123, %s139
      %p141 = scmp.eq.s32.totalorder %s26, 0
      %p142 = por %p140, %p141
      %s143 = ssub.s32 %s20, %s27
      %p144 = scmp.eq.s32.totalorder %s143, 0
      %s146 = sadd.s32 %s145, 1
      %s147 = scalar_select %p144, %s145, %s146
      %p150 = pneg %p144
      %p151 = scmp.eq.s32.totalorder %s20, 1
      %p152 = por %p150, %p151
      %p153 = scmp.ne.s32.totalorder %s145, %s148
      %p154 = scmp.eq.s32.totalorder %s20, 0
      %p155 = por %p153, %p154
      %p156 = scmp.ne.s32.totalorder %s145, %s148
      %p157 = scmp.eq.s32.totalorder %s25, 1
      %p158 = por %p156, %p157
      %p159 = scmp.ne.s32.totalorder %s148, %s149
      %p160 = scmp.eq.s32.totalorder %s25, 0
      %p161 = por %p159, %p160
      %p162 = scmp.ne.s32.totalorder %s148, %s149
      %p163 = scmp.eq.s32.totalorder %s26, 1
      %p164 = por %p162, %p163
      %p166 = scmp.ne.s32.totalorder %s149, %s165
      %p167 = scmp.eq.s32.totalorder %s26, 0
      %p168 = por %p166, %p167
      %s169 = ssub.s32 %s20, %s27
      %p170 = scmp.eq.s32.totalorder %s169, 0
      %s172 = sadd.s32 %s171, 1
      %s173 = scalar_select %p170, %s171, %s172
      %p176 = pneg %p170
      %p177 = scmp.eq.s32.totalorder %s20, 1
      %p178 = por %p176, %p177
      %p179 = scmp.ne.s32.totalorder %s171, %s174
      %p180 = scmp.eq.s32.totalorder %s20, 0
      %p181 = por %p179, %p180
      %p182 = scmp.ne.s32.totalorder %s171, %s174
      %p183 = scmp.eq.s32.totalorder %s25, 1
      %p184 = por %p182, %p183
      %p185 = scmp.ne.s32.totalorder %s174, %s175
      %p186 = scmp.eq.s32.totalorder %s25, 0
      %p187 = por %p185, %p186
      %p188 = scmp.ne.s32.totalorder %s174, %s175
      %p189 = scmp.eq.s32.totalorder %s26, 1
      %p190 = por %p188, %p189
      %p192 = scmp.ne.s32.totalorder %s175, %s191
      %p193 = scmp.eq.s32.totalorder %s26, 0
      %p194 = por %p192, %p193
      %p195 = scmp.le.s32.totalorder 1, %s20
      %p196 = scmp.lt.s32.totalorder %s20, 3
      %p197 = pnand %p195, %p196
      %p198 = pneg %p197
      // Predicated region
      $region9: #{generator_forward.3} parent=5 // pred_check
        _
      $region10: #{generator_forward.3} parent=5 // pred_check_branch
        %200 = sbr.rel (%p197) target = $region12
      $region11: #{generator_forward.3} parent=5 // pred_region
        %s201 = ssub.s32 %s20, 1
        // Predicated region
        $region13: #{generator_forward.3} parent=11 // pred_check
          %p202 = pneg %p41
        $region14: #{generator_forward.3} parent=11 // pred_check_branch
          %204 = sbr.rel (%p202) target = $region16
        $region15: #{generator_forward.3} parent=11 // pred_region
          %s206 = ssub.s32 32, 32
          %207 = vsyncadd [#allocation3], %s206
          %s209 = sshll.u32 [#allocation2], 4
          %s210 = int_to_ptr.vmem [resolvable:$true] %s209
          %212 = dma.hbm_to_vmem [thread:$0]  %s0, 32, %s210, [#allocation3]
        $region16: #{generator_forward.3} parent=11 // pred_fallthru
          _
        // Predicated region
        $region17: #{generator_forward.3} parent=11 // pred_check
          %p213 = pneg %p62
        $region18: #{generator_forward.3} parent=11 // pred_check_branch
          %215 = sbr.rel (%p213) target = $region20
        $region19: #{generator_forward.3} parent=11 // pred_region
          %s217 = ssub.s32 512, 512
          %218 = vsyncadd [#allocation5], %s217
          %s219 = sshll.u32 [#allocation4], 4
          %s220 = int_to_ptr.vmem [resolvable:$true] %s219
          %225 = dma.hbm_to_vmem [thread:$0]  %s1, 512, %s220, [#allocation5], 128, 128, 8
        $region20: #{generator_forward.3} parent=11 // pred_fallthru
          _
        // Predicated region
        $region21: #{generator_forward.3} parent=11 // pred_check
          %p226 = pneg %p83
        $region22: #{generator_forward.3} parent=11 // pred_check_branch
          %228 = sbr.rel (%p226) target = $region24
        $region23: #{generator_forward.3} parent=11 // pred_region
          %s230 = ssub.s32 16, 16
          %231 = vsyncadd [#allocation5], %s230
          %s233 = sshll.u32 [#allocation6], 4
          %s234 = int_to_ptr.vmem [resolvable:$true] %s233
          %236 = dma.hbm_to_vmem [thread:$0]  %s2, 16, %s234, [#allocation5]
        $region24: #{generator_forward.3} parent=11 // pred_fallthru
          _
      $region12: #{generator_forward.3} parent=5 // pred_fallthru
        _
      %p237 = scmp.lt.s32.totalorder %s20, 2
      // Predicated region
      $region25: #{generator_forward.3} parent=5 // pred_check
        %p238 = pneg %p237
      $region26: #{generator_forward.3} parent=5 // pred_check_branch
        %240 = sbr.rel (%p238) target = $region28
      $region27: #{generator_forward.3} parent=5 // pred_region
        // Predicated region
        $region29: #{generator_forward.3} parent=27 // pred_check
          %p241 = pneg %p103
        $region30: #{generator_forward.3} parent=27 // pred_check_branch
          %243 = sbr.rel (%p241) target = $region32
        $region31: #{generator_forward.3} parent=27 // pred_region
          %s244 = sand.u32 %s20, 1
          %s245 = scalar_lea.sflag [#allocation8], %s244
          %s246 = sand.u32 %s93, 1
          %s247 = smul.addr %s246, 1024
          %s248 = scalar_lea.vmem [#allocation7], %s247
          %s249 = smul.u32 16, %s20
          %s251 = ssub.s32 16384, 16384
          %252 = vsyncadd %s245, %s251
          %s253 = smul.addr %s249, 64
          %s254 = scalar_lea.hbm %s3, %s253
          %s255 = sshll.u32 %s248, 4
          %s256 = int_to_ptr.vmem [resolvable:$true] %s255
          %261 = dma.hbm_to_vmem [thread:$0]  %s254, 16384, %s256, %s245, 2048, 1024, 64
        $region32: #{generator_forward.3} parent=27 // pred_fallthru
          _
        // Predicated region
        $region33: #{generator_forward.3} parent=27 // pred_check
          %p262 = pneg %p129
        $region34: #{generator_forward.3} parent=27 // pred_check_branch
          %264 = sbr.rel (%p262) target = $region36
        $region35: #{generator_forward.3} parent=27 // pred_region
          %s265 = sand.u32 %s20, 1
          %s266 = scalar_lea.sflag [#allocation8], %s265
          %s267 = sand.u32 %s119, 1
          %s268 = smul.addr %s267, 16
          %s269 = scalar_lea.vmem [#allocation9], %s268
          %s270 = smul.u32 16, %s20
          %s272 = ssub.s32 256, 256
          %273 = vsyncadd %s266, %s272
          %s274 = smul.addr %s270, 16
          %s275 = scalar_lea.hbm %s4, %s274
          %s277 = sshll.u32 %s269, 4
          %s278 = int_to_ptr.vmem [resolvable:$true] %s277
          %280 = dma.hbm_to_vmem [thread:$0]  %s275, 256, %s278, %s266
        $region36: #{generator_forward.3} parent=27 // pred_fallthru
          _
        // Predicated region
        $region37: #{generator_forward.3} parent=27 // pred_check
          %p281 = pneg %p155
        $region38: #{generator_forward.3} parent=27 // pred_check_branch
          %283 = sbr.rel (%p281) target = $region40
        $region39: #{generator_forward.3} parent=27 // pred_region
          %s284 = sand.u32 %s145, 1
          %s285 = scalar_lea.sflag [#allocation11], %s284
          %s286 = sand.u32 %s145, 1
          %s287 = smul.addr %s286, 16
          %s288 = scalar_lea.vmem [#allocation10], %s287
          %s289 = smul.u32 16, %s20
          %s291 = ssub.s32 256, 256
          %292 = vsyncadd %s285, %s291
          %s293 = smul.addr %s289, 16
          %s294 = scalar_lea.hbm %s5, %s293
          %s296 = sshll.u32 %s288, 4
          %s297 = int_to_ptr.vmem [resolvable:$true] %s296
          %299 = dma.hbm_to_vmem [thread:$0]  %s294, 256, %s297, %s285
        $region40: #{generator_forward.3} parent=27 // pred_fallthru
          _
      $region28: #{generator_forward.3} parent=5 // pred_fallthru
        _
      %p300 = scmp.le.s32.totalorder 1, %s20
      %p301 = scmp.lt.s32.totalorder %s20, 3
      %p302 = pnand %p300, %p301
      %p303 = pneg %p302
      // Predicated region
      $region41: #{generator_forward.3} parent=5 // pred_check
        _
      $region42: #{generator_forward.3} parent=5 // pred_check_branch
        %305 = sbr.rel (%p302) target = $region44
      $region43: #{generator_forward.3} parent=5 // pred_region
        %s306 = ssub.s32 %s20, 1
        // Predicated region
        $region45: #{generator_forward.3} parent=43 // pred_check
          %p307 = pneg %p41
        $region46: #{generator_forward.3} parent=43 // pred_check_branch
          %309 = sbr.rel (%p307) target = $region48
        $region47: #{generator_forward.3} parent=43 // pred_region
          %310 = dma.done [#allocation3], 32
        $region48: #{generator_forward.3} parent=43 // pred_fallthru
          _
        // Predicated region
        $region49: #{generator_forward.3} parent=43 // pred_check
          %p311 = pneg %p62
        $region50: #{generator_forward.3} parent=43 // pred_check_branch
          %313 = sbr.rel (%p311) target = $region52
        $region51: #{generator_forward.3} parent=43 // pred_region
          %314 = dma.done [#allocation5], 512
        $region52: #{generator_forward.3} parent=43 // pred_fallthru
          _
        // Predicated region
        $region53: #{generator_forward.3} parent=43 // pred_check
          %p315 = pneg %p83
        $region54: #{generator_forward.3} parent=43 // pred_check_branch
          %317 = sbr.rel (%p315) target = $region56
        $region55: #{generator_forward.3} parent=43 // pred_region
          %318 = dma.done [#allocation5], 16
        $region56: #{generator_forward.3} parent=43 // pred_fallthru
          _
        %s319 = sand.u32 %s25, 1
        %s320 = scalar_lea.sflag [#allocation8], %s319
        %s321 = sand.u32 %s96, 1
        %s322 = smul.addr %s321, 1024
        %s323 = scalar_lea.vmem [#allocation7], %s322
        // Predicated region
        $region57: #{generator_forward.3} parent=43 // pred_check
          %p324 = pneg %p109
        $region58: #{generator_forward.3} parent=43 // pred_check_branch
          %326 = sbr.rel (%p324) target = $region60
        $region59: #{generator_forward.3} parent=43 // pred_region
          %327 = dma.done %s320, 16384
        $region60: #{generator_forward.3} parent=43 // pred_fallthru
          _
        %s328 = sand.u32 %s25, 1
        %s329 = scalar_lea.sflag [#allocation8], %s328
        %s330 = sand.u32 %s122, 1
        %s331 = smul.addr %s330, 16
        %s332 = scalar_lea.vmem [#allocation9], %s331
        // Predicated region
        $region61: #{generator_forward.3} parent=43 // pred_check
          %p333 = pneg %p135
        $region62: #{generator_forward.3} parent=43 // pred_check_branch
          %335 = sbr.rel (%p333) target = $region64
        $region63: #{generator_forward.3} parent=43 // pred_region
          %336 = dma.done %s329, 256
        $region64: #{generator_forward.3} parent=43 // pred_fallthru
          _
        %s337 = sand.u32 %s148, 1
        %s338 = scalar_lea.sflag [#allocation11], %s337
        %s339 = sand.u32 %s148, 1
        %s340 = smul.addr %s339, 16
        %s341 = scalar_lea.vmem [#allocation10], %s340
        // Predicated region
        $region65: #{generator_forward.3} parent=43 // pred_check
          %p342 = pneg %p161
        $region66: #{generator_forward.3} parent=43 // pred_check_branch
          %344 = sbr.rel (%p342) target = $region68
        $region67: #{generator_forward.3} parent=43 // pred_region
          %345 = dma.done %s338, 256
        $region68: #{generator_forward.3} parent=43 // pred_fallthru
          _
        %p346 = pneg %p41
        %p347 = pneg %p38
        %p348 = pneg %p62
        %p349 = pneg %p59
        %p350 = pneg %p83
        %p351 = pneg %p80
        %s352 = sand.u32 %s25, 1
        %s353 = scalar_lea.sflag [#allocation8], %s352
        %s354 = sand.u32 %s96, 1
        %s355 = smul.addr %s354, 1024
        %s356 = scalar_lea.vmem [#allocation7], %s355
        %p357 = pneg %p109
        %p358 = pneg %p106
        %s359 = sand.u32 %s25, 1
        %s360 = scalar_lea.sflag [#allocation8], %s359
        %s361 = sand.u32 %s122, 1
        %s362 = smul.addr %s361, 16
        %s363 = scalar_lea.vmem [#allocation9], %s362
        %p364 = pneg %p135
        %p365 = pneg %p132
        %s366 = sand.u32 %s148, 1
        %s367 = scalar_lea.sflag [#allocation11], %s366
        %s368 = sand.u32 %s148, 1
        %s369 = smul.addr %s368, 16
        %s370 = scalar_lea.vmem [#allocation10], %s369
        %p371 = pneg %p161
        %p372 = pneg %p158
        %p373 = pneg %p187
        %p374 = pneg %p184
        %s375 = smul.u32 16, %s25
        %p376 = scmp.lt.s32.totalorder %s375, 31
        %s377 = scalar_select %p376, %s375, 31
        %s378 = scalar_lea.vmem %s6, %s377
        %s379 = smul.u32 16, %s25
        %s380 = smul.u32 16, %s25
        %s381 = smul.u32 16, %s25
        %s382 = smul.u32 16, %s25
        %p383 = scmp.lt.s32.totalorder %s382, 31
        %s384 = scalar_select %p383, %s382, 31
        %s385 = scalar_lea.vmem %s6, %s384
        %s386 = smul.u32 16, %s25
        %v388 = vld [vmem:[#allocation2] sm:$0x3]
        %v389 = vld [vmem:[#allocation4] sm:$0xff]
        %v390 = vld [vmem:[#allocation4 + $0x8] sm:$0xff]
        %v391 = vld [vmem:[#allocation4 + $0x10] sm:$0xff]
        %v392 = vld [vmem:[#allocation4 + $0x18] sm:$0xff]
        %v393 = vld [vmem:[#allocation6] sm:$0x1]
        %v395 = vlaneseq
        %v396 = vshrl.u32 %v395, 7
        %v397 = vsub.s32 0, %v396
        %v398 = vrot.slane %v393, %v397
        %vm400 = vcmask 261120
        %v402 = vsel %vm400, %v388, 0
        %404 = vmatprep.subr.mxu0 0.0
        %405 = vmatpush1.msra.mxu0 %v389
        %406 = vmatprep.subr.mxu0 0.0
        %407 = vmatpush1.msra.mxu0 %v390
        %408 = vmatprep.subr.mxu0 0.0
        %409 = vmatpush1.msra.mxu0 %v391
        %410 = vmatprep.subr.mxu0 0.0
        %411 = vmatpush1.msra.mxu0 %v392
        %412 = vmatprep.subr.mxu0 0.0
        %413 = vmatpush1.msra.mxu0 0.0
        %414 = vmatprep.subr.mxu0 0.0
        %415 = vmatpush1.msra.mxu0 0.0
        %416 = vmatprep.subr.mxu0 0.0
        %417 = vmatpush1.msra.mxu0 0.0
        %418 = vmatprep.subr.mxu0 0.0
        %419 = vmatpush1.msra.mxu0 0.0
        %420 = vmatprep.subr.mxu0 0.0
        %421 = vmatpush1.msra.mxu0 0.0
        %422 = vmatprep.subr.mxu0 0.0
        %423 = vmatpush1.msra.mxu0 0.0
        %424 = vmatprep.subr.mxu0 0.0
        %425 = vmatpush1.msra.mxu0 0.0
        %426 = vmatprep.subr.mxu0 0.0
        %427 = vmatpush1.msra.mxu0 0.0
        %428 = vmatprep.subr.mxu0 0.0
        %429 = vmatpush1.msra.mxu0 0.0
        %430 = vmatprep.subr.mxu0 0.0
        %431 = vmatpush1.msra.mxu0 0.0
        %432 = vmatprep.subr.mxu0 0.0
        %433 = vmatpush1.msra.mxu0 0.0
        %434 = vmatprep.subr.mxu0 0.0
        %435 = vmatpush1.msra.mxu0 0.0
        %436 = vmatprep.subr.mxu0 0.0
        %437 = vmatpush1.msra.mxu0 0.0
        %438 = vmatprep.subr.mxu0 0.0
        %439 = vmatpush1.msra.mxu0 0.0
        %440 = vmatprep.subr.mxu0 0.0
        %441 = vmatpush1.msra.mxu0 0.0
        %442 = vmatprep.subr.mxu0 0.0
        %443 = vmatpush1.msra.mxu0 0.0
        %444 = vmatprep.subr.mxu0 0.0
        %445 = vmatpush1.msra.mxu0 0.0
        %446 = vmatprep.subr.mxu0 0.0
        %447 = vmatpush1.msra.mxu0 0.0
        %448 = vmatprep.subr.mxu0 0.0
        %449 = vmatpush1.msra.mxu0 0.0
        %450 = vmatprep.subr.mxu0 0.0
        %451 = vmatpush1.msra.mxu0 0.0
        %452 = vmatprep.subr.mxu0 0.0
        %453 = vmatpush1.msra.mxu0 0.0
        %454 = vmatprep.subr.mxu0 0.0
        %455 = vmatpush1.msra.mxu0 0.0
        %456 = vmatprep.subr.mxu0 0.0
        %457 = vmatpush1.msra.mxu0 0.0
        %458 = vmatprep.subr.mxu0 0.0
        %459 = vmatpush1.msra.mxu0 0.0
        %460 = vmatprep.subr.mxu0 0.0
        %461 = vmatpush1.msra.mxu0 0.0
        %462 = vmatprep.subr.mxu0 0.0
        %463 = vmatpush1.msra.mxu0 0.0
        %464 = vmatprep.subr.mxu0 0.0
        %465 = vmatpush1.msra.mxu0 0.0
        %466 = vmatprep.subr.mxu0 0.0
        %467 = vmatpush1.msra.mxu0 0.0
        %468 = vmatprep.mubr.f32.mxu0 0.0
        %469 = vmatmul.mubr.f32.gmra.mrb[0].mxu0 %v402
        %v470 = vpop.f32.mrb[0].mxu0
        %v471 = vadd.f32 %v398, %v470
        %v472 = vpop.f32.mrb[0].mxu0
        %473 = vdwg.mxu0
        %v474 = vmax.f32 %v471, 0.0
        %v475 = vpack.c.bf16 %v474, %v474
        %v476 = vld [vmem:[%s323] sm:$0xff]
        %v477 = vld [vmem:[%s323 + $0x8] sm:$0xff]
        %v478 = vld [vmem:[%s323 + $0x10] sm:$0xff]
        %v479 = vld [vmem:[%s323 + $0x18] sm:$0xff]
        %v480 = vld [vmem:[%s323 + $0x20] sm:$0xff]
        %v481 = vld [vmem:[%s323 + $0x28] sm:$0xff]
        %v482 = vld [vmem:[%s323 + $0x30] sm:$0xff]
        %v483 = vld [vmem:[%s323 + $0x38] sm:$0xff]
        %v484 = vld [vmem:[%s323 + $0x40] sm:$0xff]
        %v485 = vld [vmem:[%s323 + $0x48] sm:$0xff]
        %v486 = vld [vmem:[%s323 + $0x50] sm:$0xff]
        %v487 = vld [vmem:[%s323 + $0x58] sm:$0xff]
        %v488 = vld [vmem:[%s323 + $0x60] sm:$0xff]
        %v489 = vld [vmem:[%s323 + $0x68] sm:$0xff]
        %v490 = vld [vmem:[%s323 + $0x70] sm:$0xff]
        %v491 = vld [vmem:[%s323 + $0x78] sm:$0xff]
        %v492 = vld [vmem:[%s323 + $0x80] sm:$0xff]
        %v493 = vld [vmem:[%s323 + $0x88] sm:$0xff]
        %v494 = vld [vmem:[%s323 + $0x90] sm:$0xff]
        %v495 = vld [vmem:[%s323 + $0x98] sm:$0xff]
        %v496 = vld [vmem:[%s323 + $0xa0] sm:$0xff]
        %v497 = vld [vmem:[%s323 + $0xa8] sm:$0xff]
        %v498 = vld [vmem:[%s323 + $0xb0] sm:$0xff]
        %v499 = vld [vmem:[%s323 + $0xb8] sm:$0xff]
        %v500 = vld [vmem:[%s323 + $0xc0] sm:$0xff]
        %v501 = vld [vmem:[%s323 + $0xc8] sm:$0xff]
        %v502 = vld [vmem:[%s323 + $0xd0] sm:$0xff]
        %v503 = vld [vmem:[%s323 + $0xd8] sm:$0xff]
        %v504 = vld [vmem:[%s323 + $0xe0] sm:$0xff]
        %v505 = vld [vmem:[%s323 + $0xe8] sm:$0xff]
        %v506 = vld [vmem:[%s323 + $0xf0] sm:$0xff]
        %v507 = vld [vmem:[%s323 + $0xf8] sm:$0xff]
        %v508 = vld [vmem:[%s323 + $0x100] sm:$0xff]
        %v509 = vld [vmem:[%s323 + $0x108] sm:$0xff]
        %v510 = vld [vmem:[%s323 + $0x110] sm:$0xff]
        %v511 = vld [vmem:[%s323 + $0x118] sm:$0xff]
        %v512 = vld [vmem:[%s323 + $0x120] sm:$0xff]
        %v513 = vld [vmem:[%s323 + $0x128] sm:$0xff]
        %v514 = vld [vmem:[%s323 + $0x130] sm:$0xff]
        %v515 = vld [vmem:[%s323 + $0x138] sm:$0xff]
        %v516 = vld [vmem:[%s323 + $0x140] sm:$0xff]
        %v517 = vld [vmem:[%s323 + $0x148] sm:$0xff]
        %v518 = vld [vmem:[%s323 + $0x150] sm:$0xff]
        %v519 = vld [vmem:[%s323 + $0x158] sm:$0xff]
        %v520 = vld [vmem:[%s323 + $0x160] sm:$0xff]
        %v521 = vld [vmem:[%s323 + $0x168] sm:$0xff]
        %v522 = vld [vmem:[%s323 + $0x170] sm:$0xff]
        %v523 = vld [vmem:[%s323 + $0x178] sm:$0xff]
        %v524 = vld [vmem:[%s323 + $0x180] sm:$0xff]
        %v525 = vld [vmem:[%s323 + $0x188] sm:$0xff]
        %v526 = vld [vmem:[%s323 + $0x190] sm:$0xff]
        %v527 = vld [vmem:[%s323 + $0x198] sm:$0xff]
        %v528 = vld [vmem:[%s323 + $0x1a0] sm:$0xff]
        %v529 = vld [vmem:[%s323 + $0x1a8] sm:$0xff]
        %v530 = vld [vmem:[%s323 + $0x1b0] sm:$0xff]
        %v531 = vld [vmem:[%s323 + $0x1b8] sm:$0xff]
        %v532 = vld [vmem:[%s323 + $0x1c0] sm:$0xff]
        %v533 = vld [vmem:[%s323 + $0x1c8] sm:$0xff]
        %v534 = vld [vmem:[%s323 + $0x1d0] sm:$0xff]
        %v535 = vld [vmem:[%s323 + $0x1d8] sm:$0xff]
        %v536 = vld [vmem:[%s323 + $0x1e0] sm:$0xff]
        %v537 = vld [vmem:[%s323 + $0x1e8] sm:$0xff]
        %v538 = vld [vmem:[%s323 + $0x1f0] sm:$0xff]
        %v539 = vld [vmem:[%s323 + $0x1f8] sm:$0xff]
        %v540 = vld [vmem:[%s323 + $0x200] sm:$0xff]
        %v541 = vld [vmem:[%s323 + $0x208] sm:$0xff]
        %v542 = vld [vmem:[%s323 + $0x210] sm:$0xff]
        %v543 = vld [vmem:[%s323 + $0x218] sm:$0xff]
        %v544 = vld [vmem:[%s323 + $0x220] sm:$0xff]
        %v545 = vld [vmem:[%s323 + $0x228] sm:$0xff]
        %v546 = vld [vmem:[%s323 + $0x230] sm:$0xff]
        %v547 = vld [vmem:[%s323 + $0x238] sm:$0xff]
        %v548 = vld [vmem:[%s323 + $0x240] sm:$0xff]
        %v549 = vld [vmem:[%s323 + $0x248] sm:$0xff]
        %v550 = vld [vmem:[%s323 + $0x250] sm:$0xff]
        %v551 = vld [vmem:[%s323 + $0x258] sm:$0xff]
        %v552 = vld [vmem:[%s323 + $0x260] sm:$0xff]
        %v553 = vld [vmem:[%s323 + $0x268] sm:$0xff]
        %v554 = vld [vmem:[%s323 + $0x270] sm:$0xff]
        %v555 = vld [vmem:[%s323 + $0x278] sm:$0xff]
        %v556 = vld [vmem:[%s323 + $0x280] sm:$0xff]
        %v557 = vld [vmem:[%s323 + $0x288] sm:$0xff]
        %v558 = vld [vmem:[%s323 + $0x290] sm:$0xff]
        %v559 = vld [vmem:[%s323 + $0x298] sm:$0xff]
        %v560 = vld [vmem:[%s323 + $0x2a0] sm:$0xff]
        %v561 = vld [vmem:[%s323 + $0x2a8] sm:$0xff]
        %v562 = vld [vmem:[%s323 + $0x2b0] sm:$0xff]
        %v563 = vld [vmem:[%s323 + $0x2b8] sm:$0xff]
        %v564 = vld [vmem:[%s323 + $0x2c0] sm:$0xff]
        %v565 = vld [vmem:[%s323 + $0x2c8] sm:$0xff]
        %v566 = vld [vmem:[%s323 + $0x2d0] sm:$0xff]
        %v567 = vld [vmem:[%s323 + $0x2d8] sm:$0xff]
        %v568 = vld [vmem:[%s323 + $0x2e0] sm:$0xff]
        %v569 = vld [vmem:[%s323 + $0x2e8] sm:$0xff]
        %v570 = vld [vmem:[%s323 + $0x2f0] sm:$0xff]
        %v571 = vld [vmem:[%s323 + $0x2f8] sm:$0xff]
        %v572 = vld [vmem:[%s323 + $0x300] sm:$0xff]
        %v573 = vld [vmem:[%s323 + $0x308] sm:$0xff]
        %v574 = vld [vmem:[%s323 + $0x310] sm:$0xff]
        %v575 = vld [vmem:[%s323 + $0x318] sm:$0xff]
        %v576 = vld [vmem:[%s323 + $0x320] sm:$0xff]
        %v577 = vld [vmem:[%s323 + $0x328] sm:$0xff]
        %v578 = vld [vmem:[%s323 + $0x330] sm:$0xff]
        %v579 = vld [vmem:[%s323 + $0x338] sm:$0xff]
        %v580 = vld [vmem:[%s323 + $0x340] sm:$0xff]
        %v581 = vld [vmem:[%s323 + $0x348] sm:$0xff]
        %v582 = vld [vmem:[%s323 + $0x350] sm:$0xff]
        %v583 = vld [vmem:[%s323 + $0x358] sm:$0xff]
        %v584 = vld [vmem:[%s323 + $0x360] sm:$0xff]
        %v585 = vld [vmem:[%s323 + $0x368] sm:$0xff]
        %v586 = vld [vmem:[%s323 + $0x370] sm:$0xff]
        %v587 = vld [vmem:[%s323 + $0x378] sm:$0xff]
        %v588 = vld [vmem:[%s323 + $0x380] sm:$0xff]
        %v589 = vld [vmem:[%s323 + $0x388] sm:$0xff]
        %v590 = vld [vmem:[%s323 + $0x390] sm:$0xff]
        %v591 = vld [vmem:[%s323 + $0x398] sm:$0xff]
        %v592 = vld [vmem:[%s323 + $0x3a0] sm:$0xff]
        %v593 = vld [vmem:[%s323 + $0x3a8] sm:$0xff]
        %v594 = vld [vmem:[%s323 + $0x3b0] sm:$0xff]
        %v595 = vld [vmem:[%s323 + $0x3b8] sm:$0xff]
        %v596 = vld [vmem:[%s323 + $0x3c0] sm:$0xff]
        %v597 = vld [vmem:[%s323 + $0x3c8] sm:$0xff]
        %v598 = vld [vmem:[%s323 + $0x3d0] sm:$0xff]
        %v599 = vld [vmem:[%s323 + $0x3d8] sm:$0xff]
        %v600 = vld [vmem:[%s323 + $0x3e0] sm:$0xff]
        %v601 = vld [vmem:[%s323 + $0x3e8] sm:$0xff]
        %v602 = vld [vmem:[%s323 + $0x3f0] sm:$0xff]
        %v603 = vld [vmem:[%s323 + $0x3f8] sm:$0xff]
        %v732 = vunpack.c.l.b16 %v476
        %v733 = vunpack.c.h.b16 %v476
        %v734 = vunpack.c.l.b16 %v477
        %v735 = vunpack.c.h.b16 %v477
        %v736 = vunpack.c.l.b16 %v478
        %v737 = vunpack.c.h.b16 %v478
        %v738 = vunpack.c.l.b16 %v479
        %v739 = vunpack.c.h.b16 %v479
        %v740 = vunpack.c.l.b16 %v480
        %v741 = vunpack.c.h.b16 %v480
        %v742 = vunpack.c.l.b16 %v481
        %v743 = vunpack.c.h.b16 %v481
        %v744 = vunpack.c.l.b16 %v482
        %v745 = vunpack.c.h.b16 %v482
        %v746 = vunpack.c.l.b16 %v483
        %v747 = vunpack.c.h.b16 %v483
        %v748 = vunpack.c.l.b16 %v484
        %v749 = vunpack.c.h.b16 %v484
        %v750 = vunpack.c.l.b16 %v485
        %v751 = vunpack.c.h.b16 %v485
        %v752 = vunpack.c.l.b16 %v486
        %v753 = vunpack.c.h.b16 %v486
        %v754 = vunpack.c.l.b16 %v487
        %v755 = vunpack.c.h.b16 %v487
        %v756 = vunpack.c.l.b16 %v488
        %v757 = vunpack.c.h.b16 %v488
        %v758 = vunpack.c.l.b16 %v489
        %v759 = vunpack.c.h.b16 %v489
        %v760 = vunpack.c.l.b16 %v490
        %v761 = vunpack.c.h.b16 %v490
        %v762 = vunpack.c.l.b16 %v491
        %v763 = vunpack.c.h.b16 %v491
        %v764 = vunpack.c.l.b16 %v492
        %v765 = vunpack.c.h.b16 %v492
        %v766 = vunpack.c.l.b16 %v493
        %v767 = vunpack.c.h.b16 %v493
        %v768 = vunpack.c.l.b16 %v494
        %v769 = vunpack.c.h.b16 %v494
        %v770 = vunpack.c.l.b16 %v495
        %v771 = vunpack.c.h.b16 %v495
        %v772 = vunpack.c.l.b16 %v496
        %v773 = vunpack.c.h.b16 %v496
        %v774 = vunpack.c.l.b16 %v497
        %v775 = vunpack.c.h.b16 %v497
        %v776 = vunpack.c.l.b16 %v498
        %v777 = vunpack.c.h.b16 %v498
        %v778 = vunpack.c.l.b16 %v499
        %v779 = vunpack.c.h.b16 %v499
        %v780 = vunpack.c.l.b16 %v500
        %v781 = vunpack.c.h.b16 %v500
        %v782 = vunpack.c.l.b16 %v501
        %v783 = vunpack.c.h.b16 %v501
        %v784 = vunpack.c.l.b16 %v502
        %v785 = vunpack.c.h.b16 %v502
        %v786 = vunpack.c.l.b16 %v503
        %v787 = vunpack.c.h.b16 %v503
        %v788 = vunpack.c.l.b16 %v504
        %v789 = vunpack.c.h.b16 %v504
        %v790 = vunpack.c.l.b16 %v505
        %v791 = vunpack.c.h.b16 %v505
        %v792 = vunpack.c.l.b16 %v506
        %v793 = vunpack.c.h.b16 %v506
        %v794 = vunpack.c.l.b16 %v507
        %v795 = vunpack.c.h.b16 %v507
        %v796 = vunpack.c.l.b16 %v508
        %v797 = vunpack.c.h.b16 %v508
        %v798 = vunpack.c.l.b16 %v509
        %v799 = vunpack.c.h.b16 %v509
        %v800 = vunpack.c.l.b16 %v510
        %v801 = vunpack.c.h.b16 %v510
        %v802 = vunpack.c.l.b16 %v511
        %v803 = vunpack.c.h.b16 %v511
        %v804 = vunpack.c.l.b16 %v512
        %v805 = vunpack.c.h.b16 %v512
        %v806 = vunpack.c.l.b16 %v513
        %v807 = vunpack.c.h.b16 %v513
        %v808 = vunpack.c.l.b16 %v514
        %v809 = vunpack.c.h.b16 %v514
        %v810 = vunpack.c.l.b16 %v515
        %v811 = vunpack.c.h.b16 %v515
        %v812 = vunpack.c.l.b16 %v516
        %v813 = vunpack.c.h.b16 %v516
        %v814 = vunpack.c.l.b16 %v517
        %v815 = vunpack.c.h.b16 %v517
        %v816 = vunpack.c.l.b16 %v518
        %v817 = vunpack.c.h.b16 %v518
        %v818 = vunpack.c.l.b16 %v519
        %v819 = vunpack.c.h.b16 %v519
        %v820 = vunpack.c.l.b16 %v520
        %v821 = vunpack.c.h.b16 %v520
        %v822 = vunpack.c.l.b16 %v521
        %v823 = vunpack.c.h.b16 %v521
        %v824 = vunpack.c.l.b16 %v522
        %v825 = vunpack.c.h.b16 %v522
        %v826 = vunpack.c.l.b16 %v523
        %v827 = vunpack.c.h.b16 %v523
        %v828 = vunpack.c.l.b16 %v524
        %v829 = vunpack.c.h.b16 %v524
        %v830 = vunpack.c.l.b16 %v525
        %v831 = vunpack.c.h.b16 %v525
        %v832 = vunpack.c.l.b16 %v526
        %v833 = vunpack.c.h.b16 %v526
        %v834 = vunpack.c.l.b16 %v527
        %v835 = vunpack.c.h.b16 %v527
        %v836 = vunpack.c.l.b16 %v528
        %v837 = vunpack.c.h.b16 %v528
        %v838 = vunpack.c.l.b16 %v529
        %v839 = vunpack.c.h.b16 %v529
        %v840 = vunpack.c.l.b16 %v530
        %v841 = vunpack.c.h.b16 %v530
        %v842 = vunpack.c.l.b16 %v531
        %v843 = vunpack.c.h.b16 %v531
        %v844 = vunpack.c.l.b16 %v532
        %v845 = vunpack.c.h.b16 %v532
        %v846 = vunpack.c.l.b16 %v533
        %v847 = vunpack.c.h.b16 %v533
        %v848 = vunpack.c.l.b16 %v534
        %v849 = vunpack.c.h.b16 %v534
        %v850 = vunpack.c.l.b16 %v535
        %v851 = vunpack.c.h.b16 %v535
        %v852 = vunpack.c.l.b16 %v536
        %v853 = vunpack.c.h.b16 %v536
        %v854 = vunpack.c.l.b16 %v537
        %v855 = vunpack.c.h.b16 %v537
        %v856 = vunpack.c.l.b16 %v538
        %v857 = vunpack.c.h.b16 %v538
        %v858 = vunpack.c.l.b16 %v539
        %v859 = vunpack.c.h.b16 %v539
        %v860 = vunpack.c.l.b16 %v540
        %v861 = vunpack.c.h.b16 %v540
        %v862 = vunpack.c.l.b16 %v541
        %v863 = vunpack.c.h.b16 %v541
        %v864 = vunpack.c.l.b16 %v542
        %v865 = vunpack.c.h.b16 %v542
        %v866 = vunpack.c.l.b16 %v543
        %v867 = vunpack.c.h.b16 %v543
        %v868 = vunpack.c.l.b16 %v544
        %v869 = vunpack.c.h.b16 %v544
        %v870 = vunpack.c.l.b16 %v545
        %v871 = vunpack.c.h.b16 %v545
        %v872 = vunpack.c.l.b16 %v546
        %v873 = vunpack.c.h.b16 %v546
        %v874 = vunpack.c.l.b16 %v547
        %v875 = vunpack.c.h.b16 %v547
        %v876 = vunpack.c.l.b16 %v548
        %v877 = vunpack.c.h.b16 %v548
        %v878 = vunpack.c.l.b16 %v549
        %v879 = vunpack.c.h.b16 %v549
        %v880 = vunpack.c.l.b16 %v550
        %v881 = vunpack.c.h.b16 %v550
        %v882 = vunpack.c.l.b16 %v551
        %v883 = vunpack.c.h.b16 %v551
        %v884 = vunpack.c.l.b16 %v552
        %v885 = vunpack.c.h.b16 %v552
        %v886 = vunpack.c.l.b16 %v553
        %v887 = vunpack.c.h.b16 %v553
        %v888 = vunpack.c.l.b16 %v554
        %v889 = vunpack.c.h.b16 %v554
        %v890 = vunpack.c.l.b16 %v555
        %v891 = vunpack.c.h.b16 %v555
        %v892 = vunpack.c.l.b16 %v556
        %v893 = vunpack.c.h.b16 %v556
        %v894 = vunpack.c.l.b16 %v557
        %v895 = vunpack.c.h.b16 %v557
        %v896 = vunpack.c.l.b16 %v558
        %v897 = vunpack.c.h.b16 %v558
        %v898 = vunpack.c.l.b16 %v559
        %v899 = vunpack.c.h.b16 %v559
        %v900 = vunpack.c.l.b16 %v560
        %v901 = vunpack.c.h.b16 %v560
        %v902 = vunpack.c.l.b16 %v561
        %v903 = vunpack.c.h.b16 %v561
        %v904 = vunpack.c.l.b16 %v562
        %v905 = vunpack.c.h.b16 %v562
        %v906 = vunpack.c.l.b16 %v563
        %v907 = vunpack.c.h.b16 %v563
        %v908 = vunpack.c.l.b16 %v564
        %v909 = vunpack.c.h.b16 %v564
        %v910 = vunpack.c.l.b16 %v565
        %v911 = vunpack.c.h.b16 %v565
        %v912 = vunpack.c.l.b16 %v566
        %v913 = vunpack.c.h.b16 %v566
        %v914 = vunpack.c.l.b16 %v567
        %v915 = vunpack.c.h.b16 %v567
        %v916 = vunpack.c.l.b16 %v568
        %v917 = vunpack.c.h.b16 %v568
        %v918 = vunpack.c.l.b16 %v569
        %v919 = vunpack.c.h.b16 %v569
        %v920 = vunpack.c.l.b16 %v570
        %v921 = vunpack.c.h.b16 %v570
        %v922 = vunpack.c.l.b16 %v571
        %v923 = vunpack.c.h.b16 %v571
        %v924 = vunpack.c.l.b16 %v572
        %v925 = vunpack.c.h.b16 %v572
        %v926 = vunpack.c.l.b16 %v573
        %v927 = vunpack.c.h.b16 %v573
        %v928 = vunpack.c.l.b16 %v574
        %v929 = vunpack.c.h.b16 %v574
        %v930 = vunpack.c.l.b16 %v575
        %v931 = vunpack.c.h.b16 %v575
        %v932 = vunpack.c.l.b16 %v576
        %v933 = vunpack.c.h.b16 %v576
        %v934 = vunpack.c.l.b16 %v577
        %v935 = vunpack.c.h.b16 %v577
        %v936 = vunpack.c.l.b16 %v578
        %v937 = vunpack.c.h.b16 %v578
        %v938 = vunpack.c.l.b16 %v579
        %v939 = vunpack.c.h.b16 %v579
        %v940 = vunpack.c.l.b16 %v580
        %v941 = vunpack.c.h.b16 %v580
        %v942 = vunpack.c.l.b16 %v581
        %v943 = vunpack.c.h.b16 %v581
        %v944 = vunpack.c.l.b16 %v582
        %v945 = vunpack.c.h.b16 %v582
        %v946 = vunpack.c.l.b16 %v583
        %v947 = vunpack.c.h.b16 %v583
        %v948 = vunpack.c.l.b16 %v584
        %v949 = vunpack.c.h.b16 %v584
        %v950 = vunpack.c.l.b16 %v585
        %v951 = vunpack.c.h.b16 %v585
        %v952 = vunpack.c.l.b16 %v586
        %v953 = vunpack.c.h.b16 %v586
        %v954 = vunpack.c.l.b16 %v587
        %v955 = vunpack.c.h.b16 %v587
        %v956 = vunpack.c.l.b16 %v588
        %v957 = vunpack.c.h.b16 %v588
        %v958 = vunpack.c.l.b16 %v589
        %v959 = vunpack.c.h.b16 %v589
        %v960 = vunpack.c.l.b16 %v590
        %v961 = vunpack.c.h.b16 %v590
        %v962 = vunpack.c.l.b16 %v591
        %v963 = vunpack.c.h.b16 %v591
        %v964 = vunpack.c.l.b16 %v592
        %v965 = vunpack.c.h.b16 %v592
        %v966 = vunpack.c.l.b16 %v593
        %v967 = vunpack.c.h.b16 %v593
        %v968 = vunpack.c.l.b16 %v594
        %v969 = vunpack.c.h.b16 %v594
        %v970 = vunpack.c.l.b16 %v595
        %v971 = vunpack.c.h.b16 %v595
        %v972 = vunpack.c.l.b16 %v596
        %v973 = vunpack.c.h.b16 %v596
        %v974 = vunpack.c.l.b16 %v597
        %v975 = vunpack.c.h.b16 %v597
        %v976 = vunpack.c.l.b16 %v598
        %v977 = vunpack.c.h.b16 %v598
        %v978 = vunpack.c.l.b16 %v599
        %v979 = vunpack.c.h.b16 %v599
        %v980 = vunpack.c.l.b16 %v600
        %v981 = vunpack.c.h.b16 %v600
        %v982 = vunpack.c.l.b16 %v601
        %v983 = vunpack.c.h.b16 %v601
        %v984 = vunpack.c.l.b16 %v602
        %v985 = vunpack.c.h.b16 %v602
        %v986 = vunpack.c.l.b16 %v603
        %v987 = vunpack.c.h.b16 %v603
        %v988 = vpack.c.b16 %v748, %v732
        %v989 = vpack.c.b16 %v749, %v733
        %v990 = vpack.c.b16 %v750, %v734
        %v991 = vpack.c.b16 %v751, %v735
        %v992 = vpack.c.b16 %v752, %v736
        %v993 = vpack.c.b16 %v753, %v737
        %v994 = vpack.c.b16 %v754, %v738
        %v995 = vpack.c.b16 %v755, %v739
        %v996 = vpack.c.b16 %v756, %v740
        %v997 = vpack.c.b16 %v757, %v741
        %v998 = vpack.c.b16 %v758, %v742
        %v999 = vpack.c.b16 %v759, %v743
        %v1000 = vpack.c.b16 %v760, %v744
        %v1001 = vpack.c.b16 %v761, %v745
        %v1002 = vpack.c.b16 %v762, %v746
        %v1003 = vpack.c.b16 %v763, %v747
        %v1004 = vpack.c.b16 %v780, %v764
        %v1005 = vpack.c.b16 %v781, %v765
        %v1006 = vpack.c.b16 %v782, %v766
        %v1007 = vpack.c.b16 %v783, %v767
        %v1008 = vpack.c.b16 %v784, %v768
        %v1009 = vpack.c.b16 %v785, %v769
        %v1010 = vpack.c.b16 %v786, %v770
        %v1011 = vpack.c.b16 %v787, %v771
        %v1012 = vpack.c.b16 %v788, %v772
        %v1013 = vpack.c.b16 %v789, %v773
        %v1014 = vpack.c.b16 %v790, %v774
        %v1015 = vpack.c.b16 %v791, %v775
        %v1016 = vpack.c.b16 %v792, %v776
        %v1017 = vpack.c.b16 %v793, %v777
        %v1018 = vpack.c.b16 %v794, %v778
        %v1019 = vpack.c.b16 %v795, %v779
        %v1020 = vpack.c.b16 %v812, %v796
        %v1021 = vpack.c.b16 %v813, %v797
        %v1022 = vpack.c.b16 %v814, %v798
        %v1023 = vpack.c.b16 %v815, %v799
        %v1024 = vpack.c.b16 %v816, %v800
        %v1025 = vpack.c.b16 %v817, %v801
        %v1026 = vpack.c.b16 %v818, %v802
        %v1027 = vpack.c.b16 %v819, %v803
        %v1028 = vpack.c.b16 %v820, %v804
        %v1029 = vpack.c.b16 %v821, %v805
        %v1030 = vpack.c.b16 %v822, %v806
        %v1031 = vpack.c.b16 %v823, %v807
        %v1032 = vpack.c.b16 %v824, %v808
        %v1033 = vpack.c.b16 %v825, %v809
        %v1034 = vpack.c.b16 %v826, %v810
        %v1035 = vpack.c.b16 %v827, %v811
        %v1036 = vpack.c.b16 %v844, %v828
        %v1037 = vpack.c.b16 %v845, %v829
        %v1038 = vpack.c.b16 %v846, %v830
        %v1039 = vpack.c.b16 %v847, %v831
        %v1040 = vpack.c.b16 %v848, %v832
        %v1041 = vpack.c.b16 %v849, %v833
        %v1042 = vpack.c.b16 %v850, %v834
        %v1043 = vpack.c.b16 %v851, %v835
        %v1044 = vpack.c.b16 %v852, %v836
        %v1045 = vpack.c.b16 %v853, %v837
        %v1046 = vpack.c.b16 %v854, %v838
        %v1047 = vpack.c.b16 %v855, %v839
        %v1048 = vpack.c.b16 %v856, %v840
        %v1049 = vpack.c.b16 %v857, %v841
        %v1050 = vpack.c.b16 %v858, %v842
        %v1051 = vpack.c.b16 %v859, %v843
        %v1052 = vpack.c.b16 %v876, %v860
        %v1053 = vpack.c.b16 %v877, %v861
        %v1054 = vpack.c.b16 %v878, %v862
        %v1055 = vpack.c.b16 %v879, %v863
        %v1056 = vpack.c.b16 %v880, %v864
        %v1057 = vpack.c.b16 %v881, %v865
        %v1058 = vpack.c.b16 %v882, %v866
        %v1059 = vpack.c.b16 %v883, %v867
        %v1060 = vpack.c.b16 %v884, %v868
        %v1061 = vpack.c.b16 %v885, %v869
        %v1062 = vpack.c.b16 %v886, %v870
        %v1063 = vpack.c.b16 %v887, %v871
        %v1064 = vpack.c.b16 %v888, %v872
        %v1065 = vpack.c.b16 %v889, %v873
        %v1066 = vpack.c.b16 %v890, %v874
        %v1067 = vpack.c.b16 %v891, %v875
        %v1068 = vpack.c.b16 %v908, %v892
        %v1069 = vpack.c.b16 %v909, %v893
        %v1070 = vpack.c.b16 %v910, %v894
        %v1071 = vpack.c.b16 %v911, %v895
        %v1072 = vpack.c.b16 %v912, %v896
        %v1073 = vpack.c.b16 %v913, %v897
        %v1074 = vpack.c.b16 %v914, %v898
        %v1075 = vpack.c.b16 %v915, %v899
        %v1076 = vpack.c.b16 %v916, %v900
        %v1077 = vpack.c.b16 %v917, %v901
        %v1078 = vpack.c.b16 %v918, %v902
        %v1079 = vpack.c.b16 %v919, %v903
        %v1080 = vpack.c.b16 %v920, %v904
        %v1081 = vpack.c.b16 %v921, %v905
        %v1082 = vpack.c.b16 %v922, %v906
        %v1083 = vpack.c.b16 %v923, %v907
        %v1084 = vpack.c.b16 %v940, %v924
        %v1085 = vpack.c.b16 %v941, %v925
        %v1086 = vpack.c.b16 %v942, %v926
        %v1087 = vpack.c.b16 %v943, %v927
        %v1088 = vpack.c.b16 %v944, %v928
        %v1089 = vpack.c.b16 %v945, %v929
        %v1090 = vpack.c.b16 %v946, %v930
        %v1091 = vpack.c.b16 %v947, %v931
        %v1092 = vpack.c.b16 %v948, %v932
        %v1093 = vpack.c.b16 %v949, %v933
        %v1094 = vpack.c.b16 %v950, %v934
        %v1095 = vpack.c.b16 %v951, %v935
        %v1096 = vpack.c.b16 %v952, %v936
        %v1097 = vpack.c.b16 %v953, %v937
        %v1098 = vpack.c.b16 %v954, %v938
        %v1099 = vpack.c.b16 %v955, %v939
        %v1100 = vpack.c.b16 %v972, %v956
        %v1101 = vpack.c.b16 %v973, %v957
        %v1102 = vpack.c.b16 %v974, %v958
        %v1103 = vpack.c.b16 %v975, %v959
        %v1104 = vpack.c.b16 %v976, %v960
        %v1105 = vpack.c.b16 %v977, %v961
        %v1106 = vpack.c.b16 %v978, %v962
        %v1107 = vpack.c.b16 %v979, %v963
        %v1108 = vpack.c.b16 %v980, %v964
        %v1109 = vpack.c.b16 %v981, %v965
        %v1110 = vpack.c.b16 %v982, %v966
        %v1111 = vpack.c.b16 %v983, %v967
        %v1112 = vpack.c.b16 %v984, %v968
        %v1113 = vpack.c.b16 %v985, %v969
        %v1114 = vpack.c.b16 %v986, %v970
        %v1115 = vpack.c.b16 %v987, %v971
        %1244 = vmatprep.subr.bf16.mxu0 %v989
        %1245 = vmatpush1.bf16.msra.mxu0 %v988
        %1246 = vmatprep.subr.bf16.mxu0 %v1005
        %1247 = vmatpush1.bf16.msra.mxu0 %v1004
        %1248 = vmatprep.subr.bf16.mxu0 %v1021
        %1249 = vmatpush1.bf16.msra.mxu0 %v1020
        %1250 = vmatprep.subr.bf16.mxu0 %v1037
        %1251 = vmatpush1.bf16.msra.mxu0 %v1036
        %1252 = vmatprep.subr.bf16.mxu0 %v1053
        %1253 = vmatpush1.bf16.msra.mxu0 %v1052
        %1254 = vmatprep.subr.bf16.mxu0 %v1069
        %1255 = vmatpush1.bf16.msra.mxu0 %v1068
        %1256 = vmatprep.subr.bf16.mxu0 %v1085
        %1257 = vmatpush1.bf16.msra.mxu0 %v1084
        %1258 = vmatprep.subr.bf16.mxu0 %v1101
        %1259 = vmatpush1.bf16.msra.mxu0 %v1100
        %1260 = vmatprep.subr.bf16.mxu0 0
        %1261 = vmatpush1.bf16.msra.mxu0 0
        %1262 = vmatprep.subr.bf16.mxu0 0
        %1263 = vmatpush1.bf16.msra.mxu0 0
        %1264 = vmatprep.subr.bf16.mxu0 0
        %1265 = vmatpush1.bf16.msra.mxu0 0
        %1266 = vmatprep.subr.bf16.mxu0 0
        %1267 = vmatpush1.bf16.msra.mxu0 0
        %1268 = vmatprep.subr.bf16.mxu0 0
        %1269 = vmatpush1.bf16.msra.mxu0 0
        %1270 = vmatprep.subr.bf16.mxu0 0
        %1271 = vmatpush1.bf16.msra.mxu0 0
        %1272 = vmatprep.subr.bf16.mxu0 0
        %1273 = vmatpush1.bf16.msra.mxu0 0
        %1274 = vmatprep.subr.bf16.mxu0 0
        %1275 = vmatpush1.bf16.msra.mxu0 0
        %1276 = vmatprep.mubr.bf16.mxu0 0
        %1277 = vmatmul.mubr.bf16.gmra.mrb[0].mxu0 %v475
        %v1278 = vpop.f32.mrb[0].mxu0
        %v1279 = vadd.f32 0.0, %v1278
        %v1280 = vpop.f32.mrb[0].mxu0
        %v1281 = vadd.f32 0.0, %v1280
        %v1282 = vpop.f32.mrb[0].mxu0
        %v1283 = vpop.f32.mrb[0].mxu0
        %1284 = vdwg.mxu0
        %1285 = vmatprep.subr.bf16.mxu0 %v991
        %1286 = vmatpush1.bf16.msra.mxu0 %v990
        %1287 = vmatprep.subr.bf16.mxu0 %v1007
        %1288 = vmatpush1.bf16.msra.mxu0 %v1006
        %1289 = vmatprep.subr.bf16.mxu0 %v1023
        %1290 = vmatpush1.bf16.msra.mxu0 %v1022
        %1291 = vmatprep.subr.bf16.mxu0 %v1039
        %1292 = vmatpush1.bf16.msra.mxu0 %v1038
        %1293 = vmatprep.subr.bf16.mxu0 %v1055
        %1294 = vmatpush1.bf16.msra.mxu0 %v1054
        %1295 = vmatprep.subr.bf16.mxu0 %v1071
        %1296 = vmatpush1.bf16.msra.mxu0 %v1070
        %1297 = vmatprep.subr.bf16.mxu0 %v1087
        %1298 = vmatpush1.bf16.msra.mxu0 %v1086
        %1299 = vmatprep.subr.bf16.mxu0 %v1103
        %1300 = vmatpush1.bf16.msra.mxu0 %v1102
        %1301 = vmatprep.subr.bf16.mxu0 0
        %1302 = vmatpush1.bf16.msra.mxu0 0
        %1303 = vmatprep.subr.bf16.mxu0 0
        %1304 = vmatpush1.bf16.msra.mxu0 0
        %1305 = vmatprep.subr.bf16.mxu0 0
        %1306 = vmatpush1.bf16.msra.mxu0 0
        %1307 = vmatprep.subr.bf16.mxu0 0
        %1308 = vmatpush1.bf16.msra.mxu0 0
        %1309 = vmatprep.subr.bf16.mxu0 0
        %1310 = vmatpush1.bf16.msra.mxu0 0
        %1311 = vmatprep.subr.bf16.mxu0 0
        %1312 = vmatpush1.bf16.msra.mxu0 0
        %1313 = vmatprep.subr.bf16.mxu0 0
        %1314 = vmatpush1.bf16.msra.mxu0 0
        %1315 = vmatprep.subr.bf16.mxu0 0
        %1316 = vmatpush1.bf16.msra.mxu0 0
        %1317 = vmatprep.mubr.bf16.mxu0 0
        %1318 = vmatmul.mubr.bf16.gmra.mrb[0].mxu0 %v475
        %v1319 = vpop.f32.mrb[0].mxu0
        %v1320 = vadd.f32 0.0, %v1319
        %v1321 = vpop.f32.mrb[0].mxu0
        %v1322 = vadd.f32 0.0, %v1321
        %v1323 = vpop.f32.mrb[0].mxu0
        %v1324 = vpop.f32.mrb[0].mxu0
        %1325 = vdwg.mxu0
        %1326 = vmatprep.subr.bf16.mxu0 %v993
        %1327 = vmatpush1.bf16.msra.mxu0 %v992
        %1328 = vmatprep.subr.bf16.mxu0 %v1009
        %1329 = vmatpush1.bf16.msra.mxu0 %v1008
        %1330 = vmatprep.subr.bf16.mxu0 %v1025
        %1331 = vmatpush1.bf16.msra.mxu0 %v1024
        %1332 = vmatprep.subr.bf16.mxu0 %v1041
        %1333 = vmatpush1.bf16.msra.mxu0 %v1040
        %1334 = vmatprep.subr.bf16.mxu0 %v1057
        %1335 = vmatpush1.bf16.msra.mxu0 %v1056
        %1336 = vmatprep.subr.bf16.mxu0 %v1073
        %1337 = vmatpush1.bf16.msra.mxu0 %v1072
        %1338 = vmatprep.subr.bf16.mxu0 %v1089
        %1339 = vmatpush1.bf16.msra.mxu0 %v1088
        %1340 = vmatprep.subr.bf16.mxu0 %v1105
        %1341 = vmatpush1.bf16.msra.mxu0 %v1104
        %1342 = vmatprep.subr.bf16.mxu0 0
        %1343 = vmatpush1.bf16.msra.mxu0 0
        %1344 = vmatprep.subr.bf16.mxu0 0
        %1345 = vmatpush1.bf16.msra.mxu0 0
        %1346 = vmatprep.subr.bf16.mxu0 0
        %1347 = vmatpush1.bf16.msra.mxu0 0
        %1348 = vmatprep.subr.bf16.mxu0 0
        %1349 = vmatpush1.bf16.msra.mxu0 0
        %1350 = vmatprep.subr.bf16.mxu0 0
        %1351 = vmatpush1.bf16.msra.mxu0 0
        %1352 = vmatprep.subr.bf16.mxu0 0
        %1353 = vmatpush1.bf16.msra.mxu0 0
        %1354 = vmatprep.subr.bf16.mxu0 0
        %1355 = vmatpush1.bf16.msra.mxu0 0
        %1356 = vmatprep.subr.bf16.mxu0 0
        %1357 = vmatpush1.bf16.msra.mxu0 0
        %1358 = vmatprep.mubr.bf16.mxu0 0
        %1359 = vmatmul.mubr.bf16.gmra.mrb[0].mxu0 %v475
        %v1360 = vpop.f32.mrb[0].mxu0
        %v1361 = vadd.f32 0.0, %v1360
        %v1362 = vpop.f32.mrb[0].mxu0
        %v1363 = vadd.f32 0.0, %v1362
        %v1364 = vpop.f32.mrb[0].mxu0
        %v1365 = vpop.f32.mrb[0].mxu0
        %1366 = vdwg.mxu0
        %1367 = vmatprep.subr.bf16.mxu0 %v995
        %1368 = vmatpush1.bf16.msra.mxu0 %v994
        %1369 = vmatprep.subr.bf16.mxu0 %v1011
        %1370 = vmatpush1.bf16.msra.mxu0 %v1010
        %1371 = vmatprep.subr.bf16.mxu0 %v1027
        %1372 = vmatpush1.bf16.msra.mxu0 %v1026
        %1373 = vmatprep.subr.bf16.mxu0 %v1043
        %1374 = vmatpush1.bf16.msra.mxu0 %v1042
        %1375 = vmatprep.subr.bf16.mxu0 %v1059
        %1376 = vmatpush1.bf16.msra.mxu0 %v1058
        %1377 = vmatprep.subr.bf16.mxu0 %v1075
        %1378 = vmatpush1.bf16.msra.mxu0 %v1074
        %1379 = vmatprep.subr.bf16.mxu0 %v1091
        %1380 = vmatpush1.bf16.msra.mxu0 %v1090
        %1381 = vmatprep.subr.bf16.mxu0 %v1107
        %1382 = vmatpush1.bf16.msra.mxu0 %v1106
        %1383 = vmatprep.subr.bf16.mxu0 0
        %1384 = vmatpush1.bf16.msra.mxu0 0
        %1385 = vmatprep.subr.bf16.mxu0 0
        %1386 = vmatpush1.bf16.msra.mxu0 0
        %1387 = vmatprep.subr.bf16.mxu0 0
        %1388 = vmatpush1.bf16.msra.mxu0 0
        %1389 = vmatprep.subr.bf16.mxu0 0
        %1390 = vmatpush1.bf16.msra.mxu0 0
        %1391 = vmatprep.subr.bf16.mxu0 0
        %1392 = vmatpush1.bf16.msra.mxu0 0
        %1393 = vmatprep.subr.bf16.mxu0 0
        %1394 = vmatpush1.bf16.msra.mxu0 0
        %1395 = vmatprep.subr.bf16.mxu0 0
        %1396 = vmatpush1.bf16.msra.mxu0 0
        %1397 = vmatprep.subr.bf16.mxu0 0
        %1398 = vmatpush1.bf16.msra.mxu0 0
        %1399 = vmatprep.mubr.bf16.mxu0 0
        %1400 = vmatmul.mubr.bf16.gmra.mrb[0].mxu0 %v475
        %v1401 = vpop.f32.mrb[0].mxu0
        %v1402 = vadd.f32 0.0, %v1401
        %v1403 = vpop.f32.mrb[0].mxu0
        %v1404 = vadd.f32 0.0, %v1403
        %v1405 = vpop.f32.mrb[0].mxu0
        %v1406 = vpop.f32.mrb[0].mxu0
        %1407 = vdwg.mxu0
        %1408 = vmatprep.subr.bf16.mxu0 %v997
        %1409 = vmatpush1.bf16.msra.mxu0 %v996
        %1410 = vmatprep.subr.bf16.mxu0 %v1013
        %1411 = vmatpush1.bf16.msra.mxu0 %v1012
        %1412 = vmatprep.subr.bf16.mxu0 %v1029
        %1413 = vmatpush1.bf16.msra.mxu0 %v1028
        %1414 = vmatprep.subr.bf16.mxu0 %v1045
        %1415 = vmatpush1.bf16.msra.mxu0 %v1044
        %1416 = vmatprep.subr.bf16.mxu0 %v1061
        %1417 = vmatpush1.bf16.msra.mxu0 %v1060
        %1418 = vmatprep.subr.bf16.mxu0 %v1077
        %1419 = vmatpush1.bf16.msra.mxu0 %v1076
        %1420 = vmatprep.subr.bf16.mxu0 %v1093
        %1421 = vmatpush1.bf16.msra.mxu0 %v1092
        %1422 = vmatprep.subr.bf16.mxu0 %v1109
        %1423 = vmatpush1.bf16.msra.mxu0 %v1108
        %1424 = vmatprep.subr.bf16.mxu0 0
        %1425 = vmatpush1.bf16.msra.mxu0 0
        %1426 = vmatprep.subr.bf16.mxu0 0
        %1427 = vmatpush1.bf16.msra.mxu0 0
        %1428 = vmatprep.subr.bf16.mxu0 0
        %1429 = vmatpush1.bf16.msra.mxu0 0
        %1430 = vmatprep.subr.bf16.mxu0 0
        %1431 = vmatpush1.bf16.msra.mxu0 0
        %1432 = vmatprep.subr.bf16.mxu0 0
        %1433 = vmatpush1.bf16.msra.mxu0 0
        %1434 = vmatprep.subr.bf16.mxu0 0
        %1435 = vmatpush1.bf16.msra.mxu0 0
        %1436 = vmatprep.subr.bf16.mxu0 0
        %1437 = vmatpush1.bf16.msra.mxu0 0
        %1438 = vmatprep.subr.bf16.mxu0 0
        %1439 = vmatpush1.bf16.msra.mxu0 0
        %1440 = vmatprep.mubr.bf16.mxu0 0
        %1441 = vmatmul.mubr.bf16.gmra.mrb[0].mxu0 %v475
        %v1442 = vpop.f32.mrb[0].mxu0
        %v1443 = vadd.f32 0.0, %v1442
        %v1444 = vpop.f32.mrb[0].mxu0
        %v1445 = vadd.f32 0.0, %v1444
        %v1446 = vpop.f32.mrb[0].mxu0
        %v1447 = vpop.f32.mrb[0].mxu0
        %1448 = vdwg.mxu0
        %1449 = vmatprep.subr.bf16.mxu0 %v999
        %1450 = vmatpush1.bf16.msra.mxu0 %v998
        %1451 = vmatprep.subr.bf16.mxu0 %v1015
        %1452 = vmatpush1.bf16.msra.mxu0 %v1014
        %1453 = vmatprep.subr.bf16.mxu0 %v1031
        %1454 = vmatpush1.bf16.msra.mxu0 %v1030
        %1455 = vmatprep.subr.bf16.mxu0 %v1047
        %1456 = vmatpush1.bf16.msra.mxu0 %v1046
        %1457 = vmatprep.subr.bf16.mxu0 %v1063
        %1458 = vmatpush1.bf16.msra.mxu0 %v1062
        %1459 = vmatprep.subr.bf16.mxu0 %v1079
        %1460 = vmatpush1.bf16.msra.mxu0 %v1078
        %1461 = vmatprep.subr.bf16.mxu0 %v1095
        %1462 = vmatpush1.bf16.msra.mxu0 %v1094
        %1463 = vmatprep.subr.bf16.mxu0 %v1111
        %1464 = vmatpush1.bf16.msra.mxu0 %v1110
        %1465 = vmatprep.subr.bf16.mxu0 0
        %1466 = vmatpush1.bf16.msra.mxu0 0
        %1467 = vmatprep.subr.bf16.mxu0 0
        %1468 = vmatpush1.bf16.msra.mxu0 0
        %1469 = vmatprep.subr.bf16.mxu0 0
        %1470 = vmatpush1.bf16.msra.mxu0 0
        %1471 = vmatprep.subr.bf16.mxu0 0
        %1472 = vmatpush1.bf16.msra.mxu0 0
        %1473 = vmatprep.subr.bf16.mxu0 0
        %1474 = vmatpush1.bf16.msra.mxu0 0
        %1475 = vmatprep.subr.bf16.mxu0 0
        %1476 = vmatpush1.bf16.msra.mxu0 0
        %1477 = vmatprep.subr.bf16.mxu0 0
        %1478 = vmatpush1.bf16.msra.mxu0 0
        %1479 = vmatprep.subr.bf16.mxu0 0
        %1480 = vmatpush1.bf16.msra.mxu0 0
        %1481 = vmatprep.mubr.bf16.mxu0 0
        %1482 = vmatmul.mubr.bf16.gmra.mrb[0].mxu0 %v475
        %v1483 = vpop.f32.mrb[0].mxu0
        %v1484 = vadd.f32 0.0, %v1483
        %v1485 = vpop.f32.mrb[0].mxu0
        %v1486 = vadd.f32 0.0, %v1485
        %v1487 = vpop.f32.mrb[0].mxu0
        %v1488 = vpop.f32.mrb[0].mxu0
        %1489 = vdwg.mxu0
        %1490 = vmatprep.subr.bf16.mxu0 %v1001
        %1491 = vmatpush1.bf16.msra.mxu0 %v1000
        %1492 = vmatprep.subr.bf16.mxu0 %v1017
        %1493 = vmatpush1.bf16.msra.mxu0 %v1016
        %1494 = vmatprep.subr.bf16.mxu0 %v1033
        %1495 = vmatpush1.bf16.msra.mxu0 %v1032
        %1496 = vmatprep.subr.bf16.mxu0 %v1049
        %1497 = vmatpush1.bf16.msra.mxu0 %v1048
        %1498 = vmatprep.subr.bf16.mxu0 %v1065
        %1499 = vmatpush1.bf16.msra.mxu0 %v1064
        %1500 = vmatprep.subr.bf16.mxu0 %v1081
        %1501 = vmatpush1.bf16.msra.mxu0 %v1080
        %1502 = vmatprep.subr.bf16.mxu0 %v1097
        %1503 = vmatpush1.bf16.msra.mxu0 %v1096
        %1504 = vmatprep.subr.bf16.mxu0 %v1113
        %1505 = vmatpush1.bf16.msra.mxu0 %v1112
        %1506 = vmatprep.subr.bf16.mxu0 0
        %1507 = vmatpush1.bf16.msra.mxu0 0
        %1508 = vmatprep.subr.bf16.mxu0 0
        %1509 = vmatpush1.bf16.msra.mxu0 0
        %1510 = vmatprep.subr.bf16.mxu0 0
        %1511 = vmatpush1.bf16.msra.mxu0 0
        %1512 = vmatprep.subr.bf16.mxu0 0
        %1513 = vmatpush1.bf16.msra.mxu0 0
        %1514 = vmatprep.subr.bf16.mxu0 0
        %1515 = vmatpush1.bf16.msra.mxu0 0
        %1516 = vmatprep.subr.bf16.mxu0 0
        %1517 = vmatpush1.bf16.msra.mxu0 0
        %1518 = vmatprep.subr.bf16.mxu0 0
        %1519 = vmatpush1.bf16.msra.mxu0 0
        %1520 = vmatprep.subr.bf16.mxu0 0
        %1521 = vmatpush1.bf16.msra.mxu0 0
        %1522 = vmatprep.mubr.bf16.mxu0 0
        %1523 = vmatmul.mubr.bf16.gmra.mrb[0].mxu0 %v475
        %v1524 = vpop.f32.mrb[0].mxu0
        %v1525 = vadd.f32 0.0, %v1524
        %v1526 = vpop.f32.mrb[0].mxu0
        %v1527 = vadd.f32 0.0, %v1526
        %v1528 = vpop.f32.mrb[0].mxu0
        %v1529 = vpop.f32.mrb[0].mxu0
        %1530 = vdwg.mxu0
        %1531 = vmatprep.subr.bf16.mxu0 %v1003
        %1532 = vmatpush1.bf16.msra.mxu0 %v1002
        %1533 = vmatprep.subr.bf16.mxu0 %v1019
        %1534 = vmatpush1.bf16.msra.mxu0 %v1018
        %1535 = vmatprep.subr.bf16.mxu0 %v1035
        %1536 = vmatpush1.bf16.msra.mxu0 %v1034
        %1537 = vmatprep.subr.bf16.mxu0 %v1051
        %1538 = vmatpush1.bf16.msra.mxu0 %v1050
        %1539 = vmatprep.subr.bf16.mxu0 %v1067
        %1540 = vmatpush1.bf16.msra.mxu0 %v1066
        %1541 = vmatprep.subr.bf16.mxu0 %v1083
        %1542 = vmatpush1.bf16.msra.mxu0 %v1082
        %1543 = vmatprep.subr.bf16.mxu0 %v1099
        %1544 = vmatpush1.bf16.msra.mxu0 %v1098
        %1545 = vmatprep.subr.bf16.mxu0 %v1115
        %1546 = vmatpush1.bf16.msra.mxu0 %v1114
        %1547 = vmatprep.subr.bf16.mxu0 0
        %1548 = vmatpush1.bf16.msra.mxu0 0
        %1549 = vmatprep.subr.bf16.mxu0 0
        %1550 = vmatpush1.bf16.msra.mxu0 0
        %1551 = vmatprep.subr.bf16.mxu0 0
        %1552 = vmatpush1.bf16.msra.mxu0 0
        %1553 = vmatprep.subr.bf16.mxu0 0
        %1554 = vmatpush1.bf16.msra.mxu0 0
        %1555 = vmatprep.subr.bf16.mxu0 0
        %1556 = vmatpush1.bf16.msra.mxu0 0
        %1557 = vmatprep.subr.bf16.mxu0 0
        %1558 = vmatpush1.bf16.msra.mxu0 0
        %1559 = vmatprep.subr.bf16.mxu0 0
        %1560 = vmatpush1.bf16.msra.mxu0 0
        %1561 = vmatprep.subr.bf16.mxu0 0
        %1562 = vmatpush1.bf16.msra.mxu0 0
        %1563 = vmatprep.mubr.bf16.mxu0 0
        %1564 = vmatmul.mubr.bf16.gmra.mrb[0].mxu0 %v475
        %v1565 = vpop.f32.mrb[0].mxu0
        %v1566 = vadd.f32 0.0, %v1565
        %v1567 = vpop.f32.mrb[0].mxu0
        %v1568 = vadd.f32 0.0, %v1567
        %v1569 = vpop.f32.mrb[0].mxu0
        %v1570 = vpop.f32.mrb[0].mxu0
        %1571 = vdwg.mxu0
        %vm1572 = vcmask 1041408
        %v1573 = vsel %vm1572, %v1279, 0.0
        %v1574 = vrot.slane %v1573, 4
        %v1575 = vadd.f32 %v1573, %v1574
        %v1576 = vrot.slane %v1575, 2
        %v1577 = vadd.f32 %v1575, %v1576
        %v1578 = vrot.slane %v1577, 1
        %v1579 = vadd.f32 %v1577, %v1578
        %v1580 = vsel %vm1572, %v1281, 0.0
        %v1581 = vrot.slane %v1580, 4
        %v1582 = vadd.f32 %v1580, %v1581
        %v1583 = vrot.slane %v1582, 2
        %v1584 = vadd.f32 %v1582, %v1583
        %v1585 = vrot.slane %v1584, 1
        %v1586 = vadd.f32 %v1584, %v1585
        %v1587 = vsel %vm1572, %v1320, 0.0
        %v1588 = vrot.slane %v1587, 4
        %v1589 = vadd.f32 %v1587, %v1588
        %v1590 = vrot.slane %v1589, 2
        %v1591 = vadd.f32 %v1589, %v1590
        %v1592 = vrot.slane %v1591, 1
        %v1593 = vadd.f32 %v1591, %v1592
        %v1594 = vsel %vm1572, %v1322, 0.0
        %v1595 = vrot.slane %v1594, 4
        %v1596 = vadd.f32 %v1594, %v1595
        %v1597 = vrot.slane %v1596, 2
        %v1598 = vadd.f32 %v1596, %v1597
        %v1599 = vrot.slane %v1598, 1
        %v1600 = vadd.f32 %v1598, %v1599
        %v1601 = vsel %vm1572, %v1361, 0.0
        %v1602 = vrot.slane %v1601, 4
        %v1603 = vadd.f32 %v1601, %v1602
        %v1604 = vrot.slane %v1603, 2
        %v1605 = vadd.f32 %v1603, %v1604
        %v1606 = vrot.slane %v1605, 1
        %v1607 = vadd.f32 %v1605, %v1606
        %v1608 = vsel %vm1572, %v1363, 0.0
        %v1609 = vrot.slane %v1608, 4
        %v1610 = vadd.f32 %v1608, %v1609
        %v1611 = vrot.slane %v1610, 2
        %v1612 = vadd.f32 %v1610, %v1611
        %v1613 = vrot.slane %v1612, 1
        %v1614 = vadd.f32 %v1612, %v1613
        %v1615 = vsel %vm1572, %v1402, 0.0
        %v1616 = vrot.slane %v1615, 4
        %v1617 = vadd.f32 %v1615, %v1616
        %v1618 = vrot.slane %v1617, 2
        %v1619 = vadd.f32 %v1617, %v1618
        %v1620 = vrot.slane %v1619, 1
        %v1621 = vadd.f32 %v1619, %v1620
        %v1622 = vsel %vm1572, %v1404, 0.0
        %v1623 = vrot.slane %v1622, 4
        %v1624 = vadd.f32 %v1622, %v1623
        %v1625 = vrot.slane %v1624, 2
        %v1626 = vadd.f32 %v1624, %v1625
        %v1627 = vrot.slane %v1626, 1
        %v1628 = vadd.f32 %v1626, %v1627
        %v1629 = vsel %vm1572, %v1443, 0.0
        %v1630 = vrot.slane %v1629, 4
        %v1631 = vadd.f32 %v1629, %v1630
        %v1632 = vrot.slane %v1631, 2
        %v1633 = vadd.f32 %v1631, %v1632
        %v1634 = vrot.slane %v1633, 1
        %v1635 = vadd.f32 %v1633, %v1634
        %v1636 = vsel %vm1572, %v1445, 0.0
        %v1637 = vrot.slane %v1636, 4
        %v1638 = vadd.f32 %v1636, %v1637
        %v1639 = vrot.slane %v1638, 2
        %v1640 = vadd.f32 %v1638, %v1639
        %v1641 = vrot.slane %v1640, 1
        %v1642 = vadd.f32 %v1640, %v1641
        %v1643 = vsel %vm1572, %v1484, 0.0
        %v1644 = vrot.slane %v1643, 4
        %v1645 = vadd.f32 %v1643, %v1644
        %v1646 = vrot.slane %v1645, 2
        %v1647 = vadd.f32 %v1645, %v1646
        %v1648 = vrot.slane %v1647, 1
        %v1649 = vadd.f32 %v1647, %v1648
        %v1650 = vsel %vm1572, %v1486, 0.0
        %v1651 = vrot.slane %v1650, 4
        %v1652 = vadd.f32 %v1650, %v1651
        %v1653 = vrot.slane %v1652, 2
        %v1654 = vadd.f32 %v1652, %v1653
        %v1655 = vrot.slane %v1654, 1
        %v1656 = vadd.f32 %v1654, %v1655
        %v1657 = vsel %vm1572, %v1525, 0.0
        %v1658 = vrot.slane %v1657, 4
        %v1659 = vadd.f32 %v1657, %v1658
        %v1660 = vrot.slane %v1659, 2
        %v1661 = vadd.f32 %v1659, %v1660
        %v1662 = vrot.slane %v1661, 1
        %v1663 = vadd.f32 %v1661, %v1662
        %v1664 = vsel %vm1572, %v1527, 0.0
        %v1665 = vrot.slane %v1664, 4
        %v1666 = vadd.f32 %v1664, %v1665
        %v1667 = vrot.slane %v1666, 2
        %v1668 = vadd.f32 %v1666, %v1667
        %v1669 = vrot.slane %v1668, 1
        %v1670 = vadd.f32 %v1668, %v1669
        %v1671 = vsel %vm1572, %v1566, 0.0
        %v1672 = vrot.slane %v1671, 4
        %v1673 = vadd.f32 %v1671, %v1672
        %v1674 = vrot.slane %v1673, 2
        %v1675 = vadd.f32 %v1673, %v1674
        %v1676 = vrot.slane %v1675, 1
        %v1677 = vadd.f32 %v1675, %v1676
        %v1678 = vsel %vm1572, %v1568, 0.0
        %v1679 = vrot.slane %v1678, 4
        %v1680 = vadd.f32 %v1678, %v1679
        %v1681 = vrot.slane %v1680, 2
        %v1682 = vadd.f32 %v1680, %v1681
        %v1683 = vrot.slane %v1682, 1
        %v1684 = vadd.f32 %v1682, %v1683
        %v1685 = vrcp.pop 2.0
        %v1686 = vmul.f32 %v1579, %v1685
        %v1687 = vmul.f32 %v1586, %v1685
        %v1688 = vmul.f32 %v1593, %v1685
        %v1689 = vmul.f32 %v1600, %v1685
        %v1690 = vmul.f32 %v1607, %v1685
        %v1691 = vmul.f32 %v1614, %v1685
        %v1692 = vmul.f32 %v1621, %v1685
        %v1693 = vmul.f32 %v1628, %v1685
        %v1694 = vmul.f32 %v1635, %v1685
        %v1695 = vmul.f32 %v1642, %v1685
        %v1696 = vmul.f32 %v1649, %v1685
        %v1697 = vmul.f32 %v1656, %v1685
        %v1698 = vmul.f32 %v1663, %v1685
        %v1699 = vmul.f32 %v1670, %v1685
        %v1700 = vmul.f32 %v1677, %v1685
        %v1701 = vmul.f32 %v1684, %v1685
        %v1702 = vmul.f32 %v1279, %v1279
        %v1703 = vmul.f32 %v1281, %v1281
        %v1704 = vmul.f32 %v1320, %v1320
        %v1705 = vmul.f32 %v1322, %v1322
        %v1706 = vmul.f32 %v1361, %v1361
        %v1707 = vmul.f32 %v1363, %v1363
        %v1708 = vmul.f32 %v1402, %v1402
        %v1709 = vmul.f32 %v1404, %v1404
        %v1710 = vmul.f32 %v1443, %v1443
        %v1711 = vmul.f32 %v1445, %v1445
        %v1712 = vmul.f32 %v1484, %v1484
        %v1713 = vmul.f32 %v1486, %v1486
        %v1714 = vmul.f32 %v1525, %v1525
        %v1715 = vmul.f32 %v1527, %v1527
        %v1716 = vmul.f32 %v1566, %v1566
        %v1717 = vmul.f32 %v1568, %v1568
        %v1718 = vsel %vm1572, %v1702, 0.0
        %v1719 = vrot.slane %v1718, 4
        %v1720 = vadd.f32 %v1718, %v1719
        %v1721 = vrot.slane %v1720, 2
        %v1722 = vadd.f32 %v1720, %v1721
        %v1723 = vrot.slane %v1722, 1
        %v1724 = vadd.f32 %v1722, %v1723
        %v1725 = vsel %vm1572, %v1703, 0.0
        %v1726 = vrot.slane %v1725, 4
        %v1727 = vadd.f32 %v1725, %v1726
        %v1728 = vrot.slane %v1727, 2
        %v1729 = vadd.f32 %v1727, %v1728
        %v1730 = vrot.slane %v1729, 1
        %v1731 = vadd.f32 %v1729, %v1730
        %v1732 = vsel %vm1572, %v1704, 0.0
        %v1733 = vrot.slane %v1732, 4
        %v1734 = vadd.f32 %v1732, %v1733
        %v1735 = vrot.slane %v1734, 2
        %v1736 = vadd.f32 %v1734, %v1735
        %v1737 = vrot.slane %v1736, 1
        %v1738 = vadd.f32 %v1736, %v1737
        %v1739 = vsel %vm1572, %v1705, 0.0
        %v1740 = vrot.slane %v1739, 4
        %v1741 = vadd.f32 %v1739, %v1740
        %v1742 = vrot.slane %v1741, 2
        %v1743 = vadd.f32 %v1741, %v1742
        %v1744 = vrot.slane %v1743, 1
        %v1745 = vadd.f32 %v1743, %v1744
        %v1746 = vsel %vm1572, %v1706, 0.0
        %v1747 = vrot.slane %v1746, 4
        %v1748 = vadd.f32 %v1746, %v1747
        %v1749 = vrot.slane %v1748, 2
        %v1750 = vadd.f32 %v1748, %v1749
        %v1751 = vrot.slane %v1750, 1
        %v1752 = vadd.f32 %v1750, %v1751
        %v1753 = vsel %vm1572, %v1707, 0.0
        %v1754 = vrot.slane %v1753, 4
        %v1755 = vadd.f32 %v1753, %v1754
        %v1756 = vrot.slane %v1755, 2
        %v1757 = vadd.f32 %v1755, %v1756
        %v1758 = vrot.slane %v1757, 1
        %v1759 = vadd.f32 %v1757, %v1758
        %v1760 = vsel %vm1572, %v1708, 0.0
        %v1761 = vrot.slane %v1760, 4
        %v1762 = vadd.f32 %v1760, %v1761
        %v1763 = vrot.slane %v1762, 2
        %v1764 = vadd.f32 %v1762, %v1763
        %v1765 = vrot.slane %v1764, 1
        %v1766 = vadd.f32 %v1764, %v1765
        %v1767 = vsel %vm1572, %v1709, 0.0
        %v1768 = vrot.slane %v1767, 4
        %v1769 = vadd.f32 %v1767, %v1768
        %v1770 = vrot.slane %v1769, 2
        %v1771 = vadd.f32 %v1769, %v1770
        %v1772 = vrot.slane %v1771, 1
        %v1773 = vadd.f32 %v1771, %v1772
        %v1774 = vsel %vm1572, %v1710, 0.0
        %v1775 = vrot.slane %v1774, 4
        %v1776 = vadd.f32 %v1774, %v1775
        %v1777 = vrot.slane %v1776, 2
        %v1778 = vadd.f32 %v1776, %v1777
        %v1779 = vrot.slane %v1778, 1
        %v1780 = vadd.f32 %v1778, %v1779
        %v1781 = vsel %vm1572, %v1711, 0.0
        %v1782 = vrot.slane %v1781, 4
        %v1783 = vadd.f32 %v1781, %v1782
        %v1784 = vrot.slane %v1783, 2
        %v1785 = vadd.f32 %v1783, %v1784
        %v1786 = vrot.slane %v1785, 1
        %v1787 = vadd.f32 %v1785, %v1786
        %v1788 = vsel %vm1572, %v1712, 0.0
        %v1789 = vrot.slane %v1788, 4
        %v1790 = vadd.f32 %v1788, %v1789
        %v1791 = vrot.slane %v1790, 2
        %v1792 = vadd.f32 %v1790, %v1791
        %v1793 = vrot.slane %v1792, 1
        %v1794 = vadd.f32 %v1792, %v1793
        %v1795 = vsel %vm1572, %v1713, 0.0
        %v1796 = vrot.slane %v1795, 4
        %v1797 = vadd.f32 %v1795, %v1796
        %v1798 = vrot.slane %v1797, 2
        %v1799 = vadd.f32 %v1797, %v1798
        %v1800 = vrot.slane %v1799, 1
        %v1801 = vadd.f32 %v1799, %v1800
        %v1802 = vsel %vm1572, %v1714, 0.0
        %v1803 = vrot.slane %v1802, 4
        %v1804 = vadd.f32 %v1802, %v1803
        %v1805 = vrot.slane %v1804, 2
        %v1806 = vadd.f32 %v1804, %v1805
        %v1807 = vrot.slane %v1806, 1
        %v1808 = vadd.f32 %v1806, %v1807
        %v1809 = vsel %vm1572, %v1715, 0.0
        %v1810 = vrot.slane %v1809, 4
        %v1811 = vadd.f32 %v1809, %v1810
        %v1812 = vrot.slane %v1811, 2
        %v1813 = vadd.f32 %v1811, %v1812
        %v1814 = vrot.slane %v1813, 1
        %v1815 = vadd.f32 %v1813, %v1814
        %v1816 = vsel %vm1572, %v1716, 0.0
        %v1817 = vrot.slane %v1816, 4
        %v1818 = vadd.f32 %v1816, %v1817
        %v1819 = vrot.slane %v1818, 2
        %v1820 = vadd.f32 %v1818, %v1819
        %v1821 = vrot.slane %v1820, 1
        %v1822 = vadd.f32 %v1820, %v1821
        %v1823 = vsel %vm1572, %v1717, 0.0
        %v1824 = vrot.slane %v1823, 4
        %v1825 = vadd.f32 %v1823, %v1824
        %v1826 = vrot.slane %v1825, 2
        %v1827 = vadd.f32 %v1825, %v1826
        %v1828 = vrot.slane %v1827, 1
        %v1829 = vadd.f32 %v1827, %v1828
        %v1830 = vmul.f32 %v1724, %v1685
        %v1831 = vmul.f32 %v1731, %v1685
        %v1832 = vmul.f32 %v1738, %v1685
        %v1833 = vmul.f32 %v1745, %v1685
        %v1834 = vmul.f32 %v1752, %v1685
        %v1835 = vmul.f32 %v1759, %v1685
        %v1836 = vmul.f32 %v1766, %v1685
        %v1837 = vmul.f32 %v1773, %v1685
        %v1838 = vmul.f32 %v1780, %v1685
        %v1839 = vmul.f32 %v1787, %v1685
        %v1840 = vmul.f32 %v1794, %v1685
        %v1841 = vmul.f32 %v1801, %v1685
        %v1842 = vmul.f32 %v1808, %v1685
        %v1843 = vmul.f32 %v1815, %v1685
        %v1844 = vmul.f32 %v1822, %v1685
        %v1845 = vmul.f32 %v1829, %v1685
        %v1846 = vmul.f32 %v1686, %v1686
        %v1847 = vmul.f32 %v1687, %v1687
        %v1848 = vmul.f32 %v1688, %v1688
        %v1849 = vmul.f32 %v1689, %v1689
        %v1850 = vmul.f32 %v1690, %v1690
        %v1851 = vmul.f32 %v1691, %v1691
        %v1852 = vmul.f32 %v1692, %v1692
        %v1853 = vmul.f32 %v1693, %v1693
        %v1854 = vmul.f32 %v1694, %v1694
        %v1855 = vmul.f32 %v1695, %v1695
        %v1856 = vmul.f32 %v1696, %v1696
        %v1857 = vmul.f32 %v1697, %v1697
        %v1858 = vmul.f32 %v1698, %v1698
        %v1859 = vmul.f32 %v1699, %v1699
        %v1860 = vmul.f32 %v1700, %v1700
        %v1861 = vmul.f32 %v1701, %v1701
        %v1862 = vsub.f32 %v1830, %v1846
        %v1863 = vsub.f32 %v1831, %v1847
        %v1864 = vsub.f32 %v1832, %v1848
        %v1865 = vsub.f32 %v1833, %v1849
        %v1866 = vsub.f32 %v1834, %v1850
        %v1867 = vsub.f32 %v1835, %v1851
        %v1868 = vsub.f32 %v1836, %v1852
        %v1869 = vsub.f32 %v1837, %v1853
        %v1870 = vsub.f32 %v1838, %v1854
        %v1871 = vsub.f32 %v1839, %v1855
        %v1872 = vsub.f32 %v1840, %v1856
        %v1873 = vsub.f32 %v1841, %v1857
        %v1874 = vsub.f32 %v1842, %v1858
        %v1875 = vsub.f32 %v1843, %v1859
        %v1876 = vsub.f32 %v1844, %v1860
        %v1877 = vsub.f32 %v1845, %v1861
        %v1878 = vmax.f32 %v1862, 0.0
        %v1879 = vmax.f32 %v1863, 0.0
        %v1880 = vmax.f32 %v1864, 0.0
        %v1881 = vmax.f32 %v1865, 0.0
        %v1882 = vmax.f32 %v1866, 0.0
        %v1883 = vmax.f32 %v1867, 0.0
        %v1884 = vmax.f32 %v1868, 0.0
        %v1885 = vmax.f32 %v1869, 0.0
        %v1886 = vmax.f32 %v1870, 0.0
        %v1887 = vmax.f32 %v1871, 0.0
        %v1888 = vmax.f32 %v1872, 0.0
        %v1889 = vmax.f32 %v1873, 0.0
        %v1890 = vmax.f32 %v1874, 0.0
        %v1891 = vmax.f32 %v1875, 0.0
        %v1892 = vmax.f32 %v1876, 0.0
        %v1893 = vmax.f32 %v1877, 0.0
        %v1894 = vld [vmem:[%s332] sm:$0xff]
        %v1895 = vld [vmem:[%s332 + $0x8] sm:$0xff]
        %v1896 = vadd.f32 %v1878, 1e-05
        %v1897 = vadd.f32 %v1879, 1e-05
        %v1898 = vadd.f32 %v1880, 1e-05
        %v1899 = vadd.f32 %v1881, 1e-05
        %v1900 = vadd.f32 %v1882, 1e-05
        %v1901 = vadd.f32 %v1883, 1e-05
        %v1902 = vadd.f32 %v1884, 1e-05
        %v1903 = vadd.f32 %v1885, 1e-05
        %v1904 = vadd.f32 %v1886, 1e-05
        %v1905 = vadd.f32 %v1887, 1e-05
        %v1906 = vadd.f32 %v1888, 1e-05
        %v1907 = vadd.f32 %v1889, 1e-05
        %v1908 = vadd.f32 %v1890, 1e-05
        %v1909 = vadd.f32 %v1891, 1e-05
        %v1910 = vadd.f32 %v1892, 1e-05
        %v1911 = vadd.f32 %v1893, 1e-05
        %v1912 = vrsqrt.pop %v1896
        %v1913 = vrsqrt.pop %v1897
        %v1914 = vrsqrt.pop %v1898
        %v1915 = vrsqrt.pop %v1899
        %v1916 = vrsqrt.pop %v1900
        %v1917 = vrsqrt.pop %v1901
        %v1918 = vrsqrt.pop %v1902
        %v1919 = vrsqrt.pop %v1903
        %v1920 = vrsqrt.pop %v1904
        %v1921 = vrsqrt.pop %v1905
        %v1922 = vrsqrt.pop %v1906
        %v1923 = vrsqrt.pop %v1907
        %v1924 = vrsqrt.pop %v1908
        %v1925 = vrsqrt.pop %v1909
        %v1926 = vrsqrt.pop %v1910
        %v1927 = vrsqrt.pop %v1911
        %v1944 = vcombine.low %v1912, %v1913
        %v1945 = vcombine.low %v1914, %v1915
        %v1946 = vcombine.low %v1916, %v1917
        %v1947 = vcombine.low %v1918, %v1919
        %v1949 = vunpack.c.l.s4 1966171168
        %v1950 = vunpack.c.0.s8 %v1949
        %v1951 = vlaneseq
        %v1952 = vshrl.u32 %v1951, 7
        %v1953 = vsub.s32 %v1950, %v1952
        %v1954 = vrot.slane %v1944, %v1953
        %v1956 = vunpack.c.l.s4 1966171168
        %v1957 = vunpack.c.0.s8 %v1956
        %v1958 = vlaneseq
        %v1959 = vshrl.u32 %v1958, 7
        %v1960 = vsub.s32 %v1957, %v1959
        %v1961 = vrot.slane %v1945, %v1960
        %v1963 = vunpack.c.l.s4 1966171168
        %v1964 = vunpack.c.0.s8 %v1963
        %v1965 = vlaneseq
        %v1966 = vshrl.u32 %v1965, 7
        %v1967 = vsub.s32 %v1964, %v1966
        %v1968 = vrot.slane %v1946, %v1967
        %v1970 = vunpack.c.l.s4 1966171168
        %v1971 = vunpack.c.0.s8 %v1970
        %v1972 = vlaneseq
        %v1973 = vshrl.u32 %v1972, 7
        %v1974 = vsub.s32 %v1971, %v1973
        %v1975 = vrot.slane %v1947, %v1974
        %v1976 = vcombine.low %v1954, %v1961
        %v1977 = vcombine.low %v1968, %v1975
        %v1979 = vunpack.c.l.s4 1966171168
        %v1980 = vunpack.c.0.s8 %v1979
        %v1981 = vlaneseq
        %v1982 = vshrl.u32 %v1981, 7
        %v1983 = vsub.s32 %v1980, %v1982
        %v1984 = vrot.slane %v1976, %v1983
        %v1986 = vunpack.c.l.s4 1966171168
        %v1987 = vunpack.c.0.s8 %v1986
        %v1988 = vlaneseq
        %v1989 = vshrl.u32 %v1988, 7
        %v1990 = vsub.s32 %v1987, %v1989
        %v1991 = vrot.slane %v1977, %v1990
        %v1992 = vcombine.low %v1984, %v1991
        %v1993 = vcombine.low %v1920, %v1921
        %v1994 = vcombine.low %v1922, %v1923
        %v1995 = vcombine.low %v1924, %v1925
        %v1996 = vcombine.low %v1926, %v1927
        %v1998 = vunpack.c.l.s4 1966171168
        %v1999 = vunpack.c.0.s8 %v1998
        %v2000 = vlaneseq
        %v2001 = vshrl.u32 %v2000, 7
        %v2002 = vsub.s32 %v1999, %v2001
        %v2003 = vrot.slane %v1993, %v2002
        %v2005 = vunpack.c.l.s4 1966171168
        %v2006 = vunpack.c.0.s8 %v2005
        %v2007 = vlaneseq
        %v2008 = vshrl.u32 %v2007, 7
        %v2009 = vsub.s32 %v2006, %v2008
        %v2010 = vrot.slane %v1994, %v2009
        %v2012 = vunpack.c.l.s4 1966171168
        %v2013 = vunpack.c.0.s8 %v2012
        %v2014 = vlaneseq
        %v2015 = vshrl.u32 %v2014, 7
        %v2016 = vsub.s32 %v2013, %v2015
        %v2017 = vrot.slane %v1995, %v2016
        %v2019 = vunpack.c.l.s4 1966171168
        %v2020 = vunpack.c.0.s8 %v2019
        %v2021 = vlaneseq
        %v2022 = vshrl.u32 %v2021, 7
        %v2023 = vsub.s32 %v2020, %v2022
        %v2024 = vrot.slane %v1996, %v2023
        %v2025 = vcombine.low %v2003, %v2010
        %v2026 = vcombine.low %v2017, %v2024
        %v2028 = vunpack.c.l.s4 1966171168
        %v2029 = vunpack.c.0.s8 %v2028
        %v2030 = vlaneseq
        %v2031 = vshrl.u32 %v2030, 7
        %v2032 = vsub.s32 %v2029, %v2031
        %v2033 = vrot.slane %v2025, %v2032
        %v2035 = vunpack.c.l.s4 1966171168
        %v2036 = vunpack.c.0.s8 %v2035
        %v2037 = vlaneseq
        %v2038 = vshrl.u32 %v2037, 7
        %v2039 = vsub.s32 %v2036, %v2038
        %v2040 = vrot.slane %v2026, %v2039
        %v2041 = vcombine.low %v2033, %v2040
        %v2044 = vmul.f32 %v1894, %v1992
        %v2045 = vmul.f32 %v1895, %v2041
        %v2046 = vld [vmem:[%s341] sm:$0xff]
        %v2047 = vld [vmem:[%s341 + $0x8] sm:$0xff]
        %v2064 = vcombine.low %v1686, %v1687
        %v2065 = vcombine.low %v1688, %v1689
        %v2066 = vcombine.low %v1690, %v1691
        %v2067 = vcombine.low %v1692, %v1693
        %v2069 = vunpack.c.l.s4 1966171168
        %v2070 = vunpack.c.0.s8 %v2069
        %v2071 = vlaneseq
        %v2072 = vshrl.u32 %v2071, 7
        %v2073 = vsub.s32 %v2070, %v2072
        %v2074 = vrot.slane %v2064, %v2073
        %v2076 = vunpack.c.l.s4 1966171168
        %v2077 = vunpack.c.0.s8 %v2076
        %v2078 = vlaneseq
        %v2079 = vshrl.u32 %v2078, 7
        %v2080 = vsub.s32 %v2077, %v2079
        %v2081 = vrot.slane %v2065, %v2080
        %v2083 = vunpack.c.l.s4 1966171168
        %v2084 = vunpack.c.0.s8 %v2083
        %v2085 = vlaneseq
        %v2086 = vshrl.u32 %v2085, 7
        %v2087 = vsub.s32 %v2084, %v2086
        %v2088 = vrot.slane %v2066, %v2087
        %v2090 = vunpack.c.l.s4 1966171168
        %v2091 = vunpack.c.0.s8 %v2090
        %v2092 = vlaneseq
        %v2093 = vshrl.u32 %v2092, 7
        %v2094 = vsub.s32 %v2091, %v2093
        %v2095 = vrot.slane %v2067, %v2094
        %v2096 = vcombine.low %v2074, %v2081
        %v2097 = vcombine.low %v2088, %v2095
        %v2099 = vunpack.c.l.s4 1966171168
        %v2100 = vunpack.c.0.s8 %v2099
        %v2101 = vlaneseq
        %v2102 = vshrl.u32 %v2101, 7
        %v2103 = vsub.s32 %v2100, %v2102
        %v2104 = vrot.slane %v2096, %v2103
        %v2106 = vunpack.c.l.s4 1966171168
        %v2107 = vunpack.c.0.s8 %v2106
        %v2108 = vlaneseq
        %v2109 = vshrl.u32 %v2108, 7
        %v2110 = vsub.s32 %v2107, %v2109
        %v2111 = vrot.slane %v2097, %v2110
        %v2112 = vcombine.low %v2104, %v2111
        %v2113 = vcombine.low %v1694, %v1695
        %v2114 = vcombine.low %v1696, %v1697
        %v2115 = vcombine.low %v1698, %v1699
        %v2116 = vcombine.low %v1700, %v1701
        %v2118 = vunpack.c.l.s4 1966171168
        %v2119 = vunpack.c.0.s8 %v2118
        %v2120 = vlaneseq
        %v2121 = vshrl.u32 %v2120, 7
        %v2122 = vsub.s32 %v2119, %v2121
        %v2123 = vrot.slane %v2113, %v2122
        %v2125 = vunpack.c.l.s4 1966171168
        %v2126 = vunpack.c.0.s8 %v2125
        %v2127 = vlaneseq
        %v2128 = vshrl.u32 %v2127, 7
        %v2129 = vsub.s32 %v2126, %v2128
        %v2130 = vrot.slane %v2114, %v2129
        %v2132 = vunpack.c.l.s4 1966171168
        %v2133 = vunpack.c.0.s8 %v2132
        %v2134 = vlaneseq
        %v2135 = vshrl.u32 %v2134, 7
        %v2136 = vsub.s32 %v2133, %v2135
        %v2137 = vrot.slane %v2115, %v2136
        %v2139 = vunpack.c.l.s4 1966171168
        %v2140 = vunpack.c.0.s8 %v2139
        %v2141 = vlaneseq
        %v2142 = vshrl.u32 %v2141, 7
        %v2143 = vsub.s32 %v2140, %v2142
        %v2144 = vrot.slane %v2116, %v2143
        %v2145 = vcombine.low %v2123, %v2130
        %v2146 = vcombine.low %v2137, %v2144
        %v2148 = vunpack.c.l.s4 1966171168
        %v2149 = vunpack.c.0.s8 %v2148
        %v2150 = vlaneseq
        %v2151 = vshrl.u32 %v2150, 7
        %v2152 = vsub.s32 %v2149, %v2151
        %v2153 = vrot.slane %v2145, %v2152
        %v2155 = vunpack.c.l.s4 1966171168
        %v2156 = vunpack.c.0.s8 %v2155
        %v2157 = vlaneseq
        %v2158 = vshrl.u32 %v2157, 7
        %v2159 = vsub.s32 %v2156, %v2158
        %v2160 = vrot.slane %v2146, %v2159
        %v2161 = vcombine.low %v2153, %v2160
        %v2164 = vmul.f32 %v2044, %v2112
        %v2165 = vmul.f32 %v2045, %v2161
        %v2166 = vsub.f32 %v2046, %v2164
        %v2167 = vsub.f32 %v2047, %v2165
        %v2170 = vlaneseq
        %v2171 = vshrl.u32 %v2170, 7
        %v2172 = vsub.s32 0, %v2171
        %v2173 = vrot.slane %v2044, %v2172
        %v2174 = vlaneseq
        %v2175 = vshrl.u32 %v2174, 7
        %v2176 = vsub.s32 1, %v2175
        %v2177 = vrot.slane %v2044, %v2176
        %v2178 = vlaneseq
        %v2179 = vshrl.u32 %v2178, 7
        %v2180 = vsub.s32 2, %v2179
        %v2181 = vrot.slane %v2044, %v2180
        %v2182 = vlaneseq
        %v2183 = vshrl.u32 %v2182, 7
        %v2184 = vsub.s32 3, %v2183
        %v2185 = vrot.slane %v2044, %v2184
        %v2186 = vlaneseq
        %v2187 = vshrl.u32 %v2186, 7
        %v2188 = vsub.s32 4, %v2187
        %v2189 = vrot.slane %v2044, %v2188
        %v2190 = vlaneseq
        %v2191 = vshrl.u32 %v2190, 7
        %v2192 = vsub.s32 5, %v2191
        %v2193 = vrot.slane %v2044, %v2192
        %v2194 = vlaneseq
        %v2195 = vshrl.u32 %v2194, 7
        %v2196 = vsub.s32 6, %v2195
        %v2197 = vrot.slane %v2044, %v2196
        %v2198 = vlaneseq
        %v2199 = vshrl.u32 %v2198, 7
        %v2200 = vsub.s32 7, %v2199
        %v2201 = vrot.slane %v2044, %v2200
        %v2202 = vlaneseq
        %v2203 = vshrl.u32 %v2202, 7
        %v2204 = vsub.s32 0, %v2203
        %v2205 = vrot.slane %v2045, %v2204
        %v2206 = vlaneseq
        %v2207 = vshrl.u32 %v2206, 7
        %v2208 = vsub.s32 1, %v2207
        %v2209 = vrot.slane %v2045, %v2208
        %v2210 = vlaneseq
        %v2211 = vshrl.u32 %v2210, 7
        %v2212 = vsub.s32 2, %v2211
        %v2213 = vrot.slane %v2045, %v2212
        %v2214 = vlaneseq
        %v2215 = vshrl.u32 %v2214, 7
        %v2216 = vsub.s32 3, %v2215
        %v2217 = vrot.slane %v2045, %v2216
        %v2218 = vlaneseq
        %v2219 = vshrl.u32 %v2218, 7
        %v2220 = vsub.s32 4, %v2219
        %v2221 = vrot.slane %v2045, %v2220
        %v2222 = vlaneseq
        %v2223 = vshrl.u32 %v2222, 7
        %v2224 = vsub.s32 5, %v2223
        %v2225 = vrot.slane %v2045, %v2224
        %v2226 = vlaneseq
        %v2227 = vshrl.u32 %v2226, 7
        %v2228 = vsub.s32 6, %v2227
        %v2229 = vrot.slane %v2045, %v2228
        %v2230 = vlaneseq
        %v2231 = vshrl.u32 %v2230, 7
        %v2232 = vsub.s32 7, %v2231
        %v2233 = vrot.slane %v2045, %v2232
        %v2250 = vmul.f32 %v1279, %v2173
        %v2251 = vmul.f32 %v1281, %v2177
        %v2252 = vmul.f32 %v1320, %v2181
        %v2253 = vmul.f32 %v1322, %v2185
        %v2254 = vmul.f32 %v1361, %v2189
        %v2255 = vmul.f32 %v1363, %v2193
        %v2256 = vmul.f32 %v1402, %v2197
        %v2257 = vmul.f32 %v1404, %v2201
        %v2258 = vmul.f32 %v1443, %v2205
        %v2259 = vmul.f32 %v1445, %v2209
        %v2260 = vmul.f32 %v1484, %v2213
        %v2261 = vmul.f32 %v1486, %v2217
        %v2262 = vmul.f32 %v1525, %v2221
        %v2263 = vmul.f32 %v1527, %v2225
        %v2264 = vmul.f32 %v1566, %v2229
        %v2265 = vmul.f32 %v1568, %v2233
        %v2268 = vlaneseq
        %v2269 = vshrl.u32 %v2268, 7
        %v2270 = vsub.s32 0, %v2269
        %v2271 = vrot.slane %v2166, %v2270
        %v2272 = vlaneseq
        %v2273 = vshrl.u32 %v2272, 7
        %v2274 = vsub.s32 1, %v2273
        %v2275 = vrot.slane %v2166, %v2274
        %v2276 = vlaneseq
        %v2277 = vshrl.u32 %v2276, 7
        %v2278 = vsub.s32 2, %v2277
        %v2279 = vrot.slane %v2166, %v2278
        %v2280 = vlaneseq
        %v2281 = vshrl.u32 %v2280, 7
        %v2282 = vsub.s32 3, %v2281
        %v2283 = vrot.slane %v2166, %v2282
        %v2284 = vlaneseq
        %v2285 = vshrl.u32 %v2284, 7
        %v2286 = vsub.s32 4, %v2285
        %v2287 = vrot.slane %v2166, %v2286
        %v2288 = vlaneseq
        %v2289 = vshrl.u32 %v2288, 7
        %v2290 = vsub.s32 5, %v2289
        %v2291 = vrot.slane %v2166, %v2290
        %v2292 = vlaneseq
        %v2293 = vshrl.u32 %v2292, 7
        %v2294 = vsub.s32 6, %v2293
        %v2295 = vrot.slane %v2166, %v2294
        %v2296 = vlaneseq
        %v2297 = vshrl.u32 %v2296, 7
        %v2298 = vsub.s32 7, %v2297
        %v2299 = vrot.slane %v2166, %v2298
        %v2300 = vlaneseq
        %v2301 = vshrl.u32 %v2300, 7
        %v2302 = vsub.s32 0, %v2301
        %v2303 = vrot.slane %v2167, %v2302
        %v2304 = vlaneseq
        %v2305 = vshrl.u32 %v2304, 7
        %v2306 = vsub.s32 1, %v2305
        %v2307 = vrot.slane %v2167, %v2306
        %v2308 = vlaneseq
        %v2309 = vshrl.u32 %v2308, 7
        %v2310 = vsub.s32 2, %v2309
        %v2311 = vrot.slane %v2167, %v2310
        %v2312 = vlaneseq
        %v2313 = vshrl.u32 %v2312, 7
        %v2314 = vsub.s32 3, %v2313
        %v2315 = vrot.slane %v2167, %v2314
        %v2316 = vlaneseq
        %v2317 = vshrl.u32 %v2316, 7
        %v2318 = vsub.s32 4, %v2317
        %v2319 = vrot.slane %v2167, %v2318
        %v2320 = vlaneseq
        %v2321 = vshrl.u32 %v2320, 7
        %v2322 = vsub.s32 5, %v2321
        %v2323 = vrot.slane %v2167, %v2322
        %v2324 = vlaneseq
        %v2325 = vshrl.u32 %v2324, 7
        %v2326 = vsub.s32 6, %v2325
        %v2327 = vrot.slane %v2167, %v2326
        %v2328 = vlaneseq
        %v2329 = vshrl.u32 %v2328, 7
        %v2330 = vsub.s32 7, %v2329
        %v2331 = vrot.slane %v2167, %v2330
        %v2348 = vadd.f32 %v2250, %v2271
        %v2349 = vadd.f32 %v2251, %v2275
        %v2350 = vadd.f32 %v2252, %v2279
        %v2351 = vadd.f32 %v2253, %v2283
        %v2352 = vadd.f32 %v2254, %v2287
        %v2353 = vadd.f32 %v2255, %v2291
        %v2354 = vadd.f32 %v2256, %v2295
        %v2355 = vadd.f32 %v2257, %v2299
        %v2356 = vadd.f32 %v2258, %v2303
        %v2357 = vadd.f32 %v2259, %v2307
        %v2358 = vadd.f32 %v2260, %v2311
        %v2359 = vadd.f32 %v2261, %v2315
        %v2360 = vadd.f32 %v2262, %v2319
        %v2361 = vadd.f32 %v2263, %v2323
        %v2362 = vadd.f32 %v2264, %v2327
        %v2363 = vadd.f32 %v2265, %v2331
        %v2364 = vmax.f32 %v2348, 0.0
        %v2365 = vmax.f32 %v2349, 0.0
        %v2366 = vmax.f32 %v2350, 0.0
        %v2367 = vmax.f32 %v2351, 0.0
        %v2368 = vmax.f32 %v2352, 0.0
        %v2369 = vmax.f32 %v2353, 0.0
        %v2370 = vmax.f32 %v2354, 0.0
        %v2371 = vmax.f32 %v2355, 0.0
        %v2372 = vmax.f32 %v2356, 0.0
        %v2373 = vmax.f32 %v2357, 0.0
        %v2374 = vmax.f32 %v2358, 0.0
        %v2375 = vmax.f32 %v2359, 0.0
        %v2376 = vmax.f32 %v2360, 0.0
        %v2377 = vmax.f32 %v2361, 0.0
        %v2378 = vmax.f32 %v2362, 0.0
        %v2379 = vmax.f32 %v2363, 0.0
        %v2380 = vpack.c.bf16 %v2364, %v2364
        %v2381 = vpack.c.bf16 %v2365, %v2365
        %v2382 = vpack.c.bf16 %v2366, %v2366
        %v2383 = vpack.c.bf16 %v2367, %v2367
        %v2384 = vpack.c.bf16 %v2368, %v2368
        %v2385 = vpack.c.bf16 %v2369, %v2369
        %v2386 = vpack.c.bf16 %v2370, %v2370
        %v2387 = vpack.c.bf16 %v2371, %v2371
        %v2388 = vpack.c.bf16 %v2372, %v2372
        %v2389 = vpack.c.bf16 %v2373, %v2373
        %v2390 = vpack.c.bf16 %v2374, %v2374
        %v2391 = vpack.c.bf16 %v2375, %v2375
        %v2392 = vpack.c.bf16 %v2376, %v2376
        %v2393 = vpack.c.bf16 %v2377, %v2377
        %v2394 = vpack.c.bf16 %v2378, %v2378
        %v2395 = vpack.c.bf16 %v2379, %v2379
        %v2412 = vcombine.low %v2380, %v2381
        %v2413 = vcombine.low %v2382, %v2383
        %v2414 = vcombine.low %v2384, %v2385
        %v2415 = vcombine.low %v2386, %v2387
        %v2417 = vunpack.c.l.s4 1966171168
        %v2418 = vunpack.c.0.s8 %v2417
        %v2419 = vlaneseq
        %v2420 = vshrl.u32 %v2419, 7
        %v2421 = vsub.s32 %v2418, %v2420
        %v2422 = vrot.slane %v2412, %v2421
        %v2424 = vunpack.c.l.s4 1966171168
        %v2425 = vunpack.c.0.s8 %v2424
        %v2426 = vlaneseq
        %v2427 = vshrl.u32 %v2426, 7
        %v2428 = vsub.s32 %v2425, %v2427
        %v2429 = vrot.slane %v2413, %v2428
        %v2431 = vunpack.c.l.s4 1966171168
        %v2432 = vunpack.c.0.s8 %v2431
        %v2433 = vlaneseq
        %v2434 = vshrl.u32 %v2433, 7
        %v2435 = vsub.s32 %v2432, %v2434
        %v2436 = vrot.slane %v2414, %v2435
        %v2438 = vunpack.c.l.s4 1966171168
        %v2439 = vunpack.c.0.s8 %v2438
        %v2440 = vlaneseq
        %v2441 = vshrl.u32 %v2440, 7
        %v2442 = vsub.s32 %v2439, %v2441
        %v2443 = vrot.slane %v2415, %v2442
        %v2444 = vcombine.low %v2422, %v2429
        %v2445 = vcombine.low %v2436, %v2443
        %v2447 = vunpack.c.l.s4 1966171168
        %v2448 = vunpack.c.0.s8 %v2447
        %v2449 = vlaneseq
        %v2450 = vshrl.u32 %v2449, 7
        %v2451 = vsub.s32 %v2448, %v2450
        %v2452 = vrot.slane %v2444, %v2451
        %v2454 = vunpack.c.l.s4 1966171168
        %v2455 = vunpack.c.0.s8 %v2454
        %v2456 = vlaneseq
        %v2457 = vshrl.u32 %v2456, 7
        %v2458 = vsub.s32 %v2455, %v2457
        %v2459 = vrot.slane %v2445, %v2458
        %v2460 = vcombine.low %v2452, %v2459
        %v2461 = vcombine.low %v2388, %v2389
        %v2462 = vcombine.low %v2390, %v2391
        %v2463 = vcombine.low %v2392, %v2393
        %v2464 = vcombine.low %v2394, %v2395
        %v2466 = vunpack.c.l.s4 1966171168
        %v2467 = vunpack.c.0.s8 %v2466
        %v2468 = vlaneseq
        %v2469 = vshrl.u32 %v2468, 7
        %v2470 = vsub.s32 %v2467, %v2469
        %v2471 = vrot.slane %v2461, %v2470
        %v2473 = vunpack.c.l.s4 1966171168
        %v2474 = vunpack.c.0.s8 %v2473
        %v2475 = vlaneseq
        %v2476 = vshrl.u32 %v2475, 7
        %v2477 = vsub.s32 %v2474, %v2476
        %v2478 = vrot.slane %v2462, %v2477
        %v2480 = vunpack.c.l.s4 1966171168
        %v2481 = vunpack.c.0.s8 %v2480
        %v2482 = vlaneseq
        %v2483 = vshrl.u32 %v2482, 7
        %v2484 = vsub.s32 %v2481, %v2483
        %v2485 = vrot.slane %v2463, %v2484
        %v2487 = vunpack.c.l.s4 1966171168
        %v2488 = vunpack.c.0.s8 %v2487
        %v2489 = vlaneseq
        %v2490 = vshrl.u32 %v2489, 7
        %v2491 = vsub.s32 %v2488, %v2490
        %v2492 = vrot.slane %v2464, %v2491
        %v2493 = vcombine.low %v2471, %v2478
        %v2494 = vcombine.low %v2485, %v2492
        %v2496 = vunpack.c.l.s4 1966171168
        %v2497 = vunpack.c.0.s8 %v2496
        %v2498 = vlaneseq
        %v2499 = vshrl.u32 %v2498, 7
        %v2500 = vsub.s32 %v2497, %v2499
        %v2501 = vrot.slane %v2493, %v2500
        %v2503 = vunpack.c.l.s4 1966171168
        %v2504 = vunpack.c.0.s8 %v2503
        %v2505 = vlaneseq
        %v2506 = vshrl.u32 %v2505, 7
        %v2507 = vsub.s32 %v2504, %v2506
        %v2508 = vrot.slane %v2494, %v2507
        %v2509 = vcombine.low %v2501, %v2508
        %2512 = vst [vmem:[%s385] sm:$0xff] %v2460
        %2513 = vst [vmem:[%s385 + $0x8] sm:$0xff] %v2509
        %s2514 = smul.u32 16, %s25
        %p2515 = scmp.lt.s32.totalorder %s2514, 31
        %s2516 = scalar_select %p2515, %s2514, 31
        %s2517 = scalar_lea.vmem %s6, %s2516
        // Predicated region
        $region69: #{generator_forward.3} parent=43 // pred_check
          %p2518 = pneg %p184
        $region70: #{generator_forward.3} parent=43 // pred_check_branch
          %2520 = sbr.rel (%p2518) target = $region72
        $region71: #{generator_forward.3} parent=43 // pred_region
          %s2521 = smul.u32 16, %s25
        $region72: #{generator_forward.3} parent=43 // pred_fallthru
          _
      $region44: #{generator_forward.3} parent=5 // pred_fallthru
        _
      %p2522 = scmp.le.s32.totalorder 2, %s20
      // Predicated region
      $region73: #{generator_forward.3} parent=5 // pred_check
        %p2523 = pneg %p2522
      $region74: #{generator_forward.3} parent=5 // pred_check_branch
        %2525 = sbr.rel (%p2523) target = $region76
      $region75: #{generator_forward.3} parent=5 // pred_region
        %s2526 = ssub.s32 %s20, 2
        // Predicated region
        $region77: #{generator_forward.3} parent=75 // pred_check
          %p2527 = pneg %p190
        $region78: #{generator_forward.3} parent=75 // pred_check_branch
          %2529 = sbr.rel (%p2527) target = $region80
        $region79: #{generator_forward.3} parent=75 // pred_region
          %s2530 = smul.u32 16, %s26
          %p2531 = scmp.lt.s32.totalorder %s2530, 31
          %s2532 = scalar_select %p2531, %s2530, 31
          %s2533 = scalar_lea.vmem %s6, %s2532
        $region80: #{generator_forward.3} parent=75 // pred_fallthru
          _
      $region76: #{generator_forward.3} parent=5 // pred_fallthru
        _
    $region6: #{generator_forward.3} parent=1 // loop_footer
      %s24 = sadd.s32 1, %s20
    $region7: #{generator_forward.3} parent=1 // loop_footer_branch
      %19 = sbr.rel target = $region3
    $region8: #{generator_forward.3} parent=1 // loop_exit
      _
    %2534 = vsyncpa [#allocation3], 1
    %s2535 = scalar_lea.sflag [#allocation3], 1
    %2536 = vsyncpa %s2535, 1
    %2537 = vsyncpa [#allocation5], 1
    %2538 = vsyncpa [#allocation8], 1
    %s2539 = scalar_lea.sflag [#allocation8], 1
    %2540 = vsyncpa %s2539, 1
    %2541 = vsyncpa [#allocation11], 1
    %s2542 = scalar_lea.sflag [#allocation11], 1
    %2543 = vsyncpa %s2542, 1

// kernel: generator_forward.5
$region0: #{generator_forward.5}
  #allocation0 [shape = 'u32[]', space=smem, size = 0x4, offset = 0x4, fixed_abs, tag = 'smem constant byte address 0x4 - core index']
  #allocation1 [shape = 'u32[144,128]{1,0:T(1,128)}', space=vmem, size = 0x12000, scoped, tag = 'internal scratch']
  %s0 = inlined_call_operand.vmem [shape: bf16[128,1152], index: 0, kind: input, shape index: {}]
  %s1 = inlined_call_operand.vmem [shape: bf16[1152,128], index: 1, kind: input, shape index: {}]
  %s2 = inlined_call_operand.vmem [shape: f32[1,128], index: 2, kind: input, shape index: {}]
  %s3 = inlined_call_operand.vmem [shape: f32[128,128], index: 3, kind: output, shape index: {}]
  %s4 = sld [smem:[#allocation0]]
  $region45: #{generator_forward.5} parent=0
    _
  %s6 = ssub.s32 1, %s4
  %s7 = scalar_select 0, %s6, %s4
  loop: start=0, step=1, limit=4
  $region2: #{generator_forward.5} parent=0 // loop_pre_header
    _
  $region3: #{generator_forward.5} parent=0 // loop_header
    %s9 = sphi 0, %s13
    %p10 = scmp.ge.s32.totalorder %s9, 4
    %s19 = sphi 0, %s21
    %s22 = sphi 0, %s19
    %s23 = sphi 0, %s22
    %s39 = sphi 0, %s23
    %s43 = sphi 0, %s43
    %s45 = sphi 0, %s43
    %s46 = sphi 0, %s45
    %s60 = sphi 0, %s46
    %s64 = sphi 0, %s64
    %s66 = sphi 0, %s64
    %s67 = sphi 0, %s66
    %s81 = sphi 0, %s67
    %s87 = sphi 0, %s89
    %s90 = sphi 0, %s87
    %s91 = sphi 0, %s90
    %s107 = sphi 0, %s91
  $region4: #{generator_forward.5} parent=0 // loop_header_branch
    %12 = sbr.rel (%p10) target = $region8
  $region5: #{generator_forward.5} parent=0 // loop_body
    %s14 = ssub.s32 %s9, 1
    %s15 = ssub.s32 %s9, 2
    %s16 = sadd.s32 %s9, 1
    %s17 = ssub.s32 %s9, %s16
    %p18 = scmp.eq.s32.totalorder %s17, 0
    %s20 = sadd.s32 %s19, 1
    %s21 = scalar_select %p18, %s19, %s20
    %p24 = pneg %p18
    %p25 = scmp.eq.s32.totalorder %s9, 1
    %p26 = por %p24, %p25
    %p27 = scmp.ne.s32.totalorder %s19, %s22
    %p28 = scmp.eq.s32.totalorder %s9, 0
    %p29 = por %p27, %p28
    %p30 = scmp.ne.s32.totalorder %s19, %s22
    %p31 = scmp.eq.s32.totalorder %s14, 1
    %p32 = por %p30, %p31
    %p33 = scmp.ne.s32.totalorder %s22, %s23
    %p34 = scmp.eq.s32.totalorder %s14, 0
    %p35 = por %p33, %p34
    %p36 = scmp.ne.s32.totalorder %s22, %s23
    %p37 = scmp.eq.s32.totalorder %s15, 1
    %p38 = por %p36, %p37
    %p40 = scmp.ne.s32.totalorder %s23, %s39
    %p41 = scmp.eq.s32.totalorder %s15, 0
    %p42 = por %p40, %p41
    %s44 = sadd.s32 %s43, 1
    %p47 = scmp.eq.s32.totalorder %s9, 1
    %p48 = scmp.ne.s32.totalorder %s43, %s45
    %p49 = scmp.eq.s32.totalorder %s9, 0
    %p50 = por %p48, %p49
    %p51 = scmp.ne.s32.totalorder %s43, %s45
    %p52 = scmp.eq.s32.totalorder %s14, 1
    %p53 = por %p51, %p52
    %p54 = scmp.ne.s32.totalorder %s45, %s46
    %p55 = scmp.eq.s32.totalorder %s14, 0
    %p56 = por %p54, %p55
    %p57 = scmp.ne.s32.totalorder %s45, %s46
    %p58 = scmp.eq.s32.totalorder %s15, 1
    %p59 = por %p57, %p58
    %p61 = scmp.ne.s32.totalorder %s46, %s60
    %p62 = scmp.eq.s32.totalorder %s15, 0
    %p63 = por %p61, %p62
    %s65 = sadd.s32 %s64, 1
    %p68 = scmp.eq.s32.totalorder %s9, 1
    %p69 = scmp.ne.s32.totalorder %s64, %s66
    %p70 = scmp.eq.s32.totalorder %s9, 0
    %p71 = por %p69, %p70
    %p72 = scmp.ne.s32.totalorder %s64, %s66
    %p73 = scmp.eq.s32.totalorder %s14, 1
    %p74 = por %p72, %p73
    %p75 = scmp.ne.s32.totalorder %s66, %s67
    %p76 = scmp.eq.s32.totalorder %s14, 0
    %p77 = por %p75, %p76
    %p78 = scmp.ne.s32.totalorder %s66, %s67
    %p79 = scmp.eq.s32.totalorder %s15, 1
    %p80 = por %p78, %p79
    %p82 = scmp.ne.s32.totalorder %s67, %s81
    %p83 = scmp.eq.s32.totalorder %s15, 0
    %p84 = por %p82, %p83
    %s85 = ssub.s32 %s9, %s16
    %p86 = scmp.eq.s32.totalorder %s85, 0
    %s88 = sadd.s32 %s87, 1
    %s89 = scalar_select %p86, %s87, %s88
    %p92 = pneg %p86
    %p93 = scmp.eq.s32.totalorder %s9, 1
    %p94 = por %p92, %p93
    %p95 = scmp.ne.s32.totalorder %s87, %s90
    %p96 = scmp.eq.s32.totalorder %s9, 0
    %p97 = por %p95, %p96
    %p98 = scmp.ne.s32.totalorder %s87, %s90
    %p99 = scmp.eq.s32.totalorder %s14, 1
    %p100 = por %p98, %p99
    %p101 = scmp.ne.s32.totalorder %s90, %s91
    %p102 = scmp.eq.s32.totalorder %s14, 0
    %p103 = por %p101, %p102
    %p104 = scmp.ne.s32.totalorder %s90, %s91
    %p105 = scmp.eq.s32.totalorder %s15, 1
    %p106 = por %p104, %p105
    %p108 = scmp.ne.s32.totalorder %s91, %s107
    %p109 = scmp.eq.s32.totalorder %s15, 0
    %p110 = por %p108, %p109
    %p111 = scmp.le.s32.totalorder 1, %s9
    %p112 = scmp.lt.s32.totalorder %s9, 3
    %p113 = pnand %p111, %p112
    %p114 = pneg %p113
    // Predicated region
    $region9: #{generator_forward.5} parent=5 // pred_check
      _
    $region10: #{generator_forward.5} parent=5 // pred_check_branch
      %116 = sbr.rel (%p113) target = $region12
    $region11: #{generator_forward.5} parent=5 // pred_region
      %s117 = ssub.s32 %s9, 1
      // Predicated region
      $region13: #{generator_forward.5} parent=11 // pred_check
        %p118 = pneg %p56
      $region14: #{generator_forward.5} parent=11 // pred_check_branch
        %120 = sbr.rel (%p118) target = $region16
      $region15: #{generator_forward.5} parent=11 // pred_region
        _
      $region16: #{generator_forward.5} parent=11 // pred_fallthru
        _
      // Predicated region
      $region17: #{generator_forward.5} parent=11 // pred_check
        %p121 = pneg %p77
      $region18: #{generator_forward.5} parent=11 // pred_check_branch
        %123 = sbr.rel (%p121) target = $region20
      $region19: #{generator_forward.5} parent=11 // pred_region
        _
      $region20: #{generator_forward.5} parent=11 // pred_fallthru
        _
    $region12: #{generator_forward.5} parent=5 // pred_fallthru
      _
    %p124 = scmp.lt.s32.totalorder %s9, 2
    // Predicated region
    $region21: #{generator_forward.5} parent=5 // pred_check
      %p125 = pneg %p124
    $region22: #{generator_forward.5} parent=5 // pred_check_branch
      %127 = sbr.rel (%p125) target = $region24
    $region23: #{generator_forward.5} parent=5 // pred_region
      // Predicated region
      $region25: #{generator_forward.5} parent=23 // pred_check
        %p128 = pneg %p29
      $region26: #{generator_forward.5} parent=23 // pred_check_branch
        %130 = sbr.rel (%p128) target = $region28
      $region27: #{generator_forward.5} parent=23 // pred_region
        %s131 = smul.u32 8, %s9
        %p132 = scmp.lt.s32.totalorder %s131, 15
        %s133 = scalar_select %p132, %s131, 15
        %s134 = smul.addr %s133, 9
        %s135 = smul.addr %s134, 4
        %s136 = scalar_lea.vmem %s0, %s135
        %s137 = smul.u32 8, %s9
      $region28: #{generator_forward.5} parent=23 // pred_fallthru
        _
    $region24: #{generator_forward.5} parent=5 // pred_fallthru
      _
    %p138 = scmp.le.s32.totalorder 1, %s9
    %p139 = scmp.lt.s32.totalorder %s9, 3
    %p140 = pnand %p138, %p139
    %p141 = pneg %p140
    // Predicated region
    $region29: #{generator_forward.5} parent=5 // pred_check
      _
    $region30: #{generator_forward.5} parent=5 // pred_check_branch
      %143 = sbr.rel (%p140) target = $region32
    $region31: #{generator_forward.5} parent=5 // pred_region
      %s144 = ssub.s32 %s9, 1
      %s145 = smul.u32 8, %s14
      %p146 = scmp.lt.s32.totalorder %s145, 15
      %s147 = scalar_select %p146, %s145, 15
      %s148 = smul.addr %s147, 9
      %s149 = smul.addr %s148, 4
      %s150 = scalar_lea.vmem %s0, %s149
      %p151 = pneg %p35
      %p152 = pneg %p32
      %p153 = pneg %p56
      %p154 = pneg %p53
      %p155 = pneg %p77
      %p156 = pneg %p74
      %p157 = pneg %p103
      %p158 = pneg %p100
      %s159 = smul.u32 8, %s14
      %p160 = scmp.lt.s32.totalorder %s159, 15
      %s161 = scalar_select %p160, %s159, 15
      %s162 = smul.addr %s161, 8
      %s163 = scalar_lea.vmem %s3, %s162
      %s164 = smul.u32 8, %s14
      %p165 = scmp.lt.s32.totalorder %s164, 15
      %s166 = scalar_select %p165, %s164, 15
      %s167 = smul.addr %s166, 9
      %s168 = smul.addr %s167, 4
      %s169 = scalar_lea.vmem %s0, %s168
      %s170 = smul.u32 8, %s14
      %s171 = smul.u32 8, %s14
      %p172 = scmp.lt.s32.totalorder %s171, 15
      %s173 = scalar_select %p172, %s171, 15
      %s174 = smul.addr %s173, 8
      %s175 = scalar_lea.vmem %s3, %s174
      %s176 = smul.u32 8, %s14
      %v178 = vld [vmem:[%s169] sm:$0xff]
      %v179 = vld [vmem:[%s169 + $0x8] sm:$0xff]
      %v180 = vld [vmem:[%s169 + $0x10] sm:$0xff]
      %v181 = vld [vmem:[%s169 + $0x18] sm:$0xff]
      %v182 = vld [vmem:[%s169 + $0x20] sm:$0xf]
      %v183 = vld [vmem:[%s169 + $0x24] sm:$0xff]
      %v184 = vld [vmem:[%s169 + $0x2c] sm:$0xff]
      %v185 = vld [vmem:[%s169 + $0x34] sm:$0xff]
      %v186 = vld [vmem:[%s169 + $0x3c] sm:$0xff]
      %v187 = vld [vmem:[%s169 + $0x44] sm:$0xf]
      %v188 = vld [vmem:[%s169 + $0x48] sm:$0xff]
      %v189 = vld [vmem:[%s169 + $0x50] sm:$0xff]
      %v190 = vld [vmem:[%s169 + $0x58] sm:$0xff]
      %v191 = vld [vmem:[%s169 + $0x60] sm:$0xff]
      %v192 = vld [vmem:[%s169 + $0x68] sm:$0xf]
      %v193 = vld [vmem:[%s169 + $0x6c] sm:$0xff]
      %v194 = vld [vmem:[%s169 + $0x74] sm:$0xff]
      %v195 = vld [vmem:[%s169 + $0x7c] sm:$0xff]
      %v196 = vld [vmem:[%s169 + $0x84] sm:$0xff]
      %v197 = vld [vmem:[%s169 + $0x8c] sm:$0xf]
      %v198 = vld [vmem:[%s169 + $0x90] sm:$0xff]
      %v199 = vld [vmem:[%s169 + $0x98] sm:$0xff]
      %v200 = vld [vmem:[%s169 + $0xa0] sm:$0xff]
      %v201 = vld [vmem:[%s169 + $0xa8] sm:$0xff]
      %v202 = vld [vmem:[%s169 + $0xb0] sm:$0xf]
      %v203 = vld [vmem:[%s169 + $0xb4] sm:$0xff]
      %v204 = vld [vmem:[%s169 + $0xbc] sm:$0xff]
      %v205 = vld [vmem:[%s169 + $0xc4] sm:$0xff]
      %v206 = vld [vmem:[%s169 + $0xcc] sm:$0xff]
      %v207 = vld [vmem:[%s169 + $0xd4] sm:$0xf]
      %v208 = vld [vmem:[%s169 + $0xd8] sm:$0xff]
      %v209 = vld [vmem:[%s169 + $0xe0] sm:$0xff]
      %v210 = vld [vmem:[%s169 + $0xe8] sm:$0xff]
      %v211 = vld [vmem:[%s169 + $0xf0] sm:$0xff]
      %v212 = vld [vmem:[%s169 + $0xf8] sm:$0xf]
      %v213 = vld [vmem:[%s169 + $0xfc] sm:$0xff]
      %v214 = vld [vmem:[%s169 + $0x104] sm:$0xff]
      %v215 = vld [vmem:[%s169 + $0x10c] sm:$0xff]
      %v216 = vld [vmem:[%s169 + $0x114] sm:$0xff]
      %v217 = vld [vmem:[%s169 + $0x11c] sm:$0xf]
      %v218 = vld [vmem:[%s1] sm:$0xf]
      %v219 = vld [vmem:[%s1 + $0x4] sm:$0xf]
      %v220 = vld [vmem:[%s1 + $0x8] sm:$0xf]
      %v221 = vld [vmem:[%s1 + $0xc] sm:$0xf]
      %v222 = vld [vmem:[%s1 + $0x10] sm:$0xf]
      %v223 = vld [vmem:[%s1 + $0x14] sm:$0xf]
      %v224 = vld [vmem:[%s1 + $0x18] sm:$0xf]
      %v225 = vld [vmem:[%s1 + $0x1c] sm:$0xf]
      %v226 = vld [vmem:[%s1 + $0x20] sm:$0xf]
      %v227 = vld [vmem:[%s1 + $0x24] sm:$0xf]
      %v228 = vld [vmem:[%s1 + $0x28] sm:$0xf]
      %v229 = vld [vmem:[%s1 + $0x2c] sm:$0xf]
      %v230 = vld [vmem:[%s1 + $0x30] sm:$0xf]
      %v231 = vld [vmem:[%s1 + $0x34] sm:$0xf]
      %v232 = vld [vmem:[%s1 + $0x38] sm:$0xf]
      %v233 = vld [vmem:[%s1 + $0x3c] sm:$0xf]
      %v234 = vld [vmem:[%s1 + $0x40] sm:$0xf]
      %v235 = vld [vmem:[%s1 + $0x44] sm:$0xf]
      %v236 = vld [vmem:[%s1 + $0x48] sm:$0xf]
      %v237 = vld [vmem:[%s1 + $0x4c] sm:$0xf]
      %v238 = vld [vmem:[%s1 + $0x50] sm:$0xf]
      %v239 = vld [vmem:[%s1 + $0x54] sm:$0xf]
      %v240 = vld [vmem:[%s1 + $0x58] sm:$0xf]
      %v241 = vld [vmem:[%s1 + $0x5c] sm:$0xf]
      %v242 = vld [vmem:[%s1 + $0x60] sm:$0xf]
      %v243 = vld [vmem:[%s1 + $0x64] sm:$0xf]
      %v244 = vld [vmem:[%s1 + $0x68] sm:$0xf]
      %v245 = vld [vmem:[%s1 + $0x6c] sm:$0xf]
      %v246 = vld [vmem:[%s1 + $0x70] sm:$0xf]
      %v247 = vld [vmem:[%s1 + $0x74] sm:$0xf]
      %v248 = vld [vmem:[%s1 + $0x78] sm:$0xf]
      %v249 = vld [vmem:[%s1 + $0x7c] sm:$0xf]
      %v250 = vld [vmem:[%s1 + $0x80] sm:$0xf]
      %v251 = vld [vmem:[%s1 + $0x84] sm:$0xf]
      %v252 = vld [vmem:[%s1 + $0x88] sm:$0xf]
      %v253 = vld [vmem:[%s1 + $0x8c] sm:$0xf]
      %v254 = vld [vmem:[%s1 + $0x90] sm:$0xf]
      %v255 = vld [vmem:[%s1 + $0x94] sm:$0xf]
      %v256 = vld [vmem:[%s1 + $0x98] sm:$0xf]
      %v257 = vld [vmem:[%s1 + $0x9c] sm:$0xf]
      %v258 = vld [vmem:[%s1 + $0xa0] sm:$0xf]
      %v259 = vld [vmem:[%s1 + $0xa4] sm:$0xf]
      %v260 = vld [vmem:[%s1 + $0xa8] sm:$0xf]
      %v261 = vld [vmem:[%s1 + $0xac] sm:$0xf]
      %v262 = vld [vmem:[%s1 + $0xb0] sm:$0xf]
      %v263 = vld [vmem:[%s1 + $0xb4] sm:$0xf]
      %v264 = vld [vmem:[%s1 + $0xb8] sm:$0xf]
      %v265 = vld [vmem:[%s1 + $0xbc] sm:$0xf]
      %v266 = vld [vmem:[%s1 + $0xc0] sm:$0xf]
      %v267 = vld [vmem:[%s1 + $0xc4] sm:$0xf]
      %v268 = vld [vmem:[%s1 + $0xc8] sm:$0xf]
      %v269 = vld [vmem:[%s1 + $0xcc] sm:$0xf]
      %v270 = vld [vmem:[%s1 + $0xd0] sm:$0xf]
      %v271 = vld [vmem:[%s1 + $0xd4] sm:$0xf]
      %v272 = vld [vmem:[%s1 + $0xd8] sm:$0xf]
      %v273 = vld [vmem:[%s1 + $0xdc] sm:$0xf]
      %v274 = vld [vmem:[%s1 + $0xe0] sm:$0xf]
      %v275 = vld [vmem:[%s1 + $0xe4] sm:$0xf]
      %v276 = vld [vmem:[%s1 + $0xe8] sm:$0xf]
      %v277 = vld [vmem:[%s1 + $0xec] sm:$0xf]
      %v278 = vld [vmem:[%s1 + $0xf0] sm:$0xf]
      %v279 = vld [vmem:[%s1 + $0xf4] sm:$0xf]
      %v280 = vld [vmem:[%s1 + $0xf8] sm:$0xf]
      %v281 = vld [vmem:[%s1 + $0xfc] sm:$0xf]
      %v282 = vld [vmem:[%s1 + $0x100] sm:$0xf]
      %v283 = vld [vmem:[%s1 + $0x104] sm:$0xf]
      %v284 = vld [vmem:[%s1 + $0x108] sm:$0xf]
      %v285 = vld [vmem:[%s1 + $0x10c] sm:$0xf]
      %v286 = vld [vmem:[%s1 + $0x110] sm:$0xf]
      %v287 = vld [vmem:[%s1 + $0x114] sm:$0xf]
      %v288 = vld [vmem:[%s1 + $0x118] sm:$0xf]
      %v289 = vld [vmem:[%s1 + $0x11c] sm:$0xf]
      %v290 = vld [vmem:[%s1 + $0x120] sm:$0xf]
      %v291 = vld [vmem:[%s1 + $0x124] sm:$0xf]
      %v292 = vld [vmem:[%s1 + $0x128] sm:$0xf]
      %v293 = vld [vmem:[%s1 + $0x12c] sm:$0xf]
      %v294 = vld [vmem:[%s1 + $0x130] sm:$0xf]
      %v295 = vld [vmem:[%s1 + $0x134] sm:$0xf]
      %v296 = vld [vmem:[%s1 + $0x138] sm:$0xf]
      %v297 = vld [vmem:[%s1 + $0x13c] sm:$0xf]
      %v298 = vld [vmem:[%s1 + $0x140] sm:$0xf]
      %v299 = vld [vmem:[%s1 + $0x144] sm:$0xf]
      %v300 = vld [vmem:[%s1 + $0x148] sm:$0xf]
      %v301 = vld [vmem:[%s1 + $0x14c] sm:$0xf]
      %v302 = vld [vmem:[%s1 + $0x150] sm:$0xf]
      %v303 = vld [vmem:[%s1 + $0x154] sm:$0xf]
      %v304 = vld [vmem:[%s1 + $0x158] sm:$0xf]
      %v305 = vld [vmem:[%s1 + $0x15c] sm:$0xf]
      %v306 = vld [vmem:[%s1 + $0x160] sm:$0xf]
      %v307 = vld [vmem:[%s1 + $0x164] sm:$0xf]
      %v308 = vld [vmem:[%s1 + $0x168] sm:$0xf]
      %v309 = vld [vmem:[%s1 + $0x16c] sm:$0xf]
      %v310 = vld [vmem:[%s1 + $0x170] sm:$0xf]
      %v311 = vld [vmem:[%s1 + $0x174] sm:$0xf]
      %v312 = vld [vmem:[%s1 + $0x178] sm:$0xf]
      %v313 = vld [vmem:[%s1 + $0x17c] sm:$0xf]
      %v314 = vld [vmem:[%s1 + $0x180] sm:$0xf]
      %v315 = vld [vmem:[%s1 + $0x184] sm:$0xf]
      %v316 = vld [vmem:[%s1 + $0x188] sm:$0xf]
      %v317 = vld [vmem:[%s1 + $0x18c] sm:$0xf]
      %v318 = vld [vmem:[%s1 + $0x190] sm:$0xf]
      %v319 = vld [vmem:[%s1 + $0x194] sm:$0xf]
      %v320 = vld [vmem:[%s1 + $0x198] sm:$0xf]
      %v321 = vld [vmem:[%s1 + $0x19c] sm:$0xf]
      %v322 = vld [vmem:[%s1 + $0x1a0] sm:$0xf]
      %v323 = vld [vmem:[%s1 + $0x1a4] sm:$0xf]
      %v324 = vld [vmem:[%s1 + $0x1a8] sm:$0xf]
      %v325 = vld [vmem:[%s1 + $0x1ac] sm:$0xf]
      %v326 = vld [vmem:[%s1 + $0x1b0] sm:$0xf]
      %v327 = vld [vmem:[%s1 + $0x1b4] sm:$0xf]
      %v328 = vld [vmem:[%s1 + $0x1b8] sm:$0xf]
      %v329 = vld [vmem:[%s1 + $0x1bc] sm:$0xf]
      %v330 = vld [vmem:[%s1 + $0x1c0] sm:$0xf]
      %v331 = vld [vmem:[%s1 + $0x1c4] sm:$0xf]
      %v332 = vld [vmem:[%s1 + $0x1c8] sm:$0xf]
      %v333 = vld [vmem:[%s1 + $0x1cc] sm:$0xf]
      %v334 = vld [vmem:[%s1 + $0x1d0] sm:$0xf]
      %v335 = vld [vmem:[%s1 + $0x1d4] sm:$0xf]
      %v336 = vld [vmem:[%s1 + $0x1d8] sm:$0xf]
      %v337 = vld [vmem:[%s1 + $0x1dc] sm:$0xf]
      %v338 = vld [vmem:[%s1 + $0x1e0] sm:$0xf]
      %v339 = vld [vmem:[%s1 + $0x1e4] sm:$0xf]
      %v340 = vld [vmem:[%s1 + $0x1e8] sm:$0xf]
      %v341 = vld [vmem:[%s1 + $0x1ec] sm:$0xf]
      %v342 = vld [vmem:[%s1 + $0x1f0] sm:$0xf]
      %v343 = vld [vmem:[%s1 + $0x1f4] sm:$0xf]
      %v344 = vld [vmem:[%s1 + $0x1f8] sm:$0xf]
      %v345 = vld [vmem:[%s1 + $0x1fc] sm:$0xf]
      %v346 = vld [vmem:[%s1 + $0x200] sm:$0xf]
      %v347 = vld [vmem:[%s1 + $0x204] sm:$0xf]
      %v348 = vld [vmem:[%s1 + $0x208] sm:$0xf]
      %v349 = vld [vmem:[%s1 + $0x20c] sm:$0xf]
      %v350 = vld [vmem:[%s1 + $0x210] sm:$0xf]
      %v351 = vld [vmem:[%s1 + $0x214] sm:$0xf]
      %v352 = vld [vmem:[%s1 + $0x218] sm:$0xf]
      %v353 = vld [vmem:[%s1 + $0x21c] sm:$0xf]
      %v354 = vld [vmem:[%s1 + $0x220] sm:$0xf]
      %v355 = vld [vmem:[%s1 + $0x224] sm:$0xf]
      %v356 = vld [vmem:[%s1 + $0x228] sm:$0xf]
      %v357 = vld [vmem:[%s1 + $0x22c] sm:$0xf]
      %v358 = vld [vmem:[%s1 + $0x230] sm:$0xf]
      %v359 = vld [vmem:[%s1 + $0x234] sm:$0xf]
      %v360 = vld [vmem:[%s1 + $0x238] sm:$0xf]
      %v361 = vld [vmem:[%s1 + $0x23c] sm:$0xf]
      %v362 = vld [vmem:[%s2] sm:$0x1]
      %v364 = vlaneseq
      %v365 = vshrl.u32 %v364, 7
      %v366 = vsub.s32 0, %v365
      %v367 = vrot.slane %v362, %v366
      %v409 = vunpack.c.l.b16 %v178
      %v410 = vunpack.c.h.b16 %v178
      %v411 = vunpack.c.l.b16 %v179
      %v412 = vunpack.c.h.b16 %v179
      %v413 = vunpack.c.l.b16 %v180
      %v414 = vunpack.c.h.b16 %v180
      %v415 = vunpack.c.l.b16 %v181
      %v416 = vunpack.c.h.b16 %v181
      %v417 = vunpack.c.l.b16 %v182
      %v418 = vunpack.c.l.b16 %v183
      %v419 = vunpack.c.h.b16 %v183
      %v420 = vunpack.c.l.b16 %v184
      %v421 = vunpack.c.h.b16 %v184
      %v422 = vunpack.c.l.b16 %v185
      %v423 = vunpack.c.h.b16 %v185
      %v424 = vunpack.c.l.b16 %v186
      %v425 = vunpack.c.h.b16 %v186
      %v426 = vunpack.c.l.b16 %v187
      %v427 = vunpack.c.l.b16 %v188
      %v428 = vunpack.c.h.b16 %v188
      %v429 = vunpack.c.l.b16 %v189
      %v430 = vunpack.c.h.b16 %v189
      %v431 = vunpack.c.l.b16 %v190
      %v432 = vunpack.c.h.b16 %v190
      %v433 = vunpack.c.l.b16 %v191
      %v434 = vunpack.c.h.b16 %v191
      %v435 = vunpack.c.l.b16 %v192
      %v436 = vunpack.c.l.b16 %v193
      %v437 = vunpack.c.h.b16 %v193
      %v438 = vunpack.c.l.b16 %v194
      %v439 = vunpack.c.h.b16 %v194
      %v440 = vunpack.c.l.b16 %v195
      %v441 = vunpack.c.h.b16 %v195
      %v442 = vunpack.c.l.b16 %v196
      %v443 = vunpack.c.h.b16 %v196
      %v444 = vunpack.c.l.b16 %v197
      %v445 = vunpack.c.l.b16 %v198
      %v446 = vunpack.c.h.b16 %v198
      %v447 = vunpack.c.l.b16 %v199
      %v448 = vunpack.c.h.b16 %v199
      %v449 = vunpack.c.l.b16 %v200
      %v450 = vunpack.c.h.b16 %v200
      %v451 = vunpack.c.l.b16 %v201
      %v452 = vunpack.c.h.b16 %v201
      %v453 = vunpack.c.l.b16 %v202
      %v454 = vunpack.c.l.b16 %v203
      %v455 = vunpack.c.h.b16 %v203
      %v456 = vunpack.c.l.b16 %v204
      %v457 = vunpack.c.h.b16 %v204
      %v458 = vunpack.c.l.b16 %v205
      %v459 = vunpack.c.h.b16 %v205
      %v460 = vunpack.c.l.b16 %v206
      %v461 = vunpack.c.h.b16 %v206
      %v462 = vunpack.c.l.b16 %v207
      %v463 = vunpack.c.l.b16 %v208
      %v464 = vunpack.c.h.b16 %v208
      %v465 = vunpack.c.l.b16 %v209
      %v466 = vunpack.c.h.b16 %v209
      %v467 = vunpack.c.l.b16 %v210
      %v468 = vunpack.c.h.b16 %v210
      %v469 = vunpack.c.l.b16 %v211
      %v470 = vunpack.c.h.b16 %v211
      %v471 = vunpack.c.l.b16 %v212
      %v472 = vunpack.c.l.b16 %v213
      %v473 = vunpack.c.h.b16 %v213
      %v474 = vunpack.c.l.b16 %v214
      %v475 = vunpack.c.h.b16 %v214
      %v476 = vunpack.c.l.b16 %v215
      %v477 = vunpack.c.h.b16 %v215
      %v478 = vunpack.c.l.b16 %v216
      %v479 = vunpack.c.h.b16 %v216
      %v480 = vunpack.c.l.b16 %v217
      %v481 = vpack.c.b16 %v418, %v409
      %v482 = vpack.c.b16 %v419, %v410
      %v483 = vpack.c.b16 %v420, %v411
      %v484 = vpack.c.b16 %v421, %v412
      %v485 = vpack.c.b16 %v422, %v413
      %v486 = vpack.c.b16 %v423, %v414
      %v487 = vpack.c.b16 %v424, %v415
      %v488 = vpack.c.b16 %v425, %v416
      %v489 = vpack.c.b16 %v426, %v417
      %v490 = vpack.c.b16 %v436, %v427
      %v491 = vpack.c.b16 %v437, %v428
      %v492 = vpack.c.b16 %v438, %v429
      %v493 = vpack.c.b16 %v439, %v430
      %v494 = vpack.c.b16 %v440, %v431
      %v495 = vpack.c.b16 %v441, %v432
      %v496 = vpack.c.b16 %v442, %v433
      %v497 = vpack.c.b16 %v443, %v434
      %v498 = vpack.c.b16 %v444, %v435
      %v499 = vpack.c.b16 %v454, %v445
      %v500 = vpack.c.b16 %v455, %v446
      %v501 = vpack.c.b16 %v456, %v447
      %v502 = vpack.c.b16 %v457, %v448
      %v503 = vpack.c.b16 %v458, %v449
      %v504 = vpack.c.b16 %v459, %v450
      %v505 = vpack.c.b16 %v460, %v451
      %v506 = vpack.c.b16 %v461, %v452
      %v507 = vpack.c.b16 %v462, %v453
      %v508 = vpack.c.b16 %v472, %v463
      %v509 = vpack.c.b16 %v473, %v464
      %v510 = vpack.c.b16 %v474, %v465
      %v511 = vpack.c.b16 %v475, %v466
      %v512 = vpack.c.b16 %v476, %v467
      %v513 = vpack.c.b16 %v477, %v468
      %v514 = vpack.c.b16 %v478, %v469
      %v515 = vpack.c.b16 %v479, %v470
      %v516 = vpack.c.b16 %v480, %v471
      %v697 = vunpack.c.l.b16 %v218
      %v698 = vunpack.c.l.b16 %v219
      %v699 = vunpack.c.l.b16 %v220
      %v700 = vunpack.c.l.b16 %v221
      %v701 = vunpack.c.l.b16 %v222
      %v702 = vunpack.c.l.b16 %v223
      %v703 = vunpack.c.l.b16 %v224
      %v704 = vunpack.c.l.b16 %v225
      %v705 = vunpack.c.l.b16 %v226
      %v706 = vunpack.c.l.b16 %v227
      %v707 = vunpack.c.l.b16 %v228
      %v708 = vunpack.c.l.b16 %v229
      %v709 = vunpack.c.l.b16 %v230
      %v710 = vunpack.c.l.b16 %v231
      %v711 = vunpack.c.l.b16 %v232
      %v712 = vunpack.c.l.b16 %v233
      %v713 = vunpack.c.l.b16 %v234
      %v714 = vunpack.c.l.b16 %v235
      %v715 = vunpack.c.l.b16 %v236
      %v716 = vunpack.c.l.b16 %v237
      %v717 = vunpack.c.l.b16 %v238
      %v718 = vunpack.c.l.b16 %v239
      %v719 = vunpack.c.l.b16 %v240
      %v720 = vunpack.c.l.b16 %v241
      %v721 = vunpack.c.l.b16 %v242
      %v722 = vunpack.c.l.b16 %v243
      %v723 = vunpack.c.l.b16 %v244
      %v724 = vunpack.c.l.b16 %v245
      %v725 = vunpack.c.l.b16 %v246
      %v726 = vunpack.c.l.b16 %v247
      %v727 = vunpack.c.l.b16 %v248
      %v728 = vunpack.c.l.b16 %v249
      %v729 = vunpack.c.l.b16 %v250
      %v730 = vunpack.c.l.b16 %v251
      %v731 = vunpack.c.l.b16 %v252
      %v732 = vunpack.c.l.b16 %v253
      %v733 = vunpack.c.l.b16 %v254
      %v734 = vunpack.c.l.b16 %v255
      %v735 = vunpack.c.l.b16 %v256
      %v736 = vunpack.c.l.b16 %v257
      %v737 = vunpack.c.l.b16 %v258
      %v738 = vunpack.c.l.b16 %v259
      %v739 = vunpack.c.l.b16 %v260
      %v740 = vunpack.c.l.b16 %v261
      %v741 = vunpack.c.l.b16 %v262
      %v742 = vunpack.c.l.b16 %v263
      %v743 = vunpack.c.l.b16 %v264
      %v744 = vunpack.c.l.b16 %v265
      %v745 = vunpack.c.l.b16 %v266
      %v746 = vunpack.c.l.b16 %v267
      %v747 = vunpack.c.l.b16 %v268
      %v748 = vunpack.c.l.b16 %v269
      %v749 = vunpack.c.l.b16 %v270
      %v750 = vunpack.c.l.b16 %v271
      %v751 = vunpack.c.l.b16 %v272
      %v752 = vunpack.c.l.b16 %v273
      %v753 = vunpack.c.l.b16 %v274
      %v754 = vunpack.c.l.b16 %v275
      %v755 = vunpack.c.l.b16 %v276
      %v756 = vunpack.c.l.b16 %v277
      %v757 = vunpack.c.l.b16 %v278
      %v758 = vunpack.c.l.b16 %v279
      %v759 = vunpack.c.l.b16 %v280
      %v760 = vunpack.c.l.b16 %v281
      %v761 = vunpack.c.l.b16 %v282
      %v762 = vunpack.c.l.b16 %v283
      %v763 = vunpack.c.l.b16 %v284
      %v764 = vunpack.c.l.b16 %v285
      %v765 = vunpack.c.l.b16 %v286
      %v766 = vunpack.c.l.b16 %v287
      %v767 = vunpack.c.l.b16 %v288
      %v768 = vunpack.c.l.b16 %v289
      %v769 = vunpack.c.l.b16 %v290
      %v770 = vunpack.c.l.b16 %v291
      %v771 = vunpack.c.l.b16 %v292
      %v772 = vunpack.c.l.b16 %v293
      %v773 = vunpack.c.l.b16 %v294
      %v774 = vunpack.c.l.b16 %v295
      %v775 = vunpack.c.l.b16 %v296
      %v776 = vunpack.c.l.b16 %v297
      %v777 = vunpack.c.l.b16 %v298
      %v778 = vunpack.c.l.b16 %v299
      %v779 = vunpack.c.l.b16 %v300
      %v780 = vunpack.c.l.b16 %v301
      %v781 = vunpack.c.l.b16 %v302
      %v782 = vunpack.c.l.b16 %v303
      %v783 = vunpack.c.l.b16 %v304
      %v784 = vunpack.c.l.b16 %v305
      %v785 = vunpack.c.l.b16 %v306
      %v786 = vunpack.c.l.b16 %v307
      %v787 = vunpack.c.l.b16 %v308
      %v788 = vunpack.c.l.b16 %v309
      %v789 = vunpack.c.l.b16 %v310
      %v790 = vunpack.c.l.b16 %v311
      %v791 = vunpack.c.l.b16 %v312
      %v792 = vunpack.c.l.b16 %v313
      %v793 = vunpack.c.l.b16 %v314
      %v794 = vunpack.c.l.b16 %v315
      %v795 = vunpack.c.l.b16 %v316
      %v796 = vunpack.c.l.b16 %v317
      %v797 = vunpack.c.l.b16 %v318
      %v798 = vunpack.c.l.b16 %v319
      %v799 = vunpack.c.l.b16 %v320
      %v800 = vunpack.c.l.b16 %v321
      %v801 = vunpack.c.l.b16 %v322
      %v802 = vunpack.c.l.b16 %v323
      %v803 = vunpack.c.l.b16 %v324
      %v804 = vunpack.c.l.b16 %v325
      %v805 = vunpack.c.l.b16 %v326
      %v806 = vunpack.c.l.b16 %v327
      %v807 = vunpack.c.l.b16 %v328
      %v808 = vunpack.c.l.b16 %v329
      %v809 = vunpack.c.l.b16 %v330
      %v810 = vunpack.c.l.b16 %v331
      %v811 = vunpack.c.l.b16 %v332
      %v812 = vunpack.c.l.b16 %v333
      %v813 = vunpack.c.l.b16 %v334
      %v814 = vunpack.c.l.b16 %v335
      %v815 = vunpack.c.l.b16 %v336
      %v816 = vunpack.c.l.b16 %v337
      %v817 = vunpack.c.l.b16 %v338
      %v818 = vunpack.c.l.b16 %v339
      %v819 = vunpack.c.l.b16 %v340
      %v820 = vunpack.c.l.b16 %v341
      %v821 = vunpack.c.l.b16 %v342
      %v822 = vunpack.c.l.b16 %v343
      %v823 = vunpack.c.l.b16 %v344
      %v824 = vunpack.c.l.b16 %v345
      %v825 = vunpack.c.l.b16 %v346
      %v826 = vunpack.c.l.b16 %v347
      %v827 = vunpack.c.l.b16 %v348
      %v828 = vunpack.c.l.b16 %v349
      %v829 = vunpack.c.l.b16 %v350
      %v830 = vunpack.c.l.b16 %v351
      %v831 = vunpack.c.l.b16 %v352
      %v832 = vunpack.c.l.b16 %v353
      %v833 = vunpack.c.l.b16 %v354
      %v834 = vunpack.c.l.b16 %v355
      %v835 = vunpack.c.l.b16 %v356
      %v836 = vunpack.c.l.b16 %v357
      %v837 = vunpack.c.l.b16 %v358
      %v838 = vunpack.c.l.b16 %v359
      %v839 = vunpack.c.l.b16 %v360
      %v840 = vunpack.c.l.b16 %v361
      %v841 = vpack.c.b16 %v698, %v697
      %v842 = vpack.c.b16 %v700, %v699
      %v843 = vpack.c.b16 %v702, %v701
      %v844 = vpack.c.b16 %v704, %v703
      %v845 = vpack.c.b16 %v706, %v705
      %v846 = vpack.c.b16 %v708, %v707
      %v847 = vpack.c.b16 %v710, %v709
      %v848 = vpack.c.b16 %v712, %v711
      %v849 = vpack.c.b16 %v714, %v713
      %v850 = vpack.c.b16 %v716, %v715
      %v851 = vpack.c.b16 %v718, %v717
      %v852 = vpack.c.b16 %v720, %v719
      %v853 = vpack.c.b16 %v722, %v721
      %v854 = vpack.c.b16 %v724, %v723
      %v855 = vpack.c.b16 %v726, %v725
      %v856 = vpack.c.b16 %v728, %v727
      %v857 = vpack.c.b16 %v730, %v729
      %v858 = vpack.c.b16 %v732, %v731
      %v859 = vpack.c.b16 %v734, %v733
      %v860 = vpack.c.b16 %v736, %v735
      %v861 = vpack.c.b16 %v738, %v737
      %v862 = vpack.c.b16 %v740, %v739
      %v863 = vpack.c.b16 %v742, %v741
      %v864 = vpack.c.b16 %v744, %v743
      %v865 = vpack.c.b16 %v746, %v745
      %v866 = vpack.c.b16 %v748, %v747
      %v867 = vpack.c.b16 %v750, %v749
      %v868 = vpack.c.b16 %v752, %v751
      %v869 = vpack.c.b16 %v754, %v753
      %v870 = vpack.c.b16 %v756, %v755
      %v871 = vpack.c.b16 %v758, %v757
      %v872 = vpack.c.b16 %v760, %v759
      %v873 = vpack.c.b16 %v762, %v761
      %v874 = vpack.c.b16 %v764, %v763
      %v875 = vpack.c.b16 %v766, %v765
      %v876 = vpack.c.b16 %v768, %v767
      %v877 = vpack.c.b16 %v770, %v769
      %v878 = vpack.c.b16 %v772, %v771
      %v879 = vpack.c.b16 %v774, %v773
      %v880 = vpack.c.b16 %v776, %v775
      %v881 = vpack.c.b16 %v778, %v777
      %v882 = vpack.c.b16 %v780, %v779
      %v883 = vpack.c.b16 %v782, %v781
      %v884 = vpack.c.b16 %v784, %v783
      %v885 = vpack.c.b16 %v786, %v785
      %v886 = vpack.c.b16 %v788, %v787
      %v887 = vpack.c.b16 %v790, %v789
      %v888 = vpack.c.b16 %v792, %v791
      %v889 = vpack.c.b16 %v794, %v793
      %v890 = vpack.c.b16 %v796, %v795
      %v891 = vpack.c.b16 %v798, %v797
      %v892 = vpack.c.b16 %v800, %v799
      %v893 = vpack.c.b16 %v802, %v801
      %v894 = vpack.c.b16 %v804, %v803
      %v895 = vpack.c.b16 %v806, %v805
      %v896 = vpack.c.b16 %v808, %v807
      %v897 = vpack.c.b16 %v810, %v809
      %v898 = vpack.c.b16 %v812, %v811
      %v899 = vpack.c.b16 %v814, %v813
      %v900 = vpack.c.b16 %v816, %v815
      %v901 = vpack.c.b16 %v818, %v817
      %v902 = vpack.c.b16 %v820, %v819
      %v903 = vpack.c.b16 %v822, %v821
      %v904 = vpack.c.b16 %v824, %v823
      %v905 = vpack.c.b16 %v826, %v825
      %v906 = vpack.c.b16 %v828, %v827
      %v907 = vpack.c.b16 %v830, %v829
      %v908 = vpack.c.b16 %v832, %v831
      %v909 = vpack.c.b16 %v834, %v833
      %v910 = vpack.c.b16 %v836, %v835
      %v911 = vpack.c.b16 %v838, %v837
      %v912 = vpack.c.b16 %v840, %v839
      %985 = vmatprep.subr.bf16.mxu0 0
      %986 = vmatpush1.bf16.msra.mxu0 %v841
      %987 = vmatprep.subr.bf16.mxu0 0
      %988 = vmatpush1.bf16.msra.mxu0 %v842
      %989 = vmatprep.subr.bf16.mxu0 0
      %990 = vmatpush1.bf16.msra.mxu0 %v843
      %991 = vmatprep.subr.bf16.mxu0 0
      %992 = vmatpush1.bf16.msra.mxu0 %v844
      %993 = vmatprep.subr.bf16.mxu0 0
      %994 = vmatpush1.bf16.msra.mxu0 %v845
      %995 = vmatprep.subr.bf16.mxu0 0
      %996 = vmatpush1.bf16.msra.mxu0 %v846
      %997 = vmatprep.subr.bf16.mxu0 0
      %998 = vmatpush1.bf16.msra.mxu0 %v847
      %999 = vmatprep.subr.bf16.mxu0 0
      %1000 = vmatpush1.bf16.msra.mxu0 %v848
      %1001 = vmatprep.subr.bf16.mxu0 0
      %1002 = vmatpush1.bf16.msra.mxu0 %v849
      %1003 = vmatprep.subr.bf16.mxu0 0
      %1004 = vmatpush1.bf16.msra.mxu0 %v850
      %1005 = vmatprep.subr.bf16.mxu0 0
      %1006 = vmatpush1.bf16.msra.mxu0 %v851
      %1007 = vmatprep.subr.bf16.mxu0 0
      %1008 = vmatpush1.bf16.msra.mxu0 %v852
      %1009 = vmatprep.subr.bf16.mxu0 0
      %1010 = vmatpush1.bf16.msra.mxu0 %v853
      %1011 = vmatprep.subr.bf16.mxu0 0
      %1012 = vmatpush1.bf16.msra.mxu0 %v854
      %1013 = vmatprep.subr.bf16.mxu0 0
      %1014 = vmatpush1.bf16.msra.mxu0 %v855
      %1015 = vmatprep.subr.bf16.mxu0 0
      %1016 = vmatpush1.bf16.msra.mxu0 %v856
      %1017 = vmatprep.mubr.bf16.mxu0 %v482
      %1018 = vmatmul.mubr.bf16.gmra.mrb[0].mxu0 %v481
      %v1019 = vpop.f32.mrb[0].mxu0
      %v1020 = vadd.f32 %v367, %v1019
      %v1021 = vpop.f32.mrb[0].mxu0
      %v1022 = vpop.f32.mrb[0].mxu0
      %v1023 = vadd.f32 %v367, %v1022
      %v1024 = vpop.f32.mrb[0].mxu0
      %1025 = vmatprep.mubr.bf16.mxu0 %v491
      %1026 = vmatmul.mubr.bf16.gmra.mrb[0].mxu0 %v490
      %v1027 = vpop.f32.mrb[0].mxu0
      %v1028 = vadd.f32 %v367, %v1027
      %v1029 = vpop.f32.mrb[0].mxu0
      %v1030 = vpop.f32.mrb[0].mxu0
      %v1031 = vadd.f32 %v367, %v1030
      %v1032 = vpop.f32.mrb[0].mxu0
      %1033 = vmatprep.mubr.bf16.mxu0 %v500
      %1034 = vmatmul.mubr.bf16.gmra.mrb[0].mxu0 %v499
      %v1035 = vpop.f32.mrb[0].mxu0
      %v1036 = vadd.f32 %v367, %v1035
      %v1037 = vpop.f32.mrb[0].mxu0
      %v1038 = vpop.f32.mrb[0].mxu0
      %v1039 = vadd.f32 %v367, %v1038
      %v1040 = vpop.f32.mrb[0].mxu0
      %1041 = vmatprep.mubr.bf16.mxu0 %v509
      %1042 = vmatmul.mubr.bf16.gmra.mrb[0].mxu0 %v508
      %v1043 = vpop.f32.mrb[0].mxu0
      %v1044 = vadd.f32 %v367, %v1043
      %v1045 = vpop.f32.mrb[0].mxu0
      %v1046 = vpop.f32.mrb[0].mxu0
      %v1047 = vadd.f32 %v367, %v1046
      %v1048 = vpop.f32.mrb[0].mxu0
      %1049 = vdwg.mxu0
      %1050 = vmatprep.subr.bf16.mxu0 0
      %1051 = vmatpush1.bf16.msra.mxu0 %v857
      %1052 = vmatprep.subr.bf16.mxu0 0
      %1053 = vmatpush1.bf16.msra.mxu0 %v858
      %1054 = vmatprep.subr.bf16.mxu0 0
      %1055 = vmatpush1.bf16.msra.mxu0 %v859
      %1056 = vmatprep.subr.bf16.mxu0 0
      %1057 = vmatpush1.bf16.msra.mxu0 %v860
      %1058 = vmatprep.subr.bf16.mxu0 0
      %1059 = vmatpush1.bf16.msra.mxu0 %v861
      %1060 = vmatprep.subr.bf16.mxu0 0
      %1061 = vmatpush1.bf16.msra.mxu0 %v862
      %1062 = vmatprep.subr.bf16.mxu0 0
      %1063 = vmatpush1.bf16.msra.mxu0 %v863
      %1064 = vmatprep.subr.bf16.mxu0 0
      %1065 = vmatpush1.bf16.msra.mxu0 %v864
      %1066 = vmatprep.subr.bf16.mxu0 0
      %1067 = vmatpush1.bf16.msra.mxu0 %v865
      %1068 = vmatprep.subr.bf16.mxu0 0
      %1069 = vmatpush1.bf16.msra.mxu0 %v866
      %1070 = vmatprep.subr.bf16.mxu0 0
      %1071 = vmatpush1.bf16.msra.mxu0 %v867
      %1072 = vmatprep.subr.bf16.mxu0 0
      %1073 = vmatpush1.bf16.msra.mxu0 %v868
      %1074 = vmatprep.subr.bf16.mxu0 0
      %1075 = vmatpush1.bf16.msra.mxu0 %v869
      %1076 = vmatprep.subr.bf16.mxu0 0
      %1077 = vmatpush1.bf16.msra.mxu0 %v870
      %1078 = vmatprep.subr.bf16.mxu0 0
      %1079 = vmatpush1.bf16.msra.mxu0 %v871
      %1080 = vmatprep.subr.bf16.mxu0 0
      %1081 = vmatpush1.bf16.msra.mxu0 %v872
      %1082 = vmatprep.mubr.bf16.mxu0 %v484
      %1083 = vmatmul.mubr.bf16.gmra.mrb[0].mxu0 %v483
      %v1084 = vpop.f32.mrb[0].mxu0
      %v1085 = vadd.f32 %v1020, %v1084
      %v1086 = vpop.f32.mrb[0].mxu0
      %v1087 = vpop.f32.mrb[0].mxu0
      %v1088 = vadd.f32 %v1023, %v1087
      %v1089 = vpop.f32.mrb[0].mxu0
      %1090 = vmatprep.mubr.bf16.mxu0 %v493
      %1091 = vmatmul.mubr.bf16.gmra.mrb[0].mxu0 %v492
      %v1092 = vpop.f32.mrb[0].mxu0
      %v1093 = vadd.f32 %v1028, %v1092
      %v1094 = vpop.f32.mrb[0].mxu0
      %v1095 = vpop.f32.mrb[0].mxu0
      %v1096 = vadd.f32 %v1031, %v1095
      %v1097 = vpop.f32.mrb[0].mxu0
      %1098 = vmatprep.mubr.bf16.mxu0 %v502
      %1099 = vmatmul.mubr.bf16.gmra.mrb[0].mxu0 %v501
      %v1100 = vpop.f32.mrb[0].mxu0
      %v1101 = vadd.f32 %v1036, %v1100
      %v1102 = vpop.f32.mrb[0].mxu0
      %v1103 = vpop.f32.mrb[0].mxu0
      %v1104 = vadd.f32 %v1039, %v1103
      %v1105 = vpop.f32.mrb[0].mxu0
      %1106 = vmatprep.mubr.bf16.mxu0 %v511
      %1107 = vmatmul.mubr.bf16.gmra.mrb[0].mxu0 %v510
      %v1108 = vpop.f32.mrb[0].mxu0
      %v1109 = vadd.f32 %v1044, %v1108
      %v1110 = vpop.f32.mrb[0].mxu0
      %v1111 = vpop.f32.mrb[0].mxu0
      %v1112 = vadd.f32 %v1047, %v1111
      %v1113 = vpop.f32.mrb[0].mxu0
      %1114 = vdwg.mxu0
      %1115 = vmatprep.subr.bf16.mxu0 0
      %1116 = vmatpush1.bf16.msra.mxu0 %v873
      %1117 = vmatprep.subr.bf16.mxu0 0
      %1118 = vmatpush1.bf16.msra.mxu0 %v874
      %1119 = vmatprep.subr.bf16.mxu0 0
      %1120 = vmatpush1.bf16.msra.mxu0 %v875
      %1121 = vmatprep.subr.bf16.mxu0 0
      %1122 = vmatpush1.bf16.msra.mxu0 %v876
      %1123 = vmatprep.subr.bf16.mxu0 0
      %1124 = vmatpush1.bf16.msra.mxu0 %v877
      %1125 = vmatprep.subr.bf16.mxu0 0
      %1126 = vmatpush1.bf16.msra.mxu0 %v878
      %1127 = vmatprep.subr.bf16.mxu0 0
      %1128 = vmatpush1.bf16.msra.mxu0 %v879
      %1129 = vmatprep.subr.bf16.mxu0 0
      %1130 = vmatpush1.bf16.msra.mxu0 %v880
      %1131 = vmatprep.subr.bf16.mxu0 0
      %1132 = vmatpush1.bf16.msra.mxu0 %v881
      %1133 = vmatprep.subr.bf16.mxu0 0
      %1134 = vmatpush1.bf16.msra.mxu0 %v882
      %1135 = vmatprep.subr.bf16.mxu0 0
      %1136 = vmatpush1.bf16.msra.mxu0 %v883
      %1137 = vmatprep.subr.bf16.mxu0 0
      %1138 = vmatpush1.bf16.msra.mxu0 %v884
      %1139 = vmatprep.subr.bf16.mxu0 0
      %1140 = vmatpush1.bf16.msra.mxu0 %v885
      %1141 = vmatprep.subr.bf16.mxu0 0
      %1142 = vmatpush1.bf16.msra.mxu0 %v886
      %1143 = vmatprep.subr.bf16.mxu0 0
      %1144 = vmatpush1.bf16.msra.mxu0 %v887
      %1145 = vmatprep.subr.bf16.mxu0 0
      %1146 = vmatpush1.bf16.msra.mxu0 %v888
      %1147 = vmatprep.mubr.bf16.mxu0 %v486
      %1148 = vmatmul.mubr.bf16.gmra.mrb[0].mxu0 %v485
      %v1149 = vpop.f32.mrb[0].mxu0
      %v1150 = vadd.f32 %v1085, %v1149
      %v1151 = vpop.f32.mrb[0].mxu0
      %v1152 = vpop.f32.mrb[0].mxu0
      %v1153 = vadd.f32 %v1088, %v1152
      %v1154 = vpop.f32.mrb[0].mxu0
      %1155 = vmatprep.mubr.bf16.mxu0 %v495
      %1156 = vmatmul.mubr.bf16.gmra.mrb[0].mxu0 %v494
      %v1157 = vpop.f32.mrb[0].mxu0
      %v1158 = vadd.f32 %v1093, %v1157
      %v1159 = vpop.f32.mrb[0].mxu0
      %v1160 = vpop.f32.mrb[0].mxu0
      %v1161 = vadd.f32 %v1096, %v1160
      %v1162 = vpop.f32.mrb[0].mxu0
      %1163 = vmatprep.mubr.bf16.mxu0 %v504
      %1164 = vmatmul.mubr.bf16.gmra.mrb[0].mxu0 %v503
      %v1165 = vpop.f32.mrb[0].mxu0
      %v1166 = vadd.f32 %v1101, %v1165
      %v1167 = vpop.f32.mrb[0].mxu0
      %v1168 = vpop.f32.mrb[0].mxu0
      %v1169 = vadd.f32 %v1104, %v1168
      %v1170 = vpop.f32.mrb[0].mxu0
      %1171 = vmatprep.mubr.bf16.mxu0 %v513
      %1172 = vmatmul.mubr.bf16.gmra.mrb[0].mxu0 %v512
      %v1173 = vpop.f32.mrb[0].mxu0
      %v1174 = vadd.f32 %v1109, %v1173
      %v1175 = vpop.f32.mrb[0].mxu0
      %v1176 = vpop.f32.mrb[0].mxu0
      %v1177 = vadd.f32 %v1112, %v1176
      %v1178 = vpop.f32.mrb[0].mxu0
      %1179 = vdwg.mxu0
      %1180 = vmatprep.subr.bf16.mxu0 0
      %1181 = vmatpush1.bf16.msra.mxu0 %v889
      %1182 = vmatprep.subr.bf16.mxu0 0
      %1183 = vmatpush1.bf16.msra.mxu0 %v890
      %1184 = vmatprep.subr.bf16.mxu0 0
      %1185 = vmatpush1.bf16.msra.mxu0 %v891
      %1186 = vmatprep.subr.bf16.mxu0 0
      %1187 = vmatpush1.bf16.msra.mxu0 %v892
      %1188 = vmatprep.subr.bf16.mxu0 0
      %1189 = vmatpush1.bf16.msra.mxu0 %v893
      %1190 = vmatprep.subr.bf16.mxu0 0
      %1191 = vmatpush1.bf16.msra.mxu0 %v894
      %1192 = vmatprep.subr.bf16.mxu0 0
      %1193 = vmatpush1.bf16.msra.mxu0 %v895
      %1194 = vmatprep.subr.bf16.mxu0 0
      %1195 = vmatpush1.bf16.msra.mxu0 %v896
      %1196 = vmatprep.subr.bf16.mxu0 0
      %1197 = vmatpush1.bf16.msra.mxu0 %v897
      %1198 = vmatprep.subr.bf16.mxu0 0
      %1199 = vmatpush1.bf16.msra.mxu0 %v898
      %1200 = vmatprep.subr.bf16.mxu0 0
      %1201 = vmatpush1.bf16.msra.mxu0 %v899
      %1202 = vmatprep.subr.bf16.mxu0 0
      %1203 = vmatpush1.bf16.msra.mxu0 %v900
      %1204 = vmatprep.subr.bf16.mxu0 0
      %1205 = vmatpush1.bf16.msra.mxu0 %v901
      %1206 = vmatprep.subr.bf16.mxu0 0
      %1207 = vmatpush1.bf16.msra.mxu0 %v902
      %1208 = vmatprep.subr.bf16.mxu0 0
      %1209 = vmatpush1.bf16.msra.mxu0 %v903
      %1210 = vmatprep.subr.bf16.mxu0 0
      %1211 = vmatpush1.bf16.msra.mxu0 %v904
      %1212 = vmatprep.mubr.bf16.mxu0 %v488
      %1213 = vmatmul.mubr.bf16.gmra.mrb[0].mxu0 %v487
      %v1214 = vpop.f32.mrb[0].mxu0
      %v1215 = vadd.f32 %v1150, %v1214
      %v1216 = vpop.f32.mrb[0].mxu0
      %v1217 = vpop.f32.mrb[0].mxu0
      %v1218 = vadd.f32 %v1153, %v1217
      %v1219 = vpop.f32.mrb[0].mxu0
      %1220 = vmatprep.mubr.bf16.mxu0 %v497
      %1221 = vmatmul.mubr.bf16.gmra.mrb[0].mxu0 %v496
      %v1222 = vpop.f32.mrb[0].mxu0
      %v1223 = vadd.f32 %v1158, %v1222
      %v1224 = vpop.f32.mrb[0].mxu0
      %v1225 = vpop.f32.mrb[0].mxu0
      %v1226 = vadd.f32 %v1161, %v1225
      %v1227 = vpop.f32.mrb[0].mxu0
      %1228 = vmatprep.mubr.bf16.mxu0 %v506
      %1229 = vmatmul.mubr.bf16.gmra.mrb[0].mxu0 %v505
      %v1230 = vpop.f32.mrb[0].mxu0
      %v1231 = vadd.f32 %v1166, %v1230
      %v1232 = vpop.f32.mrb[0].mxu0
      %v1233 = vpop.f32.mrb[0].mxu0
      %v1234 = vadd.f32 %v1169, %v1233
      %v1235 = vpop.f32.mrb[0].mxu0
      %1236 = vmatprep.mubr.bf16.mxu0 %v515
      %1237 = vmatmul.mubr.bf16.gmra.mrb[0].mxu0 %v514
      %v1238 = vpop.f32.mrb[0].mxu0
      %v1239 = vadd.f32 %v1174, %v1238
      %v1240 = vpop.f32.mrb[0].mxu0
      %v1241 = vpop.f32.mrb[0].mxu0
      %v1242 = vadd.f32 %v1177, %v1241
      %v1243 = vpop.f32.mrb[0].mxu0
      %1244 = vdwg.mxu0
      %1245 = vmatprep.subr.bf16.mxu0 0
      %1246 = vmatpush1.bf16.msra.mxu0 %v905
      %1247 = vmatprep.subr.bf16.mxu0 0
      %1248 = vmatpush1.bf16.msra.mxu0 %v906
      %1249 = vmatprep.subr.bf16.mxu0 0
      %1250 = vmatpush1.bf16.msra.mxu0 %v907
      %1251 = vmatprep.subr.bf16.mxu0 0
      %1252 = vmatpush1.bf16.msra.mxu0 %v908
      %1253 = vmatprep.subr.bf16.mxu0 0
      %1254 = vmatpush1.bf16.msra.mxu0 %v909
      %1255 = vmatprep.subr.bf16.mxu0 0
      %1256 = vmatpush1.bf16.msra.mxu0 %v910
      %1257 = vmatprep.subr.bf16.mxu0 0
      %1258 = vmatpush1.bf16.msra.mxu0 %v911
      %1259 = vmatprep.subr.bf16.mxu0 0
      %1260 = vmatpush1.bf16.msra.mxu0 %v912
      %1261 = vmatprep.subr.bf16.mxu0 0
      %1262 = vmatpush1.bf16.msra.mxu0 0
      %1263 = vmatprep.subr.bf16.mxu0 0
      %1264 = vmatpush1.bf16.msra.mxu0 0
      %1265 = vmatprep.subr.bf16.mxu0 0
      %1266 = vmatpush1.bf16.msra.mxu0 0
      %1267 = vmatprep.subr.bf16.mxu0 0
      %1268 = vmatpush1.bf16.msra.mxu0 0
      %1269 = vmatprep.subr.bf16.mxu0 0
      %1270 = vmatpush1.bf16.msra.mxu0 0
      %1271 = vmatprep.subr.bf16.mxu0 0
      %1272 = vmatpush1.bf16.msra.mxu0 0
      %1273 = vmatprep.subr.bf16.mxu0 0
      %1274 = vmatpush1.bf16.msra.mxu0 0
      %1275 = vmatprep.subr.bf16.mxu0 0
      %1276 = vmatpush1.bf16.msra.mxu0 0
      %1277 = vmatprep.mubr.bf16.mxu0 0
      %1278 = vmatmul.mubr.bf16.gmra.mrb[0].mxu0 %v489
      %v1279 = vpop.f32.mrb[0].mxu0
      %v1280 = vadd.f32 %v1215, %v1279
      %v1281 = vpop.f32.mrb[0].mxu0
      %v1282 = vpop.f32.mrb[0].mxu0
      %v1283 = vadd.f32 %v1218, %v1282
      %v1284 = vpop.f32.mrb[0].mxu0
      %1285 = vmatprep.mubr.bf16.mxu0 0
      %1286 = vmatmul.mubr.bf16.gmra.mrb[0].mxu0 %v498
      %v1287 = vpop.f32.mrb[0].mxu0
      %v1288 = vadd.f32 %v1223, %v1287
      %v1289 = vpop.f32.mrb[0].mxu0
      %v1290 = vpop.f32.mrb[0].mxu0
      %v1291 = vadd.f32 %v1226, %v1290
      %v1292 = vpop.f32.mrb[0].mxu0
      %1293 = vmatprep.mubr.bf16.mxu0 0
      %1294 = vmatmul.mubr.bf16.gmra.mrb[0].mxu0 %v507
      %v1295 = vpop.f32.mrb[0].mxu0
      %v1296 = vadd.f32 %v1231, %v1295
      %v1297 = vpop.f32.mrb[0].mxu0
      %v1298 = vpop.f32.mrb[0].mxu0
      %v1299 = vadd.f32 %v1234, %v1298
      %v1300 = vpop.f32.mrb[0].mxu0
      %1301 = vmatprep.mubr.bf16.mxu0 0
      %1302 = vmatmul.mubr.bf16.gmra.mrb[0].mxu0 %v516
      %v1303 = vpop.f32.mrb[0].mxu0
      %v1304 = vadd.f32 %v1239, %v1303
      %v1305 = vpop.f32.mrb[0].mxu0
      %v1306 = vpop.f32.mrb[0].mxu0
      %v1307 = vadd.f32 %v1242, %v1306
      %v1308 = vpop.f32.mrb[0].mxu0
      %1309 = vdwg.mxu0
      %v1310 = vmul.f32 %v1280, 0.5
      %v1311 = vmul.f32 %v1283, 0.5
      %v1312 = vmul.f32 %v1288, 0.5
      %v1313 = vmul.f32 %v1291, 0.5
      %v1314 = vmul.f32 %v1296, 0.5
      %v1315 = vmul.f32 %v1299, 0.5
      %v1316 = vmul.f32 %v1304, 0.5
      %v1317 = vmul.f32 %v1307, 0.5
      %v1318 = vtanh.pop %v1310
      %v1319 = vtanh.pop %v1311
      %v1320 = vtanh.pop %v1312
      %v1321 = vtanh.pop %v1313
      %v1322 = vtanh.pop %v1314
      %v1323 = vtanh.pop %v1315
      %v1324 = vtanh.pop %v1316
      %v1325 = vtanh.pop %v1317
      %v1326 = vadd.f32 %v1318, 1.0
      %v1327 = vadd.f32 %v1319, 1.0
      %v1328 = vadd.f32 %v1320, 1.0
      %v1329 = vadd.f32 %v1321, 1.0
      %v1330 = vadd.f32 %v1322, 1.0
      %v1331 = vadd.f32 %v1323, 1.0
      %v1332 = vadd.f32 %v1324, 1.0
      %v1333 = vadd.f32 %v1325, 1.0
      %v1334 = vmul.f32 %v1326, 0.5
      %v1335 = vmul.f32 %v1327, 0.5
      %v1336 = vmul.f32 %v1328, 0.5
      %v1337 = vmul.f32 %v1329, 0.5
      %v1338 = vmul.f32 %v1330, 0.5
      %v1339 = vmul.f32 %v1331, 0.5
      %v1340 = vmul.f32 %v1332, 0.5
      %v1341 = vmul.f32 %v1333, 0.5
      %1342 = vst [vmem:[%s175] sm:$0xff] %v1334
      %1343 = vst [vmem:[%s175 + $0x8] sm:$0xff] %v1335
      %1344 = vst [vmem:[%s175 + $0x10] sm:$0xff] %v1336
      %1345 = vst [vmem:[%s175 + $0x18] sm:$0xff] %v1337
      %1346 = vst [vmem:[%s175 + $0x20] sm:$0xff] %v1338
      %1347 = vst [vmem:[%s175 + $0x28] sm:$0xff] %v1339
      %1348 = vst [vmem:[%s175 + $0x30] sm:$0xff] %v1340
      %1349 = vst [vmem:[%s175 + $0x38] sm:$0xff] %v1341
      %s1350 = smul.u32 8, %s14
      %p1351 = scmp.lt.s32.totalorder %s1350, 15
      %s1352 = scalar_select %p1351, %s1350, 15
      %s1353 = smul.addr %s1352, 8
      %s1354 = scalar_lea.vmem %s3, %s1353
      // Predicated region
      $region33: #{generator_forward.5} parent=31 // pred_check
        %p1355 = pneg %p100
      $region34: #{generator_forward.5} parent=31 // pred_check_branch
        %1357 = sbr.rel (%p1355) target = $region36
      $region35: #{generator_forward.5} parent=31 // pred_region
        %s1358 = smul.u32 8, %s14
      $region36: #{generator_forward.5} parent=31 // pred_fallthru
        _
    $region32: #{generator_forward.5} parent=5 // pred_fallthru
      _
    %p1359 = scmp.le.s32.totalorder 2, %s9
    // Predicated region
    $region37: #{generator_forward.5} parent=5 // pred_check
      %p1360 = pneg %p1359
    $region38: #{generator_forward.5} parent=5 // pred_check_branch
      %1362 = sbr.rel (%p1360) target = $region40
    $region39: #{generator_forward.5} parent=5 // pred_region
      %s1363 = ssub.s32 %s9, 2
      // Predicated region
      $region41: #{generator_forward.5} parent=39 // pred_check
        %p1364 = pneg %p106
      $region42: #{generator_forward.5} parent=39 // pred_check_branch
        %1366 = sbr.rel (%p1364) target = $region44
      $region43: #{generator_forward.5} parent=39 // pred_region
        %s1367 = smul.u32 8, %s15
        %p1368 = scmp.lt.s32.totalorder %s1367, 15
        %s1369 = scalar_select %p1368, %s1367, 15
        %s1370 = smul.addr %s1369, 8
        %s1371 = scalar_lea.vmem %s3, %s1370
      $region44: #{generator_forward.5} parent=39 // pred_fallthru
        _
    $region40: #{generator_forward.5} parent=5 // pred_fallthru
      _
  $region6: #{generator_forward.5} parent=0 // loop_footer
    %s13 = sadd.s32 1, %s9
  $region7: #{generator_forward.5} parent=0 // loop_footer_branch
    %8 = sbr.rel target = $region3
  $region8: #{generator_forward.5} parent=0 // loop_exit
    _

// kernel: generator_forward.4
$region0: #{generator_forward.4}
  #allocation0 [shape = 'u32[]', space=smem, size = 0x4, offset = 0x4, fixed_abs, tag = 'smem constant byte address 0x4 - core index']
  #allocation1 [shape = 'u32[144,128]{1,0:T(1,128)}', space=vmem, size = 0x12000, scoped, tag = 'internal scratch']
  %s0 = inlined_call_operand.vmem [shape: bf16[32,2304], index: 0, kind: input, shape index: {}]
  %s1 = inlined_call_operand.hbm [shape: bf16[2304,512], index: 1, kind: input, shape index: {}]
  %s2 = inlined_call_operand.hbm [shape: f32[1,128], index: 2, kind: input, shape index: {}]
  %s3 = inlined_call_operand.hbm [shape: f32[1,128], index: 3, kind: input, shape index: {}]
  %s4 = inlined_call_operand.vmem [shape: bf16[32,512], index: 4, kind: output, shape index: {}]
  %s5 = sld [smem:[#allocation0]]
  $region38: #{generator_forward.4} parent=0
    _
  %s7 = ssub.s32 1, %s5
  %s8 = scalar_select 0, %s7, %s5
  $region1: #{generator_forward.4} parent=0
    #allocation2 [shape = 'u8[2359296]{0}', space=vmem, size = 0x240000, scoped, tag = 'input window, operand 1, single buffered']
    #allocation3 [shape = 's32[1]{0}', space=sflag, size = 0x4, scoped, tag = 'scoped memory for generator_forward.4']
    #allocation4 [shape = 'u8[512]{0}', space=vmem, size = 0x400, scoped, tag = 'input window, operand 2, single buffered']
    #allocation5 [shape = 's32[1]{0}', space=sflag, size = 0x4, scoped, tag = 'scoped memory for generator_forward.4']
    #allocation6 [shape = 'u8[512]{0}', space=vmem, size = 0x400, scoped, tag = 'input window, operand 3, single buffered']
    %9 = vsyncpa [#allocation3], 0
    %10 = vsyncpa [#allocation5], 0
    // Predicated region
    $region2: #{generator_forward.4} parent=1 // pred_check
      _
    $region3: #{generator_forward.4} parent=1 // pred_check_branch
      %12 = sbr.rel (0) target = $region5
    $region4: #{generator_forward.4} parent=1 // pred_region
      _
    $region5: #{generator_forward.4} parent=1 // pred_fallthru
      _
    // Predicated region
    $region6: #{generator_forward.4} parent=1 // pred_check
      _
    $region7: #{generator_forward.4} parent=1 // pred_check_branch
      %14 = sbr.rel (0) target = $region9
    $region8: #{generator_forward.4} parent=1 // pred_region
      %s16 = ssub.s32 73728, 73728
      %17 = vsyncadd [#allocation3], %s16
      %s18 = sshll.u32 [#allocation2], 4
      %s19 = int_to_ptr.vmem [resolvable:$true] %s18
      %24 = dma.hbm_to_vmem [thread:$0]  %s1, 73728, %s19, [#allocation3], 256, 256, 16
    $region9: #{generator_forward.4} parent=1 // pred_fallthru
      _
    // Predicated region
    $region10: #{generator_forward.4} parent=1 // pred_check
      _
    $region11: #{generator_forward.4} parent=1 // pred_check_branch
      %26 = sbr.rel (0) target = $region13
    $region12: #{generator_forward.4} parent=1 // pred_region
      %s28 = ssub.s32 16, 16
      %29 = vsyncadd [#allocation5], %s28
      %s31 = sshll.u32 [#allocation4], 4
      %s32 = int_to_ptr.vmem [resolvable:$true] %s31
      %34 = dma.hbm_to_vmem [thread:$0]  %s2, 16, %s32, [#allocation5]
    $region13: #{generator_forward.4} parent=1 // pred_fallthru
      _
    // Predicated region
    $region14: #{generator_forward.4} parent=1 // pred_check
      _
    $region15: #{generator_forward.4} parent=1 // pred_check_branch
      %36 = sbr.rel (0) target = $region17
    $region16: #{generator_forward.4} parent=1 // pred_region
      %s38 = ssub.s32 16, 16
      %39 = vsyncadd [#allocation5], %s38
      %s41 = sshll.u32 [#allocation6], 4
      %s42 = int_to_ptr.vmem [resolvable:$true] %s41
      %44 = dma.hbm_to_vmem [thread:$0]  %s3, 16, %s42, [#allocation5]
    $region17: #{generator_forward.4} parent=1 // pred_fallthru
      _
    // Predicated region
    $region18: #{generator_forward.4} parent=1 // pred_check
      _
    $region19: #{generator_forward.4} parent=1 // pred_check_branch
      %46 = sbr.rel (0) target = $region21
    $region20: #{generator_forward.4} parent=1 // pred_region
      %47 = dma.done [#allocation3], 73728
    $region21: #{generator_forward.4} parent=1 // pred_fallthru
      _
    // Predicated region
    $region22: #{generator_forward.4} parent=1 // pred_check
      _
    $region23: #{generator_forward.4} parent=1 // pred_check_branch
      %49 = sbr.rel (0) target = $region25
    $region24: #{generator_forward.4} parent=1 // pred_region
      %50 = dma.done [#allocation5], 16
    $region25: #{generator_forward.4} parent=1 // pred_fallthru
      _
    // Predicated region
    $region26: #{generator_forward.4} parent=1 // pred_check
      _
    $region27: #{generator_forward.4} parent=1 // pred_check_branch
      %52 = sbr.rel (0) target = $region29
    $region28: #{generator_forward.4} parent=1 // pred_region
      %53 = dma.done [#allocation5], 16
    $region29: #{generator_forward.4} parent=1 // pred_fallthru
      _
    %v54 = vld [vmem:[%s0] sm:$0xff]
    %v55 = vld [vmem:[%s0 + $0x8] sm:$0xff]
    %v56 = vld [vmem:[%s0 + $0x10] sm:$0xff]
    %v57 = vld [vmem:[%s0 + $0x18] sm:$0xff]
    %v58 = vld [vmem:[%s0 + $0x20] sm:$0xff]
    %v59 = vld [vmem:[%s0 + $0x28] sm:$0xff]
    %v60 = vld [vmem:[%s0 + $0x30] sm:$0xff]
    %v61 = vld [vmem:[%s0 + $0x38] sm:$0xff]
    %v62 = vld [vmem:[%s0 + $0x40] sm:$0xff]
    %v63 = vld [vmem:[%s0 + $0x48] sm:$0xff]
    %v64 = vld [vmem:[%s0 + $0x50] sm:$0xff]
    %v65 = vld [vmem:[%s0 + $0x58] sm:$0xff]
    %v66 = vld [vmem:[%s0 + $0x60] sm:$0xff]
    %v67 = vld [vmem:[%s0 + $0x68] sm:$0xff]
    %v68 = vld [vmem:[%s0 + $0x70] sm:$0xff]
    %v69 = vld [vmem:[%s0 + $0x78] sm:$0xff]
    %v70 = vld [vmem:[%s0 + $0x80] sm:$0xff]
    %v71 = vld [vmem:[%s0 + $0x88] sm:$0xff]
    %v72 = vld [vmem:[%s0 + $0x90] sm:$0xff]
    %v73 = vld [vmem:[%s0 + $0x98] sm:$0xff]
    %v74 = vld [vmem:[%s0 + $0xa0] sm:$0xff]
    %v75 = vld [vmem:[%s0 + $0xa8] sm:$0xff]
    %v76 = vld [vmem:[%s0 + $0xb0] sm:$0xff]
    %v77 = vld [vmem:[%s0 + $0xb8] sm:$0xff]
    %v78 = vld [vmem:[%s0 + $0xc0] sm:$0xff]
    %v79 = vld [vmem:[%s0 + $0xc8] sm:$0xff]
    %v80 = vld [vmem:[%s0 + $0xd0] sm:$0xff]
    %v81 = vld [vmem:[%s0 + $0xd8] sm:$0xff]
    %v82 = vld [vmem:[%s0 + $0xe0] sm:$0xff]
    %v83 = vld [vmem:[%s0 + $0xe8] sm:$0xff]
    %v84 = vld [vmem:[%s0 + $0xf0] sm:$0xff]
    %v85 = vld [vmem:[%s0 + $0xf8] sm:$0xff]
    %v86 = vld [vmem:[%s0 + $0x100] sm:$0xff]
    %v87 = vld [vmem:[%s0 + $0x108] sm:$0xff]
    %v88 = vld [vmem:[%s0 + $0x110] sm:$0xff]
    %v89 = vld [vmem:[%s0 + $0x118] sm:$0xff]
    %v90 = vld [vmem:[#allocation2] sm:$0xff]
    %v91 = vld [vmem:[#allocation2 + $0x8] sm:$0xff]
    %v92 = vld [vmem:[#allocation2 + $0x10] sm:$0xff]
    %v93 = vld [vmem:[#allocation2 + $0x18] sm:$0xff]
    %v94 = vld [vmem:[#allocation2 + $0x20] sm:$0xff]
    %v95 = vld [vmem:[#allocation2 + $0x28] sm:$0xff]
    %v96 = vld [vmem:[#allocation2 + $0x30] sm:$0xff]
    %v97 = vld [vmem:[#allocation2 + $0x38] sm:$0xff]
    %v98 = vld [vmem:[#allocation2 + $0x40] sm:$0xff]
    %v99 = vld [vmem:[#allocation2 + $0x48] sm:$0xff]
    %v100 = vld [vmem:[#allocation2 + $0x50] sm:$0xff]
    %v101 = vld [vmem:[#allocation2 + $0x58] sm:$0xff]
    %v102 = vld [vmem:[#allocation2 + $0x60] sm:$0xff]
    %v103 = vld [vmem:[#allocation2 + $0x68] sm:$0xff]
    %v104 = vld [vmem:[#allocation2 + $0x70] sm:$0xff]
    %v105 = vld [vmem:[#allocation2 + $0x78] sm:$0xff]
    %v106 = vld [vmem:[#allocation2 + $0x80] sm:$0xff]
    %v107 = vld [vmem:[#allocation2 + $0x88] sm:$0xff]
    %v108 = vld [vmem:[#allocation2 + $0x90] sm:$0xff]
    %v109 = vld [vmem:[#allocation2 + $0x98] sm:$0xff]
    %v110 = vld [vmem:[#allocation2 + $0xa0] sm:$0xff]
    %v111 = vld [vmem:[#allocation2 + $0xa8] sm:$0xff]
    %v112 = vld [vmem:[#allocation2 + $0xb0] sm:$0xff]
    %v113 = vld [vmem:[#allocation2 + $0xb8] sm:$0xff]
    %v114 = vld [vmem:[#allocation2 + $0xc0] sm:$0xff]
    %v115 = vld [vmem:[#allocation2 + $0xc8] sm:$0xff]
    %v116 = vld [vmem:[#allocation2 + $0xd0] sm:$0xff]
    %v117 = vld [vmem:[#allocation2 + $0xd8] sm:$0xff]
    %v118 = vld [vmem:[#allocation2 + $0xe0] sm:$0xff]
    %v119 = vld [vmem:[#allocation2 + $0xe8] sm:$0xff]
    %v120 = vld [vmem:[#allocation2 + $0xf0] sm:$0xff]
    %v121 = vld [vmem:[#allocation2 + $0xf8] sm:$0xff]
    %v122 = vld [vmem:[#allocation2 + $0x100] sm:$0xff]
    %v123 = vld [vmem:[#allocation2 + $0x108] sm:$0xff]
    %v124 = vld [vmem:[#allocation2 + $0x110] sm:$0xff]
    %v125 = vld [vmem:[#allocation2 + $0x118] sm:$0xff]
    %v126 = vld [vmem:[#allocation2 + $0x120] sm:$0xff]
    %v127 = vld [vmem:[#allocation2 + $0x128] sm:$0xff]
    %v128 = vld [vmem:[#allocation2 + $0x130] sm:$0xff]
    %v129 = vld [vmem:[#allocation2 + $0x138] sm:$0xff]
    %v130 = vld [vmem:[#allocation2 + $0x140] sm:$0xff]
    %v131 = vld [vmem:[#allocation2 + $0x148] sm:$0xff]
    %v132 = vld [vmem:[#allocation2 + $0x150] sm:$0xff]
    %v133 = vld [vmem:[#allocation2 + $0x158] sm:$0xff]
    %v134 = vld [vmem:[#allocation2 + $0x160] sm:$0xff]
    %v135 = vld [vmem:[#allocation2 + $0x168] sm:$0xff]
    %v136 = vld [vmem:[#allocation2 + $0x170] sm:$0xff]
    %v137 = vld [vmem:[#allocation2 + $0x178] sm:$0xff]
    %v138 = vld [vmem:[#allocation2 + $0x180] sm:$0xff]
    %v139 = vld [vmem:[#allocation2 + $0x188] sm:$0xff]
    %v140 = vld [vmem:[#allocation2 + $0x190] sm:$0xff]
    %v141 = vld [vmem:[#allocation2 + $0x198] sm:$0xff]
    %v142 = vld [vmem:[#allocation2 + $0x1a0] sm:$0xff]
    %v143 = vld [vmem:[#allocation2 + $0x1a8] sm:$0xff]
    %v144 = vld [vmem:[#allocation2 + $0x1b0] sm:$0xff]
    %v145 = vld [vmem:[#allocation2 + $0x1b8] sm:$0xff]
    %v146 = vld [vmem:[#allocation2 + $0x1c0] sm:$0xff]
    %v147 = vld [vmem:[#allocation2 + $0x1c8] sm:$0xff]
    %v148 = vld [vmem:[#allocation2 + $0x1d0] sm:$0xff]
    %v149 = vld [vmem:[#allocation2 + $0x1d8] sm:$0xff]
    %v150 = vld [vmem:[#allocation2 + $0x1e0] sm:$0xff]
    %v151 = vld [vmem:[#allocation2 + $0x1e8] sm:$0xff]
    %v152 = vld [vmem:[#allocation2 + $0x1f0] sm:$0xff]
    %v153 = vld [vmem:[#allocation2 + $0x1f8] sm:$0xff]
    %v154 = vld [vmem:[#allocation2 + $0x200] sm:$0xff]
    %v155 = vld [vmem:[#allocation2 + $0x208] sm:$0xff]
    %v156 = vld [vmem:[#allocation2 + $0x210] sm:$0xff]
    %v157 = vld [vmem:[#allocation2 + $0x218] sm:$0xff]
    %v158 = vld [vmem:[#allocation2 + $0x220] sm:$0xff]
    %v159 = vld [vmem:[#allocation2 + $0x228] sm:$0xff]
    %v160 = vld [vmem:[#allocation2 + $0x230] sm:$0xff]
    %v161 = vld [vmem:[#allocation2 + $0x238] sm:$0xff]
    %v162 = vld [vmem:[#allocation2 + $0x240] sm:$0xff]
    %v163 = vld [vmem:[#allocation2 + $0x248] sm:$0xff]
    %v164 = vld [vmem:[#allocation2 + $0x250] sm:$0xff]
    %v165 = vld [vmem:[#allocation2 + $0x258] sm:$0xff]
    %v166 = vld [vmem:[#allocation2 + $0x260] sm:$0xff]
    %v167 = vld [vmem:[#allocation2 + $0x268] sm:$0xff]
    %v168 = vld [vmem:[#allocation2 + $0x270] sm:$0xff]
    %v169 = vld [vmem:[#allocation2 + $0x278] sm:$0xff]
    %v170 = vld [vmem:[#allocation2 + $0x280] sm:$0xff]
    %v171 = vld [vmem:[#allocation2 + $0x288] sm:$0xff]
    %v172 = vld [vmem:[#allocation2 + $0x290] sm:$0xff]
    %v173 = vld [vmem:[#allocation2 + $0x298] sm:$0xff]
    %v174 = vld [vmem:[#allocation2 + $0x2a0] sm:$0xff]
    %v175 = vld [vmem:[#allocation2 + $0x2a8] sm:$0xff]
    %v176 = vld [vmem:[#allocation2 + $0x2b0] sm:$0xff]
    %v177 = vld [vmem:[#allocation2 + $0x2b8] sm:$0xff]
    %v178 = vld [vmem:[#allocation2 + $0x2c0] sm:$0xff]
    %v179 = vld [vmem:[#allocation2 + $0x2c8] sm:$0xff]
    %v180 = vld [vmem:[#allocation2 + $0x2d0] sm:$0xff]
    %v181 = vld [vmem:[#allocation2 + $0x2d8] sm:$0xff]
    %v182 = vld [vmem:[#allocation2 + $0x2e0] sm:$0xff]
    %v183 = vld [vmem:[#allocation2 + $0x2e8] sm:$0xff]
    %v184 = vld [vmem:[#allocation2 + $0x2f0] sm:$0xff]
    %v185 = vld [vmem:[#allocation2 + $0x2f8] sm:$0xff]
    %v186 = vld [vmem:[#allocation2 + $0x300] sm:$0xff]
    %v187 = vld [vmem:[#allocation2 + $0x308] sm:$0xff]
    %v188 = vld [vmem:[#allocation2 + $0x310] sm:$0xff]
    %v189 = vld [vmem:[#allocation2 + $0x318] sm:$0xff]
    %v190 = vld [vmem:[#allocation2 + $0x320] sm:$0xff]
    %v191 = vld [vmem:[#allocation2 + $0x328] sm:$0xff]
    %v192 = vld [vmem:[#allocation2 + $0x330] sm:$0xff]
    %v193 = vld [vmem:[#allocation2 + $0x338] sm:$0xff]
    %v194 = vld [vmem:[#allocation2 + $0x340] sm:$0xff]
    %v195 = vld [vmem:[#allocation2 + $0x348] sm:$0xff]
    %v196 = vld [vmem:[#allocation2 + $0x350] sm:$0xff]
    %v197 = vld [vmem:[#allocation2 + $0x358] sm:$0xff]
    %v198 = vld [vmem:[#allocation2 + $0x360] sm:$0xff]
    %v199 = vld [vmem:[#allocation2 + $0x368] sm:$0xff]
    %v200 = vld [vmem:[#allocation2 + $0x370] sm:$0xff]
    %v201 = vld [vmem:[#allocation2 + $0x378] sm:$0xff]
    %v202 = vld [vmem:[#allocation2 + $0x380] sm:$0xff]
    %v203 = vld [vmem:[#allocation2 + $0x388] sm:$0xff]
    %v204 = vld [vmem:[#allocation2 + $0x390] sm:$0xff]
    %v205 = vld [vmem:[#allocation2 + $0x398] sm:$0xff]
    %v206 = vld [vmem:[#allocation2 + $0x3a0] sm:$0xff]
    %v207 = vld [vmem:[#allocation2 + $0x3a8] sm:$0xff]
    %v208 = vld [vmem:[#allocation2 + $0x3b0] sm:$0xff]
    %v209 = vld [vmem:[#allocation2 + $0x3b8] sm:$0xff]
    %v210 = vld [vmem:[#allocation2 + $0x3c0] sm:$0xff]
    %v211 = vld [vmem:[#allocation2 + $0x3c8] sm:$0xff]
    %v212 = vld [vmem:[#allocation2 + $0x3d0] sm:$0xff]
    %v213 = vld [vmem:[#allocation2 + $0x3d8] sm:$0xff]
    %v214 = vld [vmem:[#allocation2 + $0x3e0] sm:$0xff]
    %v215 = vld [vmem:[#allocation2 + $0x3e8] sm:$0xff]
    %v216 = vld [vmem:[#allocation2 + $0x3f0] sm:$0xff]
    %v217 = vld [vmem:[#allocation2 + $0x3f8] sm:$0xff]
    %v218 = vld [vmem:[#allocation2 + $0x400] sm:$0xff]
    %v219 = vld [vmem:[#allocation2 + $0x408] sm:$0xff]
    %v220 = vld [vmem:[#allocation2 + $0x410] sm:$0xff]
    %v221 = vld [vmem:[#allocation2 + $0x418] sm:$0xff]
    %v222 = vld [vmem:[#allocation2 + $0x420] sm:$0xff]
    %v223 = vld [vmem:[#allocation2 + $0x428] sm:$0xff]
    %v224 = vld [vmem:[#allocation2 + $0x430] sm:$0xff]
    %v225 = vld [vmem:[#allocation2 + $0x438] sm:$0xff]
    %v226 = vld [vmem:[#allocation2 + $0x440] sm:$0xff]
    %v227 = vld [vmem:[#allocation2 + $0x448] sm:$0xff]
    %v228 = vld [vmem:[#allocation2 + $0x450] sm:$0xff]
    %v229 = vld [vmem:[#allocation2 + $0x458] sm:$0xff]
    %v230 = vld [vmem:[#allocation2 + $0x460] sm:$0xff]
    %v231 = vld [vmem:[#allocation2 + $0x468] sm:$0xff]
    %v232 = vld [vmem:[#allocation2 + $0x470] sm:$0xff]
    %v233 = vld [vmem:[#allocation2 + $0x478] sm:$0xff]
    %v234 = vld [vmem:[#allocation2 + $0x480] sm:$0xff]
    %v235 = vld [vmem:[#allocation2 + $0x488] sm:$0xff]
    %v236 = vld [vmem:[#allocation2 + $0x490] sm:$0xff]
    %v237 = vld [vmem:[#allocation2 + $0x498] sm:$0xff]
    %v238 = vld [vmem:[#allocation2 + $0x4a0] sm:$0xff]
    %v239 = vld [vmem:[#allocation2 + $0x4a8] sm:$0xff]
    %v240 = vld [vmem:[#allocation2 + $0x4b0] sm:$0xff]
    %v241 = vld [vmem:[#allocation2 + $0x4b8] sm:$0xff]
    %v242 = vld [vmem:[#allocation2 + $0x4c0] sm:$0xff]
    %v243 = vld [vmem:[#allocation2 + $0x4c8] sm:$0xff]
    %v244 = vld [vmem:[#allocation2 + $0x4d0] sm:$0xff]
    %v245 = vld [vmem:[#allocation2 + $0x4d8] sm:$0xff]
    %v246 = vld [vmem:[#allocation2 + $0x4e0] sm:$0xff]
    %v247 = vld [vmem:[#allocation2 + $0x4e8] sm:$0xff]
    %v248 = vld [vmem:[#allocation2 + $0x4f0] sm:$0xff]
    %v249 = vld [vmem:[#allocation2 + $0x4f8] sm:$0xff]
    %v250 = vld [vmem:[#allocation2 + $0x500] sm:$0xff]
    %v251 = vld [vmem:[#allocation2 + $0x508] sm:$0xff]
    %v252 = vld [vmem:[#allocation2 + $0x510] sm:$0xff]
    %v253 = vld [vmem:[#allocation2 + $0x518] sm:$0xff]
    %v254 = vld [vmem:[#allocation2 + $0x520] sm:$0xff]
    %v255 = vld [vmem:[#allocation2 + $0x528] sm:$0xff]
    %v256 = vld [vmem:[#allocation2 + $0x530] sm:$0xff]
    %v257 = vld [vmem:[#allocation2 + $0x538] sm:$0xff]
    %v258 = vld [vmem:[#allocation2 + $0x540] sm:$0xff]
    %v259 = vld [vmem:[#allocation2 + $0x548] sm:$0xff]
    %v260 = vld [vmem:[#allocation2 + $0x550] sm:$0xff]
    %v261 = vld [vmem:[#allocation2 + $0x558] sm:$0xff]
    %v262 = vld [vmem:[#allocation2 + $0x560] sm:$0xff]
    %v263 = vld [vmem:[#allocation2 + $0x568] sm:$0xff]
    %v264 = vld [vmem:[#allocation2 + $0x570] sm:$0xff]
    %v265 = vld [vmem:[#allocation2 + $0x578] sm:$0xff]
    %v266 = vld [vmem:[#allocation2 + $0x580] sm:$0xff]
    %v267 = vld [vmem:[#allocation2 + $0x588] sm:$0xff]
    %v268 = vld [vmem:[#allocation2 + $0x590] sm:$0xff]
    %v269 = vld [vmem:[#allocation2 + $0x598] sm:$0xff]
    %v270 = vld [vmem:[#allocation2 + $0x5a0] sm:$0xff]
    %v271 = vld [vmem:[#allocation2 + $0x5a8] sm:$0xff]
    %v272 = vld [vmem:[#allocation2 + $0x5b0] sm:$0xff]
    %v273 = vld [vmem:[#allocation2 + $0x5b8] sm:$0xff]
    %v274 = vld [vmem:[#allocation2 + $0x5c0] sm:$0xff]
    %v275 = vld [vmem:[#allocation2 + $0x5c8] sm:$0xff]
    %v276 = vld [vmem:[#allocation2 + $0x5d0] sm:$0xff]
    %v277 = vld [vmem:[#allocation2 + $0x5d8] sm:$0xff]
    %v278 = vld [vmem:[#allocation2 + $0x5e0] sm:$0xff]
    %v279 = vld [vmem:[#allocation2 + $0x5e8] sm:$0xff]
    %v280 = vld [vmem:[#allocation2 + $0x5f0] sm:$0xff]
    %v281 = vld [vmem:[#allocation2 + $0x5f8] sm:$0xff]
    %v282 = vld [vmem:[#allocation2 + $0x600] sm:$0xff]
    %v283 = vld [vmem:[#allocation2 + $0x608] sm:$0xff]
    %v284 = vld [vmem:[#allocation2 + $0x610] sm:$0xff]
    %v285 = vld [vmem:[#allocation2 + $0x618] sm:$0xff]
    %v286 = vld [vmem:[#allocation2 + $0x620] sm:$0xff]
    %v287 = vld [vmem:[#allocation2 + $0x628] sm:$0xff]
    %v288 = vld [vmem:[#allocation2 + $0x630] sm:$0xff]
    %v289 = vld [vmem:[#allocation2 + $0x638] sm:$0xff]
    %v290 = vld [vmem:[#allocation2 + $0x640] sm:$0xff]
    %v291 = vld [vmem:[#allocation2 + $0x648] sm:$0xff]
    %v292 = vld [vmem:[#allocation2 + $0x650] sm:$0xff]
    %v293 = vld [vmem:[#allocation2 + $0x658] sm:$0xff]
    %v294 = vld [vmem:[#allocation2 + $0x660] sm:$0xff]
    %v295 = vld [vmem:[#allocation2 + $0x668] sm:$0xff]
    %v296 = vld [vmem:[#allocation2 + $0x670] sm:$0xff]
    %v297 = vld [vmem:[#allocation2 + $0x678] sm:$0xff]
    %v298 = vld [vmem:[#allocation2 + $0x680] sm:$0xff]
    %v299 = vld [vmem:[#allocation2 + $0x688] sm:$0xff]
    %v300 = vld [vmem:[#allocation2 + $0x690] sm:$0xff]
    %v301 = vld [vmem:[#allocation2 + $0x698] sm:$0xff]
    %v302 = vld [vmem:[#allocation2 + $0x6a0] sm:$0xff]
    %v303 = vld [vmem:[#allocation2 + $0x6a8] sm:$0xff]
    %v304 = vld [vmem:[#allocation2 + $0x6b0] sm:$0xff]
    %v305 = vld [vmem:[#allocation2 + $0x6b8] sm:$0xff]
    %v306 = vld [vmem:[#allocation2 + $0x6c0] sm:$0xff]
    %v307 = vld [vmem:[#allocation2 + $0x6c8] sm:$0xff]
    %v308 = vld [vmem:[#allocation2 + $0x6d0] sm:$0xff]
    %v309 = vld [vmem:[#allocation2 + $0x6d8] sm:$0xff]
    %v310 = vld [vmem:[#allocation2 + $0x6e0] sm:$0xff]
    %v311 = vld [vmem:[#allocation2 + $0x6e8] sm:$0xff]
    %v312 = vld [vmem:[#allocation2 + $0x6f0] sm:$0xff]
    %v313 = vld [vmem:[#allocation2 + $0x6f8] sm:$0xff]
    %v314 = vld [vmem:[#allocation2 + $0x700] sm:$0xff]
    %v315 = vld [vmem:[#allocation2 + $0x708] sm:$0xff]
    %v316 = vld [vmem:[#allocation2 + $0x710] sm:$0xff]
    %v317 = vld [vmem:[#allocation2 + $0x718] sm:$0xff]
    %v318 = vld [vmem:[#allocation2 + $0x720] sm:$0xff]
    %v319 = vld [vmem:[#allocation2 + $0x728] sm:$0xff]
    %v320 = vld [vmem:[#allocation2 + $0x730] sm:$0xff]
    %v321 = vld [vmem:[#allocation2 + $0x738] sm:$0xff]
    %v322 = vld [vmem:[#allocation2 + $0x740] sm:$0xff]
    %v323 = vld [vmem:[#allocation2 + $0x748] sm:$0xff]
    %v324 = vld [vmem:[#allocation2 + $0x750] sm:$0xff]
    %v325 = vld [vmem:[#allocation2 + $0x758] sm:$0xff]
    %v326 = vld [vmem:[#allocation2 + $0x760] sm:$0xff]
    %v327 = vld [vmem:[#allocation2 + $0x768] sm:$0xff]
    %v328 = vld [vmem:[#allocation2 + $0x770] sm:$0xff]
    %v329 = vld [vmem:[#allocation2 + $0x778] sm:$0xff]
    %v330 = vld [vmem:[#allocation2 + $0x780] sm:$0xff]
    %v331 = vld [vmem:[#allocation2 + $0x788] sm:$0xff]
    %v332 = vld [vmem:[#allocation2 + $0x790] sm:$0xff]
    %v333 = vld [vmem:[#allocation2 + $0x798] sm:$0xff]
    %v334 = vld [vmem:[#allocation2 + $0x7a0] sm:$0xff]
    %v335 = vld [vmem:[#allocation2 + $0x7a8] sm:$0xff]
    %v336 = vld [vmem:[#allocation2 + $0x7b0] sm:$0xff]
    %v337 = vld [vmem:[#allocation2 + $0x7b8] sm:$0xff]
    %v338 = vld [vmem:[#allocation2 + $0x7c0] sm:$0xff]
    %v339 = vld [vmem:[#allocation2 + $0x7c8] sm:$0xff]
    %v340 = vld [vmem:[#allocation2 + $0x7d0] sm:$0xff]
    %v341 = vld [vmem:[#allocation2 + $0x7d8] sm:$0xff]
    %v342 = vld [vmem:[#allocation2 + $0x7e0] sm:$0xff]
    %v343 = vld [vmem:[#allocation2 + $0x7e8] sm:$0xff]
    %v344 = vld [vmem:[#allocation2 + $0x7f0] sm:$0xff]
    %v345 = vld [vmem:[#allocation2 + $0x7f8] sm:$0xff]
    %v346 = vld [vmem:[#allocation2 + $0x800] sm:$0xff]
    %v347 = vld [vmem:[#allocation2 + $0x808] sm:$0xff]
    %v348 = vld [vmem:[#allocation2 + $0x810] sm:$0xff]
    %v349 = vld [vmem:[#allocation2 + $0x818] sm:$0xff]
    %v350 = vld [vmem:[#allocation2 + $0x820] sm:$0xff]
    %v351 = vld [vmem:[#allocation2 + $0x828] sm:$0xff]
    %v352 = vld [vmem:[#allocation2 + $0x830] sm:$0xff]
    %v353 = vld [vmem:[#allocation2 + $0x838] sm:$0xff]
    %v354 = vld [vmem:[#allocation2 + $0x840] sm:$0xff]
    %v355 = vld [vmem:[#allocation2 + $0x848] sm:$0xff]
    %v356 = vld [vmem:[#allocation2 + $0x850] sm:$0xff]
    %v357 = vld [vmem:[#allocation2 + $0x858] sm:$0xff]
    %v358 = vld [vmem:[#allocation2 + $0x860] sm:$0xff]
    %v359 = vld [vmem:[#allocation2 + $0x868] sm:$0xff]
    %v360 = vld [vmem:[#allocation2 + $0x870] sm:$0xff]
    %v361 = vld [vmem:[#allocation2 + $0x878] sm:$0xff]
    %v362 = vld [vmem:[#allocation2 + $0x880] sm:$0xff]
    %v363 = vld [vmem:[#allocation2 + $0x888] sm:$0xff]
    %v364 = vld [vmem:[#allocation2 + $0x890] sm:$0xff]
    %v365 = vld [vmem:[#allocation2 + $0x898] sm:$0xff]
    %v366 = vld [vmem:[#allocation2 + $0x8a0] sm:$0xff]
    %v367 = vld [vmem:[#allocation2 + $0x8a8] sm:$0xff]
    %v368 = vld [vmem:[#allocation2 + $0x8b0] sm:$0xff]
    %v369 = vld [vmem:[#allocation2 + $0x8b8] sm:$0xff]
    %v370 = vld [vmem:[#allocation2 + $0x8c0] sm:$0xff]
    %v371 = vld [vmem:[#allocation2 + $0x8c8] sm:$0xff]
    %v372 = vld [vmem:[#allocation2 + $0x8d0] sm:$0xff]
    %v373 = vld [vmem:[#allocation2 + $0x8d8] sm:$0xff]
    %v374 = vld [vmem:[#allocation2 + $0x8e0] sm:$0xff]
    %v375 = vld [vmem:[#allocation2 + $0x8e8] sm:$0xff]
    %v376 = vld [vmem:[#allocation2 + $0x8f0] sm:$0xff]
    %v377 = vld [vmem:[#allocation2 + $0x8f8] sm:$0xff]
    %v378 = vld [vmem:[#allocation2 + $0x900] sm:$0xff]
    %v379 = vld [vmem:[#allocation2 + $0x908] sm:$0xff]
    %v380 = vld [vmem:[#allocation2 + $0x910] sm:$0xff]
    %v381 = vld [vmem:[#allocation2 + $0x918] sm:$0xff]
    %v382 = vld [vmem:[#allocation2 + $0x920] sm:$0xff]
    %v383 = vld [vmem:[#allocation2 + $0x928] sm:$0xff]
    %v384 = vld [vmem:[#allocation2 + $0x930] sm:$0xff]
    %v385 = vld [vmem:[#allocation2 + $0x938] sm:$0xff]
    %v386 = vld [vmem:[#allocation2 + $0x940] sm:$0xff]
    %v387 = vld [vmem:[#allocation2 + $0x948] sm:$0xff]
    %v388 = vld [vmem:[#allocation2 + $0x950] sm:$0xff]
    %v389 = vld [vmem:[#allocation2 + $0x958] sm:$0xff]
    %v390 = vld [vmem:[#allocation2 + $0x960] sm:$0xff]
    %v391 = vld [vmem:[#allocation2 + $0x968] sm:$0xff]
    %v392 = vld [vmem:[#allocation2 + $0x970] sm:$0xff]
    %v393 = vld [vmem:[#allocation2 + $0x978] sm:$0xff]
    %v394 = vld [vmem:[#allocation2 + $0x980] sm:$0xff]
    %v395 = vld [vmem:[#allocation2 + $0x988] sm:$0xff]
    %v396 = vld [vmem:[#allocation2 + $0x990] sm:$0xff]
    %v397 = vld [vmem:[#allocation2 + $0x998] sm:$0xff]
    %v398 = vld [vmem:[#allocation2 + $0x9a0] sm:$0xff]
    %v399 = vld [vmem:[#allocation2 + $0x9a8] sm:$0xff]
    %v400 = vld [vmem:[#allocation2 + $0x9b0] sm:$0xff]
    %v401 = vld [vmem:[#allocation2 + $0x9b8] sm:$0xff]
    %v402 = vld [vmem:[#allocation2 + $0x9c0] sm:$0xff]
    %v403 = vld [vmem:[#allocation2 + $0x9c8] sm:$0xff]
    %v404 = vld [vmem:[#allocation2 + $0x9d0] sm:$0xff]
    %v405 = vld [vmem:[#allocation2 + $0x9d8] sm:$0xff]
    %v406 = vld [vmem:[#allocation2 + $0x9e0] sm:$0xff]
    %v407 = vld [vmem:[#allocation2 + $0x9e8] sm:$0xff]
    %v408 = vld [vmem:[#allocation2 + $0x9f0] sm:$0xff]
    %v409 = vld [vmem:[#allocation2 + $0x9f8] sm:$0xff]
    %v410 = vld [vmem:[#allocation2 + $0xa00] sm:$0xff]
    %v411 = vld [vmem:[#allocation2 + $0xa08] sm:$0xff]
    %v412 = vld [vmem:[#allocation2 + $0xa10] sm:$0xff]
    %v413 = vld [vmem:[#allocation2 + $0xa18] sm:$0xff]
    %v414 = vld [vmem:[#allocation2 + $0xa20] sm:$0xff]
    %v415 = vld [vmem:[#allocation2 + $0xa28] sm:$0xff]
    %v416 = vld [vmem:[#allocation2 + $0xa30] sm:$0xff]
    %v417 = vld [vmem:[#allocation2 + $0xa38] sm:$0xff]
    %v418 = vld [vmem:[#allocation2 + $0xa40] sm:$0xff]
    %v419 = vld [vmem:[#allocation2 + $0xa48] sm:$0xff]
    %v420 = vld [vmem:[#allocation2 + $0xa50] sm:$0xff]
    %v421 = vld [vmem:[#allocation2 + $0xa58] sm:$0xff]
    %v422 = vld [vmem:[#allocation2 + $0xa60] sm:$0xff]
    %v423 = vld [vmem:[#allocation2 + $0xa68] sm:$0xff]
    %v424 = vld [vmem:[#allocation2 + $0xa70] sm:$0xff]
    %v425 = vld [vmem:[#allocation2 + $0xa78] sm:$0xff]
    %v426 = vld [vmem:[#allocation2 + $0xa80] sm:$0xff]
    %v427 = vld [vmem:[#allocation2 + $0xa88] sm:$0xff]
    %v428 = vld [vmem:[#allocation2 + $0xa90] sm:$0xff]
    %v429 = vld [vmem:[#allocation2 + $0xa98] sm:$0xff]
    %v430 = vld [vmem:[#allocation2 + $0xaa0] sm:$0xff]
    %v431 = vld [vmem:[#allocation2 + $0xaa8] sm:$0xff]
    %v432 = vld [vmem:[#allocation2 + $0xab0] sm:$0xff]
    %v433 = vld [vmem:[#allocation2 + $0xab8] sm:$0xff]
    %v434 = vld [vmem:[#allocation2 + $0xac0] sm:$0xff]
    %v435 = vld [vmem:[#allocation2 + $0xac8] sm:$0xff]
    %v436 = vld [vmem:[#allocation2 + $0xad0] sm:$0xff]
    %v437 = vld [vmem:[#allocation2 + $0xad8] sm:$0xff]
    %v438 = vld [vmem:[#allocation2 + $0xae0] sm:$0xff]
    %v439 = vld [vmem:[#allocation2 + $0xae8] sm:$0xff]
    %v440 = vld [vmem:[#allocation2 + $0xaf0] sm:$0xff]
    %v441 = vld [vmem:[#allocation2 + $0xaf8] sm:$0xff]
    %v442 = vld [vmem:[#allocation2 + $0xb00] sm:$0xff]
    %v443 = vld [vmem:[#allocation2 + $0xb08] sm:$0xff]
    %v444 = vld [vmem:[#allocation2 + $0xb10] sm:$0xff]
    %v445 = vld [vmem:[#allocation2 + $0xb18] sm:$0xff]
    %v446 = vld [vmem:[#allocation2 + $0xb20] sm:$0xff]
    %v447 = vld [vmem:[#allocation2 + $0xb28] sm:$0xff]
    %v448 = vld [vmem:[#allocation2 + $0xb30] sm:$0xff]
    %v449 = vld [vmem:[#allocation2 + $0xb38] sm:$0xff]
    %v450 = vld [vmem:[#allocation2 + $0xb40] sm:$0xff]
    %v451 = vld [vmem:[#allocation2 + $0xb48] sm:$0xff]
    %v452 = vld [vmem:[#allocation2 + $0xb50] sm:$0xff]
    %v453 = vld [vmem:[#allocation2 + $0xb58] sm:$0xff]
    %v454 = vld [vmem:[#allocation2 + $0xb60] sm:$0xff]
    %v455 = vld [vmem:[#allocation2 + $0xb68] sm:$0xff]
    %v456 = vld [vmem:[#allocation2 + $0xb70] sm:$0xff]
    %v457 = vld [vmem:[#allocation2 + $0xb78] sm:$0xff]
    %v458 = vld [vmem:[#allocation2 + $0xb80] sm:$0xff]
    %v459 = vld [vmem:[#allocation2 + $0xb88] sm:$0xff]
    %v460 = vld [vmem:[#allocation2 + $0xb90] sm:$0xff]
    %v461 = vld [vmem:[#allocation2 + $0xb98] sm:$0xff]
    %v462 = vld [vmem:[#allocation2 + $0xba0] sm:$0xff]
    %v463 = vld [vmem:[#allocation2 + $0xba8] sm:$0xff]
    %v464 = vld [vmem:[#allocation2 + $0xbb0] sm:$0xff]
    %v465 = vld [vmem:[#allocation2 + $0xbb8] sm:$0xff]
    %v466 = vld [vmem:[#allocation2 + $0xbc0] sm:$0xff]
    %v467 = vld [vmem:[#allocation2 + $0xbc8] sm:$0xff]
    %v468 = vld [vmem:[#allocation2 + $0xbd0] sm:$0xff]
    %v469 = vld [vmem:[#allocation2 + $0xbd8] sm:$0xff]
    %v470 = vld [vmem:[#allocation2 + $0xbe0] sm:$0xff]
    %v471 = vld [vmem:[#allocation2 + $0xbe8] sm:$0xff]
    %v472 = vld [vmem:[#allocation2 + $0xbf0] sm:$0xff]
    %v473 = vld [vmem:[#allocation2 + $0xbf8] sm:$0xff]
    %v474 = vld [vmem:[#allocation2 + $0xc00] sm:$0xff]
    %v475 = vld [vmem:[#allocation2 + $0xc08] sm:$0xff]
    %v476 = vld [vmem:[#allocation2 + $0xc10] sm:$0xff]
    %v477 = vld [vmem:[#allocation2 + $0xc18] sm:$0xff]
    %v478 = vld [vmem:[#allocation2 + $0xc20] sm:$0xff]
    %v479 = vld [vmem:[#allocation2 + $0xc28] sm:$0xff]
    %v480 = vld [vmem:[#allocation2 + $0xc30] sm:$0xff]
    %v481 = vld [vmem:[#allocation2 + $0xc38] sm:$0xff]
    %v482 = vld [vmem:[#allocation2 + $0xc40] sm:$0xff]
    %v483 = vld [vmem:[#allocation2 + $0xc48] sm:$0xff]
    %v484 = vld [vmem:[#allocation2 + $0xc50] sm:$0xff]
    %v485 = vld [vmem:[#allocation2 + $0xc58] sm:$0xff]
    %v486 = vld [vmem:[#allocation2 + $0xc60] sm:$0xff]
    %v487 = vld [vmem:[#allocation2 + $0xc68] sm:$0xff]
    %v488 = vld [vmem:[#allocation2 + $0xc70] sm:$0xff]
    %v489 = vld [vmem:[#allocation2 + $0xc78] sm:$0xff]
    %v490 = vld [vmem:[#allocation2 + $0xc80] sm:$0xff]
    %v491 = vld [vmem:[#allocation2 + $0xc88] sm:$0xff]
    %v492 = vld [vmem:[#allocation2 + $0xc90] sm:$0xff]
    %v493 = vld [vmem:[#allocation2 + $0xc98] sm:$0xff]
    %v494 = vld [vmem:[#allocation2 + $0xca0] sm:$0xff]
    %v495 = vld [vmem:[#allocation2 + $0xca8] sm:$0xff]
    %v496 = vld [vmem:[#allocation2 + $0xcb0] sm:$0xff]
    %v497 = vld [vmem:[#allocation2 + $0xcb8] sm:$0xff]
    %v498 = vld [vmem:[#allocation2 + $0xcc0] sm:$0xff]
    %v499 = vld [vmem:[#allocation2 + $0xcc8] sm:$0xff]
    %v500 = vld [vmem:[#allocation2 + $0xcd0] sm:$0xff]
    %v501 = vld [vmem:[#allocation2 + $0xcd8] sm:$0xff]
    %v502 = vld [vmem:[#allocation2 + $0xce0] sm:$0xff]
    %v503 = vld [vmem:[#allocation2 + $0xce8] sm:$0xff]
    %v504 = vld [vmem:[#allocation2 + $0xcf0] sm:$0xff]
    %v505 = vld [vmem:[#allocation2 + $0xcf8] sm:$0xff]
    %v506 = vld [vmem:[#allocation2 + $0xd00] sm:$0xff]
    %v507 = vld [vmem:[#allocation2 + $0xd08] sm:$0xff]
    %v508 = vld [vmem:[#allocation2 + $0xd10] sm:$0xff]
    %v509 = vld [vmem:[#allocation2 + $0xd18] sm:$0xff]
    %v510 = vld [vmem:[#allocation2 + $0xd20] sm:$0xff]
    %v511 = vld [vmem:[#allocation2 + $0xd28] sm:$0xff]
    %v512 = vld [vmem:[#allocation2 + $0xd30] sm:$0xff]
    %v513 = vld [vmem:[#allocation2 + $0xd38] sm:$0xff]
    %v514 = vld [vmem:[#allocation2 + $0xd40] sm:$0xff]
    %v515 = vld [vmem:[#allocation2 + $0xd48] sm:$0xff]
    %v516 = vld [vmem:[#allocation2 + $0xd50] sm:$0xff]
    %v517 = vld [vmem:[#allocation2 + $0xd58] sm:$0xff]
    %v518 = vld [vmem:[#allocation2 + $0xd60] sm:$0xff]
    %v519 = vld [vmem:[#allocation2 + $0xd68] sm:$0xff]
    %v520 = vld [vmem:[#allocation2 + $0xd70] sm:$0xff]
    %v521 = vld [vmem:[#allocation2 + $0xd78] sm:$0xff]
    %v522 = vld [vmem:[#allocation2 + $0xd80] sm:$0xff]
    %v523 = vld [vmem:[#allocation2 + $0xd88] sm:$0xff]
    %v524 = vld [vmem:[#allocation2 + $0xd90] sm:$0xff]
    %v525 = vld [vmem:[#allocation2 + $0xd98] sm:$0xff]
    %v526 = vld [vmem:[#allocation2 + $0xda0] sm:$0xff]
    %v527 = vld [vmem:[#allocation2 + $0xda8] sm:$0xff]
    %v528 = vld [vmem:[#allocation2 + $0xdb0] sm:$0xff]
    %v529 = vld [vmem:[#allocation2 + $0xdb8] sm:$0xff]
    %v530 = vld [vmem:[#allocation2 + $0xdc0] sm:$0xff]
    %v531 = vld [vmem:[#allocation2 + $0xdc8] sm:$0xff]
    %v532 = vld [vmem:[#allocation2 + $0xdd0] sm:$0xff]
    %v533 = vld [vmem:[#allocation2 + $0xdd8] sm:$0xff]
    %v534 = vld [vmem:[#allocation2 + $0xde0] sm:$0xff]
    %v535 = vld [vmem:[#allocation2 + $0xde8] sm:$0xff]
    %v536 = vld [vmem:[#allocation2 + $0xdf0] sm:$0xff]
    %v537 = vld [vmem:[#allocation2 + $0xdf8] sm:$0xff]
    %v538 = vld [vmem:[#allocation2 + $0xe00] sm:$0xff]
    %v539 = vld [vmem:[#allocation2 + $0xe08] sm:$0xff]
    %v540 = vld [vmem:[#allocation2 + $0xe10] sm:$0xff]
    %v541 = vld [vmem:[#allocation2 + $0xe18] sm:$0xff]
    %v542 = vld [vmem:[#allocation2 + $0xe20] sm:$0xff]
    %v543 = vld [vmem:[#allocation2 + $0xe28] sm:$0xff]
    %v544 = vld [vmem:[#allocation2 + $0xe30] sm:$0xff]
    %v545 = vld [vmem:[#allocation2 + $0xe38] sm:$0xff]
    %v546 = vld [vmem:[#allocation2 + $0xe40] sm:$0xff]
    %v547 = vld [vmem:[#allocation2 + $0xe48] sm:$0xff]
    %v548 = vld [vmem:[#allocation2 + $0xe50] sm:$0xff]
    %v549 = vld [vmem:[#allocation2 + $0xe58] sm:$0xff]
    %v550 = vld [vmem:[#allocation2 + $0xe60] sm:$0xff]
    %v551 = vld [vmem:[#allocation2 + $0xe68] sm:$0xff]
    %v552 = vld [vmem:[#allocation2 + $0xe70] sm:$0xff]
    %v553 = vld [vmem:[#allocation2 + $0xe78] sm:$0xff]
    %v554 = vld [vmem:[#allocation2 + $0xe80] sm:$0xff]
    %v555 = vld [vmem:[#allocation2 + $0xe88] sm:$0xff]
    %v556 = vld [vmem:[#allocation2 + $0xe90] sm:$0xff]
    %v557 = vld [vmem:[#allocation2 + $0xe98] sm:$0xff]
    %v558 = vld [vmem:[#allocation2 + $0xea0] sm:$0xff]
    %v559 = vld [vmem:[#allocation2 + $0xea8] sm:$0xff]
    %v560 = vld [vmem:[#allocation2 + $0xeb0] sm:$0xff]
    %v561 = vld [vmem:[#allocation2 + $0xeb8] sm:$0xff]
    %v562 = vld [vmem:[#allocation2 + $0xec0] sm:$0xff]
    %v563 = vld [vmem:[#allocation2 + $0xec8] sm:$0xff]
    %v564 = vld [vmem:[#allocation2 + $0xed0] sm:$0xff]
    %v565 = vld [vmem:[#allocation2 + $0xed8] sm:$0xff]
    %v566 = vld [vmem:[#allocation2 + $0xee0] sm:$0xff]
    %v567 = vld [vmem:[#allocation2 + $0xee8] sm:$0xff]
    %v568 = vld [vmem:[#allocation2 + $0xef0] sm:$0xff]
    %v569 = vld [vmem:[#allocation2 + $0xef8] sm:$0xff]
    %v570 = vld [vmem:[#allocation2 + $0xf00] sm:$0xff]
    %v571 = vld [vmem:[#allocation2 + $0xf08] sm:$0xff]
    %v572 = vld [vmem:[#allocation2 + $0xf10] sm:$0xff]
    %v573 = vld [vmem:[#allocation2 + $0xf18] sm:$0xff]
    %v574 = vld [vmem:[#allocation2 + $0xf20] sm:$0xff]
    %v575 = vld [vmem:[#allocation2 + $0xf28] sm:$0xff]
    %v576 = vld [vmem:[#allocation2 + $0xf30] sm:$0xff]
    %v577 = vld [vmem:[#allocation2 + $0xf38] sm:$0xff]
    %v578 = vld [vmem:[#allocation2 + $0xf40] sm:$0xff]
    %v579 = vld [vmem:[#allocation2 + $0xf48] sm:$0xff]
    %v580 = vld [vmem:[#allocation2 + $0xf50] sm:$0xff]
    %v581 = vld [vmem:[#allocation2 + $0xf58] sm:$0xff]
    %v582 = vld [vmem:[#allocation2 + $0xf60] sm:$0xff]
    %v583 = vld [vmem:[#allocation2 + $0xf68] sm:$0xff]
    %v584 = vld [vmem:[#allocation2 + $0xf70] sm:$0xff]
    %v585 = vld [vmem:[#allocation2 + $0xf78] sm:$0xff]
    %v586 = vld [vmem:[#allocation2 + $0xf80] sm:$0xff]
    %v587 = vld [vmem:[#allocation2 + $0xf88] sm:$0xff]
    %v588 = vld [vmem:[#allocation2 + $0xf90] sm:$0xff]
    %v589 = vld [vmem:[#allocation2 + $0xf98] sm:$0xff]
    %v590 = vld [vmem:[#allocation2 + $0xfa0] sm:$0xff]
    %v591 = vld [vmem:[#allocation2 + $0xfa8] sm:$0xff]
    %v592 = vld [vmem:[#allocation2 + $0xfb0] sm:$0xff]
    %v593 = vld [vmem:[#allocation2 + $0xfb8] sm:$0xff]
    %v594 = vld [vmem:[#allocation2 + $0xfc0] sm:$0xff]
    %v595 = vld [vmem:[#allocation2 + $0xfc8] sm:$0xff]
    %v596 = vld [vmem:[#allocation2 + $0xfd0] sm:$0xff]
    %v597 = vld [vmem:[#allocation2 + $0xfd8] sm:$0xff]
    %v598 = vld [vmem:[#allocation2 + $0xfe0] sm:$0xff]
    %v599 = vld [vmem:[#allocation2 + $0xfe8] sm:$0xff]
    %v600 = vld [vmem:[#allocation2 + $0xff0] sm:$0xff]
    %v601 = vld [vmem:[#allocation2 + $0xff8] sm:$0xff]
    %v602 = vld [vmem:[#allocation2 + $0x1000] sm:$0xff]
    %v603 = vld [vmem:[#allocation2 + $0x1008] sm:$0xff]
    %v604 = vld [vmem:[#allocation2 + $0x1010] sm:$0xff]
    %v605 = vld [vmem:[#allocation2 + $0x1018] sm:$0xff]
    %v606 = vld [vmem:[#allocation2 + $0x1020] sm:$0xff]
    %v607 = vld [vmem:[#allocation2 + $0x1028] sm:$0xff]
    %v608 = vld [vmem:[#allocation2 + $0x1030] sm:$0xff]
    %v609 = vld [vmem:[#allocation2 + $0x1038] sm:$0xff]
    %v610 = vld [vmem:[#allocation2 + $0x1040] sm:$0xff]
    %v611 = vld [vmem:[#allocation2 + $0x1048] sm:$0xff]
    %v612 = vld [vmem:[#allocation2 + $0x1050] sm:$0xff]
    %v613 = vld [vmem:[#allocation2 + $0x1058] sm:$0xff]
    %v614 = vld [vmem:[#allocation2 + $0x1060] sm:$0xff]
    %v615 = vld [vmem:[#allocation2 + $0x1068] sm:$0xff]
    %v616 = vld [vmem:[#allocation2 + $0x1070] sm:$0xff]
    %v617 = vld [vmem:[#allocation2 + $0x1078] sm:$0xff]
    %v618 = vld [vmem:[#allocation2 + $0x1080] sm:$0xff]
    %v619 = vld [vmem:[#allocation2 + $0x1088] sm:$0xff]
    %v620 = vld [vmem:[#allocation2 + $0x1090] sm:$0xff]
    %v621 = vld [vmem:[#allocation2 + $0x1098] sm:$0xff]
    %v622 = vld [vmem:[#allocation2 + $0x10a0] sm:$0xff]
    %v623 = vld [vmem:[#allocation2 + $0x10a8] sm:$0xff]
    %v624 = vld [vmem:[#allocation2 + $0x10b0] sm:$0xff]
    %v625 = vld [vmem:[#allocation2 + $0x10b8] sm:$0xff]
    %v626 = vld [vmem:[#allocation2 + $0x10c0] sm:$0xff]
    %v627 = vld [vmem:[#allocation2 + $0x10c8] sm:$0xff]
    %v628 = vld [vmem:[#allocation2 + $0x10d0] sm:$0xff]
    %v629 = vld [vmem:[#allocation2 + $0x10d8] sm:$0xff]
    %v630 = vld [vmem:[#allocation2 + $0x10e0] sm:$0xff]
    %v631 = vld [vmem:[#allocation2 + $0x10e8] sm:$0xff]
    %v632 = vld [vmem:[#allocation2 + $0x10f0] sm:$0xff]
    %v633 = vld [vmem:[#allocation2 + $0x10f8] sm:$0xff]
    %v634 = vld [vmem:[#allocation2 + $0x1100] sm:$0xff]
    %v635 = vld [vmem:[#allocation2 + $0x1108] sm:$0xff]
    %v636 = vld [vmem:[#allocation2 + $0x1110] sm:$0xff]
    %v637 = vld [vmem:[#allocation2 + $0x1118] sm:$0xff]
    %v638 = vld [vmem:[#allocation2 + $0x1120] sm:$0xff]
    %v639 = vld [vmem:[#allocation2 + $0x1128] sm:$0xff]
    %v640 = vld [vmem:[#allocation2 + $0x1130] sm:$0xff]
    %v641 = vld [vmem:[#allocation2 + $0x1138] sm:$0xff]
    %v642 = vld [vmem:[#allocation2 + $0x1140] sm:$0xff]
    %v643 = vld [vmem:[#allocation2 + $0x1148] sm:$0xff]
    %v644 = vld [vmem:[#allocation2 + $0x1150] sm:$0xff]
    %v645 = vld [vmem:[#allocation2 + $0x1158] sm:$0xff]
    %v646 = vld [vmem:[#allocation2 + $0x1160] sm:$0xff]
    %v647 = vld [vmem:[#allocation2 + $0x1168] sm:$0xff]
    %v648 = vld [vmem:[#allocation2 + $0x1170] sm:$0xff]
    %v649 = vld [vmem:[#allocation2 + $0x1178] sm:$0xff]
    %v650 = vld [vmem:[#allocation2 + $0x1180] sm:$0xff]
    %v651 = vld [vmem:[#allocation2 + $0x1188] sm:$0xff]
    %v652 = vld [vmem:[#allocation2 + $0x1190] sm:$0xff]
    %v653 = vld [vmem:[#allocation2 + $0x1198] sm:$0xff]
    %v654 = vld [vmem:[#allocation2 + $0x11a0] sm:$0xff]
    %v655 = vld [vmem:[#allocation2 + $0x11a8] sm:$0xff]
    %v656 = vld [vmem:[#allocation2 + $0x11b0] sm:$0xff]
    %v657 = vld [vmem:[#allocation2 + $0x11b8] sm:$0xff]
    %v658 = vld [vmem:[#allocation2 + $0x11c0] sm:$0xff]
    %v659 = vld [vmem:[#allocation2 + $0x11c8] sm:$0xff]
    %v660 = vld [vmem:[#allocation2 + $0x11d0] sm:$0xff]
    %v661 = vld [vmem:[#allocation2 + $0x11d8] sm:$0xff]
    %v662 = vld [vmem:[#allocation2 + $0x11e0] sm:$0xff]
    %v663 = vld [vmem:[#allocation2 + $0x11e8] sm:$0xff]
    %v664 = vld [vmem:[#allocation2 + $0x11f0] sm:$0xff]
    %v665 = vld [vmem:[#allocation2 + $0x11f8] sm:$0xff]
    %v702 = vunpack.c.l.b16 %v54
    %v703 = vunpack.c.h.b16 %v54
    %v704 = vunpack.c.l.b16 %v55
    %v705 = vunpack.c.h.b16 %v55
    %v706 = vunpack.c.l.b16 %v56
    %v707 = vunpack.c.h.b16 %v56
    %v708 = vunpack.c.l.b16 %v57
    %v709 = vunpack.c.h.b16 %v57
    %v710 = vunpack.c.l.b16 %v58
    %v711 = vunpack.c.h.b16 %v58
    %v712 = vunpack.c.l.b16 %v59
    %v713 = vunpack.c.h.b16 %v59
    %v714 = vunpack.c.l.b16 %v60
    %v715 = vunpack.c.h.b16 %v60
    %v716 = vunpack.c.l.b16 %v61
    %v717 = vunpack.c.h.b16 %v61
    %v718 = vunpack.c.l.b16 %v62
    %v719 = vunpack.c.h.b16 %v62
    %v720 = vunpack.c.l.b16 %v63
    %v721 = vunpack.c.h.b16 %v63
    %v722 = vunpack.c.l.b16 %v64
    %v723 = vunpack.c.h.b16 %v64
    %v724 = vunpack.c.l.b16 %v65
    %v725 = vunpack.c.h.b16 %v65
    %v726 = vunpack.c.l.b16 %v66
    %v727 = vunpack.c.h.b16 %v66
    %v728 = vunpack.c.l.b16 %v67
    %v729 = vunpack.c.h.b16 %v67
    %v730 = vunpack.c.l.b16 %v68
    %v731 = vunpack.c.h.b16 %v68
    %v732 = vunpack.c.l.b16 %v69
    %v733 = vunpack.c.h.b16 %v69
    %v734 = vunpack.c.l.b16 %v70
    %v735 = vunpack.c.h.b16 %v70
    %v736 = vunpack.c.l.b16 %v71
    %v737 = vunpack.c.h.b16 %v71
    %v738 = vunpack.c.l.b16 %v72
    %v739 = vunpack.c.h.b16 %v72
    %v740 = vunpack.c.l.b16 %v73
    %v741 = vunpack.c.h.b16 %v73
    %v742 = vunpack.c.l.b16 %v74
    %v743 = vunpack.c.h.b16 %v74
    %v744 = vunpack.c.l.b16 %v75
    %v745 = vunpack.c.h.b16 %v75
    %v746 = vunpack.c.l.b16 %v76
    %v747 = vunpack.c.h.b16 %v76
    %v748 = vunpack.c.l.b16 %v77
    %v749 = vunpack.c.h.b16 %v77
    %v750 = vunpack.c.l.b16 %v78
    %v751 = vunpack.c.h.b16 %v78
    %v752 = vunpack.c.l.b16 %v79
    %v753 = vunpack.c.h.b16 %v79
    %v754 = vunpack.c.l.b16 %v80
    %v755 = vunpack.c.h.b16 %v80
    %v756 = vunpack.c.l.b16 %v81
    %v757 = vunpack.c.h.b16 %v81
    %v758 = vunpack.c.l.b16 %v82
    %v759 = vunpack.c.h.b16 %v82
    %v760 = vunpack.c.l.b16 %v83
    %v761 = vunpack.c.h.b16 %v83
    %v762 = vunpack.c.l.b16 %v84
    %v763 = vunpack.c.h.b16 %v84
    %v764 = vunpack.c.l.b16 %v85
    %v765 = vunpack.c.h.b16 %v85
    %v766 = vunpack.c.l.b16 %v86
    %v767 = vunpack.c.h.b16 %v86
    %v768 = vunpack.c.l.b16 %v87
    %v769 = vunpack.c.h.b16 %v87
    %v770 = vunpack.c.l.b16 %v88
    %v771 = vunpack.c.h.b16 %v88
    %v772 = vunpack.c.l.b16 %v89
    %v773 = vunpack.c.h.b16 %v89
    %v774 = vpack.c.b16 %v720, %v702
    %v775 = vpack.c.b16 %v721, %v703
    %v776 = vpack.c.b16 %v722, %v704
    %v777 = vpack.c.b16 %v723, %v705
    %v778 = vpack.c.b16 %v724, %v706
    %v779 = vpack.c.b16 %v725, %v707
    %v780 = vpack.c.b16 %v726, %v708
    %v781 = vpack.c.b16 %v727, %v709
    %v782 = vpack.c.b16 %v728, %v710
    %v783 = vpack.c.b16 %v729, %v711
    %v784 = vpack.c.b16 %v730, %v712
    %v785 = vpack.c.b16 %v731, %v713
    %v786 = vpack.c.b16 %v732, %v714
    %v787 = vpack.c.b16 %v733, %v715
    %v788 = vpack.c.b16 %v734, %v716
    %v789 = vpack.c.b16 %v735, %v717
    %v790 = vpack.c.b16 %v736, %v718
    %v791 = vpack.c.b16 %v737, %v719
    %v792 = vpack.c.b16 %v756, %v738
    %v793 = vpack.c.b16 %v757, %v739
    %v794 = vpack.c.b16 %v758, %v740
    %v795 = vpack.c.b16 %v759, %v741
    %v796 = vpack.c.b16 %v760, %v742
    %v797 = vpack.c.b16 %v761, %v743
    %v798 = vpack.c.b16 %v762, %v744
    %v799 = vpack.c.b16 %v763, %v745
    %v800 = vpack.c.b16 %v764, %v746
    %v801 = vpack.c.b16 %v765, %v747
    %v802 = vpack.c.b16 %v766, %v748
    %v803 = vpack.c.b16 %v767, %v749
    %v804 = vpack.c.b16 %v768, %v750
    %v805 = vpack.c.b16 %v769, %v751
    %v806 = vpack.c.b16 %v770, %v752
    %v807 = vpack.c.b16 %v771, %v753
    %v808 = vpack.c.b16 %v772, %v754
    %v809 = vpack.c.b16 %v773, %v755
    %v1422 = vunpack.c.l.b16 %v90
    %v1423 = vunpack.c.h.b16 %v90
    %v1424 = vunpack.c.l.b16 %v91
    %v1425 = vunpack.c.h.b16 %v91
    %v1426 = vunpack.c.l.b16 %v92
    %v1427 = vunpack.c.h.b16 %v92
    %v1428 = vunpack.c.l.b16 %v93
    %v1429 = vunpack.c.h.b16 %v93
    %v1430 = vunpack.c.l.b16 %v94
    %v1431 = vunpack.c.h.b16 %v94
    %v1432 = vunpack.c.l.b16 %v95
    %v1433 = vunpack.c.h.b16 %v95
    %v1434 = vunpack.c.l.b16 %v96
    %v1435 = vunpack.c.h.b16 %v96
    %v1436 = vunpack.c.l.b16 %v97
    %v1437 = vunpack.c.h.b16 %v97
    %v1438 = vunpack.c.l.b16 %v98
    %v1439 = vunpack.c.h.b16 %v98
    %v1440 = vunpack.c.l.b16 %v99
    %v1441 = vunpack.c.h.b16 %v99
    %v1442 = vunpack.c.l.b16 %v100
    %v1443 = vunpack.c.h.b16 %v100
    %v1444 = vunpack.c.l.b16 %v101
    %v1445 = vunpack.c.h.b16 %v101
    %v1446 = vunpack.c.l.b16 %v102
    %v1447 = vunpack.c.h.b16 %v102
    %v1448 = vunpack.c.l.b16 %v103
    %v1449 = vunpack.c.h.b16 %v103
    %v1450 = vunpack.c.l.b16 %v104
    %v1451 = vunpack.c.h.b16 %v104
    %v1452 = vunpack.c.l.b16 %v105
    %v1453 = vunpack.c.h.b16 %v105
    %v1454 = vunpack.c.l.b16 %v106
    %v1455 = vunpack.c.h.b16 %v106
    %v1456 = vunpack.c.l.b16 %v107
    %v1457 = vunpack.c.h.b16 %v107
    %v1458 = vunpack.c.l.b16 %v108
    %v1459 = vunpack.c.h.b16 %v108
    %v1460 = vunpack.c.l.b16 %v109
    %v1461 = vunpack.c.h.b16 %v109
    %v1462 = vunpack.c.l.b16 %v110
    %v1463 = vunpack.c.h.b16 %v110
    %v1464 = vunpack.c.l.b16 %v111
    %v1465 = vunpack.c.h.b16 %v111
    %v1466 = vunpack.c.l.b16 %v112
    %v1467 = vunpack.c.h.b16 %v112
    %v1468 = vunpack.c.l.b16 %v113
    %v1469 = vunpack.c.h.b16 %v113
    %v1470 = vunpack.c.l.b16 %v114
    %v1471 = vunpack.c.h.b16 %v114
    %v1472 = vunpack.c.l.b16 %v115
    %v1473 = vunpack.c.h.b16 %v115
    %v1474 = vunpack.c.l.b16 %v116
    %v1475 = vunpack.c.h.b16 %v116
    %v1476 = vunpack.c.l.b16 %v117
    %v1477 = vunpack.c.h.b16 %v117
    %v1478 = vunpack.c.l.b16 %v118
    %v1479 = vunpack.c.h.b16 %v118
    %v1480 = vunpack.c.l.b16 %v119
    %v1481 = vunpack.c.h.b16 %v119
    %v1482 = vunpack.c.l.b16 %v120
    %v1483 = vunpack.c.h.b16 %v120
    %v1484 = vunpack.c.l.b16 %v121
    %v1485 = vunpack.c.h.b16 %v121
    %v1486 = vunpack.c.l.b16 %v122
    %v1487 = vunpack.c.h.b16 %v122
    %v1488 = vunpack.c.l.b16 %v123
    %v1489 = vunpack.c.h.b16 %v123
    %v1490 = vunpack.c.l.b16 %v124
    %v1491 = vunpack.c.h.b16 %v124
    %v1492 = vunpack.c.l.b16 %v125
    %v1493 = vunpack.c.h.b16 %v125
    %v1494 = vunpack.c.l.b16 %v126
    %v1495 = vunpack.c.h.b16 %v126
    %v1496 = vunpack.c.l.b16 %v127
    %v1497 = vunpack.c.h.b16 %v127
    %v1498 = vunpack.c.l.b16 %v128
    %v1499 = vunpack.c.h.b16 %v128
    %v1500 = vunpack.c.l.b16 %v129
    %v1501 = vunpack.c.h.b16 %v129
    %v1502 = vunpack.c.l.b16 %v130
    %v1503 = vunpack.c.h.b16 %v130
    %v1504 = vunpack.c.l.b16 %v131
    %v1505 = vunpack.c.h.b16 %v131
    %v1506 = vunpack.c.l.b16 %v132
    %v1507 = vunpack.c.h.b16 %v132
    %v1508 = vunpack.c.l.b16 %v133
    %v1509 = vunpack.c.h.b16 %v133
    %v1510 = vunpack.c.l.b16 %v134
    %v1511 = vunpack.c.h.b16 %v134
    %v1512 = vunpack.c.l.b16 %v135
    %v1513 = vunpack.c.h.b16 %v135
    %v1514 = vunpack.c.l.b16 %v136
    %v1515 = vunpack.c.h.b16 %v136
    %v1516 = vunpack.c.l.b16 %v137
    %v1517 = vunpack.c.h.b16 %v137
    %v1518 = vunpack.c.l.b16 %v138
    %v1519 = vunpack.c.h.b16 %v138
    %v1520 = vunpack.c.l.b16 %v139
    %v1521 = vunpack.c.h.b16 %v139
    %v1522 = vunpack.c.l.b16 %v140
    %v1523 = vunpack.c.h.b16 %v140
    %v1524 = vunpack.c.l.b16 %v141
    %v1525 = vunpack.c.h.b16 %v141
    %v1526 = vunpack.c.l.b16 %v142
    %v1527 = vunpack.c.h.b16 %v142
    %v1528 = vunpack.c.l.b16 %v143
    %v1529 = vunpack.c.h.b16 %v143
    %v1530 = vunpack.c.l.b16 %v144
    %v1531 = vunpack.c.h.b16 %v144
    %v1532 = vunpack.c.l.b16 %v145
    %v1533 = vunpack.c.h.b16 %v145
    %v1534 = vunpack.c.l.b16 %v146
    %v1535 = vunpack.c.h.b16 %v146
    %v1536 = vunpack.c.l.b16 %v147
    %v1537 = vunpack.c.h.b16 %v147
    %v1538 = vunpack.c.l.b16 %v148
    %v1539 = vunpack.c.h.b16 %v148
    %v1540 = vunpack.c.l.b16 %v149
    %v1541 = vunpack.c.h.b16 %v149
    %v1542 = vunpack.c.l.b16 %v150
    %v1543 = vunpack.c.h.b16 %v150
    %v1544 = vunpack.c.l.b16 %v151
    %v1545 = vunpack.c.h.b16 %v151
    %v1546 = vunpack.c.l.b16 %v152
    %v1547 = vunpack.c.h.b16 %v152
    %v1548 = vunpack.c.l.b16 %v153
    %v1549 = vunpack.c.h.b16 %v153
    %v1550 = vunpack.c.l.b16 %v154
    %v1551 = vunpack.c.h.b16 %v154
    %v1552 = vunpack.c.l.b16 %v155
    %v1553 = vunpack.c.h.b16 %v155
    %v1554 = vunpack.c.l.b16 %v156
    %v1555 = vunpack.c.h.b16 %v156
    %v1556 = vunpack.c.l.b16 %v157
    %v1557 = vunpack.c.h.b16 %v157
    %v1558 = vunpack.c.l.b16 %v158
    %v1559 = vunpack.c.h.b16 %v158
    %v1560 = vunpack.c.l.b16 %v159
    %v1561 = vunpack.c.h.b16 %v159
    %v1562 = vunpack.c.l.b16 %v160
    %v1563 = vunpack.c.h.b16 %v160
    %v1564 = vunpack.c.l.b16 %v161
    %v1565 = vunpack.c.h.b16 %v161
    %v1566 = vunpack.c.l.b16 %v162
    %v1567 = vunpack.c.h.b16 %v162
    %v1568 = vunpack.c.l.b16 %v163
    %v1569 = vunpack.c.h.b16 %v163
    %v1570 = vunpack.c.l.b16 %v164
    %v1571 = vunpack.c.h.b16 %v164
    %v1572 = vunpack.c.l.b16 %v165
    %v1573 = vunpack.c.h.b16 %v165
    %v1574 = vunpack.c.l.b16 %v166
    %v1575 = vunpack.c.h.b16 %v166
    %v1576 = vunpack.c.l.b16 %v167
    %v1577 = vunpack.c.h.b16 %v167
    %v1578 = vunpack.c.l.b16 %v168
    %v1579 = vunpack.c.h.b16 %v168
    %v1580 = vunpack.c.l.b16 %v169
    %v1581 = vunpack.c.h.b16 %v169
    %v1582 = vunpack.c.l.b16 %v170
    %v1583 = vunpack.c.h.b16 %v170
    %v1584 = vunpack.c.l.b16 %v171
    %v1585 = vunpack.c.h.b16 %v171
    %v1586 = vunpack.c.l.b16 %v172
    %v1587 = vunpack.c.h.b16 %v172
    %v1588 = vunpack.c.l.b16 %v173
    %v1589 = vunpack.c.h.b16 %v173
    %v1590 = vunpack.c.l.b16 %v174
    %v1591 = vunpack.c.h.b16 %v174
    %v1592 = vunpack.c.l.b16 %v175
    %v1593 = vunpack.c.h.b16 %v175
    %v1594 = vunpack.c.l.b16 %v176
    %v1595 = vunpack.c.h.b16 %v176
    %v1596 = vunpack.c.l.b16 %v177
    %v1597 = vunpack.c.h.b16 %v177
    %v1598 = vunpack.c.l.b16 %v178
    %v1599 = vunpack.c.h.b16 %v178
    %v1600 = vunpack.c.l.b16 %v179
    %v1601 = vunpack.c.h.b16 %v179
    %v1602 = vunpack.c.l.b16 %v180
    %v1603 = vunpack.c.h.b16 %v180
    %v1604 = vunpack.c.l.b16 %v181
    %v1605 = vunpack.c.h.b16 %v181
    %v1606 = vunpack.c.l.b16 %v182
    %v1607 = vunpack.c.h.b16 %v182
    %v1608 = vunpack.c.l.b16 %v183
    %v1609 = vunpack.c.h.b16 %v183
    %v1610 = vunpack.c.l.b16 %v184
    %v1611 = vunpack.c.h.b16 %v184
    %v1612 = vunpack.c.l.b16 %v185
    %v1613 = vunpack.c.h.b16 %v185
    %v1614 = vunpack.c.l.b16 %v186
    %v1615 = vunpack.c.h.b16 %v186
    %v1616 = vunpack.c.l.b16 %v187
    %v1617 = vunpack.c.h.b16 %v187
    %v1618 = vunpack.c.l.b16 %v188
    %v1619 = vunpack.c.h.b16 %v188
    %v1620 = vunpack.c.l.b16 %v189
    %v1621 = vunpack.c.h.b16 %v189
    %v1622 = vunpack.c.l.b16 %v190
    %v1623 = vunpack.c.h.b16 %v190
    %v1624 = vunpack.c.l.b16 %v191
    %v1625 = vunpack.c.h.b16 %v191
    %v1626 = vunpack.c.l.b16 %v192
    %v1627 = vunpack.c.h.b16 %v192
    %v1628 = vunpack.c.l.b16 %v193
    %v1629 = vunpack.c.h.b16 %v193
    %v1630 = vunpack.c.l.b16 %v194
    %v1631 = vunpack.c.h.b16 %v194
    %v1632 = vunpack.c.l.b16 %v195
    %v1633 = vunpack.c.h.b16 %v195
    %v1634 = vunpack.c.l.b16 %v196
    %v1635 = vunpack.c.h.b16 %v196
    %v1636 = vunpack.c.l.b16 %v197
    %v1637 = vunpack.c.h.b16 %v197
    %v1638 = vunpack.c.l.b16 %v198
    %v1639 = vunpack.c.h.b16 %v198
    %v1640 = vunpack.c.l.b16 %v199
    %v1641 = vunpack.c.h.b16 %v199
    %v1642 = vunpack.c.l.b16 %v200
    %v1643 = vunpack.c.h.b16 %v200
    %v1644 = vunpack.c.l.b16 %v201
    %v1645 = vunpack.c.h.b16 %v201
    %v1646 = vunpack.c.l.b16 %v202
    %v1647 = vunpack.c.h.b16 %v202
    %v1648 = vunpack.c.l.b16 %v203
    %v1649 = vunpack.c.h.b16 %v203
    %v1650 = vunpack.c.l.b16 %v204
    %v1651 = vunpack.c.h.b16 %v204
    %v1652 = vunpack.c.l.b16 %v205
    %v1653 = vunpack.c.h.b16 %v205
    %v1654 = vunpack.c.l.b16 %v206
    %v1655 = vunpack.c.h.b16 %v206
    %v1656 = vunpack.c.l.b16 %v207
    %v1657 = vunpack.c.h.b16 %v207
    %v1658 = vunpack.c.l.b16 %v208
    %v1659 = vunpack.c.h.b16 %v208
    %v1660 = vunpack.c.l.b16 %v209
    %v1661 = vunpack.c.h.b16 %v209
    %v1662 = vunpack.c.l.b16 %v210
    %v1663 = vunpack.c.h.b16 %v210
    %v1664 = vunpack.c.l.b16 %v211
    %v1665 = vunpack.c.h.b16 %v211
    %v1666 = vunpack.c.l.b16 %v212
    %v1667 = vunpack.c.h.b16 %v212
    %v1668 = vunpack.c.l.b16 %v213
    %v1669 = vunpack.c.h.b16 %v213
    %v1670 = vunpack.c.l.b16 %v214
    %v1671 = vunpack.c.h.b16 %v214
    %v1672 = vunpack.c.l.b16 %v215
    %v1673 = vunpack.c.h.b16 %v215
    %v1674 = vunpack.c.l.b16 %v216
    %v1675 = vunpack.c.h.b16 %v216
    %v1676 = vunpack.c.l.b16 %v217
    %v1677 = vunpack.c.h.b16 %v217
    %v1678 = vunpack.c.l.b16 %v218
    %v1679 = vunpack.c.h.b16 %v218
    %v1680 = vunpack.c.l.b16 %v219
    %v1681 = vunpack.c.h.b16 %v219
    %v1682 = vunpack.c.l.b16 %v220
    %v1683 = vunpack.c.h.b16 %v220
    %v1684 = vunpack.c.l.b16 %v221
    %v1685 = vunpack.c.h.b16 %v221
    %v1686 = vunpack.c.l.b16 %v222
    %v1687 = vunpack.c.h.b16 %v222
    %v1688 = vunpack.c.l.b16 %v223
    %v1689 = vunpack.c.h.b16 %v223
    %v1690 = vunpack.c.l.b16 %v224
    %v1691 = vunpack.c.h.b16 %v224
    %v1692 = vunpack.c.l.b16 %v225
    %v1693 = vunpack.c.h.b16 %v225
    %v1694 = vunpack.c.l.b16 %v226
    %v1695 = vunpack.c.h.b16 %v226
    %v1696 = vunpack.c.l.b16 %v227
    %v1697 = vunpack.c.h.b16 %v227
    %v1698 = vunpack.c.l.b16 %v228
    %v1699 = vunpack.c.h.b16 %v228
    %v1700 = vunpack.c.l.b16 %v229
    %v1701 = vunpack.c.h.b16 %v229
    %v1702 = vunpack.c.l.b16 %v230
    %v1703 = vunpack.c.h.b16 %v230
    %v1704 = vunpack.c.l.b16 %v231
    %v1705 = vunpack.c.h.b16 %v231
    %v1706 = vunpack.c.l.b16 %v232
    %v1707 = vunpack.c.h.b16 %v232
    %v1708 = vunpack.c.l.b16 %v233
    %v1709 = vunpack.c.h.b16 %v233
    %v1710 = vunpack.c.l.b16 %v234
    %v1711 = vunpack.c.h.b16 %v234
    %v1712 = vunpack.c.l.b16 %v235
    %v1713 = vunpack.c.h.b16 %v235
    %v1714 = vunpack.c.l.b16 %v236
    %v1715 = vunpack.c.h.b16 %v236
    %v1716 = vunpack.c.l.b16 %v237
    %v1717 = vunpack.c.h.b16 %v237
    %v1718 = vunpack.c.l.b16 %v238
    %v1719 = vunpack.c.h.b16 %v238
    %v1720 = vunpack.c.l.b16 %v239
    %v1721 = vunpack.c.h.b16 %v239
    %v1722 = vunpack.c.l.b16 %v240
    %v1723 = vunpack.c.h.b16 %v240
    %v1724 = vunpack.c.l.b16 %v241
    %v1725 = vunpack.c.h.b16 %v241
    %v1726 = vunpack.c.l.b16 %v242
    %v1727 = vunpack.c.h.b16 %v242
    %v1728 = vunpack.c.l.b16 %v243
    %v1729 = vunpack.c.h.b16 %v243
    %v1730 = vunpack.c.l.b16 %v244
    %v1731 = vunpack.c.h.b16 %v244
    %v1732 = vunpack.c.l.b16 %v245
    %v1733 = vunpack.c.h.b16 %v245
    %v1734 = vunpack.c.l.b16 %v246
    %v1735 = vunpack.c.h.b16 %v246
    %v1736 = vunpack.c.l.b16 %v247
    %v1737 = vunpack.c.h.b16 %v247
    %v1738 = vunpack.c.l.b16 %v248
    %v1739 = vunpack.c.h.b16 %v248
    %v1740 = vunpack.c.l.b16 %v249
    %v1741 = vunpack.c.h.b16 %v249
    %v1742 = vunpack.c.l.b16 %v250
    %v1743 = vunpack.c.h.b16 %v250
    %v1744 = vunpack.c.l.b16 %v251
    %v1745 = vunpack.c.h.b16 %v251
    %v1746 = vunpack.c.l.b16 %v252
    %v1747 = vunpack.c.h.b16 %v252
    %v1748 = vunpack.c.l.b16 %v253
    %v1749 = vunpack.c.h.b16 %v253
    %v1750 = vunpack.c.l.b16 %v254
    %v1751 = vunpack.c.h.b16 %v254
    %v1752 = vunpack.c.l.b16 %v255
    %v1753 = vunpack.c.h.b16 %v255
    %v1754 = vunpack.c.l.b16 %v256
    %v1755 = vunpack.c.h.b16 %v256
    %v1756 = vunpack.c.l.b16 %v257
    %v1757 = vunpack.c.h.b16 %v257
    %v1758 = vunpack.c.l.b16 %v258
    %v1759 = vunpack.c.h.b16 %v258
    %v1760 = vunpack.c.l.b16 %v259
    %v1761 = vunpack.c.h.b16 %v259
    %v1762 = vunpack.c.l.b16 %v260
    %v1763 = vunpack.c.h.b16 %v260
    %v1764 = vunpack.c.l.b16 %v261
    %v1765 = vunpack.c.h.b16 %v261
    %v1766 = vunpack.c.l.b16 %v262
    %v1767 = vunpack.c.h.b16 %v262
    %v1768 = vunpack.c.l.b16 %v263
    %v1769 = vunpack.c.h.b16 %v263
    %v1770 = vunpack.c.l.b16 %v264
    %v1771 = vunpack.c.h.b16 %v264
    %v1772 = vunpack.c.l.b16 %v265
    %v1773 = vunpack.c.h.b16 %v265
    %v1774 = vunpack.c.l.b16 %v266
    %v1775 = vunpack.c.h.b16 %v266
    %v1776 = vunpack.c.l.b16 %v267
    %v1777 = vunpack.c.h.b16 %v267
    %v1778 = vunpack.c.l.b16 %v268
    %v1779 = vunpack.c.h.b16 %v268
    %v1780 = vunpack.c.l.b16 %v269
    %v1781 = vunpack.c.h.b16 %v269
    %v1782 = vunpack.c.l.b16 %v270
    %v1783 = vunpack.c.h.b16 %v270
    %v1784 = vunpack.c.l.b16 %v271
    %v1785 = vunpack.c.h.b16 %v271
    %v1786 = vunpack.c.l.b16 %v272
    %v1787 = vunpack.c.h.b16 %v272
    %v1788 = vunpack.c.l.b16 %v273
    %v1789 = vunpack.c.h.b16 %v273
    %v1790 = vunpack.c.l.b16 %v274
    %v1791 = vunpack.c.h.b16 %v274
    %v1792 = vunpack.c.l.b16 %v275
    %v1793 = vunpack.c.h.b16 %v275
    %v1794 = vunpack.c.l.b16 %v276
    %v1795 = vunpack.c.h.b16 %v276
    %v1796 = vunpack.c.l.b16 %v277
    %v1797 = vunpack.c.h.b16 %v277
    %v1798 = vunpack.c.l.b16 %v278
    %v1799 = vunpack.c.h.b16 %v278
    %v1800 = vunpack.c.l.b16 %v279
    %v1801 = vunpack.c.h.b16 %v279
    %v1802 = vunpack.c.l.b16 %v280
    %v1803 = vunpack.c.h.b16 %v280
    %v1804 = vunpack.c.l.b16 %v281
    %v1805 = vunpack.c.h.b16 %v281
    %v1806 = vunpack.c.l.b16 %v282
    %v1807 = vunpack.c.h.b16 %v282
    %v1808 = vunpack.c.l.b16 %v283
    %v1809 = vunpack.c.h.b16 %v283
    %v1810 = vunpack.c.l.b16 %v284
    %v1811 = vunpack.c.h.b16 %v284
    %v1812 = vunpack.c.l.b16 %v285
    %v1813 = vunpack.c.h.b16 %v285
    %v1814 = vunpack.c.l.b16 %v286
    %v1815 = vunpack.c.h.b16 %v286
    %v1816 = vunpack.c.l.b16 %v287
    %v1817 = vunpack.c.h.b16 %v287
    %v1818 = vunpack.c.l.b16 %v288
    %v1819 = vunpack.c.h.b16 %v288
    %v1820 = vunpack.c.l.b16 %v289
    %v1821 = vunpack.c.h.b16 %v289
    %v1822 = vunpack.c.l.b16 %v290
    %v1823 = vunpack.c.h.b16 %v290
    %v1824 = vunpack.c.l.b16 %v291
    %v1825 = vunpack.c.h.b16 %v291
    %v1826 = vunpack.c.l.b16 %v292
    %v1827 = vunpack.c.h.b16 %v292
    %v1828 = vunpack.c.l.b16 %v293
    %v1829 = vunpack.c.h.b16 %v293
    %v1830 = vunpack.c.l.b16 %v294
    %v1831 = vunpack.c.h.b16 %v294
    %v1832 = vunpack.c.l.b16 %v295
    %v1833 = vunpack.c.h.b16 %v295
    %v1834 = vunpack.c.l.b16 %v296
    %v1835 = vunpack.c.h.b16 %v296
    %v1836 = vunpack.c.l.b16 %v297
    %v1837 = vunpack.c.h.b16 %v297
    %v1838 = vunpack.c.l.b16 %v298
    %v1839 = vunpack.c.h.b16 %v298
    %v1840 = vunpack.c.l.b16 %v299
    %v1841 = vunpack.c.h.b16 %v299
    %v1842 = vunpack.c.l.b16 %v300
    %v1843 = vunpack.c.h.b16 %v300
    %v1844 = vunpack.c.l.b16 %v301
    %v1845 = vunpack.c.h.b16 %v301
    %v1846 = vunpack.c.l.b16 %v302
    %v1847 = vunpack.c.h.b16 %v302
    %v1848 = vunpack.c.l.b16 %v303
    %v1849 = vunpack.c.h.b16 %v303
    %v1850 = vunpack.c.l.b16 %v304
    %v1851 = vunpack.c.h.b16 %v304
    %v1852 = vunpack.c.l.b16 %v305
    %v1853 = vunpack.c.h.b16 %v305
    %v1854 = vunpack.c.l.b16 %v306
    %v1855 = vunpack.c.h.b16 %v306
    %v1856 = vunpack.c.l.b16 %v307
    %v1857 = vunpack.c.h.b16 %v307
    %v1858 = vunpack.c.l.b16 %v308
    %v1859 = vunpack.c.h.b16 %v308
    %v1860 = vunpack.c.l.b16 %v309
    %v1861 = vunpack.c.h.b16 %v309
    %v1862 = vunpack.c.l.b16 %v310
    %v1863 = vunpack.c.h.b16 %v310
    %v1864 = vunpack.c.l.b16 %v311
    %v1865 = vunpack.c.h.b16 %v311
    %v1866 = vunpack.c.l.b16 %v312
    %v1867 = vunpack.c.h.b16 %v312
    %v1868 = vunpack.c.l.b16 %v313
    %v1869 = vunpack.c.h.b16 %v313
    %v1870 = vunpack.c.l.b16 %v314
    %v1871 = vunpack.c.h.b16 %v314
    %v1872 = vunpack.c.l.b16 %v315
    %v1873 = vunpack.c.h.b16 %v315
    %v1874 = vunpack.c.l.b16 %v316
    %v1875 = vunpack.c.h.b16 %v316
    %v1876 = vunpack.c.l.b16 %v317
    %v1877 = vunpack.c.h.b16 %v317
    %v1878 = vunpack.c.l.b16 %v318
    %v1879 = vunpack.c.h.b16 %v318
    %v1880 = vunpack.c.l.b16 %v319
    %v1881 = vunpack.c.h.b16 %v319
    %v1882 = vunpack.c.l.b16 %v320
    %v1883 = vunpack.c.h.b16 %v320
    %v1884 = vunpack.c.l.b16 %v321
    %v1885 = vunpack.c.h.b16 %v321
    %v1886 = vunpack.c.l.b16 %v322
    %v1887 = vunpack.c.h.b16 %v322
    %v1888 = vunpack.c.l.b16 %v323
    %v1889 = vunpack.c.h.b16 %v323
    %v1890 = vunpack.c.l.b16 %v324
    %v1891 = vunpack.c.h.b16 %v324
    %v1892 = vunpack.c.l.b16 %v325
    %v1893 = vunpack.c.h.b16 %v325
    %v1894 = vunpack.c.l.b16 %v326
    %v1895 = vunpack.c.h.b16 %v326
    %v1896 = vunpack.c.l.b16 %v327
    %v1897 = vunpack.c.h.b16 %v327
    %v1898 = vunpack.c.l.b16 %v328
    %v1899 = vunpack.c.h.b16 %v328
    %v1900 = vunpack.c.l.b16 %v329
    %v1901 = vunpack.c.h.b16 %v329
    %v1902 = vunpack.c.l.b16 %v330
    %v1903 = vunpack.c.h.b16 %v330
    %v1904 = vunpack.c.l.b16 %v331
    %v1905 = vunpack.c.h.b16 %v331
    %v1906 = vunpack.c.l.b16 %v332
    %v1907 = vunpack.c.h.b16 %v332
    %v1908 = vunpack.c.l.b16 %v333
    %v1909 = vunpack.c.h.b16 %v333
    %v1910 = vunpack.c.l.b16 %v334
    %v1911 = vunpack.c.h.b16 %v334
    %v1912 = vunpack.c.l.b16 %v335
    %v1913 = vunpack.c.h.b16 %v335
    %v1914 = vunpack.c.l.b16 %v336
    %v1915 = vunpack.c.h.b16 %v336
    %v1916 = vunpack.c.l.b16 %v337
    %v1917 = vunpack.c.h.b16 %v337
    %v1918 = vunpack.c.l.b16 %v338
    %v1919 = vunpack.c.h.b16 %v338
    %v1920 = vunpack.c.l.b16 %v339
    %v1921 = vunpack.c.h.b16 %v339
    %v1922 = vunpack.c.l.b16 %v340
    %v1923 = vunpack.c.h.b16 %v340
    %v1924 = vunpack.c.l.b16 %v341
    %v1925 = vunpack.c.h.b16 %v341
    %v1926 = vunpack.c.l.b16 %v342
    %v1927 = vunpack.c.h.b16 %v342
    %v1928 = vunpack.c.l.b16 %v343
    %v1929 = vunpack.c.h.b16 %v343
    %v1930 = vunpack.c.l.b16 %v344
    %v1931 = vunpack.c.h.b16 %v344
    %v1932 = vunpack.c.l.b16 %v345
    %v1933 = vunpack.c.h.b16 %v345
    %v1934 = vunpack.c.l.b16 %v346
    %v1935 = vunpack.c.h.b16 %v346
    %v1936 = vunpack.c.l.b16 %v347
    %v1937 = vunpack.c.h.b16 %v347
    %v1938 = vunpack.c.l.b16 %v348
    %v1939 = vunpack.c.h.b16 %v348
    %v1940 = vunpack.c.l.b16 %v349
    %v1941 = vunpack.c.h.b16 %v349
    %v1942 = vunpack.c.l.b16 %v350
    %v1943 = vunpack.c.h.b16 %v350
    %v1944 = vunpack.c.l.b16 %v351
    %v1945 = vunpack.c.h.b16 %v351
    %v1946 = vunpack.c.l.b16 %v352
    %v1947 = vunpack.c.h.b16 %v352
    %v1948 = vunpack.c.l.b16 %v353
    %v1949 = vunpack.c.h.b16 %v353
    %v1950 = vunpack.c.l.b16 %v354
    %v1951 = vunpack.c.h.b16 %v354
    %v1952 = vunpack.c.l.b16 %v355
    %v1953 = vunpack.c.h.b16 %v355
    %v1954 = vunpack.c.l.b16 %v356
    %v1955 = vunpack.c.h.b16 %v356
    %v1956 = vunpack.c.l.b16 %v357
    %v1957 = vunpack.c.h.b16 %v357
    %v1958 = vunpack.c.l.b16 %v358
    %v1959 = vunpack.c.h.b16 %v358
    %v1960 = vunpack.c.l.b16 %v359
    %v1961 = vunpack.c.h.b16 %v359
    %v1962 = vunpack.c.l.b16 %v360
    %v1963 = vunpack.c.h.b16 %v360
    %v1964 = vunpack.c.l.b16 %v361
    %v1965 = vunpack.c.h.b16 %v361
    %v1966 = vunpack.c.l.b16 %v362
    %v1967 = vunpack.c.h.b16 %v362
    %v1968 = vunpack.c.l.b16 %v363
    %v1969 = vunpack.c.h.b16 %v363
    %v1970 = vunpack.c.l.b16 %v364
    %v1971 = vunpack.c.h.b16 %v364
    %v1972 = vunpack.c.l.b16 %v365
    %v1973 = vunpack.c.h.b16 %v365
    %v1974 = vunpack.c.l.b16 %v366
    %v1975 = vunpack.c.h.b16 %v366
    %v1976 = vunpack.c.l.b16 %v367
    %v1977 = vunpack.c.h.b16 %v367
    %v1978 = vunpack.c.l.b16 %v368
    %v1979 = vunpack.c.h.b16 %v368
    %v1980 = vunpack.c.l.b16 %v369
    %v1981 = vunpack.c.h.b16 %v369
    %v1982 = vunpack.c.l.b16 %v370
    %v1983 = vunpack.c.h.b16 %v370
    %v1984 = vunpack.c.l.b16 %v371
    %v1985 = vunpack.c.h.b16 %v371
    %v1986 = vunpack.c.l.b16 %v372
    %v1987 = vunpack.c.h.b16 %v372
    %v1988 = vunpack.c.l.b16 %v373
    %v1989 = vunpack.c.h.b16 %v373
    %v1990 = vunpack.c.l.b16 %v374
    %v1991 = vunpack.c.h.b16 %v374
    %v1992 = vunpack.c.l.b16 %v375
    %v1993 = vunpack.c.h.b16 %v375
    %v1994 = vunpack.c.l.b16 %v376
    %v1995 = vunpack.c.h.b16 %v376
    %v1996 = vunpack.c.l.b16 %v377
    %v1997 = vunpack.c.h.b16 %v377
    %v1998 = vunpack.c.l.b16 %v378
    %v1999 = vunpack.c.h.b16 %v378
    %v2000 = vunpack.c.l.b16 %v379
    %v2001 = vunpack.c.h.b16 %v379
    %v2002 = vunpack.c.l.b16 %v380
    %v2003 = vunpack.c.h.b16 %v380
    %v2004 = vunpack.c.l.b16 %v381
    %v2005 = vunpack.c.h.b16 %v381
    %v2006 = vunpack.c.l.b16 %v382
    %v2007 = vunpack.c.h.b16 %v382
    %v2008 = vunpack.c.l.b16 %v383
    %v2009 = vunpack.c.h.b16 %v383
    %v2010 = vunpack.c.l.b16 %v384
    %v2011 = vunpack.c.h.b16 %v384
    %v2012 = vunpack.c.l.b16 %v385
    %v2013 = vunpack.c.h.b16 %v385
    %v2014 = vunpack.c.l.b16 %v386
    %v2015 = vunpack.c.h.b16 %v386
    %v2016 = vunpack.c.l.b16 %v387
    %v2017 = vunpack.c.h.b16 %v387
    %v2018 = vunpack.c.l.b16 %v388
    %v2019 = vunpack.c.h.b16 %v388
    %v2020 = vunpack.c.l.b16 %v389
    %v2021 = vunpack.c.h.b16 %v389
    %v2022 = vunpack.c.l.b16 %v390
    %v2023 = vunpack.c.h.b16 %v390
    %v2024 = vunpack.c.l.b16 %v391
    %v2025 = vunpack.c.h.b16 %v391
    %v2026 = vunpack.c.l.b16 %v392
    %v2027 = vunpack.c.h.b16 %v392
    %v2028 = vunpack.c.l.b16 %v393
    %v2029 = vunpack.c.h.b16 %v393
    %v2030 = vunpack.c.l.b16 %v394
    %v2031 = vunpack.c.h.b16 %v394
    %v2032 = vunpack.c.l.b16 %v395
    %v2033 = vunpack.c.h.b16 %v395
    %v2034 = vunpack.c.l.b16 %v396
    %v2035 = vunpack.c.h.b16 %v396
    %v2036 = vunpack.c.l.b16 %v397
    %v2037 = vunpack.c.h.b16 %v397
    %v2038 = vunpack.c.l.b16 %v398
    %v2039 = vunpack.c.h.b16 %v398
    %v2040 = vunpack.c.l.b16 %v399
    %v2041 = vunpack.c.h.b16 %v399
    %v2042 = vunpack.c.l.b16 %v400
    %v2043 = vunpack.c.h.b16 %v400
    %v2044 = vunpack.c.l.b16 %v401
    %v2045 = vunpack.c.h.b16 %v401
    %v2046 = vunpack.c.l.b16 %v402
    %v2047 = vunpack.c.h.b16 %v402
    %v2048 = vunpack.c.l.b16 %v403
    %v2049 = vunpack.c.h.b16 %v403
    %v2050 = vunpack.c.l.b16 %v404
    %v2051 = vunpack.c.h.b16 %v404
    %v2052 = vunpack.c.l.b16 %v405
    %v2053 = vunpack.c.h.b16 %v405
    %v2054 = vunpack.c.l.b16 %v406
    %v2055 = vunpack.c.h.b16 %v406
    %v2056 = vunpack.c.l.b16 %v407
    %v2057 = vunpack.c.h.b16 %v407
    %v2058 = vunpack.c.l.b16 %v408
    %v2059 = vunpack.c.h.b16 %v408
    %v2060 = vunpack.c.l.b16 %v409
    %v2061 = vunpack.c.h.b16 %v409
    %v2062 = vunpack.c.l.b16 %v410
    %v2063 = vunpack.c.h.b16 %v410
    %v2064 = vunpack.c.l.b16 %v411
    %v2065 = vunpack.c.h.b16 %v411
    %v2066 = vunpack.c.l.b16 %v412
    %v2067 = vunpack.c.h.b16 %v412
    %v2068 = vunpack.c.l.b16 %v413
    %v2069 = vunpack.c.h.b16 %v413
    %v2070 = vunpack.c.l.b16 %v414
    %v2071 = vunpack.c.h.b16 %v414
    %v2072 = vunpack.c.l.b16 %v415
    %v2073 = vunpack.c.h.b16 %v415
    %v2074 = vunpack.c.l.b16 %v416
    %v2075 = vunpack.c.h.b16 %v416
    %v2076 = vunpack.c.l.b16 %v417
    %v2077 = vunpack.c.h.b16 %v417
    %v2078 = vunpack.c.l.b16 %v418
    %v2079 = vunpack.c.h.b16 %v418
    %v2080 = vunpack.c.l.b16 %v419
    %v2081 = vunpack.c.h.b16 %v419
    %v2082 = vunpack.c.l.b16 %v420
    %v2083 = vunpack.c.h.b16 %v420
    %v2084 = vunpack.c.l.b16 %v421
    %v2085 = vunpack.c.h.b16 %v421
    %v2086 = vunpack.c.l.b16 %v422
    %v2087 = vunpack.c.h.b16 %v422
    %v2088 = vunpack.c.l.b16 %v423
    %v2089 = vunpack.c.h.b16 %v423
    %v2090 = vunpack.c.l.b16 %v424
    %v2091 = vunpack.c.h.b16 %v424
    %v2092 = vunpack.c.l.b16 %v425
    %v2093 = vunpack.c.h.b16 %v425
    %v2094 = vunpack.c.l.b16 %v426
    %v2095 = vunpack.c.h.b16 %v426
    %v2096 = vunpack.c.l.b16 %v427
    %v2097 = vunpack.c.h.b16 %v427
    %v2098 = vunpack.c.l.b16 %v428
    %v2099 = vunpack.c.h.b16 %v428
    %v2100 = vunpack.c.l.b16 %v429
    %v2101 = vunpack.c.h.b16 %v429
    %v2102 = vunpack.c.l.b16 %v430
    %v2103 = vunpack.c.h.b16 %v430
    %v2104 = vunpack.c.l.b16 %v431
    %v2105 = vunpack.c.h.b16 %v431
    %v2106 = vunpack.c.l.b16 %v432
    %v2107 = vunpack.c.h.b16 %v432
    %v2108 = vunpack.c.l.b16 %v433
    %v2109 = vunpack.c.h.b16 %v433
    %v2110 = vunpack.c.l.b16 %v434
    %v2111 = vunpack.c.h.b16 %v434
    %v2112 = vunpack.c.l.b16 %v435
    %v2113 = vunpack.c.h.b16 %v435
    %v2114 = vunpack.c.l.b16 %v436
    %v2115 = vunpack.c.h.b16 %v436
    %v2116 = vunpack.c.l.b16 %v437
    %v2117 = vunpack.c.h.b16 %v437
    %v2118 = vunpack.c.l.b16 %v438
    %v2119 = vunpack.c.h.b16 %v438
    %v2120 = vunpack.c.l.b16 %v439
    %v2121 = vunpack.c.h.b16 %v439
    %v2122 = vunpack.c.l.b16 %v440
    %v2123 = vunpack.c.h.b16 %v440
    %v2124 = vunpack.c.l.b16 %v441
    %v2125 = vunpack.c.h.b16 %v441
    %v2126 = vunpack.c.l.b16 %v442
    %v2127 = vunpack.c.h.b16 %v442
    %v2128 = vunpack.c.l.b16 %v443
    %v2129 = vunpack.c.h.b16 %v443
    %v2130 = vunpack.c.l.b16 %v444
    %v2131 = vunpack.c.h.b16 %v444
    %v2132 = vunpack.c.l.b16 %v445
    %v2133 = vunpack.c.h.b16 %v445
    %v2134 = vunpack.c.l.b16 %v446
    %v2135 = vunpack.c.h.b16 %v446
    %v2136 = vunpack.c.l.b16 %v447
    %v2137 = vunpack.c.h.b16 %v447
    %v2138 = vunpack.c.l.b16 %v448
    %v2139 = vunpack.c.h.b16 %v448
    %v2140 = vunpack.c.l.b16 %v449
    %v2141 = vunpack.c.h.b16 %v449
    %v2142 = vunpack.c.l.b16 %v450
    %v2143 = vunpack.c.h.b16 %v450
    %v2144 = vunpack.c.l.b16 %v451
    %v2145 = vunpack.c.h.b16 %v451
    %v2146 = vunpack.c.l.b16 %v452
    %v2147 = vunpack.c.h.b16 %v452
    %v2148 = vunpack.c.l.b16 %v453
    %v2149 = vunpack.c.h.b16 %v453
    %v2150 = vunpack.c.l.b16 %v454
    %v2151 = vunpack.c.h.b16 %v454
    %v2152 = vunpack.c.l.b16 %v455
    %v2153 = vunpack.c.h.b16 %v455
    %v2154 = vunpack.c.l.b16 %v456
    %v2155 = vunpack.c.h.b16 %v456
    %v2156 = vunpack.c.l.b16 %v457
    %v2157 = vunpack.c.h.b16 %v457
    %v2158 = vunpack.c.l.b16 %v458
    %v2159 = vunpack.c.h.b16 %v458
    %v2160 = vunpack.c.l.b16 %v459
    %v2161 = vunpack.c.h.b16 %v459
    %v2162 = vunpack.c.l.b16 %v460
    %v2163 = vunpack.c.h.b16 %v460
    %v2164 = vunpack.c.l.b16 %v461
    %v2165 = vunpack.c.h.b16 %v461
    %v2166 = vunpack.c.l.b16 %v462
    %v2167 = vunpack.c.h.b16 %v462
    %v2168 = vunpack.c.l.b16 %v463
    %v2169 = vunpack.c.h.b16 %v463
    %v2170 = vunpack.c.l.b16 %v464
    %v2171 = vunpack.c.h.b16 %v464
    %v2172 = vunpack.c.l.b16 %v465
    %v2173 = vunpack.c.h.b16 %v465
    %v2174 = vunpack.c.l.b16 %v466
    %v2175 = vunpack.c.h.b16 %v466
    %v2176 = vunpack.c.l.b16 %v467
    %v2177 = vunpack.c.h.b16 %v467
    %v2178 = vunpack.c.l.b16 %v468
    %v2179 = vunpack.c.h.b16 %v468
    %v2180 = vunpack.c.l.b16 %v469
    %v2181 = vunpack.c.h.b16 %v469
    %v2182 = vunpack.c.l.b16 %v470
    %v2183 = vunpack.c.h.b16 %v470
    %v2184 = vunpack.c.l.b16 %v471
    %v2185 = vunpack.c.h.b16 %v471
    %v2186 = vunpack.c.l.b16 %v472
    %v2187 = vunpack.c.h.b16 %v472
    %v2188 = vunpack.c.l.b16 %v473
    %v2189 = vunpack.c.h.b16 %v473
    %v2190 = vunpack.c.l.b16 %v474
    %v2191 = vunpack.c.h.b16 %v474
    %v2192 = vunpack.c.l.b16 %v475
    %v2193 = vunpack.c.h.b16 %v475
    %v2194 = vunpack.c.l.b16 %v476
    %v2195 = vunpack.c.h.b16 %v476
    %v2196 = vunpack.c.l.b16 %v477
    %v2197 = vunpack.c.h.b16 %v477
    %v2198 = vunpack.c.l.b16 %v478
    %v2199 = vunpack.c.h.b16 %v478
    %v2200 = vunpack.c.l.b16 %v479
    %v2201 = vunpack.c.h.b16 %v479
    %v2202 = vunpack.c.l.b16 %v480
    %v2203 = vunpack.c.h.b16 %v480
    %v2204 = vunpack.c.l.b16 %v481
    %v2205 = vunpack.c.h.b16 %v481
    %v2206 = vunpack.c.l.b16 %v482
    %v2207 = vunpack.c.h.b16 %v482
    %v2208 = vunpack.c.l.b16 %v483
    %v2209 = vunpack.c.h.b16 %v483
    %v2210 = vunpack.c.l.b16 %v484
    %v2211 = vunpack.c.h.b16 %v484
    %v2212 = vunpack.c.l.b16 %v485
    %v2213 = vunpack.c.h.b16 %v485
    %v2214 = vunpack.c.l.b16 %v486
    %v2215 = vunpack.c.h.b16 %v486
    %v2216 = vunpack.c.l.b16 %v487
    %v2217 = vunpack.c.h.b16 %v487
    %v2218 = vunpack.c.l.b16 %v488
    %v2219 = vunpack.c.h.b16 %v488
    %v2220 = vunpack.c.l.b16 %v489
    %v2221 = vunpack.c.h.b16 %v489
    %v2222 = vunpack.c.l.b16 %v490
    %v2223 = vunpack.c.h.b16 %v490
    %v2224 = vunpack.c.l.b16 %v491
    %v2225 = vunpack.c.h.b16 %v491
    %v2226 = vunpack.c.l.b16 %v492
    %v2227 = vunpack.c.h.b16 %v492
    %v2228 = vunpack.c.l.b16 %v493
    %v2229 = vunpack.c.h.b16 %v493
    %v2230 = vunpack.c.l.b16 %v494
    %v2231 = vunpack.c.h.b16 %v494
    %v2232 = vunpack.c.l.b16 %v495
    %v2233 = vunpack.c.h.b16 %v495
    %v2234 = vunpack.c.l.b16 %v496
    %v2235 = vunpack.c.h.b16 %v496
    %v2236 = vunpack.c.l.b16 %v497
    %v2237 = vunpack.c.h.b16 %v497
    %v2238 = vunpack.c.l.b16 %v498
    %v2239 = vunpack.c.h.b16 %v498
    %v2240 = vunpack.c.l.b16 %v499
    %v2241 = vunpack.c.h.b16 %v499
    %v2242 = vunpack.c.l.b16 %v500
    %v2243 = vunpack.c.h.b16 %v500
    %v2244 = vunpack.c.l.b16 %v501
    %v2245 = vunpack.c.h.b16 %v501
    %v2246 = vunpack.c.l.b16 %v502
    %v2247 = vunpack.c.h.b16 %v502
    %v2248 = vunpack.c.l.b16 %v503
    %v2249 = vunpack.c.h.b16 %v503
    %v2250 = vunpack.c.l.b16 %v504
    %v2251 = vunpack.c.h.b16 %v504
    %v2252 = vunpack.c.l.b16 %v505
    %v2253 = vunpack.c.h.b16 %v505
    %v2254 = vunpack.c.l.b16 %v506
    %v2255 = vunpack.c.h.b16 %v506
    %v2256 = vunpack.c.l.b16 %v507
    %v2257 = vunpack.c.h.b16 %v507
    %v2258 = vunpack.c.l.b16 %v508
    %v2259 = vunpack.c.h.b16 %v508
    %v2260 = vunpack.c.l.b16 %v509
    %v2261 = vunpack.c.h.b16 %v509
    %v2262 = vunpack.c.l.b16 %v510
    %v2263 = vunpack.c.h.b16 %v510
    %v2264 = vunpack.c.l.b16 %v511
    %v2265 = vunpack.c.h.b16 %v511
    %v2266 = vunpack.c.l.b16 %v512
    %v2267 = vunpack.c.h.b16 %v512
    %v2268 = vunpack.c.l.b16 %v513
    %v2269 = vunpack.c.h.b16 %v513
    %v2270 = vunpack.c.l.b16 %v514
    %v2271 = vunpack.c.h.b16 %v514
    %v2272 = vunpack.c.l.b16 %v515
    %v2273 = vunpack.c.h.b16 %v515
    %v2274 = vunpack.c.l.b16 %v516
    %v2275 = vunpack.c.h.b16 %v516
    %v2276 = vunpack.c.l.b16 %v517
    %v2277 = vunpack.c.h.b16 %v517
    %v2278 = vunpack.c.l.b16 %v518
    %v2279 = vunpack.c.h.b16 %v518
    %v2280 = vunpack.c.l.b16 %v519
    %v2281 = vunpack.c.h.b16 %v519
    %v2282 = vunpack.c.l.b16 %v520
    %v2283 = vunpack.c.h.b16 %v520
    %v2284 = vunpack.c.l.b16 %v521
    %v2285 = vunpack.c.h.b16 %v521
    %v2286 = vunpack.c.l.b16 %v522
    %v2287 = vunpack.c.h.b16 %v522
    %v2288 = vunpack.c.l.b16 %v523
    %v2289 = vunpack.c.h.b16 %v523
    %v2290 = vunpack.c.l.b16 %v524
    %v2291 = vunpack.c.h.b16 %v524
    %v2292 = vunpack.c.l.b16 %v525
    %v2293 = vunpack.c.h.b16 %v525
    %v2294 = vunpack.c.l.b16 %v526
    %v2295 = vunpack.c.h.b16 %v526
    %v2296 = vunpack.c.l.b16 %v527
    %v2297 = vunpack.c.h.b16 %v527
    %v2298 = vunpack.c.l.b16 %v528
    %v2299 = vunpack.c.h.b16 %v528
    %v2300 = vunpack.c.l.b16 %v529
    %v2301 = vunpack.c.h.b16 %v529
    %v2302 = vunpack.c.l.b16 %v530
    %v2303 = vunpack.c.h.b16 %v530
    %v2304 = vunpack.c.l.b16 %v531
    %v2305 = vunpack.c.h.b16 %v531
    %v2306 = vunpack.c.l.b16 %v532
    %v2307 = vunpack.c.h.b16 %v532
    %v2308 = vunpack.c.l.b16 %v533
    %v2309 = vunpack.c.h.b16 %v533
    %v2310 = vunpack.c.l.b16 %v534
    %v2311 = vunpack.c.h.b16 %v534
    %v2312 = vunpack.c.l.b16 %v535
    %v2313 = vunpack.c.h.b16 %v535
    %v2314 = vunpack.c.l.b16 %v536
    %v2315 = vunpack.c.h.b16 %v536
    %v2316 = vunpack.c.l.b16 %v537
    %v2317 = vunpack.c.h.b16 %v537
    %v2318 = vunpack.c.l.b16 %v538
    %v2319 = vunpack.c.h.b16 %v538
    %v2320 = vunpack.c.l.b16 %v539
    %v2321 = vunpack.c.h.b16 %v539
    %v2322 = vunpack.c.l.b16 %v540
    %v2323 = vunpack.c.h.b16 %v540
    %v2324 = vunpack.c.l.b16 %v541
    %v2325 = vunpack.c.h.b16 %v541
    %v2326 = vunpack.c.l.b16 %v542
    %v2327 = vunpack.c.h.b16 %v542
    %v2328 = vunpack.c.l.b16 %v543
    %v2329 = vunpack.c.h.b16 %v543
    %v2330 = vunpack.c.l.b16 %v544
    %v2331 = vunpack.c.h.b16 %v544
    %v2332 = vunpack.c.l.b16 %v545
    %v2333 = vunpack.c.h.b16 %v545
    %v2334 = vunpack.c.l.b16 %v546
    %v2335 = vunpack.c.h.b16 %v546
    %v2336 = vunpack.c.l.b16 %v547
    %v2337 = vunpack.c.h.b16 %v547
    %v2338 = vunpack.c.l.b16 %v548
    %v2339 = vunpack.c.h.b16 %v548
    %v2340 = vunpack.c.l.b16 %v549
    %v2341 = vunpack.c.h.b16 %v549
    %v2342 = vunpack.c.l.b16 %v550
    %v2343 = vunpack.c.h.b16 %v550
    %v2344 = vunpack.c.l.b16 %v551
    %v2345 = vunpack.c.h.b16 %v551
    %v2346 = vunpack.c.l.b16 %v552
    %v2347 = vunpack.c.h.b16 %v552
    %v2348 = vunpack.c.l.b16 %v553
    %v2349 = vunpack.c.h.b16 %v553
    %v2350 = vunpack.c.l.b16 %v554
    %v2351 = vunpack.c.h.b16 %v554
    %v2352 = vunpack.c.l.b16 %v555
    %v2353 = vunpack.c.h.b16 %v555
    %v2354 = vunpack.c.l.b16 %v556
    %v2355 = vunpack.c.h.b16 %v556
    %v2356 = vunpack.c.l.b16 %v557
    %v2357 = vunpack.c.h.b16 %v557
    %v2358 = vunpack.c.l.b16 %v558
    %v2359 = vunpack.c.h.b16 %v558
    %v2360 = vunpack.c.l.b16 %v559
    %v2361 = vunpack.c.h.b16 %v559
    %v2362 = vunpack.c.l.b16 %v560
    %v2363 = vunpack.c.h.b16 %v560
    %v2364 = vunpack.c.l.b16 %v561
    %v2365 = vunpack.c.h.b16 %v561
    %v2366 = vunpack.c.l.b16 %v562
    %v2367 = vunpack.c.h.b16 %v562
    %v2368 = vunpack.c.l.b16 %v563
    %v2369 = vunpack.c.h.b16 %v563
    %v2370 = vunpack.c.l.b16 %v564
    %v2371 = vunpack.c.h.b16 %v564
    %v2372 = vunpack.c.l.b16 %v565
    %v2373 = vunpack.c.h.b16 %v565
    %v2374 = vunpack.c.l.b16 %v566
    %v2375 = vunpack.c.h.b16 %v566
    %v2376 = vunpack.c.l.b16 %v567
    %v2377 = vunpack.c.h.b16 %v567
    %v2378 = vunpack.c.l.b16 %v568
    %v2379 = vunpack.c.h.b16 %v568
    %v2380 = vunpack.c.l.b16 %v569
    %v2381 = vunpack.c.h.b16 %v569
    %v2382 = vunpack.c.l.b16 %v570
    %v2383 = vunpack.c.h.b16 %v570
    %v2384 = vunpack.c.l.b16 %v571
    %v2385 = vunpack.c.h.b16 %v571
    %v2386 = vunpack.c.l.b16 %v572
    %v2387 = vunpack.c.h.b16 %v572
    %v2388 = vunpack.c.l.b16 %v573
    %v2389 = vunpack.c.h.b16 %v573
    %v2390 = vunpack.c.l.b16 %v574
    %v2391 = vunpack.c.h.b16 %v574
    %v2392 = vunpack.c.l.b16 %v575
    %v2393 = vunpack.c.h.b16 %v575
    %v2394 = vunpack.c.l.b16 %v576
    %v2395 = vunpack.c.h.b16 %v576
    %v2396 = vunpack.c.l.b16 %v577
    %v2397 = vunpack.c.h.b16 %v577
    %v2398 = vunpack.c.l.b16 %v578
    %v2399 = vunpack.c.h.b16 %v578
    %v2400 = vunpack.c.l.b16 %v579
    %v2401 = vunpack.c.h.b16 %v579
    %v2402 = vunpack.c.l.b16 %v580
    %v2403 = vunpack.c.h.b16 %v580
    %v2404 = vunpack.c.l.b16 %v581
    %v2405 = vunpack.c.h.b16 %v581
    %v2406 = vunpack.c.l.b16 %v582
    %v2407 = vunpack.c.h.b16 %v582
    %v2408 = vunpack.c.l.b16 %v583
    %v2409 = vunpack.c.h.b16 %v583
    %v2410 = vunpack.c.l.b16 %v584
    %v2411 = vunpack.c.h.b16 %v584
    %v2412 = vunpack.c.l.b16 %v585
    %v2413 = vunpack.c.h.b16 %v585
    %v2414 = vunpack.c.l.b16 %v586
    %v2415 = vunpack.c.h.b16 %v586
    %v2416 = vunpack.c.l.b16 %v587
    %v2417 = vunpack.c.h.b16 %v587
    %v2418 = vunpack.c.l.b16 %v588
    %v2419 = vunpack.c.h.b16 %v588
    %v2420 = vunpack.c.l.b16 %v589
    %v2421 = vunpack.c.h.b16 %v589
    %v2422 = vunpack.c.l.b16 %v590
    %v2423 = vunpack.c.h.b16 %v590
    %v2424 = vunpack.c.l.b16 %v591
    %v2425 = vunpack.c.h.b16 %v591
    %v2426 = vunpack.c.l.b16 %v592
    %v2427 = vunpack.c.h.b16 %v592
    %v2428 = vunpack.c.l.b16 %v593
    %v2429 = vunpack.c.h.b16 %v593
    %v2430 = vunpack.c.l.b16 %v594
    %v2431 = vunpack.c.h.b16 %v594
    %v2432 = vunpack.c.l.b16 %v595
    %v2433 = vunpack.c.h.b16 %v595
    %v2434 = vunpack.c.l.b16 %v596
    %v2435 = vunpack.c.h.b16 %v596
    %v2436 = vunpack.c.l.b16 %v597
    %v2437 = vunpack.c.h.b16 %v597
    %v2438 = vunpack.c.l.b16 %v598
    %v2439 = vunpack.c.h.b16 %v598
    %v2440 = vunpack.c.l.b16 %v599
    %v2441 = vunpack.c.h.b16 %v599
    %v2442 = vunpack.c.l.b16 %v600
    %v2443 = vunpack.c.h.b16 %v600
    %v2444 = vunpack.c.l.b16 %v601
    %v2445 = vunpack.c.h.b16 %v601
    %v2446 = vunpack.c.l.b16 %v602
    %v2447 = vunpack.c.h.b16 %v602
    %v2448 = vunpack.c.l.b16 %v603
    %v2449 = vunpack.c.h.b16 %v603
    %v2450 = vunpack.c.l.b16 %v604
    %v2451 = vunpack.c.h.b16 %v604
    %v2452 = vunpack.c.l.b16 %v605
    %v2453 = vunpack.c.h.b16 %v605
    %v2454 = vunpack.c.l.b16 %v606
    %v2455 = vunpack.c.h.b16 %v606
    %v2456 = vunpack.c.l.b16 %v607
    %v2457 = vunpack.c.h.b16 %v607
    %v2458 = vunpack.c.l.b16 %v608
    %v2459 = vunpack.c.h.b16 %v608
    %v2460 = vunpack.c.l.b16 %v609
    %v2461 = vunpack.c.h.b16 %v609
    %v2462 = vunpack.c.l.b16 %v610
    %v2463 = vunpack.c.h.b16 %v610
    %v2464 = vunpack.c.l.b16 %v611
    %v2465 = vunpack.c.h.b16 %v611
    %v2466 = vunpack.c.l.b16 %v612
    %v2467 = vunpack.c.h.b16 %v612
    %v2468 = vunpack.c.l.b16 %v613
    %v2469 = vunpack.c.h.b16 %v613
    %v2470 = vunpack.c.l.b16 %v614
    %v2471 = vunpack.c.h.b16 %v614
    %v2472 = vunpack.c.l.b16 %v615
    %v2473 = vunpack.c.h.b16 %v615
    %v2474 = vunpack.c.l.b16 %v616
    %v2475 = vunpack.c.h.b16 %v616
    %v2476 = vunpack.c.l.b16 %v617
    %v2477 = vunpack.c.h.b16 %v617
    %v2478 = vunpack.c.l.b16 %v618
    %v2479 = vunpack.c.h.b16 %v618
    %v2480 = vunpack.c.l.b16 %v619
    %v2481 = vunpack.c.h.b16 %v619
    %v2482 = vunpack.c.l.b16 %v620
    %v2483 = vunpack.c.h.b16 %v620
    %v2484 = vunpack.c.l.b16 %v621
    %v2485 = vunpack.c.h.b16 %v621
    %v2486 = vunpack.c.l.b16 %v622
    %v2487 = vunpack.c.h.b16 %v622
    %v2488 = vunpack.c.l.b16 %v623
    %v2489 = vunpack.c.h.b16 %v623
    %v2490 = vunpack.c.l.b16 %v624
    %v2491 = vunpack.c.h.b16 %v624
    %v2492 = vunpack.c.l.b16 %v625
    %v2493 = vunpack.c.h.b16 %v625
    %v2494 = vunpack.c.l.b16 %v626
    %v2495 = vunpack.c.h.b16 %v626
    %v2496 = vunpack.c.l.b16 %v627
    %v2497 = vunpack.c.h.b16 %v627
    %v2498 = vunpack.c.l.b16 %v628
    %v2499 = vunpack.c.h.b16 %v628
    %v2500 = vunpack.c.l.b16 %v629
    %v2501 = vunpack.c.h.b16 %v629
    %v2502 = vunpack.c.l.b16 %v630
    %v2503 = vunpack.c.h.b16 %v630
    %v2504 = vunpack.c.l.b16 %v631
    %v2505 = vunpack.c.h.b16 %v631
    %v2506 = vunpack.c.l.b16 %v632
    %v2507 = vunpack.c.h.b16 %v632
    %v2508 = vunpack.c.l.b16 %v633
    %v2509 = vunpack.c.h.b16 %v633
    %v2510 = vunpack.c.l.b16 %v634
    %v2511 = vunpack.c.h.b16 %v634
    %v2512 = vunpack.c.l.b16 %v635
    %v2513 = vunpack.c.h.b16 %v635
    %v2514 = vunpack.c.l.b16 %v636
    %v2515 = vunpack.c.h.b16 %v636
    %v2516 = vunpack.c.l.b16 %v637
    %v2517 = vunpack.c.h.b16 %v637
    %v2518 = vunpack.c.l.b16 %v638
    %v2519 = vunpack.c.h.b16 %v638
    %v2520 = vunpack.c.l.b16 %v639
    %v2521 = vunpack.c.h.b16 %v639
    %v2522 = vunpack.c.l.b16 %v640
    %v2523 = vunpack.c.h.b16 %v640
    %v2524 = vunpack.c.l.b16 %v641
    %v2525 = vunpack.c.h.b16 %v641
    %v2526 = vunpack.c.l.b16 %v642
    %v2527 = vunpack.c.h.b16 %v642
    %v2528 = vunpack.c.l.b16 %v643
    %v2529 = vunpack.c.h.b16 %v643
    %v2530 = vunpack.c.l.b16 %v644
    %v2531 = vunpack.c.h.b16 %v644
    %v2532 = vunpack.c.l.b16 %v645
    %v2533 = vunpack.c.h.b16 %v645
    %v2534 = vunpack.c.l.b16 %v646
    %v2535 = vunpack.c.h.b16 %v646
    %v2536 = vunpack.c.l.b16 %v647
    %v2537 = vunpack.c.h.b16 %v647
    %v2538 = vunpack.c.l.b16 %v648
    %v2539 = vunpack.c.h.b16 %v648
    %v2540 = vunpack.c.l.b16 %v649
    %v2541 = vunpack.c.h.b16 %v649
    %v2542 = vunpack.c.l.b16 %v650
    %v2543 = vunpack.c.h.b16 %v650
    %v2544 = vunpack.c.l.b16 %v651
    %v2545 = vunpack.c.h.b16 %v651
    %v2546 = vunpack.c.l.b16 %v652
    %v2547 = vunpack.c.h.b16 %v652
    %v2548 = vunpack.c.l.b16 %v653
    %v2549 = vunpack.c.h.b16 %v653
    %v2550 = vunpack.c.l.b16 %v654
    %v2551 = vunpack.c.h.b16 %v654
    %v2552 = vunpack.c.l.b16 %v655
    %v2553 = vunpack.c.h.b16 %v655
    %v2554 = vunpack.c.l.b16 %v656
    %v2555 = vunpack.c.h.b16 %v656
    %v2556 = vunpack.c.l.b16 %v657
    %v2557 = vunpack.c.h.b16 %v657
    %v2558 = vunpack.c.l.b16 %v658
    %v2559 = vunpack.c.h.b16 %v658
    %v2560 = vunpack.c.l.b16 %v659
    %v2561 = vunpack.c.h.b16 %v659
    %v2562 = vunpack.c.l.b16 %v660
    %v2563 = vunpack.c.h.b16 %v660
    %v2564 = vunpack.c.l.b16 %v661
    %v2565 = vunpack.c.h.b16 %v661
    %v2566 = vunpack.c.l.b16 %v662
    %v2567 = vunpack.c.h.b16 %v662
    %v2568 = vunpack.c.l.b16 %v663
    %v2569 = vunpack.c.h.b16 %v663
    %v2570 = vunpack.c.l.b16 %v664
    %v2571 = vunpack.c.h.b16 %v664
    %v2572 = vunpack.c.l.b16 %v665
    %v2573 = vunpack.c.h.b16 %v665
    %v2574 = vpack.c.b16 %v1426, %v1422
    %v2575 = vpack.c.b16 %v1427, %v1423
    %v2576 = vpack.c.b16 %v1428, %v1424
    %v2577 = vpack.c.b16 %v1429, %v1425
    %v2578 = vpack.c.b16 %v1434, %v1430
    %v2579 = vpack.c.b16 %v1435, %v1431
    %v2580 = vpack.c.b16 %v1436, %v1432
    %v2581 = vpack.c.b16 %v1437, %v1433
    %v2582 = vpack.c.b16 %v1442, %v1438
    %v2583 = vpack.c.b16 %v1443, %v1439
    %v2584 = vpack.c.b16 %v1444, %v1440
    %v2585 = vpack.c.b16 %v1445, %v1441
    %v2586 = vpack.c.b16 %v1450, %v1446
    %v2587 = vpack.c.b16 %v1451, %v1447
    %v2588 = vpack.c.b16 %v1452, %v1448
    %v2589 = vpack.c.b16 %v1453, %v1449
    %v2590 = vpack.c.b16 %v1458, %v1454
    %v2591 = vpack.c.b16 %v1459, %v1455
    %v2592 = vpack.c.b16 %v1460, %v1456
    %v2593 = vpack.c.b16 %v1461, %v1457
    %v2594 = vpack.c.b16 %v1466, %v1462
    %v2595 = vpack.c.b16 %v1467, %v1463
    %v2596 = vpack.c.b16 %v1468, %v1464
    %v2597 = vpack.c.b16 %v1469, %v1465
    %v2598 = vpack.c.b16 %v1474, %v1470
    %v2599 = vpack.c.b16 %v1475, %v1471
    %v2600 = vpack.c.b16 %v1476, %v1472
    %v2601 = vpack.c.b16 %v1477, %v1473
    %v2602 = vpack.c.b16 %v1482, %v1478
    %v2603 = vpack.c.b16 %v1483, %v1479
    %v2604 = vpack.c.b16 %v1484, %v1480
    %v2605 = vpack.c.b16 %v1485, %v1481
    %v2606 = vpack.c.b16 %v1490, %v1486
    %v2607 = vpack.c.b16 %v1491, %v1487
    %v2608 = vpack.c.b16 %v1492, %v1488
    %v2609 = vpack.c.b16 %v1493, %v1489
    %v2610 = vpack.c.b16 %v1498, %v1494
    %v2611 = vpack.c.b16 %v1499, %v1495
    %v2612 = vpack.c.b16 %v1500, %v1496
    %v2613 = vpack.c.b16 %v1501, %v1497
    %v2614 = vpack.c.b16 %v1506, %v1502
    %v2615 = vpack.c.b16 %v1507, %v1503
    %v2616 = vpack.c.b16 %v1508, %v1504
    %v2617 = vpack.c.b16 %v1509, %v1505
    %v2618 = vpack.c.b16 %v1514, %v1510
    %v2619 = vpack.c.b16 %v1515, %v1511
    %v2620 = vpack.c.b16 %v1516, %v1512
    %v2621 = vpack.c.b16 %v1517, %v1513
    %v2622 = vpack.c.b16 %v1522, %v1518
    %v2623 = vpack.c.b16 %v1523, %v1519
    %v2624 = vpack.c.b16 %v1524, %v1520
    %v2625 = vpack.c.b16 %v1525, %v1521
    %v2626 = vpack.c.b16 %v1530, %v1526
    %v2627 = vpack.c.b16 %v1531, %v1527
    %v2628 = vpack.c.b16 %v1532, %v1528
    %v2629 = vpack.c.b16 %v1533, %v1529
    %v2630 = vpack.c.b16 %v1538, %v1534
    %v2631 = vpack.c.b16 %v1539, %v1535
    %v2632 = vpack.c.b16 %v1540, %v1536
    %v2633 = vpack.c.b16 %v1541, %v1537
    %v2634 = vpack.c.b16 %v1546, %v1542
    %v2635 = vpack.c.b16 %v1547, %v1543
    %v2636 = vpack.c.b16 %v1548, %v1544
    %v2637 = vpack.c.b16 %v1549, %v1545
    %v2638 = vpack.c.b16 %v1554, %v1550
    %v2639 = vpack.c.b16 %v1555, %v1551
    %v2640 = vpack.c.b16 %v1556, %v1552
    %v2641 = vpack.c.b16 %v1557, %v1553
    %v2642 = vpack.c.b16 %v1562, %v1558
    %v2643 = vpack.c.b16 %v1563, %v1559
    %v2644 = vpack.c.b16 %v1564, %v1560
    %v2645 = vpack.c.b16 %v1565, %v1561
    %v2646 = vpack.c.b16 %v1570, %v1566
    %v2647 = vpack.c.b16 %v1571, %v1567
    %v2648 = vpack.c.b16 %v1572, %v1568
    %v2649 = vpack.c.b16 %v1573, %v1569
    %v2650 = vpack.c.b16 %v1578, %v1574
    %v2651 = vpack.c.b16 %v1579, %v1575
    %v2652 = vpack.c.b16 %v1580, %v1576
    %v2653 = vpack.c.b16 %v1581, %v1577
    %v2654 = vpack.c.b16 %v1586, %v1582
    %v2655 = vpack.c.b16 %v1587, %v1583
    %v2656 = vpack.c.b16 %v1588, %v1584
    %v2657 = vpack.c.b16 %v1589, %v1585
    %v2658 = vpack.c.b16 %v1594, %v1590
    %v2659 = vpack.c.b16 %v1595, %v1591
    %v2660 = vpack.c.b16 %v1596, %v1592
    %v2661 = vpack.c.b16 %v1597, %v1593
    %v2662 = vpack.c.b16 %v1602, %v1598
    %v2663 = vpack.c.b16 %v1603, %v1599
    %v2664 = vpack.c.b16 %v1604, %v1600
    %v2665 = vpack.c.b16 %v1605, %v1601
    %v2666 = vpack.c.b16 %v1610, %v1606
    %v2667 = vpack.c.b16 %v1611, %v1607
    %v2668 = vpack.c.b16 %v1612, %v1608
    %v2669 = vpack.c.b16 %v1613, %v1609
    %v2670 = vpack.c.b16 %v1618, %v1614
    %v2671 = vpack.c.b16 %v1619, %v1615
    %v2672 = vpack.c.b16 %v1620, %v1616
    %v2673 = vpack.c.b16 %v1621, %v1617
    %v2674 = vpack.c.b16 %v1626, %v1622
    %v2675 = vpack.c.b16 %v1627, %v1623
    %v2676 = vpack.c.b16 %v1628, %v1624
    %v2677 = vpack.c.b16 %v1629, %v1625
    %v2678 = vpack.c.b16 %v1634, %v1630
    %v2679 = vpack.c.b16 %v1635, %v1631
    %v2680 = vpack.c.b16 %v1636, %v1632
    %v2681 = vpack.c.b16 %v1637, %v1633
    %v2682 = vpack.c.b16 %v1642, %v1638
    %v2683 = vpack.c.b16 %v1643, %v1639
    %v2684 = vpack.c.b16 %v1644, %v1640
    %v2685 = vpack.c.b16 %v1645, %v1641
    %v2686 = vpack.c.b16 %v1650, %v1646
    %v2687 = vpack.c.b16 %v1651, %v1647
    %v2688 = vpack.c.b16 %v1652, %v1648
    %v2689 = vpack.c.b16 %v1653, %v1649
    %v2690 = vpack.c.b16 %v1658, %v1654
    %v2691 = vpack.c.b16 %v1659, %v1655
    %v2692 = vpack.c.b16 %v1660, %v1656
    %v2693 = vpack.c.b16 %v1661, %v1657
    %v2694 = vpack.c.b16 %v1666, %v1662
    %v2695 = vpack.c.b16 %v1667, %v1663
    %v2696 = vpack.c.b16 %v1668, %v1664
    %v2697 = vpack.c.b16 %v1669, %v1665
    %v2698 = vpack.c.b16 %v1674, %v1670
    %v2699 = vpack.c.b16 %v1675, %v1671
    %v2700 = vpack.c.b16 %v1676, %v1672
    %v2701 = vpack.c.b16 %v1677, %v1673
    %v2702 = vpack.c.b16 %v1682, %v1678
    %v2703 = vpack.c.b16 %v1683, %v1679
    %v2704 = vpack.c.b16 %v1684, %v1680
    %v2705 = vpack.c.b16 %v1685, %v1681
    %v2706 = vpack.c.b16 %v1690, %v1686
    %v2707 = vpack.c.b16 %v1691, %v1687
    %v2708 = vpack.c.b16 %v1692, %v1688
    %v2709 = vpack.c.b16 %v1693, %v1689
    %v2710 = vpack.c.b16 %v1698, %v1694
    %v2711 = vpack.c.b16 %v1699, %v1695
    %v2712 = vpack.c.b16 %v1700, %v1696
    %v2713 = vpack.c.b16 %v1701, %v1697
    %v2714 = vpack.c.b16 %v1706, %v1702
    %v2715 = vpack.c.b16 %v1707, %v1703
    %v2716 = vpack.c.b16 %v1708, %v1704
    %v2717 = vpack.c.b16 %v1709, %v1705
    %v2718 = vpack.c.b16 %v1714, %v1710
    %v2719 = vpack.c.b16 %v1715, %v1711
    %v2720 = vpack.c.b16 %v1716, %v1712
    %v2721 = vpack.c.b16 %v1717, %v1713
    %v2722 = vpack.c.b16 %v1722, %v1718
    %v2723 = vpack.c.b16 %v1723, %v1719
    %v2724 = vpack.c.b16 %v1724, %v1720
    %v2725 = vpack.c.b16 %v1725, %v1721
    %v2726 = vpack.c.b16 %v1730, %v1726
    %v2727 = vpack.c.b16 %v1731, %v1727
    %v2728 = vpack.c.b16 %v1732, %v1728
    %v2729 = vpack.c.b16 %v1733, %v1729
    %v2730 = vpack.c.b16 %v1738, %v1734
    %v2731 = vpack.c.b16 %v1739, %v1735
    %v2732 = vpack.c.b16 %v1740, %v1736
    %v2733 = vpack.c.b16 %v1741, %v1737
    %v2734 = vpack.c.b16 %v1746, %v1742
    %v2735 = vpack.c.b16 %v1747, %v1743
    %v2736 = vpack.c.b16 %v1748, %v1744
    %v2737 = vpack.c.b16 %v1749, %v1745
    %v2738 = vpack.c.b16 %v1754, %v1750
    %v2739 = vpack.c.b16 %v1755, %v1751
    %v2740 = vpack.c.b16 %v1756, %v1752
    %v2741 = vpack.c.b16 %v1757, %v1753
    %v2742 = vpack.c.b16 %v1762, %v1758
    %v2743 = vpack.c.b16 %v1763, %v1759
    %v2744 = vpack.c.b16 %v1764, %v1760
    %v2745 = vpack.c.b16 %v1765, %v1761
    %v2746 = vpack.c.b16 %v1770, %v1766
    %v2747 = vpack.c.b16 %v1771, %v1767
    %v2748 = vpack.c.b16 %v1772, %v1768
    %v2749 = vpack.c.b16 %v1773, %v1769
    %v2750 = vpack.c.b16 %v1778, %v1774
    %v2751 = vpack.c.b16 %v1779, %v1775
    %v2752 = vpack.c.b16 %v1780, %v1776
    %v2753 = vpack.c.b16 %v1781, %v1777
    %v2754 = vpack.c.b16 %v1786, %v1782
    %v2755 = vpack.c.b16 %v1787, %v1783
    %v2756 = vpack.c.b16 %v1788, %v1784
    %v2757 = vpack.c.b16 %v1789, %v1785
    %v2758 = vpack.c.b16 %v1794, %v1790
    %v2759 = vpack.c.b16 %v1795, %v1791
    %v2760 = vpack.c.b16 %v1796, %v1792
    %v2761 = vpack.c.b16 %v1797, %v1793
    %v2762 = vpack.c.b16 %v1802, %v1798
    %v2763 = vpack.c.b16 %v1803, %v1799
    %v2764 = vpack.c.b16 %v1804, %v1800
    %v2765 = vpack.c.b16 %v1805, %v1801
    %v2766 = vpack.c.b16 %v1810, %v1806
    %v2767 = vpack.c.b16 %v1811, %v1807
    %v2768 = vpack.c.b16 %v1812, %v1808
    %v2769 = vpack.c.b16 %v1813, %v1809
    %v2770 = vpack.c.b16 %v1818, %v1814
    %v2771 = vpack.c.b16 %v1819, %v1815
    %v2772 = vpack.c.b16 %v1820, %v1816
    %v2773 = vpack.c.b16 %v1821, %v1817
    %v2774 = vpack.c.b16 %v1826, %v1822
    %v2775 = vpack.c.b16 %v1827, %v1823
    %v2776 = vpack.c.b16 %v1828, %v1824
    %v2777 = vpack.c.b16 %v1829, %v1825
    %v2778 = vpack.c.b16 %v1834, %v1830
    %v2779 = vpack.c.b16 %v1835, %v1831
    %v2780 = vpack.c.b16 %v1836, %v1832
    %v2781 = vpack.c.b16 %v1837, %v1833
    %v2782 = vpack.c.b16 %v1842, %v1838
    %v2783 = vpack.c.b16 %v1843, %v1839
    %v2784 = vpack.c.b16 %v1844, %v1840
    %v2785 = vpack.c.b16 %v1845, %v1841
    %v2786 = vpack.c.b16 %v1850, %v1846
    %v2787 = vpack.c.b16 %v1851, %v1847
    %v2788 = vpack.c.b16 %v1852, %v1848
    %v2789 = vpack.c.b16 %v1853, %v1849
    %v2790 = vpack.c.b16 %v1858, %v1854
    %v2791 = vpack.c.b16 %v1859, %v1855
    %v2792 = vpack.c.b16 %v1860, %v1856
    %v2793 = vpack.c.b16 %v1861, %v1857
    %v2794 = vpack.c.b16 %v1866, %v1862
    %v2795 = vpack.c.b16 %v1867, %v1863
    %v2796 = vpack.c.b16 %v1868, %v1864
    %v2797 = vpack.c.b16 %v1869, %v1865
    %v2798 = vpack.c.b16 %v1874, %v1870
    %v2799 = vpack.c.b16 %v1875, %v1871
    %v2800 = vpack.c.b16 %v1876, %v1872
    %v2801 = vpack.c.b16 %v1877, %v1873
    %v2802 = vpack.c.b16 %v1882, %v1878
    %v2803 = vpack.c.b16 %v1883, %v1879
    %v2804 = vpack.c.b16 %v1884, %v1880
    %v2805 = vpack.c.b16 %v1885, %v1881
    %v2806 = vpack.c.b16 %v1890, %v1886
    %v2807 = vpack.c.b16 %v1891, %v1887
    %v2808 = vpack.c.b16 %v1892, %v1888
    %v2809 = vpack.c.b16 %v1893, %v1889
    %v2810 = vpack.c.b16 %v1898, %v1894
    %v2811 = vpack.c.b16 %v1899, %v1895
    %v2812 = vpack.c.b16 %v1900, %v1896
    %v2813 = vpack.c.b16 %v1901, %v1897
    %v2814 = vpack.c.b16 %v1906, %v1902
    %v2815 = vpack.c.b16 %v1907, %v1903
    %v2816 = vpack.c.b16 %v1908, %v1904
    %v2817 = vpack.c.b16 %v1909, %v1905
    %v2818 = vpack.c.b16 %v1914, %v1910
    %v2819 = vpack.c.b16 %v1915, %v1911
    %v2820 = vpack.c.b16 %v1916, %v1912
    %v2821 = vpack.c.b16 %v1917, %v1913
    %v2822 = vpack.c.b16 %v1922, %v1918
    %v2823 = vpack.c.b16 %v1923, %v1919
    %v2824 = vpack.c.b16 %v1924, %v1920
    %v2825 = vpack.c.b16 %v1925, %v1921
    %v2826 = vpack.c.b16 %v1930, %v1926
    %v2827 = vpack.c.b16 %v1931, %v1927
    %v2828 = vpack.c.b16 %v1932, %v1928
    %v2829 = vpack.c.b16 %v1933, %v1929
    %v2830 = vpack.c.b16 %v1938, %v1934
    %v2831 = vpack.c.b16 %v1939, %v1935
    %v2832 = vpack.c.b16 %v1940, %v1936
    %v2833 = vpack.c.b16 %v1941, %v1937
    %v2834 = vpack.c.b16 %v1946, %v1942
    %v2835 = vpack.c.b16 %v1947, %v1943
    %v2836 = vpack.c.b16 %v1948, %v1944
    %v2837 = vpack.c.b16 %v1949, %v1945
    %v2838 = vpack.c.b16 %v1954, %v1950
    %v2839 = vpack.c.b16 %v1955, %v1951
    %v2840 = vpack.c.b16 %v1956, %v1952
    %v2841 = vpack.c.b16 %v1957, %v1953
    %v2842 = vpack.c.b16 %v1962, %v1958
    %v2843 = vpack.c.b16 %v1963, %v1959
    %v2844 = vpack.c.b16 %v1964, %v1960
    %v2845 = vpack.c.b16 %v1965, %v1961
    %v2846 = vpack.c.b16 %v1970, %v1966
    %v2847 = vpack.c.b16 %v1971, %v1967
    %v2848 = vpack.c.b16 %v1972, %v1968
    %v2849 = vpack.c.b16 %v1973, %v1969
    %v2850 = vpack.c.b16 %v1978, %v1974
    %v2851 = vpack.c.b16 %v1979, %v1975
    %v2852 = vpack.c.b16 %v1980, %v1976
    %v2853 = vpack.c.b16 %v1981, %v1977
    %v2854 = vpack.c.b16 %v1986, %v1982
    %v2855 = vpack.c.b16 %v1987, %v1983
    %v2856 = vpack.c.b16 %v1988, %v1984
    %v2857 = vpack.c.b16 %v1989, %v1985
    %v2858 = vpack.c.b16 %v1994, %v1990
    %v2859 = vpack.c.b16 %v1995, %v1991
    %v2860 = vpack.c.b16 %v1996, %v1992
    %v2861 = vpack.c.b16 %v1997, %v1993
    %v2862 = vpack.c.b16 %v2002, %v1998
    %v2863 = vpack.c.b16 %v2003, %v1999
    %v2864 = vpack.c.b16 %v2004, %v2000
    %v2865 = vpack.c.b16 %v2005, %v2001
    %v2866 = vpack.c.b16 %v2010, %v2006
    %v2867 = vpack.c.b16 %v2011, %v2007
    %v2868 = vpack.c.b16 %v2012, %v2008
    %v2869 = vpack.c.b16 %v2013, %v2009
    %v2870 = vpack.c.b16 %v2018, %v2014
    %v2871 = vpack.c.b16 %v2019, %v2015
    %v2872 = vpack.c.b16 %v2020, %v2016
    %v2873 = vpack.c.b16 %v2021, %v2017
    %v2874 = vpack.c.b16 %v2026, %v2022
    %v2875 = vpack.c.b16 %v2027, %v2023
    %v2876 = vpack.c.b16 %v2028, %v2024
    %v2877 = vpack.c.b16 %v2029, %v2025
    %v2878 = vpack.c.b16 %v2034, %v2030
    %v2879 = vpack.c.b16 %v2035, %v2031
    %v2880 = vpack.c.b16 %v2036, %v2032
    %v2881 = vpack.c.b16 %v2037, %v2033
    %v2882 = vpack.c.b16 %v2042, %v2038
    %v2883 = vpack.c.b16 %v2043, %v2039
    %v2884 = vpack.c.b16 %v2044, %v2040
    %v2885 = vpack.c.b16 %v2045, %v2041
    %v2886 = vpack.c.b16 %v2050, %v2046
    %v2887 = vpack.c.b16 %v2051, %v2047
    %v2888 = vpack.c.b16 %v2052, %v2048
    %v2889 = vpack.c.b16 %v2053, %v2049
    %v2890 = vpack.c.b16 %v2058, %v2054
    %v2891 = vpack.c.b16 %v2059, %v2055
    %v2892 = vpack.c.b16 %v2060, %v2056
    %v2893 = vpack.c.b16 %v2061, %v2057
    %v2894 = vpack.c.b16 %v2066, %v2062
    %v2895 = vpack.c.b16 %v2067, %v2063
    %v2896 = vpack.c.b16 %v2068, %v2064
    %v2897 = vpack.c.b16 %v2069, %v2065
    %v2898 = vpack.c.b16 %v2074, %v2070
    %v2899 = vpack.c.b16 %v2075, %v2071
    %v2900 = vpack.c.b16 %v2076, %v2072
    %v2901 = vpack.c.b16 %v2077, %v2073
    %v2902 = vpack.c.b16 %v2082, %v2078
    %v2903 = vpack.c.b16 %v2083, %v2079
    %v2904 = vpack.c.b16 %v2084, %v2080
    %v2905 = vpack.c.b16 %v2085, %v2081
    %v2906 = vpack.c.b16 %v2090, %v2086
    %v2907 = vpack.c.b16 %v2091, %v2087
    %v2908 = vpack.c.b16 %v2092, %v2088
    %v2909 = vpack.c.b16 %v2093, %v2089
    %v2910 = vpack.c.b16 %v2098, %v2094
    %v2911 = vpack.c.b16 %v2099, %v2095
    %v2912 = vpack.c.b16 %v2100, %v2096
    %v2913 = vpack.c.b16 %v2101, %v2097
    %v2914 = vpack.c.b16 %v2106, %v2102
    %v2915 = vpack.c.b16 %v2107, %v2103
    %v2916 = vpack.c.b16 %v2108, %v2104
    %v2917 = vpack.c.b16 %v2109, %v2105
    %v2918 = vpack.c.b16 %v2114, %v2110
    %v2919 = vpack.c.b16 %v2115, %v2111
    %v2920 = vpack.c.b16 %v2116, %v2112
    %v2921 = vpack.c.b16 %v2117, %v2113
    %v2922 = vpack.c.b16 %v2122, %v2118
    %v2923 = vpack.c.b16 %v2123, %v2119
    %v2924 = vpack.c.b16 %v2124, %v2120
    %v2925 = vpack.c.b16 %v2125, %v2121
    %v2926 = vpack.c.b16 %v2130, %v2126
    %v2927 = vpack.c.b16 %v2131, %v2127
    %v2928 = vpack.c.b16 %v2132, %v2128
    %v2929 = vpack.c.b16 %v2133, %v2129
    %v2930 = vpack.c.b16 %v2138, %v2134
    %v2931 = vpack.c.b16 %v2139, %v2135
    %v2932 = vpack.c.b16 %v2140, %v2136
    %v2933 = vpack.c.b16 %v2141, %v2137
    %v2934 = vpack.c.b16 %v2146, %v2142
    %v2935 = vpack.c.b16 %v2147, %v2143
    %v2936 = vpack.c.b16 %v2148, %v2144
    %v2937 = vpack.c.b16 %v2149, %v2145
    %v2938 = vpack.c.b16 %v2154, %v2150
    %v2939 = vpack.c.b16 %v2155, %v2151
    %v2940 = vpack.c.b16 %v2156, %v2152
    %v2941 = vpack.c.b16 %v2157, %v2153
    %v2942 = vpack.c.b16 %v2162, %v2158
    %v2943 = vpack.c.b16 %v2163, %v2159
    %v2944 = vpack.c.b16 %v2164, %v2160
    %v2945 = vpack.c.b16 %v2165, %v2161
    %v2946 = vpack.c.b16 %v2170, %v2166
    %v2947 = vpack.c.b16 %v2171, %v2167
    %v2948 = vpack.c.b16 %v2172, %v2168
    %v2949 = vpack.c.b16 %v2173, %v2169
    %v2950 = vpack.c.b16 %v2178, %v2174
    %v2951 = vpack.c.b16 %v2179, %v2175
    %v2952 = vpack.c.b16 %v2180, %v2176
    %v2953 = vpack.c.b16 %v2181, %v2177
    %v2954 = vpack.c.b16 %v2186, %v2182
    %v2955 = vpack.c.b16 %v2187, %v2183
    %v2956 = vpack.c.b16 %v2188, %v2184
    %v2957 = vpack.c.b16 %v2189, %v2185
    %v2958 = vpack.c.b16 %v2194, %v2190
    %v2959 = vpack.c.b16 %v2195, %v2191
    %v2960 = vpack.c.b16 %v2196, %v2192
    %v2961 = vpack.c.b16 %v2197, %v2193
    %v2962 = vpack.c.b16 %v2202, %v2198
    %v2963 = vpack.c.b16 %v2203, %v2199
    %v2964 = vpack.c.b16 %v2204, %v2200
    %v2965 = vpack.c.b16 %v2205, %v2201
    %v2966 = vpack.c.b16 %v2210, %v2206
    %v2967 = vpack.c.b16 %v2211, %v2207
    %v2968 = vpack.c.b16 %v2212, %v2208
    %v2969 = vpack.c.b16 %v2213, %v2209
    %v2970 = vpack.c.b16 %v2218, %v2214
    %v2971 = vpack.c.b16 %v2219, %v2215
    %v2972 = vpack.c.b16 %v2220, %v2216
    %v2973 = vpack.c.b16 %v2221, %v2217
    %v2974 = vpack.c.b16 %v2226, %v2222
    %v2975 = vpack.c.b16 %v2227, %v2223
    %v2976 = vpack.c.b16 %v2228, %v2224
    %v2977 = vpack.c.b16 %v2229, %v2225
    %v2978 = vpack.c.b16 %v2234, %v2230
    %v2979 = vpack.c.b16 %v2235, %v2231
    %v2980 = vpack.c.b16 %v2236, %v2232
    %v2981 = vpack.c.b16 %v2237, %v2233
    %v2982 = vpack.c.b16 %v2242, %v2238
    %v2983 = vpack.c.b16 %v2243, %v2239
    %v2984 = vpack.c.b16 %v2244, %v2240
    %v2985 = vpack.c.b16 %v2245, %v2241
    %v2986 = vpack.c.b16 %v2250, %v2246
    %v2987 = vpack.c.b16 %v2251, %v2247
    %v2988 = vpack.c.b16 %v2252, %v2248
    %v2989 = vpack.c.b16 %v2253, %v2249
    %v2990 = vpack.c.b16 %v2258, %v2254
    %v2991 = vpack.c.b16 %v2259, %v2255
    %v2992 = vpack.c.b16 %v2260, %v2256
    %v2993 = vpack.c.b16 %v2261, %v2257
    %v2994 = vpack.c.b16 %v2266, %v2262
    %v2995 = vpack.c.b16 %v2267, %v2263
    %v2996 = vpack.c.b16 %v2268, %v2264
    %v2997 = vpack.c.b16 %v2269, %v2265
    %v2998 = vpack.c.b16 %v2274, %v2270
    %v2999 = vpack.c.b16 %v2275, %v2271
    %v3000 = vpack.c.b16 %v2276, %v2272
    %v3001 = vpack.c.b16 %v2277, %v2273
    %v3002 = vpack.c.b16 %v2282, %v2278
    %v3003 = vpack.c.b16 %v2283, %v2279
    %v3004 = vpack.c.b16 %v2284, %v2280
    %v3005 = vpack.c.b16 %v2285, %v2281
    %v3006 = vpack.c.b16 %v2290, %v2286
    %v3007 = vpack.c.b16 %v2291, %v2287
    %v3008 = vpack.c.b16 %v2292, %v2288
    %v3009 = vpack.c.b16 %v2293, %v2289
    %v3010 = vpack.c.b16 %v2298, %v2294
    %v3011 = vpack.c.b16 %v2299, %v2295
    %v3012 = vpack.c.b16 %v2300, %v2296
    %v3013 = vpack.c.b16 %v2301, %v2297
    %v3014 = vpack.c.b16 %v2306, %v2302
    %v3015 = vpack.c.b16 %v2307, %v2303
    %v3016 = vpack.c.b16 %v2308, %v2304
    %v3017 = vpack.c.b16 %v2309, %v2305
    %v3018 = vpack.c.b16 %v2314, %v2310
    %v3019 = vpack.c.b16 %v2315, %v2311
    %v3020 = vpack.c.b16 %v2316, %v2312
    %v3021 = vpack.c.b16 %v2317, %v2313
    %v3022 = vpack.c.b16 %v2322, %v2318
    %v3023 = vpack.c.b16 %v2323, %v2319
    %v3024 = vpack.c.b16 %v2324, %v2320
    %v3025 = vpack.c.b16 %v2325, %v2321
    %v3026 = vpack.c.b16 %v2330, %v2326
    %v3027 = vpack.c.b16 %v2331, %v2327
    %v3028 = vpack.c.b16 %v2332, %v2328
    %v3029 = vpack.c.b16 %v2333, %v2329
    %v3030 = vpack.c.b16 %v2338, %v2334
    %v3031 = vpack.c.b16 %v2339, %v2335
    %v3032 = vpack.c.b16 %v2340, %v2336
    %v3033 = vpack.c.b16 %v2341, %v2337
    %v3034 = vpack.c.b16 %v2346, %v2342
    %v3035 = vpack.c.b16 %v2347, %v2343
    %v3036 = vpack.c.b16 %v2348, %v2344
    %v3037 = vpack.c.b16 %v2349, %v2345
    %v3038 = vpack.c.b16 %v2354, %v2350
    %v3039 = vpack.c.b16 %v2355, %v2351
    %v3040 = vpack.c.b16 %v2356, %v2352
    %v3041 = vpack.c.b16 %v2357, %v2353
    %v3042 = vpack.c.b16 %v2362, %v2358
    %v3043 = vpack.c.b16 %v2363, %v2359
    %v3044 = vpack.c.b16 %v2364, %v2360
    %v3045 = vpack.c.b16 %v2365, %v2361
    %v3046 = vpack.c.b16 %v2370, %v2366
    %v3047 = vpack.c.b16 %v2371, %v2367
    %v3048 = vpack.c.b16 %v2372, %v2368
    %v3049 = vpack.c.b16 %v2373, %v2369
    %v3050 = vpack.c.b16 %v2378, %v2374
    %v3051 = vpack.c.b16 %v2379, %v2375
    %v3052 = vpack.c.b16 %v2380, %v2376
    %v3053 = vpack.c.b16 %v2381, %v2377
    %v3054 = vpack.c.b16 %v2386, %v2382
    %v3055 = vpack.c.b16 %v2387, %v2383
    %v3056 = vpack.c.b16 %v2388, %v2384
    %v3057 = vpack.c.b16 %v2389, %v2385
    %v3058 = vpack.c.b16 %v2394, %v2390
    %v3059 = vpack.c.b16 %v2395, %v2391
    %v3060 = vpack.c.b16 %v2396, %v2392
    %v3061 = vpack.c.b16 %v2397, %v2393
    %v3062 = vpack.c.b16 %v2402, %v2398
    %v3063 = vpack.c.b16 %v2403, %v2399
    %v3064 = vpack.c.b16 %v2404, %v2400
    %v3065 = vpack.c.b16 %v2405, %v2401
    %v3066 = vpack.c.b16 %v2410, %v2406
    %v3067 = vpack.c.b16 %v2411, %v2407
    %v3068 = vpack.c.b16 %v2412, %v2408
    %v3069 = vpack.c.b16 %v2413, %v2409
    %v3070 = vpack.c.b16 %v2418, %v2414
    %v3071 = vpack.c.b16 %v2419, %v2415
    %v3072 = vpack.c.b16 %v2420, %v2416
    %v3073 = vpack.c.b16 %v2421, %v2417
    %v3074 = vpack.c.b16 %v2426, %v2422
    %v3075 = vpack.c.b16 %v2427, %v2423
    %v3076 = vpack.c.b16 %v2428, %v2424
    %v3077 = vpack.c.b16 %v2429, %v2425
    %v3078 = vpack.c.b16 %v2434, %v2430
    %v3079 = vpack.c.b16 %v2435, %v2431
    %v3080 = vpack.c.b16 %v2436, %v2432
    %v3081 = vpack.c.b16 %v2437, %v2433
    %v3082 = vpack.c.b16 %v2442, %v2438
    %v3083 = vpack.c.b16 %v2443, %v2439
    %v3084 = vpack.c.b16 %v2444, %v2440
    %v3085 = vpack.c.b16 %v2445, %v2441
    %v3086 = vpack.c.b16 %v2450, %v2446
    %v3087 = vpack.c.b16 %v2451, %v2447
    %v3088 = vpack.c.b16 %v2452, %v2448
    %v3089 = vpack.c.b16 %v2453, %v2449
    %v3090 = vpack.c.b16 %v2458, %v2454
    %v3091 = vpack.c.b16 %v2459, %v2455
    %v3092 = vpack.c.b16 %v2460, %v2456
    %v3093 = vpack.c.b16 %v2461, %v2457
    %v3094 = vpack.c.b16 %v2466, %v2462
    %v3095 = vpack.c.b16 %v2467, %v2463
    %v3096 = vpack.c.b16 %v2468, %v2464
    %v3097 = vpack.c.b16 %v2469, %v2465
    %v3098 = vpack.c.b16 %v2474, %v2470
    %v3099 = vpack.c.b16 %v2475, %v2471
    %v3100 = vpack.c.b16 %v2476, %v2472
    %v3101 = vpack.c.b16 %v2477, %v2473
    %v3102 = vpack.c.b16 %v2482, %v2478
    %v3103 = vpack.c.b16 %v2483, %v2479
    %v3104 = vpack.c.b16 %v2484, %v2480
    %v3105 = vpack.c.b16 %v2485, %v2481
    %v3106 = vpack.c.b16 %v2490, %v2486
    %v3107 = vpack.c.b16 %v2491, %v2487
    %v3108 = vpack.c.b16 %v2492, %v2488
    %v3109 = vpack.c.b16 %v2493, %v2489
    %v3110 = vpack.c.b16 %v2498, %v2494
    %v3111 = vpack.c.b16 %v2499, %v2495
    %v3112 = vpack.c.b16 %v2500, %v2496
    %v3113 = vpack.c.b16 %v2501, %v2497
    %v3114 = vpack.c.b16 %v2506, %v2502
    %v3115 = vpack.c.b16 %v2507, %v2503
    %v3116 = vpack.c.b16 %v2508, %v2504
    %v3117 = vpack.c.b16 %v2509, %v2505
    %v3118 = vpack.c.b16 %v2514, %v2510
    %v3119 = vpack.c.b16 %v2515, %v2511
    %v3120 = vpack.c.b16 %v2516, %v2512
    %v3121 = vpack.c.b16 %v2517, %v2513
    %v3122 = vpack.c.b16 %v2522, %v2518
    %v3123 = vpack.c.b16 %v2523, %v2519
    %v3124 = vpack.c.b16 %v2524, %v2520
    %v3125 = vpack.c.b16 %v2525, %v2521
    %v3126 = vpack.c.b16 %v2530, %v2526
    %v3127 = vpack.c.b16 %v2531, %v2527
    %v3128 = vpack.c.b16 %v2532, %v2528
    %v3129 = vpack.c.b16 %v2533, %v2529
    %v3130 = vpack.c.b16 %v2538, %v2534
    %v3131 = vpack.c.b16 %v2539, %v2535
    %v3132 = vpack.c.b16 %v2540, %v2536
    %v3133 = vpack.c.b16 %v2541, %v2537
    %v3134 = vpack.c.b16 %v2546, %v2542
    %v3135 = vpack.c.b16 %v2547, %v2543
    %v3136 = vpack.c.b16 %v2548, %v2544
    %v3137 = vpack.c.b16 %v2549, %v2545
    %v3138 = vpack.c.b16 %v2554, %v2550
    %v3139 = vpack.c.b16 %v2555, %v2551
    %v3140 = vpack.c.b16 %v2556, %v2552
    %v3141 = vpack.c.b16 %v2557, %v2553
    %v3142 = vpack.c.b16 %v2562, %v2558
    %v3143 = vpack.c.b16 %v2563, %v2559
    %v3144 = vpack.c.b16 %v2564, %v2560
    %v3145 = vpack.c.b16 %v2565, %v2561
    %v3146 = vpack.c.b16 %v2570, %v2566
    %v3147 = vpack.c.b16 %v2571, %v2567
    %v3148 = vpack.c.b16 %v2572, %v2568
    %v3149 = vpack.c.b16 %v2573, %v2569
    %3726 = vmatprep.subr.bf16.mxu0 %v2575
    %3727 = vmatpush1.bf16.msra.mxu0 %v2574
    %3728 = vmatprep.subr.bf16.mxu0 %v2579
    %3729 = vmatpush1.bf16.msra.mxu0 %v2578
    %3730 = vmatprep.subr.bf16.mxu0 %v2583
    %3731 = vmatpush1.bf16.msra.mxu0 %v2582
    %3732 = vmatprep.subr.bf16.mxu0 %v2587
    %3733 = vmatpush1.bf16.msra.mxu0 %v2586
    %3734 = vmatprep.subr.bf16.mxu0 %v2591
    %3735 = vmatpush1.bf16.msra.mxu0 %v2590
    %3736 = vmatprep.subr.bf16.mxu0 %v2595
    %3737 = vmatpush1.bf16.msra.mxu0 %v2594
    %3738 = vmatprep.subr.bf16.mxu0 %v2599
    %3739 = vmatpush1.bf16.msra.mxu0 %v2598
    %3740 = vmatprep.subr.bf16.mxu0 %v2603
    %3741 = vmatpush1.bf16.msra.mxu0 %v2602
    %3742 = vmatprep.subr.bf16.mxu0 %v2607
    %3743 = vmatpush1.bf16.msra.mxu0 %v2606
    %3744 = vmatprep.subr.bf16.mxu0 %v2611
    %3745 = vmatpush1.bf16.msra.mxu0 %v2610
    %3746 = vmatprep.subr.bf16.mxu0 %v2615
    %3747 = vmatpush1.bf16.msra.mxu0 %v2614
    %3748 = vmatprep.subr.bf16.mxu0 %v2619
    %3749 = vmatpush1.bf16.msra.mxu0 %v2618
    %3750 = vmatprep.subr.bf16.mxu0 %v2623
    %3751 = vmatpush1.bf16.msra.mxu0 %v2622
    %3752 = vmatprep.subr.bf16.mxu0 %v2627
    %3753 = vmatpush1.bf16.msra.mxu0 %v2626
    %3754 = vmatprep.subr.bf16.mxu0 %v2631
    %3755 = vmatpush1.bf16.msra.mxu0 %v2630
    %3756 = vmatprep.subr.bf16.mxu0 %v2635
    %3757 = vmatpush1.bf16.msra.mxu0 %v2634
    %3758 = vmatprep.mubr.bf16.mxu0 %v775
    %3759 = vmatmul.mubr.bf16.gmra.mrb[0].mxu0 %v774
    %v3760 = vpop.f32.mrb[0].mxu0
    %v3761 = vadd.f32 0.0, %v3760
    %v3762 = vpop.f32.mrb[0].mxu0
    %v3763 = vadd.f32 0.0, %v3762
    %v3764 = vpop.f32.mrb[0].mxu0
    %v3765 = vadd.f32 0.0, %v3764
    %v3766 = vpop.f32.mrb[0].mxu0
    %v3767 = vadd.f32 0.0, %v3766
    %3768 = vmatprep.mubr.bf16.mxu0 %v793
    %3769 = vmatmul.mubr.bf16.gmra.mrb[0].mxu0 %v792
    %v3770 = vpop.f32.mrb[0].mxu0
    %v3771 = vadd.f32 0.0, %v3770
    %v3772 = vpop.f32.mrb[0].mxu0
    %v3773 = vadd.f32 0.0, %v3772
    %v3774 = vpop.f32.mrb[0].mxu0
    %v3775 = vadd.f32 0.0, %v3774
    %v3776 = vpop.f32.mrb[0].mxu0
    %v3777 = vadd.f32 0.0, %v3776
    %3778 = vdwg.mxu0
    %3779 = vmatprep.subr.bf16.mxu0 %v2639
    %3780 = vmatpush1.bf16.msra.mxu0 %v2638
    %3781 = vmatprep.subr.bf16.mxu0 %v2643
    %3782 = vmatpush1.bf16.msra.mxu0 %v2642
    %3783 = vmatprep.subr.bf16.mxu0 %v2647
    %3784 = vmatpush1.bf16.msra.mxu0 %v2646
    %3785 = vmatprep.subr.bf16.mxu0 %v2651
    %3786 = vmatpush1.bf16.msra.mxu0 %v2650
    %3787 = vmatprep.subr.bf16.mxu0 %v2655
    %3788 = vmatpush1.bf16.msra.mxu0 %v2654
    %3789 = vmatprep.subr.bf16.mxu0 %v2659
    %3790 = vmatpush1.bf16.msra.mxu0 %v2658
    %3791 = vmatprep.subr.bf16.mxu0 %v2663
    %3792 = vmatpush1.bf16.msra.mxu0 %v2662
    %3793 = vmatprep.subr.bf16.mxu0 %v2667
    %3794 = vmatpush1.bf16.msra.mxu0 %v2666
    %3795 = vmatprep.subr.bf16.mxu0 %v2671
    %3796 = vmatpush1.bf16.msra.mxu0 %v2670
    %3797 = vmatprep.subr.bf16.mxu0 %v2675
    %3798 = vmatpush1.bf16.msra.mxu0 %v2674
    %3799 = vmatprep.subr.bf16.mxu0 %v2679
    %3800 = vmatpush1.bf16.msra.mxu0 %v2678
    %3801 = vmatprep.subr.bf16.mxu0 %v2683
    %3802 = vmatpush1.bf16.msra.mxu0 %v2682
    %3803 = vmatprep.subr.bf16.mxu0 %v2687
    %3804 = vmatpush1.bf16.msra.mxu0 %v2686
    %3805 = vmatprep.subr.bf16.mxu0 %v2691
    %3806 = vmatpush1.bf16.msra.mxu0 %v2690
    %3807 = vmatprep.subr.bf16.mxu0 %v2695
    %3808 = vmatpush1.bf16.msra.mxu0 %v2694
    %3809 = vmatprep.subr.bf16.mxu0 %v2699
    %3810 = vmatpush1.bf16.msra.mxu0 %v2698
    %3811 = vmatprep.mubr.bf16.mxu0 %v777
    %3812 = vmatmul.mubr.bf16.gmra.mrb[0].mxu0 %v776
    %v3813 = vpop.f32.mrb[0].mxu0
    %v3814 = vadd.f32 %v3761, %v3813
    %v3815 = vpop.f32.mrb[0].mxu0
    %v3816 = vadd.f32 %v3763, %v3815
    %v3817 = vpop.f32.mrb[0].mxu0
    %v3818 = vadd.f32 %v3765, %v3817
    %v3819 = vpop.f32.mrb[0].mxu0
    %v3820 = vadd.f32 %v3767, %v3819
    %3821 = vmatprep.mubr.bf16.mxu0 %v795
    %3822 = vmatmul.mubr.bf16.gmra.mrb[0].mxu0 %v794
    %v3823 = vpop.f32.mrb[0].mxu0
    %v3824 = vadd.f32 %v3771, %v3823
    %v3825 = vpop.f32.mrb[0].mxu0
    %v3826 = vadd.f32 %v3773, %v3825
    %v3827 = vpop.f32.mrb[0].mxu0
    %v3828 = vadd.f32 %v3775, %v3827
    %v3829 = vpop.f32.mrb[0].mxu0
    %v3830 = vadd.f32 %v3777, %v3829
    %3831 = vdwg.mxu0
    %3832 = vmatprep.subr.bf16.mxu0 %v2703
    %3833 = vmatpush1.bf16.msra.mxu0 %v2702
    %3834 = vmatprep.subr.bf16.mxu0 %v2707
    %3835 = vmatpush1.bf16.msra.mxu0 %v2706
    %3836 = vmatprep.subr.bf16.mxu0 %v2711
    %3837 = vmatpush1.bf16.msra.mxu0 %v2710
    %3838 = vmatprep.subr.bf16.mxu0 %v2715
    %3839 = vmatpush1.bf16.msra.mxu0 %v2714
    %3840 = vmatprep.subr.bf16.mxu0 %v2719
    %3841 = vmatpush1.bf16.msra.mxu0 %v2718
    %3842 = vmatprep.subr.bf16.mxu0 %v2723
    %3843 = vmatpush1.bf16.msra.mxu0 %v2722
    %3844 = vmatprep.subr.bf16.mxu0 %v2727
    %3845 = vmatpush1.bf16.msra.mxu0 %v2726
    %3846 = vmatprep.subr.bf16.mxu0 %v2731
    %3847 = vmatpush1.bf16.msra.mxu0 %v2730
    %3848 = vmatprep.subr.bf16.mxu0 %v2735
    %3849 = vmatpush1.bf16.msra.mxu0 %v2734
    %3850 = vmatprep.subr.bf16.mxu0 %v2739
    %3851 = vmatpush1.bf16.msra.mxu0 %v2738
    %3852 = vmatprep.subr.bf16.mxu0 %v2743
    %3853 = vmatpush1.bf16.msra.mxu0 %v2742
    %3854 = vmatprep.subr.bf16.mxu0 %v2747
    %3855 = vmatpush1.bf16.msra.mxu0 %v2746
    %3856 = vmatprep.subr.bf16.mxu0 %v2751
    %3857 = vmatpush1.bf16.msra.mxu0 %v2750
    %3858 = vmatprep.subr.bf16.mxu0 %v2755
    %3859 = vmatpush1.bf16.msra.mxu0 %v2754
    %3860 = vmatprep.subr.bf16.mxu0 %v2759
    %3861 = vmatpush1.bf16.msra.mxu0 %v2758
    %3862 = vmatprep.subr.bf16.mxu0 %v2763
    %3863 = vmatpush1.bf16.msra.mxu0 %v2762
    %3864 = vmatprep.mubr.bf16.mxu0 %v779
    %3865 = vmatmul.mubr.bf16.gmra.mrb[0].mxu0 %v778
    %v3866 = vpop.f32.mrb[0].mxu0
    %v3867 = vadd.f32 %v3814, %v3866
    %v3868 = vpop.f32.mrb[0].mxu0
    %v3869 = vadd.f32 %v3816, %v3868
    %v3870 = vpop.f32.mrb[0].mxu0
    %v3871 = vadd.f32 %v3818, %v3870
    %v3872 = vpop.f32.mrb[0].mxu0
    %v3873 = vadd.f32 %v3820, %v3872
    %3874 = vmatprep.mubr.bf16.mxu0 %v797
    %3875 = vmatmul.mubr.bf16.gmra.mrb[0].mxu0 %v796
    %v3876 = vpop.f32.mrb[0].mxu0
    %v3877 = vadd.f32 %v3824, %v3876
    %v3878 = vpop.f32.mrb[0].mxu0
    %v3879 = vadd.f32 %v3826, %v3878
    %v3880 = vpop.f32.mrb[0].mxu0
    %v3881 = vadd.f32 %v3828, %v3880
    %v3882 = vpop.f32.mrb[0].mxu0
    %v3883 = vadd.f32 %v3830, %v3882
    %3884 = vdwg.mxu0
    %3885 = vmatprep.subr.bf16.mxu0 %v2767
    %3886 = vmatpush1.bf16.msra.mxu0 %v2766
    %3887 = vmatprep.subr.bf16.mxu0 %v2771
    %3888 = vmatpush1.bf16.msra.mxu0 %v2770
    %3889 = vmatprep.subr.bf16.mxu0 %v2775
    %3890 = vmatpush1.bf16.msra.mxu0 %v2774
    %3891 = vmatprep.subr.bf16.mxu0 %v2779
    %3892 = vmatpush1.bf16.msra.mxu0 %v2778
    %3893 = vmatprep.subr.bf16.mxu0 %v2783
    %3894 = vmatpush1.bf16.msra.mxu0 %v2782
    %3895 = vmatprep.subr.bf16.mxu0 %v2787
    %3896 = vmatpush1.bf16.msra.mxu0 %v2786
    %3897 = vmatprep.subr.bf16.mxu0 %v2791
    %3898 = vmatpush1.bf16.msra.mxu0 %v2790
    %3899 = vmatprep.subr.bf16.mxu0 %v2795
    %3900 = vmatpush1.bf16.msra.mxu0 %v2794
    %3901 = vmatprep.subr.bf16.mxu0 %v2799
    %3902 = vmatpush1.bf16.msra.mxu0 %v2798
    %3903 = vmatprep.subr.bf16.mxu0 %v2803
    %3904 = vmatpush1.bf16.msra.mxu0 %v2802
    %3905 = vmatprep.subr.bf16.mxu0 %v2807
    %3906 = vmatpush1.bf16.msra.mxu0 %v2806
    %3907 = vmatprep.subr.bf16.mxu0 %v2811
    %3908 = vmatpush1.bf16.msra.mxu0 %v2810
    %3909 = vmatprep.subr.bf16.mxu0 %v2815
    %3910 = vmatpush1.bf16.msra.mxu0 %v2814
    %3911 = vmatprep.subr.bf16.mxu0 %v2819
    %3912 = vmatpush1.bf16.msra.mxu0 %v2818
    %3913 = vmatprep.subr.bf16.mxu0 %v2823
    %3914 = vmatpush1.bf16.msra.mxu0 %v2822
    %3915 = vmatprep.subr.bf16.mxu0 %v2827
    %3916 = vmatpush1.bf16.msra.mxu0 %v2826
    %3917 = vmatprep.mubr.bf16.mxu0 %v781
    %3918 = vmatmul.mubr.bf16.gmra.mrb[0].mxu0 %v780
    %v3919 = vpop.f32.mrb[0].mxu0
    %v3920 = vadd.f32 %v3867, %v3919
    %v3921 = vpop.f32.mrb[0].mxu0
    %v3922 = vadd.f32 %v3869, %v3921
    %v3923 = vpop.f32.mrb[0].mxu0
    %v3924 = vadd.f32 %v3871, %v3923
    %v3925 = vpop.f32.mrb[0].mxu0
    %v3926 = vadd.f32 %v3873, %v3925
    %3927 = vmatprep.mubr.bf16.mxu0 %v799
    %3928 = vmatmul.mubr.bf16.gmra.mrb[0].mxu0 %v798
    %v3929 = vpop.f32.mrb[0].mxu0
    %v3930 = vadd.f32 %v3877, %v3929
    %v3931 = vpop.f32.mrb[0].mxu0
    %v3932 = vadd.f32 %v3879, %v3931
    %v3933 = vpop.f32.mrb[0].mxu0
    %v3934 = vadd.f32 %v3881, %v3933
    %v3935 = vpop.f32.mrb[0].mxu0
    %v3936 = vadd.f32 %v3883, %v3935
    %3937 = vdwg.mxu0
    %3938 = vmatprep.subr.bf16.mxu0 %v2831
    %3939 = vmatpush1.bf16.msra.mxu0 %v2830
    %3940 = vmatprep.subr.bf16.mxu0 %v2835
    %3941 = vmatpush1.bf16.msra.mxu0 %v2834
    %3942 = vmatprep.subr.bf16.mxu0 %v2839
    %3943 = vmatpush1.bf16.msra.mxu0 %v2838
    %3944 = vmatprep.subr.bf16.mxu0 %v2843
    %3945 = vmatpush1.bf16.msra.mxu0 %v2842
    %3946 = vmatprep.subr.bf16.mxu0 %v2847
    %3947 = vmatpush1.bf16.msra.mxu0 %v2846
    %3948 = vmatprep.subr.bf16.mxu0 %v2851
    %3949 = vmatpush1.bf16.msra.mxu0 %v2850
    %3950 = vmatprep.subr.bf16.mxu0 %v2855
    %3951 = vmatpush1.bf16.msra.mxu0 %v2854
    %3952 = vmatprep.subr.bf16.mxu0 %v2859
    %3953 = vmatpush1.bf16.msra.mxu0 %v2858
    %3954 = vmatprep.subr.bf16.mxu0 %v2863
    %3955 = vmatpush1.bf16.msra.mxu0 %v2862
    %3956 = vmatprep.subr.bf16.mxu0 %v2867
    %3957 = vmatpush1.bf16.msra.mxu0 %v2866
    %3958 = vmatprep.subr.bf16.mxu0 %v2871
    %3959 = vmatpush1.bf16.msra.mxu0 %v2870
    %3960 = vmatprep.subr.bf16.mxu0 %v2875
    %3961 = vmatpush1.bf16.msra.mxu0 %v2874
    %3962 = vmatprep.subr.bf16.mxu0 %v2879
    %3963 = vmatpush1.bf16.msra.mxu0 %v2878
    %3964 = vmatprep.subr.bf16.mxu0 %v2883
    %3965 = vmatpush1.bf16.msra.mxu0 %v2882
    %3966 = vmatprep.subr.bf16.mxu0 %v2887
    %3967 = vmatpush1.bf16.msra.mxu0 %v2886
    %3968 = vmatprep.subr.bf16.mxu0 %v2891
    %3969 = vmatpush1.bf16.msra.mxu0 %v2890
    %3970 = vmatprep.mubr.bf16.mxu0 %v783
    %3971 = vmatmul.mubr.bf16.gmra.mrb[0].mxu0 %v782
    %v3972 = vpop.f32.mrb[0].mxu0
    %v3973 = vadd.f32 %v3920, %v3972
    %v3974 = vpop.f32.mrb[0].mxu0
    %v3975 = vadd.f32 %v3922, %v3974
    %v3976 = vpop.f32.mrb[0].mxu0
    %v3977 = vadd.f32 %v3924, %v3976
    %v3978 = vpop.f32.mrb[0].mxu0
    %v3979 = vadd.f32 %v3926, %v3978
    %3980 = vmatprep.mubr.bf16.mxu0 %v801
    %3981 = vmatmul.mubr.bf16.gmra.mrb[0].mxu0 %v800
    %v3982 = vpop.f32.mrb[0].mxu0
    %v3983 = vadd.f32 %v3930, %v3982
    %v3984 = vpop.f32.mrb[0].mxu0
    %v3985 = vadd.f32 %v3932, %v3984
    %v3986 = vpop.f32.mrb[0].mxu0
    %v3987 = vadd.f32 %v3934, %v3986
    %v3988 = vpop.f32.mrb[0].mxu0
    %v3989 = vadd.f32 %v3936, %v3988
    %3990 = vdwg.mxu0
    %3991 = vmatprep.subr.bf16.mxu0 %v2895
    %3992 = vmatpush1.bf16.msra.mxu0 %v2894
    %3993 = vmatprep.subr.bf16.mxu0 %v2899
    %3994 = vmatpush1.bf16.msra.mxu0 %v2898
    %3995 = vmatprep.subr.bf16.mxu0 %v2903
    %3996 = vmatpush1.bf16.msra.mxu0 %v2902
    %3997 = vmatprep.subr.bf16.mxu0 %v2907
    %3998 = vmatpush1.bf16.msra.mxu0 %v2906
    %3999 = vmatprep.subr.bf16.mxu0 %v2911
    %4000 = vmatpush1.bf16.msra.mxu0 %v2910
    %4001 = vmatprep.subr.bf16.mxu0 %v2915
    %4002 = vmatpush1.bf16.msra.mxu0 %v2914
    %4003 = vmatprep.subr.bf16.mxu0 %v2919
    %4004 = vmatpush1.bf16.msra.mxu0 %v2918
    %4005 = vmatprep.subr.bf16.mxu0 %v2923
    %4006 = vmatpush1.bf16.msra.mxu0 %v2922
    %4007 = vmatprep.subr.bf16.mxu0 %v2927
    %4008 = vmatpush1.bf16.msra.mxu0 %v2926
    %4009 = vmatprep.subr.bf16.mxu0 %v2931
    %4010 = vmatpush1.bf16.msra.mxu0 %v2930
    %4011 = vmatprep.subr.bf16.mxu0 %v2935
    %4012 = vmatpush1.bf16.msra.mxu0 %v2934
    %4013 = vmatprep.subr.bf16.mxu0 %v2939
    %4014 = vmatpush1.bf16.msra.mxu0 %v2938
    %4015 = vmatprep.subr.bf16.mxu0 %v2943
    %4016 = vmatpush1.bf16.msra.mxu0 %v2942
    %4017 = vmatprep.subr.bf16.mxu0 %v2947
    %4018 = vmatpush1.bf16.msra.mxu0 %v2946
    %4019 = vmatprep.subr.bf16.mxu0 %v2951
    %4020 = vmatpush1.bf16.msra.mxu0 %v2950
    %4021 = vmatprep.subr.bf16.mxu0 %v2955
    %4022 = vmatpush1.bf16.msra.mxu0 %v2954
    %4023 = vmatprep.mubr.bf16.mxu0 %v785
    %4024 = vmatmul.mubr.bf16.gmra.mrb[0].mxu0 %v784
    %v4025 = vpop.f32.mrb[0].mxu0
    %v4026 = vadd.f32 %v3973, %v4025
    %v4027 = vpop.f32.mrb[0].mxu0
    %v4028 = vadd.f32 %v3975, %v4027
    %v4029 = vpop.f32.mrb[0].mxu0
    %v4030 = vadd.f32 %v3977, %v4029
    %v4031 = vpop.f32.mrb[0].mxu0
    %v4032 = vadd.f32 %v3979, %v4031
    %4033 = vmatprep.mubr.bf16.mxu0 %v803
    %4034 = vmatmul.mubr.bf16.gmra.mrb[0].mxu0 %v802
    %v4035 = vpop.f32.mrb[0].mxu0
    %v4036 = vadd.f32 %v3983, %v4035
    %v4037 = vpop.f32.mrb[0].mxu0
    %v4038 = vadd.f32 %v3985, %v4037
    %v4039 = vpop.f32.mrb[0].mxu0
    %v4040 = vadd.f32 %v3987, %v4039
    %v4041 = vpop.f32.mrb[0].mxu0
    %v4042 = vadd.f32 %v3989, %v4041
    %4043 = vdwg.mxu0
    %4044 = vmatprep.subr.bf16.mxu0 %v2959
    %4045 = vmatpush1.bf16.msra.mxu0 %v2958
    %4046 = vmatprep.subr.bf16.mxu0 %v2963
    %4047 = vmatpush1.bf16.msra.mxu0 %v2962
    %4048 = vmatprep.subr.bf16.mxu0 %v2967
    %4049 = vmatpush1.bf16.msra.mxu0 %v2966
    %4050 = vmatprep.subr.bf16.mxu0 %v2971
    %4051 = vmatpush1.bf16.msra.mxu0 %v2970
    %4052 = vmatprep.subr.bf16.mxu0 %v2975
    %4053 = vmatpush1.bf16.msra.mxu0 %v2974
    %4054 = vmatprep.subr.bf16.mxu0 %v2979
    %4055 = vmatpush1.bf16.msra.mxu0 %v2978
    %4056 = vmatprep.subr.bf16.mxu0 %v2983
    %4057 = vmatpush1.bf16.msra.mxu0 %v2982
    %4058 = vmatprep.subr.bf16.mxu0 %v2987
    %4059 = vmatpush1.bf16.msra.mxu0 %v2986
    %4060 = vmatprep.subr.bf16.mxu0 %v2991
    %4061 = vmatpush1.bf16.msra.mxu0 %v2990
    %4062 = vmatprep.subr.bf16.mxu0 %v2995
    %4063 = vmatpush1.bf16.msra.mxu0 %v2994
    %4064 = vmatprep.subr.bf16.mxu0 %v2999
    %4065 = vmatpush1.bf16.msra.mxu0 %v2998
    %4066 = vmatprep.subr.bf16.mxu0 %v3003
    %4067 = vmatpush1.bf16.msra.mxu0 %v3002
    %4068 = vmatprep.subr.bf16.mxu0 %v3007
    %4069 = vmatpush1.bf16.msra.mxu0 %v3006
    %4070 = vmatprep.subr.bf16.mxu0 %v3011
    %4071 = vmatpush1.bf16.msra.mxu0 %v3010
    %4072 = vmatprep.subr.bf16.mxu0 %v3015
    %4073 = vmatpush1.bf16.msra.mxu0 %v3014
    %4074 = vmatprep.subr.bf16.mxu0 %v3019
    %4075 = vmatpush1.bf16.msra.mxu0 %v3018
    %4076 = vmatprep.mubr.bf16.mxu0 %v787
    %4077 = vmatmul.mubr.bf16.gmra.mrb[0].mxu0 %v786
    %v4078 = vpop.f32.mrb[0].mxu0
    %v4079 = vadd.f32 %v4026, %v4078
    %v4080 = vpop.f32.mrb[0].mxu0
    %v4081 = vadd.f32 %v4028, %v4080
    %v4082 = vpop.f32.mrb[0].mxu0
    %v4083 = vadd.f32 %v4030, %v4082
    %v4084 = vpop.f32.mrb[0].mxu0
    %v4085 = vadd.f32 %v4032, %v4084
    %4086 = vmatprep.mubr.bf16.mxu0 %v805
    %4087 = vmatmul.mubr.bf16.gmra.mrb[0].mxu0 %v804
    %v4088 = vpop.f32.mrb[0].mxu0
    %v4089 = vadd.f32 %v4036, %v4088
    %v4090 = vpop.f32.mrb[0].mxu0
    %v4091 = vadd.f32 %v4038, %v4090
    %v4092 = vpop.f32.mrb[0].mxu0
    %v4093 = vadd.f32 %v4040, %v4092
    %v4094 = vpop.f32.mrb[0].mxu0
    %v4095 = vadd.f32 %v4042, %v4094
    %4096 = vdwg.mxu0
    %4097 = vmatprep.subr.bf16.mxu0 %v3023
    %4098 = vmatpush1.bf16.msra.mxu0 %v3022
    %4099 = vmatprep.subr.bf16.mxu0 %v3027
    %4100 = vmatpush1.bf16.msra.mxu0 %v3026
    %4101 = vmatprep.subr.bf16.mxu0 %v3031
    %4102 = vmatpush1.bf16.msra.mxu0 %v3030
    %4103 = vmatprep.subr.bf16.mxu0 %v3035
    %4104 = vmatpush1.bf16.msra.mxu0 %v3034
    %4105 = vmatprep.subr.bf16.mxu0 %v3039
    %4106 = vmatpush1.bf16.msra.mxu0 %v3038
    %4107 = vmatprep.subr.bf16.mxu0 %v3043
    %4108 = vmatpush1.bf16.msra.mxu0 %v3042
    %4109 = vmatprep.subr.bf16.mxu0 %v3047
    %4110 = vmatpush1.bf16.msra.mxu0 %v3046
    %4111 = vmatprep.subr.bf16.mxu0 %v3051
    %4112 = vmatpush1.bf16.msra.mxu0 %v3050
    %4113 = vmatprep.subr.bf16.mxu0 %v3055
    %4114 = vmatpush1.bf16.msra.mxu0 %v3054
    %4115 = vmatprep.subr.bf16.mxu0 %v3059
    %4116 = vmatpush1.bf16.msra.mxu0 %v3058
    %4117 = vmatprep.subr.bf16.mxu0 %v3063
    %4118 = vmatpush1.bf16.msra.mxu0 %v3062
    %4119 = vmatprep.subr.bf16.mxu0 %v3067
    %4120 = vmatpush1.bf16.msra.mxu0 %v3066
    %4121 = vmatprep.subr.bf16.mxu0 %v3071
    %4122 = vmatpush1.bf16.msra.mxu0 %v3070
    %4123 = vmatprep.subr.bf16.mxu0 %v3075
    %4124 = vmatpush1.bf16.msra.mxu0 %v3074
    %4125 = vmatprep.subr.bf16.mxu0 %v3079
    %4126 = vmatpush1.bf16.msra.mxu0 %v3078
    %4127 = vmatprep.subr.bf16.mxu0 %v3083
    %4128 = vmatpush1.bf16.msra.mxu0 %v3082
    %4129 = vmatprep.mubr.bf16.mxu0 %v789
    %4130 = vmatmul.mubr.bf16.gmra.mrb[0].mxu0 %v788
    %v4131 = vpop.f32.mrb[0].mxu0
    %v4132 = vadd.f32 %v4079, %v4131
    %v4133 = vpop.f32.mrb[0].mxu0
    %v4134 = vadd.f32 %v4081, %v4133
    %v4135 = vpop.f32.mrb[0].mxu0
    %v4136 = vadd.f32 %v4083, %v4135
    %v4137 = vpop.f32.mrb[0].mxu0
    %v4138 = vadd.f32 %v4085, %v4137
    %4139 = vmatprep.mubr.bf16.mxu0 %v807
    %4140 = vmatmul.mubr.bf16.gmra.mrb[0].mxu0 %v806
    %v4141 = vpop.f32.mrb[0].mxu0
    %v4142 = vadd.f32 %v4089, %v4141
    %v4143 = vpop.f32.mrb[0].mxu0
    %v4144 = vadd.f32 %v4091, %v4143
    %v4145 = vpop.f32.mrb[0].mxu0
    %v4146 = vadd.f32 %v4093, %v4145
    %v4147 = vpop.f32.mrb[0].mxu0
    %v4148 = vadd.f32 %v4095, %v4147
    %4149 = vdwg.mxu0
    %4150 = vmatprep.subr.bf16.mxu0 %v3087
    %4151 = vmatpush1.bf16.msra.mxu0 %v3086
    %4152 = vmatprep.subr.bf16.mxu0 %v3091
    %4153 = vmatpush1.bf16.msra.mxu0 %v3090
    %4154 = vmatprep.subr.bf16.mxu0 %v3095
    %4155 = vmatpush1.bf16.msra.mxu0 %v3094
    %4156 = vmatprep.subr.bf16.mxu0 %v3099
    %4157 = vmatpush1.bf16.msra.mxu0 %v3098
    %4158 = vmatprep.subr.bf16.mxu0 %v3103
    %4159 = vmatpush1.bf16.msra.mxu0 %v3102
    %4160 = vmatprep.subr.bf16.mxu0 %v3107
    %4161 = vmatpush1.bf16.msra.mxu0 %v3106
    %4162 = vmatprep.subr.bf16.mxu0 %v3111
    %4163 = vmatpush1.bf16.msra.mxu0 %v3110
    %4164 = vmatprep.subr.bf16.mxu0 %v3115
    %4165 = vmatpush1.bf16.msra.mxu0 %v3114
    %4166 = vmatprep.subr.bf16.mxu0 %v3119
    %4167 = vmatpush1.bf16.msra.mxu0 %v3118
    %4168 = vmatprep.subr.bf16.mxu0 %v3123
    %4169 = vmatpush1.bf16.msra.mxu0 %v3122
    %4170 = vmatprep.subr.bf16.mxu0 %v3127
    %4171 = vmatpush1.bf16.msra.mxu0 %v3126
    %4172 = vmatprep.subr.bf16.mxu0 %v3131
    %4173 = vmatpush1.bf16.msra.mxu0 %v3130
    %4174 = vmatprep.subr.bf16.mxu0 %v3135
    %4175 = vmatpush1.bf16.msra.mxu0 %v3134
    %4176 = vmatprep.subr.bf16.mxu0 %v3139
    %4177 = vmatpush1.bf16.msra.mxu0 %v3138
    %4178 = vmatprep.subr.bf16.mxu0 %v3143
    %4179 = vmatpush1.bf16.msra.mxu0 %v3142
    %4180 = vmatprep.subr.bf16.mxu0 %v3147
    %4181 = vmatpush1.bf16.msra.mxu0 %v3146
    %4182 = vmatprep.mubr.bf16.mxu0 %v791
    %4183 = vmatmul.mubr.bf16.gmra.mrb[0].mxu0 %v790
    %v4184 = vpop.f32.mrb[0].mxu0
    %v4185 = vadd.f32 %v4132, %v4184
    %v4186 = vpop.f32.mrb[0].mxu0
    %v4187 = vadd.f32 %v4134, %v4186
    %v4188 = vpop.f32.mrb[0].mxu0
    %v4189 = vadd.f32 %v4136, %v4188
    %v4190 = vpop.f32.mrb[0].mxu0
    %v4191 = vadd.f32 %v4138, %v4190
    %4192 = vmatprep.mubr.bf16.mxu0 %v809
    %4193 = vmatmul.mubr.bf16.gmra.mrb[0].mxu0 %v808
    %v4194 = vpop.f32.mrb[0].mxu0
    %v4195 = vadd.f32 %v4142, %v4194
    %v4196 = vpop.f32.mrb[0].mxu0
    %v4197 = vadd.f32 %v4144, %v4196
    %v4198 = vpop.f32.mrb[0].mxu0
    %v4199 = vadd.f32 %v4146, %v4198
    %v4200 = vpop.f32.mrb[0].mxu0
    %v4201 = vadd.f32 %v4148, %v4200
    %4202 = vdwg.mxu0
    %4203 = vmatprep.subr.bf16.mxu0 %v2577
    %4204 = vmatpush1.bf16.msra.mxu0 %v2576
    %4205 = vmatprep.subr.bf16.mxu0 %v2581
    %4206 = vmatpush1.bf16.msra.mxu0 %v2580
    %4207 = vmatprep.subr.bf16.mxu0 %v2585
    %4208 = vmatpush1.bf16.msra.mxu0 %v2584
    %4209 = vmatprep.subr.bf16.mxu0 %v2589
    %4210 = vmatpush1.bf16.msra.mxu0 %v2588
    %4211 = vmatprep.subr.bf16.mxu0 %v2593
    %4212 = vmatpush1.bf16.msra.mxu0 %v2592
    %4213 = vmatprep.subr.bf16.mxu0 %v2597
    %4214 = vmatpush1.bf16.msra.mxu0 %v2596
    %4215 = vmatprep.subr.bf16.mxu0 %v2601
    %4216 = vmatpush1.bf16.msra.mxu0 %v2600
    %4217 = vmatprep.subr.bf16.mxu0 %v2605
    %4218 = vmatpush1.bf16.msra.mxu0 %v2604
    %4219 = vmatprep.subr.bf16.mxu0 %v2609
    %4220 = vmatpush1.bf16.msra.mxu0 %v2608
    %4221 = vmatprep.subr.bf16.mxu0 %v2613
    %4222 = vmatpush1.bf16.msra.mxu0 %v2612
    %4223 = vmatprep.subr.bf16.mxu0 %v2617
    %4224 = vmatpush1.bf16.msra.mxu0 %v2616
    %4225 = vmatprep.subr.bf16.mxu0 %v2621
    %4226 = vmatpush1.bf16.msra.mxu0 %v2620
    %4227 = vmatprep.subr.bf16.mxu0 %v2625
    %4228 = vmatpush1.bf16.msra.mxu0 %v2624
    %4229 = vmatprep.subr.bf16.mxu0 %v2629
    %4230 = vmatpush1.bf16.msra.mxu0 %v2628
    %4231 = vmatprep.subr.bf16.mxu0 %v2633
    %4232 = vmatpush1.bf16.msra.mxu0 %v2632
    %4233 = vmatprep.subr.bf16.mxu0 %v2637
    %4234 = vmatpush1.bf16.msra.mxu0 %v2636
    %4235 = vmatprep.mubr.bf16.mxu0 %v775
    %4236 = vmatmul.mubr.bf16.gmra.mrb[0].mxu0 %v774
    %v4237 = vpop.f32.mrb[0].mxu0
    %v4238 = vadd.f32 0.0, %v4237
    %v4239 = vpop.f32.mrb[0].mxu0
    %v4240 = vadd.f32 0.0, %v4239
    %v4241 = vpop.f32.mrb[0].mxu0
    %v4242 = vadd.f32 0.0, %v4241
    %v4243 = vpop.f32.mrb[0].mxu0
    %v4244 = vadd.f32 0.0, %v4243
    %4245 = vmatprep.mubr.bf16.mxu0 %v793
    %4246 = vmatmul.mubr.bf16.gmra.mrb[0].mxu0 %v792
    %v4247 = vpop.f32.mrb[0].mxu0
    %v4248 = vadd.f32 0.0, %v4247
    %v4249 = vpop.f32.mrb[0].mxu0
    %v4250 = vadd.f32 0.0, %v4249
    %v4251 = vpop.f32.mrb[0].mxu0
    %v4252 = vadd.f32 0.0, %v4251
    %v4253 = vpop.f32.mrb[0].mxu0
    %v4254 = vadd.f32 0.0, %v4253
    %4255 = vdwg.mxu0
    %4256 = vmatprep.subr.bf16.mxu0 %v2641
    %4257 = vmatpush1.bf16.msra.mxu0 %v2640
    %4258 = vmatprep.subr.bf16.mxu0 %v2645
    %4259 = vmatpush1.bf16.msra.mxu0 %v2644
    %4260 = vmatprep.subr.bf16.mxu0 %v2649
    %4261 = vmatpush1.bf16.msra.mxu0 %v2648
    %4262 = vmatprep.subr.bf16.mxu0 %v2653
    %4263 = vmatpush1.bf16.msra.mxu0 %v2652
    %4264 = vmatprep.subr.bf16.mxu0 %v2657
    %4265 = vmatpush1.bf16.msra.mxu0 %v2656
    %4266 = vmatprep.subr.bf16.mxu0 %v2661
    %4267 = vmatpush1.bf16.msra.mxu0 %v2660
    %4268 = vmatprep.subr.bf16.mxu0 %v2665
    %4269 = vmatpush1.bf16.msra.mxu0 %v2664
    %4270 = vmatprep.subr.bf16.mxu0 %v2669
    %4271 = vmatpush1.bf16.msra.mxu0 %v2668
    %4272 = vmatprep.subr.bf16.mxu0 %v2673
    %4273 = vmatpush1.bf16.msra.mxu0 %v2672
    %4274 = vmatprep.subr.bf16.mxu0 %v2677
    %4275 = vmatpush1.bf16.msra.mxu0 %v2676
    %4276 = vmatprep.subr.bf16.mxu0 %v2681
    %4277 = vmatpush1.bf16.msra.mxu0 %v2680
    %4278 = vmatprep.subr.bf16.mxu0 %v2685
    %4279 = vmatpush1.bf16.msra.mxu0 %v2684
    %4280 = vmatprep.subr.bf16.mxu0 %v2689
    %4281 = vmatpush1.bf16.msra.mxu0 %v2688
    %4282 = vmatprep.subr.bf16.mxu0 %v2693
    %4283 = vmatpush1.bf16.msra.mxu0 %v2692
    %4284 = vmatprep.subr.bf16.mxu0 %v2697
    %4285 = vmatpush1.bf16.msra.mxu0 %v2696
    %4286 = vmatprep.subr.bf16.mxu0 %v2701
    %4287 = vmatpush1.bf16.msra.mxu0 %v2700
    %4288 = vmatprep.mubr.bf16.mxu0 %v777
    %4289 = vmatmul.mubr.bf16.gmra.mrb[0].mxu0 %v776
    %v4290 = vpop.f32.mrb[0].mxu0
    %v4291 = vadd.f32 %v4238, %v4290
    %v4292 = vpop.f32.mrb[0].mxu0
    %v4293 = vadd.f32 %v4240, %v4292
    %v4294 = vpop.f32.mrb[0].mxu0
    %v4295 = vadd.f32 %v4242, %v4294
    %v4296 = vpop.f32.mrb[0].mxu0
    %v4297 = vadd.f32 %v4244, %v4296
    %4298 = vmatprep.mubr.bf16.mxu0 %v795
    %4299 = vmatmul.mubr.bf16.gmra.mrb[0].mxu0 %v794
    %v4300 = vpop.f32.mrb[0].mxu0
    %v4301 = vadd.f32 %v4248, %v4300
    %v4302 = vpop.f32.mrb[0].mxu0
    %v4303 = vadd.f32 %v4250, %v4302
    %v4304 = vpop.f32.mrb[0].mxu0
    %v4305 = vadd.f32 %v4252, %v4304
    %v4306 = vpop.f32.mrb[0].mxu0
    %v4307 = vadd.f32 %v4254, %v4306
    %4308 = vdwg.mxu0
    %4309 = vmatprep.subr.bf16.mxu0 %v2705
    %4310 = vmatpush1.bf16.msra.mxu0 %v2704
    %4311 = vmatprep.subr.bf16.mxu0 %v2709
    %4312 = vmatpush1.bf16.msra.mxu0 %v2708
    %4313 = vmatprep.subr.bf16.mxu0 %v2713
    %4314 = vmatpush1.bf16.msra.mxu0 %v2712
    %4315 = vmatprep.subr.bf16.mxu0 %v2717
    %4316 = vmatpush1.bf16.msra.mxu0 %v2716
    %4317 = vmatprep.subr.bf16.mxu0 %v2721
    %4318 = vmatpush1.bf16.msra.mxu0 %v2720
    %4319 = vmatprep.subr.bf16.mxu0 %v2725
    %4320 = vmatpush1.bf16.msra.mxu0 %v2724
    %4321 = vmatprep.subr.bf16.mxu0 %v2729
    %4322 = vmatpush1.bf16.msra.mxu0 %v2728
    %4323 = vmatprep.subr.bf16.mxu0 %v2733
    %4324 = vmatpush1.bf16.msra.mxu0 %v2732
    %4325 = vmatprep.subr.bf16.mxu0 %v2737
    %4326 = vmatpush1.bf16.msra.mxu0 %v2736
    %4327 = vmatprep.subr.bf16.mxu0 %v2741
    %4328 = vmatpush1.bf16.msra.mxu0 %v2740
    %4329 = vmatprep.subr.bf16.mxu0 %v2745
    %4330 = vmatpush1.bf16.msra.mxu0 %v2744
    %4331 = vmatprep.subr.bf16.mxu0 %v2749
    %4332 = vmatpush1.bf16.msra.mxu0 %v2748
    %4333 = vmatprep.subr.bf16.mxu0 %v2753
    %4334 = vmatpush1.bf16.msra.mxu0 %v2752
    %4335 = vmatprep.subr.bf16.mxu0 %v2757
    %4336 = vmatpush1.bf16.msra.mxu0 %v2756
    %4337 = vmatprep.subr.bf16.mxu0 %v2761
    %4338 = vmatpush1.bf16.msra.mxu0 %v2760
    %4339 = vmatprep.subr.bf16.mxu0 %v2765
    %4340 = vmatpush1.bf16.msra.mxu0 %v2764
    %4341 = vmatprep.mubr.bf16.mxu0 %v779
    %4342 = vmatmul.mubr.bf16.gmra.mrb[0].mxu0 %v778
    %v4343 = vpop.f32.mrb[0].mxu0
    %v4344 = vadd.f32 %v4291, %v4343
    %v4345 = vpop.f32.mrb[0].mxu0
    %v4346 = vadd.f32 %v4293, %v4345
    %v4347 = vpop.f32.mrb[0].mxu0
    %v4348 = vadd.f32 %v4295, %v4347
    %v4349 = vpop.f32.mrb[0].mxu0
    %v4350 = vadd.f32 %v4297, %v4349
    %4351 = vmatprep.mubr.bf16.mxu0 %v797
    %4352 = vmatmul.mubr.bf16.gmra.mrb[0].mxu0 %v796
    %v4353 = vpop.f32.mrb[0].mxu0
    %v4354 = vadd.f32 %v4301, %v4353
    %v4355 = vpop.f32.mrb[0].mxu0
    %v4356 = vadd.f32 %v4303, %v4355
    %v4357 = vpop.f32.mrb[0].mxu0
    %v4358 = vadd.f32 %v4305, %v4357
    %v4359 = vpop.f32.mrb[0].mxu0
    %v4360 = vadd.f32 %v4307, %v4359
    %4361 = vdwg.mxu0
    %4362 = vmatprep.subr.bf16.mxu0 %v2769
    %4363 = vmatpush1.bf16.msra.mxu0 %v2768
    %4364 = vmatprep.subr.bf16.mxu0 %v2773
    %4365 = vmatpush1.bf16.msra.mxu0 %v2772
    %4366 = vmatprep.subr.bf16.mxu0 %v2777
    %4367 = vmatpush1.bf16.msra.mxu0 %v2776
    %4368 = vmatprep.subr.bf16.mxu0 %v2781
    %4369 = vmatpush1.bf16.msra.mxu0 %v2780
    %4370 = vmatprep.subr.bf16.mxu0 %v2785
    %4371 = vmatpush1.bf16.msra.mxu0 %v2784
    %4372 = vmatprep.subr.bf16.mxu0 %v2789
    %4373 = vmatpush1.bf16.msra.mxu0 %v2788
    %4374 = vmatprep.subr.bf16.mxu0 %v2793
    %4375 = vmatpush1.bf16.msra.mxu0 %v2792
    %4376 = vmatprep.subr.bf16.mxu0 %v2797
    %4377 = vmatpush1.bf16.msra.mxu0 %v2796
    %4378 = vmatprep.subr.bf16.mxu0 %v2801
    %4379 = vmatpush1.bf16.msra.mxu0 %v2800
    %4380 = vmatprep.subr.bf16.mxu0 %v2805
    %4381 = vmatpush1.bf16.msra.mxu0 %v2804
    %4382 = vmatprep.subr.bf16.mxu0 %v2809
    %4383 = vmatpush1.bf16.msra.mxu0 %v2808
    %4384 = vmatprep.subr.bf16.mxu0 %v2813
    %4385 = vmatpush1.bf16.msra.mxu0 %v2812
    %4386 = vmatprep.subr.bf16.mxu0 %v2817
    %4387 = vmatpush1.bf16.msra.mxu0 %v2816
    %4388 = vmatprep.subr.bf16.mxu0 %v2821
    %4389 = vmatpush1.bf16.msra.mxu0 %v2820
    %4390 = vmatprep.subr.bf16.mxu0 %v2825
    %4391 = vmatpush1.bf16.msra.mxu0 %v2824
    %4392 = vmatprep.subr.bf16.mxu0 %v2829
    %4393 = vmatpush1.bf16.msra.mxu0 %v2828
    %4394 = vmatprep.mubr.bf16.mxu0 %v781
    %4395 = vmatmul.mubr.bf16.gmra.mrb[0].mxu0 %v780
    %v4396 = vpop.f32.mrb[0].mxu0
    %v4397 = vadd.f32 %v4344, %v4396
    %v4398 = vpop.f32.mrb[0].mxu0
    %v4399 = vadd.f32 %v4346, %v4398
    %v4400 = vpop.f32.mrb[0].mxu0
    %v4401 = vadd.f32 %v4348, %v4400
    %v4402 = vpop.f32.mrb[0].mxu0
    %v4403 = vadd.f32 %v4350, %v4402
    %4404 = vmatprep.mubr.bf16.mxu0 %v799
    %4405 = vmatmul.mubr.bf16.gmra.mrb[0].mxu0 %v798
    %v4406 = vpop.f32.mrb[0].mxu0
    %v4407 = vadd.f32 %v4354, %v4406
    %v4408 = vpop.f32.mrb[0].mxu0
    %v4409 = vadd.f32 %v4356, %v4408
    %v4410 = vpop.f32.mrb[0].mxu0
    %v4411 = vadd.f32 %v4358, %v4410
    %v4412 = vpop.f32.mrb[0].mxu0
    %v4413 = vadd.f32 %v4360, %v4412
    %4414 = vdwg.mxu0
    %4415 = vmatprep.subr.bf16.mxu0 %v2833
    %4416 = vmatpush1.bf16.msra.mxu0 %v2832
    %4417 = vmatprep.subr.bf16.mxu0 %v2837
    %4418 = vmatpush1.bf16.msra.mxu0 %v2836
    %4419 = vmatprep.subr.bf16.mxu0 %v2841
    %4420 = vmatpush1.bf16.msra.mxu0 %v2840
    %4421 = vmatprep.subr.bf16.mxu0 %v2845
    %4422 = vmatpush1.bf16.msra.mxu0 %v2844
    %4423 = vmatprep.subr.bf16.mxu0 %v2849
    %4424 = vmatpush1.bf16.msra.mxu0 %v2848
    %4425 = vmatprep.subr.bf16.mxu0 %v2853
    %4426 = vmatpush1.bf16.msra.mxu0 %v2852
    %4427 = vmatprep.subr.bf16.mxu0 %v2857
    %4428 = vmatpush1.bf16.msra.mxu0 %v2856
    %4429 = vmatprep.subr.bf16.mxu0 %v2861
    %4430 = vmatpush1.bf16.msra.mxu0 %v2860
    %4431 = vmatprep.subr.bf16.mxu0 %v2865
    %4432 = vmatpush1.bf16.msra.mxu0 %v2864
    %4433 = vmatprep.subr.bf16.mxu0 %v2869
    %4434 = vmatpush1.bf16.msra.mxu0 %v2868
    %4435 = vmatprep.subr.bf16.mxu0 %v2873
    %4436 = vmatpush1.bf16.msra.mxu0 %v2872
    %4437 = vmatprep.subr.bf16.mxu0 %v2877
    %4438 = vmatpush1.bf16.msra.mxu0 %v2876
    %4439 = vmatprep.subr.bf16.mxu0 %v2881
    %4440 = vmatpush1.bf16.msra.mxu0 %v2880
    %4441 = vmatprep.subr.bf16.mxu0 %v2885
    %4442 = vmatpush1.bf16.msra.mxu0 %v2884
    %4443 = vmatprep.subr.bf16.mxu0 %v2889
    %4444 = vmatpush1.bf16.msra.mxu0 %v2888
    %4445 = vmatprep.subr.bf16.mxu0 %v2893
    %4446 = vmatpush1.bf16.msra.mxu0 %v2892
    %4447 = vmatprep.mubr.bf16.mxu0 %v783
    %4448 = vmatmul.mubr.bf16.gmra.mrb[0].mxu0 %v782
    %v4449 = vpop.f32.mrb[0].mxu0
    %v4450 = vadd.f32 %v4397, %v4449
    %v4451 = vpop.f32.mrb[0].mxu0
    %v4452 = vadd.f32 %v4399, %v4451
    %v4453 = vpop.f32.mrb[0].mxu0
    %v4454 = vadd.f32 %v4401, %v4453
    %v4455 = vpop.f32.mrb[0].mxu0
    %v4456 = vadd.f32 %v4403, %v4455
    %4457 = vmatprep.mubr.bf16.mxu0 %v801
    %4458 = vmatmul.mubr.bf16.gmra.mrb[0].mxu0 %v800
    %v4459 = vpop.f32.mrb[0].mxu0
    %v4460 = vadd.f32 %v4407, %v4459
    %v4461 = vpop.f32.mrb[0].mxu0
    %v4462 = vadd.f32 %v4409, %v4461
    %v4463 = vpop.f32.mrb[0].mxu0
    %v4464 = vadd.f32 %v4411, %v4463
    %v4465 = vpop.f32.mrb[0].mxu0
    %v4466 = vadd.f32 %v4413, %v4465
    %4467 = vdwg.mxu0
    %4468 = vmatprep.subr.bf16.mxu0 %v2897
    %4469 = vmatpush1.bf16.msra.mxu0 %v2896
    %4470 = vmatprep.subr.bf16.mxu0 %v2901
    %4471 = vmatpush1.bf16.msra.mxu0 %v2900
    %4472 = vmatprep.subr.bf16.mxu0 %v2905
    %4473 = vmatpush1.bf16.msra.mxu0 %v2904
    %4474 = vmatprep.subr.bf16.mxu0 %v2909
    %4475 = vmatpush1.bf16.msra.mxu0 %v2908
    %4476 = vmatprep.subr.bf16.mxu0 %v2913
    %4477 = vmatpush1.bf16.msra.mxu0 %v2912
    %4478 = vmatprep.subr.bf16.mxu0 %v2917
    %4479 = vmatpush1.bf16.msra.mxu0 %v2916
    %4480 = vmatprep.subr.bf16.mxu0 %v2921
    %4481 = vmatpush1.bf16.msra.mxu0 %v2920
    %4482 = vmatprep.subr.bf16.mxu0 %v2925
    %4483 = vmatpush1.bf16.msra.mxu0 %v2924
    %4484 = vmatprep.subr.bf16.mxu0 %v2929
    %4485 = vmatpush1.bf16.msra.mxu0 %v2928
    %4486 = vmatprep.subr.bf16.mxu0 %v2933
    %4487 = vmatpush1.bf16.msra.mxu0 %v2932
    %4488 = vmatprep.subr.bf16.mxu0 %v2937
    %4489 = vmatpush1.bf16.msra.mxu0 %v2936
    %4490 = vmatprep.subr.bf16.mxu0 %v2941
    %4491 = vmatpush1.bf16.msra.mxu0 %v2940
    %4492 = vmatprep.subr.bf16.mxu0 %v2945
    %4493 = vmatpush1.bf16.msra.mxu0 %v2944
    %4494 = vmatprep.subr.bf16.mxu0 %v2949
    %4495 = vmatpush1.bf16.msra.mxu0 %v2948
    %4496 = vmatprep.subr.bf16.mxu0 %v2953
    %4497 = vmatpush1.bf16.msra.mxu0 %v2952
    %4498 = vmatprep.subr.bf16.mxu0 %v2957
    %4499 = vmatpush1.bf16.msra.mxu0 %v2956
    %4500 = vmatprep.mubr.bf16.mxu0 %v785
    %4501 = vmatmul.mubr.bf16.gmra.mrb[0].mxu0 %v784
    %v4502 = vpop.f32.mrb[0].mxu0
    %v4503 = vadd.f32 %v4450, %v4502
    %v4504 = vpop.f32.mrb[0].mxu0
    %v4505 = vadd.f32 %v4452, %v4504
    %v4506 = vpop.f32.mrb[0].mxu0
    %v4507 = vadd.f32 %v4454, %v4506
    %v4508 = vpop.f32.mrb[0].mxu0
    %v4509 = vadd.f32 %v4456, %v4508
    %4510 = vmatprep.mubr.bf16.mxu0 %v803
    %4511 = vmatmul.mubr.bf16.gmra.mrb[0].mxu0 %v802
    %v4512 = vpop.f32.mrb[0].mxu0
    %v4513 = vadd.f32 %v4460, %v4512
    %v4514 = vpop.f32.mrb[0].mxu0
    %v4515 = vadd.f32 %v4462, %v4514
    %v4516 = vpop.f32.mrb[0].mxu0
    %v4517 = vadd.f32 %v4464, %v4516
    %v4518 = vpop.f32.mrb[0].mxu0
    %v4519 = vadd.f32 %v4466, %v4518
    %4520 = vdwg.mxu0
    %4521 = vmatprep.subr.bf16.mxu0 %v2961
    %4522 = vmatpush1.bf16.msra.mxu0 %v2960
    %4523 = vmatprep.subr.bf16.mxu0 %v2965
    %4524 = vmatpush1.bf16.msra.mxu0 %v2964
    %4525 = vmatprep.subr.bf16.mxu0 %v2969
    %4526 = vmatpush1.bf16.msra.mxu0 %v2968
    %4527 = vmatprep.subr.bf16.mxu0 %v2973
    %4528 = vmatpush1.bf16.msra.mxu0 %v2972
    %4529 = vmatprep.subr.bf16.mxu0 %v2977
    %4530 = vmatpush1.bf16.msra.mxu0 %v2976
    %4531 = vmatprep.subr.bf16.mxu0 %v2981
    %4532 = vmatpush1.bf16.msra.mxu0 %v2980
    %4533 = vmatprep.subr.bf16.mxu0 %v2985
    %4534 = vmatpush1.bf16.msra.mxu0 %v2984
    %4535 = vmatprep.subr.bf16.mxu0 %v2989
    %4536 = vmatpush1.bf16.msra.mxu0 %v2988
    %4537 = vmatprep.subr.bf16.mxu0 %v2993
    %4538 = vmatpush1.bf16.msra.mxu0 %v2992
    %4539 = vmatprep.subr.bf16.mxu0 %v2997
    %4540 = vmatpush1.bf16.msra.mxu0 %v2996
    %4541 = vmatprep.subr.bf16.mxu0 %v3001
    %4542 = vmatpush1.bf16.msra.mxu0 %v3000
    %4543 = vmatprep.subr.bf16.mxu0 %v3005
    %4544 = vmatpush1.bf16.msra.mxu0 %v3004
    %4545 = vmatprep.subr.bf16.mxu0 %v3009
    %4546 = vmatpush1.bf16.msra.mxu0 %v3008
    %4547 = vmatprep.subr.bf16.mxu0 %v3013
    %4548 = vmatpush1.bf16.msra.mxu0 %v3012
    %4549 = vmatprep.subr.bf16.mxu0 %v3017
    %4550 = vmatpush1.bf16.msra.mxu0 %v3016
    %4551 = vmatprep.subr.bf16.mxu0 %v3021
    %4552 = vmatpush1.bf16.msra.mxu0 %v3020
    %4553 = vmatprep.mubr.bf16.mxu0 %v787
    %4554 = vmatmul.mubr.bf16.gmra.mrb[0].mxu0 %v786
    %v4555 = vpop.f32.mrb[0].mxu0
    %v4556 = vadd.f32 %v4503, %v4555
    %v4557 = vpop.f32.mrb[0].mxu0
    %v4558 = vadd.f32 %v4505, %v4557
    %v4559 = vpop.f32.mrb[0].mxu0
    %v4560 = vadd.f32 %v4507, %v4559
    %v4561 = vpop.f32.mrb[0].mxu0
    %v4562 = vadd.f32 %v4509, %v4561
    %4563 = vmatprep.mubr.bf16.mxu0 %v805
    %4564 = vmatmul.mubr.bf16.gmra.mrb[0].mxu0 %v804
    %v4565 = vpop.f32.mrb[0].mxu0
    %v4566 = vadd.f32 %v4513, %v4565
    %v4567 = vpop.f32.mrb[0].mxu0
    %v4568 = vadd.f32 %v4515, %v4567
    %v4569 = vpop.f32.mrb[0].mxu0
    %v4570 = vadd.f32 %v4517, %v4569
    %v4571 = vpop.f32.mrb[0].mxu0
    %v4572 = vadd.f32 %v4519, %v4571
    %4573 = vdwg.mxu0
    %4574 = vmatprep.subr.bf16.mxu0 %v3025
    %4575 = vmatpush1.bf16.msra.mxu0 %v3024
    %4576 = vmatprep.subr.bf16.mxu0 %v3029
    %4577 = vmatpush1.bf16.msra.mxu0 %v3028
    %4578 = vmatprep.subr.bf16.mxu0 %v3033
    %4579 = vmatpush1.bf16.msra.mxu0 %v3032
    %4580 = vmatprep.subr.bf16.mxu0 %v3037
    %4581 = vmatpush1.bf16.msra.mxu0 %v3036
    %4582 = vmatprep.subr.bf16.mxu0 %v3041
    %4583 = vmatpush1.bf16.msra.mxu0 %v3040
    %4584 = vmatprep.subr.bf16.mxu0 %v3045
    %4585 = vmatpush1.bf16.msra.mxu0 %v3044
    %4586 = vmatprep.subr.bf16.mxu0 %v3049
    %4587 = vmatpush1.bf16.msra.mxu0 %v3048
    %4588 = vmatprep.subr.bf16.mxu0 %v3053
    %4589 = vmatpush1.bf16.msra.mxu0 %v3052
    %4590 = vmatprep.subr.bf16.mxu0 %v3057
    %4591 = vmatpush1.bf16.msra.mxu0 %v3056
    %4592 = vmatprep.subr.bf16.mxu0 %v3061
    %4593 = vmatpush1.bf16.msra.mxu0 %v3060
    %4594 = vmatprep.subr.bf16.mxu0 %v3065
    %4595 = vmatpush1.bf16.msra.mxu0 %v3064
    %4596 = vmatprep.subr.bf16.mxu0 %v3069
    %4597 = vmatpush1.bf16.msra.mxu0 %v3068
    %4598 = vmatprep.subr.bf16.mxu0 %v3073
    %4599 = vmatpush1.bf16.msra.mxu0 %v3072
    %4600 = vmatprep.subr.bf16.mxu0 %v3077
    %4601 = vmatpush1.bf16.msra.mxu0 %v3076
    %4602 = vmatprep.subr.bf16.mxu0 %v3081
    %4603 = vmatpush1.bf16.msra.mxu0 %v3080
    %4604 = vmatprep.subr.bf16.mxu0 %v3085
    %4605 = vmatpush1.bf16.msra.mxu0 %v3084
    %4606 = vmatprep.mubr.bf16.mxu0 %v789
    %4607 = vmatmul.mubr.bf16.gmra.mrb[0].mxu0 %v788
    %v4608 = vpop.f32.mrb[0].mxu0
    %v4609 = vadd.f32 %v4556, %v4608
    %v4610 = vpop.f32.mrb[0].mxu0
    %v4611 = vadd.f32 %v4558, %v4610
    %v4612 = vpop.f32.mrb[0].mxu0
    %v4613 = vadd.f32 %v4560, %v4612
    %v4614 = vpop.f32.mrb[0].mxu0
    %v4615 = vadd.f32 %v4562, %v4614
    %4616 = vmatprep.mubr.bf16.mxu0 %v807
    %4617 = vmatmul.mubr.bf16.gmra.mrb[0].mxu0 %v806
    %v4618 = vpop.f32.mrb[0].mxu0
    %v4619 = vadd.f32 %v4566, %v4618
    %v4620 = vpop.f32.mrb[0].mxu0
    %v4621 = vadd.f32 %v4568, %v4620
    %v4622 = vpop.f32.mrb[0].mxu0
    %v4623 = vadd.f32 %v4570, %v4622
    %v4624 = vpop.f32.mrb[0].mxu0
    %v4625 = vadd.f32 %v4572, %v4624
    %4626 = vdwg.mxu0
    %4627 = vmatprep.subr.bf16.mxu0 %v3089
    %4628 = vmatpush1.bf16.msra.mxu0 %v3088
    %4629 = vmatprep.subr.bf16.mxu0 %v3093
    %4630 = vmatpush1.bf16.msra.mxu0 %v3092
    %4631 = vmatprep.subr.bf16.mxu0 %v3097
    %4632 = vmatpush1.bf16.msra.mxu0 %v3096
    %4633 = vmatprep.subr.bf16.mxu0 %v3101
    %4634 = vmatpush1.bf16.msra.mxu0 %v3100
    %4635 = vmatprep.subr.bf16.mxu0 %v3105
    %4636 = vmatpush1.bf16.msra.mxu0 %v3104
    %4637 = vmatprep.subr.bf16.mxu0 %v3109
    %4638 = vmatpush1.bf16.msra.mxu0 %v3108
    %4639 = vmatprep.subr.bf16.mxu0 %v3113
    %4640 = vmatpush1.bf16.msra.mxu0 %v3112
    %4641 = vmatprep.subr.bf16.mxu0 %v3117
    %4642 = vmatpush1.bf16.msra.mxu0 %v3116
    %4643 = vmatprep.subr.bf16.mxu0 %v3121
    %4644 = vmatpush1.bf16.msra.mxu0 %v3120
    %4645 = vmatprep.subr.bf16.mxu0 %v3125
    %4646 = vmatpush1.bf16.msra.mxu0 %v3124
    %4647 = vmatprep.subr.bf16.mxu0 %v3129
    %4648 = vmatpush1.bf16.msra.mxu0 %v3128
    %4649 = vmatprep.subr.bf16.mxu0 %v3133
    %4650 = vmatpush1.bf16.msra.mxu0 %v3132
    %4651 = vmatprep.subr.bf16.mxu0 %v3137
    %4652 = vmatpush1.bf16.msra.mxu0 %v3136
    %4653 = vmatprep.subr.bf16.mxu0 %v3141
    %4654 = vmatpush1.bf16.msra.mxu0 %v3140
    %4655 = vmatprep.subr.bf16.mxu0 %v3145
    %4656 = vmatpush1.bf16.msra.mxu0 %v3144
    %4657 = vmatprep.subr.bf16.mxu0 %v3149
    %4658 = vmatpush1.bf16.msra.mxu0 %v3148
    %4659 = vmatprep.mubr.bf16.mxu0 %v791
    %4660 = vmatmul.mubr.bf16.gmra.mrb[0].mxu0 %v790
    %v4661 = vpop.f32.mrb[0].mxu0
    %v4662 = vadd.f32 %v4609, %v4661
    %v4663 = vpop.f32.mrb[0].mxu0
    %v4664 = vadd.f32 %v4611, %v4663
    %v4665 = vpop.f32.mrb[0].mxu0
    %v4666 = vadd.f32 %v4613, %v4665
    %v4667 = vpop.f32.mrb[0].mxu0
    %v4668 = vadd.f32 %v4615, %v4667
    %4669 = vmatprep.mubr.bf16.mxu0 %v809
    %4670 = vmatmul.mubr.bf16.gmra.mrb[0].mxu0 %v808
    %v4671 = vpop.f32.mrb[0].mxu0
    %v4672 = vadd.f32 %v4619, %v4671
    %v4673 = vpop.f32.mrb[0].mxu0
    %v4674 = vadd.f32 %v4621, %v4673
    %v4675 = vpop.f32.mrb[0].mxu0
    %v4676 = vadd.f32 %v4623, %v4675
    %v4677 = vpop.f32.mrb[0].mxu0
    %v4678 = vadd.f32 %v4625, %v4677
    %4679 = vdwg.mxu0
    %v4680 = vadd.f32 %v4185, %v4189
    %v4681 = vadd.f32 %v4680, %v4195
    %v4682 = vadd.f32 %v4681, %v4199
    %v4683 = vrot.slane %v4682, 4
    %v4684 = vadd.f32 %v4682, %v4683
    %v4685 = vrot.slane %v4684, 2
    %v4686 = vadd.f32 %v4684, %v4685
    %v4687 = vrot.slane %v4686, 1
    %v4688 = vadd.f32 %v4686, %v4687
    %v4689 = vadd.f32 %v4187, %v4191
    %v4690 = vadd.f32 %v4689, %v4197
    %v4691 = vadd.f32 %v4690, %v4201
    %v4692 = vrot.slane %v4691, 4
    %v4693 = vadd.f32 %v4691, %v4692
    %v4694 = vrot.slane %v4693, 2
    %v4695 = vadd.f32 %v4693, %v4694
    %v4696 = vrot.slane %v4695, 1
    %v4697 = vadd.f32 %v4695, %v4696
    %v4698 = vadd.f32 %v4662, %v4666
    %v4699 = vadd.f32 %v4698, %v4672
    %v4700 = vadd.f32 %v4699, %v4676
    %v4701 = vrot.slane %v4700, 4
    %v4702 = vadd.f32 %v4700, %v4701
    %v4703 = vrot.slane %v4702, 2
    %v4704 = vadd.f32 %v4702, %v4703
    %v4705 = vrot.slane %v4704, 1
    %v4706 = vadd.f32 %v4704, %v4705
    %v4707 = vadd.f32 %v4664, %v4668
    %v4708 = vadd.f32 %v4707, %v4674
    %v4709 = vadd.f32 %v4708, %v4678
    %v4710 = vrot.slane %v4709, 4
    %v4711 = vadd.f32 %v4709, %v4710
    %v4712 = vrot.slane %v4711, 2
    %v4713 = vadd.f32 %v4711, %v4712
    %v4714 = vrot.slane %v4713, 1
    %v4715 = vadd.f32 %v4713, %v4714
    %v4716 = vmul.f32 %v4185, %v4185
    %v4717 = vmul.f32 %v4187, %v4187
    %v4718 = vmul.f32 %v4662, %v4662
    %v4719 = vmul.f32 %v4664, %v4664
    %v4720 = vmul.f32 %v4189, %v4189
    %v4721 = vmul.f32 %v4191, %v4191
    %v4722 = vmul.f32 %v4666, %v4666
    %v4723 = vmul.f32 %v4668, %v4668
    %v4724 = vmul.f32 %v4195, %v4195
    %v4725 = vmul.f32 %v4197, %v4197
    %v4726 = vmul.f32 %v4672, %v4672
    %v4727 = vmul.f32 %v4674, %v4674
    %v4728 = vmul.f32 %v4199, %v4199
    %v4729 = vmul.f32 %v4201, %v4201
    %v4730 = vmul.f32 %v4676, %v4676
    %v4731 = vmul.f32 %v4678, %v4678
    %v4732 = vadd.f32 %v4716, %v4720
    %v4733 = vadd.f32 %v4732, %v4724
    %v4734 = vadd.f32 %v4733, %v4728
    %v4735 = vrot.slane %v4734, 4
    %v4736 = vadd.f32 %v4734, %v4735
    %v4737 = vrot.slane %v4736, 2
    %v4738 = vadd.f32 %v4736, %v4737
    %v4739 = vrot.slane %v4738, 1
    %v4740 = vadd.f32 %v4738, %v4739
    %v4741 = vadd.f32 %v4717, %v4721
    %v4742 = vadd.f32 %v4741, %v4725
    %v4743 = vadd.f32 %v4742, %v4729
    %v4744 = vrot.slane %v4743, 4
    %v4745 = vadd.f32 %v4743, %v4744
    %v4746 = vrot.slane %v4745, 2
    %v4747 = vadd.f32 %v4745, %v4746
    %v4748 = vrot.slane %v4747, 1
    %v4749 = vadd.f32 %v4747, %v4748
    %v4750 = vadd.f32 %v4718, %v4722
    %v4751 = vadd.f32 %v4750, %v4726
    %v4752 = vadd.f32 %v4751, %v4730
    %v4753 = vrot.slane %v4752, 4
    %v4754 = vadd.f32 %v4752, %v4753
    %v4755 = vrot.slane %v4754, 2
    %v4756 = vadd.f32 %v4754, %v4755
    %v4757 = vrot.slane %v4756, 1
    %v4758 = vadd.f32 %v4756, %v4757
    %v4759 = vadd.f32 %v4719, %v4723
    %v4760 = vadd.f32 %v4759, %v4727
    %v4761 = vadd.f32 %v4760, %v4731
    %v4762 = vrot.slane %v4761, 4
    %v4763 = vadd.f32 %v4761, %v4762
    %v4764 = vrot.slane %v4763, 2
    %v4765 = vadd.f32 %v4763, %v4764
    %v4766 = vrot.slane %v4765, 1
    %v4767 = vadd.f32 %v4765, %v4766
    %v4768 = vadd.f32 %v4688, %v4697
    %v4769 = vadd.f32 %v4768, %v4706
    %v4770 = vadd.f32 %v4769, %v4715
    %v4771 = vadd.f32 %v4740, %v4749
    %v4772 = vadd.f32 %v4771, %v4758
    %v4773 = vadd.f32 %v4772, %v4767
    %v4774 = vrcp.pop 128.0
    %v4775 = vmul.f32 %v4770, %v4774
    %v4776 = vmul.f32 %v4773, %v4774
    %v4777 = vmul.f32 %v4775, %v4775
    %v4778 = vsub.f32 %v4776, %v4777
    %v4779 = vmax.f32 %v4778, 0.0
    %v4780 = vld [vmem:[#allocation4] sm:$0x1]
    %v4781 = vadd.f32 %v4779, 1e-05
    %v4782 = vrsqrt.pop %v4781
    %v4783 = vmul.f32 %v4780, %v4782
    %v4784 = vld [vmem:[#allocation6] sm:$0x1]
    %v4785 = vmul.f32 %v4783, %v4775
    %v4786 = vsub.f32 %v4784, %v4785
    %v4787 = vlaneseq
    %v4788 = vshrl.u32 %v4787, 7
    %v4789 = vsub.s32 0, %v4788
    %v4790 = vrot.slane %v4783, %v4789
    %v4791 = vmul.f32 %v4185, %v4790
    %v4792 = vmul.f32 %v4187, %v4790
    %v4793 = vmul.f32 %v4662, %v4790
    %v4794 = vmul.f32 %v4664, %v4790
    %v4795 = vmul.f32 %v4189, %v4790
    %v4796 = vmul.f32 %v4191, %v4790
    %v4797 = vmul.f32 %v4666, %v4790
    %v4798 = vmul.f32 %v4668, %v4790
    %v4799 = vmul.f32 %v4195, %v4790
    %v4800 = vmul.f32 %v4197, %v4790
    %v4801 = vmul.f32 %v4672, %v4790
    %v4802 = vmul.f32 %v4674, %v4790
    %v4803 = vmul.f32 %v4199, %v4790
    %v4804 = vmul.f32 %v4201, %v4790
    %v4805 = vmul.f32 %v4676, %v4790
    %v4806 = vmul.f32 %v4678, %v4790
    %v4807 = vlaneseq
    %v4808 = vshrl.u32 %v4807, 7
    %v4809 = vsub.s32 0, %v4808
    %v4810 = vrot.slane %v4786, %v4809
    %v4811 = vadd.f32 %v4791, %v4810
    %v4812 = vadd.f32 %v4792, %v4810
    %v4813 = vadd.f32 %v4793, %v4810
    %v4814 = vadd.f32 %v4794, %v4810
    %v4815 = vadd.f32 %v4795, %v4810
    %v4816 = vadd.f32 %v4796, %v4810
    %v4817 = vadd.f32 %v4797, %v4810
    %v4818 = vadd.f32 %v4798, %v4810
    %v4819 = vadd.f32 %v4799, %v4810
    %v4820 = vadd.f32 %v4800, %v4810
    %v4821 = vadd.f32 %v4801, %v4810
    %v4822 = vadd.f32 %v4802, %v4810
    %v4823 = vadd.f32 %v4803, %v4810
    %v4824 = vadd.f32 %v4804, %v4810
    %v4825 = vadd.f32 %v4805, %v4810
    %v4826 = vadd.f32 %v4806, %v4810
    %v4827 = vmax.f32 %v4811, 0.0
    %v4828 = vmax.f32 %v4812, 0.0
    %v4829 = vmax.f32 %v4813, 0.0
    %v4830 = vmax.f32 %v4814, 0.0
    %v4831 = vmax.f32 %v4815, 0.0
    %v4832 = vmax.f32 %v4816, 0.0
    %v4833 = vmax.f32 %v4817, 0.0
    %v4834 = vmax.f32 %v4818, 0.0
    %v4835 = vmax.f32 %v4819, 0.0
    %v4836 = vmax.f32 %v4820, 0.0
    %v4837 = vmax.f32 %v4821, 0.0
    %v4838 = vmax.f32 %v4822, 0.0
    %v4839 = vmax.f32 %v4823, 0.0
    %v4840 = vmax.f32 %v4824, 0.0
    %v4841 = vmax.f32 %v4825, 0.0
    %v4842 = vmax.f32 %v4826, 0.0
    %v4843 = vpack.c.bf16 %v4831, %v4827
    %v4844 = vpack.c.bf16 %v4832, %v4828
    %v4845 = vpack.c.bf16 %v4833, %v4829
    %v4846 = vpack.c.bf16 %v4834, %v4830
    %v4847 = vpack.c.bf16 %v4839, %v4835
    %v4848 = vpack.c.bf16 %v4840, %v4836
    %v4849 = vpack.c.bf16 %v4841, %v4837
    %v4850 = vpack.c.bf16 %v4842, %v4838
    %v4859 = vunpack.c.l.b16 %v4843
    %v4860 = vunpack.c.l.b16 %v4844
    %v4861 = vunpack.c.l.b16 %v4845
    %v4862 = vunpack.c.l.b16 %v4846
    %v4863 = vunpack.c.h.b16 %v4843
    %v4864 = vunpack.c.h.b16 %v4844
    %v4865 = vunpack.c.h.b16 %v4845
    %v4866 = vunpack.c.h.b16 %v4846
    %v4867 = vunpack.c.l.b16 %v4847
    %v4868 = vunpack.c.l.b16 %v4848
    %v4869 = vunpack.c.l.b16 %v4849
    %v4870 = vunpack.c.l.b16 %v4850
    %v4871 = vunpack.c.h.b16 %v4847
    %v4872 = vunpack.c.h.b16 %v4848
    %v4873 = vunpack.c.h.b16 %v4849
    %v4874 = vunpack.c.h.b16 %v4850
    %v4875 = vpack.c.b16 %v4860, %v4859
    %v4876 = vpack.c.b16 %v4862, %v4861
    %v4877 = vpack.c.b16 %v4864, %v4863
    %v4878 = vpack.c.b16 %v4866, %v4865
    %v4879 = vpack.c.b16 %v4868, %v4867
    %v4880 = vpack.c.b16 %v4870, %v4869
    %v4881 = vpack.c.b16 %v4872, %v4871
    %v4882 = vpack.c.b16 %v4874, %v4873
    %4891 = vst [vmem:[%s4] sm:$0xff] %v4875
    %4892 = vst [vmem:[%s4 + $0x8] sm:$0xff] %v4876
    %4893 = vst [vmem:[%s4 + $0x10] sm:$0xff] %v4877
    %4894 = vst [vmem:[%s4 + $0x18] sm:$0xff] %v4878
    %4895 = vst [vmem:[%s4 + $0x20] sm:$0xff] %v4879
    %4896 = vst [vmem:[%s4 + $0x28] sm:$0xff] %v4880
    %4897 = vst [vmem:[%s4 + $0x30] sm:$0xff] %v4881
    %4898 = vst [vmem:[%s4 + $0x38] sm:$0xff] %v4882
    // Predicated region
    $region30: #{generator_forward.4} parent=1 // pred_check
      _
    $region31: #{generator_forward.4} parent=1 // pred_check_branch
      %4900 = sbr.rel (0) target = $region33
    $region32: #{generator_forward.4} parent=1 // pred_region
      _
    $region33: #{generator_forward.4} parent=1 // pred_fallthru
      _
    // Predicated region
    $region34: #{generator_forward.4} parent=1 // pred_check
      _
    $region35: #{generator_forward.4} parent=1 // pred_check_branch
      %4902 = sbr.rel (0) target = $region37
    $region36: #{generator_forward.4} parent=1 // pred_region
      _
    $region37: #{generator_forward.4} parent=1 // pred_fallthru
      _
    %4903 = vsyncpa [#allocation3], 1
    %4904 = vsyncpa [#allocation5], 1

</llo_original>
